<compile_context>
chip_gen: v6e
topology: v6e:2x2x1
jax: 0.10.0
libtpu: 0.0.40
codegen_flags: <defaults>
</compile_context>

<pallas_src>
import functools

import numpy as np
import jax
import jax.numpy as jnp
from jax.experimental import pallas as pl
from jax.experimental.pallas import tpu as pltpu

WDT = jnp.bfloat16  # weight dtype (MXU-native); all accumulation stays float32
_PARALLEL = pltpu.CompilerParams(dimension_semantics=("parallel",))


# -----------------------------------------------------------------------------
# Pallas kernels (channels-second: (Cout, Cin) @ (Cin, M), M = H*W on lanes)
# -----------------------------------------------------------------------------
def _entry_kernel(p_ref, w_ref, b_ref, o_ref):
    # relu(W @ im2col_patches + b) for one batch element.
    x = p_ref[0].astype(w_ref.dtype)                                    # (27, M)
    y = jnp.dot(w_ref[...], x, preferred_element_type=jnp.float32)
    o_ref[0] = jnp.maximum(y + b_ref[...], 0.0)


def _enc_body(taps_ref, dw_ref, b1_ref, pw_ref, b2_ref):
    # Fused: 9-tap depthwise MAC + bias + ReLU -> pointwise MXU matmul + bias + ReLU.
    dw = dw_ref[...]                                                    # (C, 9) f32
    acc = taps_ref[0, 0] * dw[:, 0:1]
    for t in range(1, 9):
        acc = acc + taps_ref[0, t] * dw[:, t:t + 1]
    h = jnp.maximum(acc + b1_ref[...], 0.0)                             # (C, M) f32
    y = jnp.dot(pw_ref[...], h.astype(pw_ref.dtype),
                preferred_element_type=jnp.float32)
    return jnp.maximum(y + b2_ref[...], 0.0)                            # (Cout, M)


def _enc_kernel(taps_ref, dw_ref, b1_ref, pw_ref, b2_ref, o_ref):
    o_ref[0] = _enc_body(taps_ref, dw_ref, b1_ref, pw_ref, b2_ref)


def _enc_epi_kernel(taps_ref, dw_ref, b1_ref, pw_ref, b2_ref, wn_ref, o_ref):
    # Bottleneck + the next decoder's up-path 1x1 conv fused as an epilogue.
    y = _enc_body(taps_ref, dw_ref, b1_ref, pw_ref, b2_ref)
    o_ref[0] = jnp.dot(wn_ref[...], y.astype(wn_ref.dtype),
                       preferred_element_type=jnp.float32)


def _dec_kernel(upz_ref, skip_ref, ws_ref, b_ref, wn_ref, o_ref):
    # d = relu(Up(prev @ Wu) + Ws @ skip + b);  output = Wu_next @ d (commuted upsample).
    s = jnp.dot(ws_ref[...], skip_ref[0].astype(ws_ref.dtype),
                preferred_element_type=jnp.float32)
    d = jnp.maximum(upz_ref[0] + s + b_ref[...], 0.0)
    o_ref[0] = jnp.dot(wn_ref[...], d.astype(wn_ref.dtype),
                       preferred_element_type=jnp.float32)


def _dec_final_kernel(upz_ref, skip_ref, ws_ref, b_ref, wf_ref, bf_ref, o_ref):
    # Last decoder with the final 1x1 classifier (weight + bias) folded in.
    s = jnp.dot(ws_ref[...], skip_ref[0].astype(ws_ref.dtype),
                preferred_element_type=jnp.float32)
    d = jnp.maximum(upz_ref[0] + s + b_ref[...], 0.0)
    o_ref[0] = jnp.dot(wf_ref[...], d.astype(wf_ref.dtype),
                       preferred_element_type=jnp.float32) + bf_ref[...]


def _final_up_kernel(z_ref, mh_ref, mwt_ref, o_ref, *, nc):
    # x2 bilinear upsample of the logits: per-channel Mh @ Z @ Mw^T (two small MXU dots).
    for c in range(nc):
        t = jnp.dot(z_ref[0, c], mwt_ref[...], preferred_element_type=jnp.float32)
        o_ref[0, c] = jnp.dot(mh_ref[...], t, preferred_element_type=jnp.float32)


# -----------------------------------------------------------------------------
# pallas_call wrappers
# -----------------------------------------------------------------------------
def _rep(shape):
    """Replicated (grid-invariant) operand: constant block index, fetched once."""
    return pl.BlockSpec(shape, lambda n: (0,) * len(shape))


def entry_conv(patches, w, b):
    N, K, M = patches.shape
    Co = w.shape[0]
    return pl.pallas_call(
        _entry_kernel,
        out_shape=jax.ShapeDtypeStruct((N, Co, M), jnp.float32),
        grid=(N,),
        in_specs=[pl.BlockSpec((1, K, M), lambda n: (n, 0, 0)),
                  _rep(w.shape), _rep(b.shape)],
        out_specs=pl.BlockSpec((1, Co, M), lambda n: (n, 0, 0)),
        compiler_params=_PARALLEL,
    )(patches, w, b)


def enc_block(taps, prm, epilogue_w=None):
    N, T, C, M = taps.shape
    Co = prm["pw"].shape[0]
    args = [taps, prm["dw"], prm["b1"], prm["pw"], prm["b2"]]
    specs = [pl.BlockSpec((1, T, C, M), lambda n: (n, 0, 0, 0)),
             _rep(prm["dw"].shape), _rep(prm["b1"].shape),
             _rep(prm["pw"].shape), _rep(prm["b2"].shape)]
    if epilogue_w is None:
        kernel, out_c = _enc_kernel, Co
    else:
        kernel, out_c = _enc_epi_kernel, epilogue_w.shape[0]
        args.append(epilogue_w)
        specs.append(_rep(epilogue_w.shape))
    return pl.pallas_call(
        kernel,
        out_shape=jax.ShapeDtypeStruct((N, out_c, M), jnp.float32),
        grid=(N,),
        in_specs=specs,
        out_specs=pl.BlockSpec((1, out_c, M), lambda n: (n, 0, 0)),
        compiler_params=_PARALLEL,
    )(*args)


def dec_block(upz, skip, prm, next_w, next_b=None):
    N, Cu, M = upz.shape
    Cs = skip.shape[1]
    Cn = next_w.shape[0]
    args = [upz, skip, prm["ws"], prm["b"], next_w]
    specs = [pl.BlockSpec((1, Cu, M), lambda n: (n, 0, 0)),
             pl.BlockSpec((1, Cs, M), lambda n: (n, 0, 0)),
             _rep(prm["ws"].shape), _rep(prm["b"].shape), _rep(next_w.shape)]
    if next_b is None:
        kernel = _dec_kernel
    else:
        kernel = _dec_final_kernel
        args.append(next_b)
        specs.append(_rep(next_b.shape))
    return pl.pallas_call(
        kernel,
        out_shape=jax.ShapeDtypeStruct((N, Cn, M), jnp.float32),
        grid=(N,),
        in_specs=specs,
        out_specs=pl.BlockSpec((1, Cn, M), lambda n: (n, 0, 0)),
        compiler_params=_PARALLEL,
    )(*args)


def final_upsample(z4d, mh, mwt):
    N, nc, Hl, Wl = z4d.shape
    Ho, Wo = mh.shape[0], mwt.shape[1]
    return pl.pallas_call(
        functools.partial(_final_up_kernel, nc=nc),
        out_shape=jax.ShapeDtypeStruct((N, nc, Ho, Wo), jnp.float32),
        grid=(N,),
        in_specs=[pl.BlockSpec((1, nc, Hl, Wl), lambda n: (n, 0, 0, 0)),
                  _rep(mh.shape), _rep(mwt.shape)],
        out_specs=pl.BlockSpec((1, nc, Ho, Wo), lambda n: (n, 0, 0, 0)),
        compiler_params=_PARALLEL,
    )(z4d, mh, mwt)


# -----------------------------------------------------------------------------
# XLA glue: 3x3/stride-2 window gather and bilinear interpolation constants
# -----------------------------------------------------------------------------
def _gather_taps(x):
    """3x3, stride 2, pad 1 window gather on NCHW.  Returns (N, 9, C, Ho*Wo)."""
    N, C, H, W = x.shape
    Ho, Wo = (H - 1) // 2 + 1, (W - 1) // 2 + 1
    xp = jnp.pad(x, ((0, 0), (0, 0), (1, 1), (1, 1)))
    taps = [xp[:, :, ki:ki + 2 * Ho:2, kj:kj + 2 * Wo:2]
            for ki in range(3) for kj in range(3)]
    t = jnp.stack(taps, axis=1)                                 # (N, 9, C, Ho, Wo)
    return t.reshape(N, 9, C, Ho * Wo), Ho, Wo


def _interp_matrix(n_in, n_out):
    """Bilinear interpolation matrix (align_corners=True, PyTorch semantics),
    built with NumPy at trace time so it is a pure compile-time constant."""
    if n_in == 1:
        return np.ones((n_out, 1), np.float32)
    src = np.arange(n_out, dtype=np.float64) * (n_in - 1) / (n_out - 1)
    i0 = np.clip(np.floor(src).astype(np.int64), 0, n_in - 2)
    frac = src - i0
    m = np.zeros((n_out, n_in), np.float64)
    rows = np.arange(n_out)
    m[rows, i0] += 1.0 - frac
    m[rows, i0 + 1] += frac
    return m.astype(np.float32)


def _upsample2x(z, Hl, Wl):
    """x2 bilinear (align_corners=True) on channels-second (N, C, Hl*Wl)."""
    N, C, _ = z.shape
    mh = _interp_matrix(Hl, 2 * Hl)
    mw = _interp_matrix(Wl, 2 * Wl)
    u = jnp.einsum("Hh,Ww,nchw->ncHW", mh, mw, z.reshape(N, C, Hl, Wl))
    return u.reshape(N, C, 4 * Hl * Wl)


# -----------------------------------------------------------------------------
# Parameters (deterministic synthetic init, BatchNorm folded) & model forward
# -----------------------------------------------------------------------------
def _key_stream(seed):
    key = jax.random.PRNGKey(seed)
    while True:
        key, sub = jax.random.split(key)
        yield sub


def init_params(num_classes=8, input_channels=3):
    ks = _key_stream(1234)
    nrm = lambda shape, s=0.1: s * jax.random.normal(next(ks), shape, jnp.float32)

    def bn_fold(c):
        # TODO(synk): inference-mode BatchNorm (running stats) with synthetic buffers.
        gamma = 1.0 + nrm((c,))
        beta = nrm((c,))
        running_mean = nrm((c,))
        running_var = 0.9 + 0.1 * jnp.abs(jax.random.normal(next(ks), (c,), jnp.float32))
        scale = gamma / jnp.sqrt(running_var + 1e-5)
        shift = beta - running_mean * scale
        return scale, shift

    enc, dec = [16, 32, 64, 128], [64, 32, 16, 16]
    p = {}

    w = nrm((3 * 3 * input_channels, enc[0]))                      # (27, 16)
    s, t = bn_fold(enc[0])
    p["entry"] = {"w": (w * s[None, :]).T.astype(WDT), "b": t.reshape(-1, 1)}

    def ds_folded(cin, cout):      # DepthwiseSeparableConv (full 3x3 depthwise)
        dw = nrm((cin, 9))
        s1, t1 = bn_fold(cin)
        pw = nrm((cin, cout))
        s2, t2 = bn_fold(cout)
        return {"dw": dw * s1[:, None], "b1": t1.reshape(-1, 1),
                "pw": (pw * s2[None, :]).T.astype(WDT), "b2": t2.reshape(-1, 1)}

    def asym_folded(cin, cout):    # AsymmetricDepthwiseSeparableConv (1x3 -> 3x1)
        k1 = nrm((cin, 3))         # 1x3 depthwise (along W, stride 2, pad 1)
        k2 = nrm((cin, 3))         # 3x1 depthwise (along H, stride 2, pad 1)
        s1, t1 = bn_fold(cin)
        pw = nrm((cin, cout))
        s2, t2 = bn_fold(cout)
        # No nonlinearity between the two depthwise convs -> exact fold into one
        # separable 3x3 stride-2 pad-1 depthwise: tap[3*ki+kj, c] = k2[c,ki]*k1[c,kj].
        dw9 = (k2[:, :, None] * k1[:, None, :]).reshape(cin, 9)
        return {"dw": dw9 * s1[:, None], "b1": t1.reshape(-1, 1),
                "pw": (pw * s2[None, :]).T.astype(WDT), "b2": t2.reshape(-1, 1)}

    p["enc1"] = ds_folded(enc[0], enc[1])
    p["enc2"] = asym_folded(enc[1], enc[2])
    p["enc3"] = ds_folded(enc[2], enc[3])
    p["bneck"] = asym_folded(enc[3], enc[3])

    def dec_folded(c_up, c_skip, cout):    # torch.cat order is [upsampled, skip]
        w = nrm((c_up + c_skip, cout))
        s, t = bn_fold(cout)
        wf = w * s[None, :]
        return {"wu": wf[:c_up].T.astype(WDT),   # (cout, c_up)  - applied in the PREVIOUS kernel
                "ws": wf[c_up:].T.astype(WDT),   # (cout, c_skip)
                "b": t.reshape(-1, 1)}

    p["dec1"] = dec_folded(enc[3], enc[3], dec[0])
    p["dec2"] = dec_folded(dec[0], enc[2], dec[1])
    p["dec3"] = dec_folded(dec[1], enc[1], dec[2])
    p["dec4"] = dec_folded(dec[2], enc[0], dec[3])

    wf = nrm((dec[3], num_classes))
    p["final"] = {"w": wf.T.astype(WDT), "b": nrm((num_classes,)).reshape(-1, 1)}
    return p


def forward(params, x_nchw):
    p = params
    N = x_nchw.shape[0]

    # Entry conv: window gather / im2col (XLA) -> fused matmul + bias + ReLU.
    t0, H0, W0 = _gather_taps(x_nchw)
    e0 = entry_conv(t0.reshape(N, -1, H0 * W0), p["entry"]["w"], p["entry"]["b"])

    # Encoder: one fused depthwise+BN+ReLU+pointwise+BN+ReLU kernel per stage.
    t1, H1, W1 = _gather_taps(e0.reshape(N, -1, H0, W0))
    e1 = enc_block(t1, p["enc1"])
    t2, H2, W2 = _gather_taps(e1.reshape(N, -1, H1, W1))
    e2 = enc_block(t2, p["enc2"])
    t3, H3, W3 = _gather_taps(e2.reshape(N, -1, H2, W2))
    e3 = enc_block(t3, p["enc3"])
    tb, Hb, Wb = _gather_taps(e3.reshape(N, -1, H3, W3))

    # Bottleneck, with dec1's up-path 1x1 conv fused as an epilogue (Up o conv == conv o Up).
    z1 = enc_block(tb, p["bneck"], epilogue_w=p["dec1"]["wu"])

    # Decoder: relu(Up(z) + Ws @ skip + b); epilogue applies the next stage's up-path conv.
    z2 = dec_block(_upsample2x(z1, Hb, Wb), e3, p["dec1"], p["dec2"]["wu"])
    z3 = dec_block(_upsample2x(z2, H3, W3), e2, p["dec2"], p["dec3"]["wu"])
    z4 = dec_block(_upsample2x(z3, H2, W2), e1, p["dec3"], p["dec4"]["wu"])
    z5 = dec_block(_upsample2x(z4, H1, W1), e0, p["dec4"],
                   p["final"]["w"], p["final"]["b"])      # classifier logits at H0 x W0

    # Final x2 bilinear upsample of the (already classified) logits; output is NCHW.
    nc = p["final"]["w"].shape[0]
    mh = jnp.asarray(_interp_matrix(H0, 2 * H0))
    mwt = jnp.asarray(_interp_matrix(W0, 2 * W0).T)
    return final_upsample(z5.reshape(N, nc, H0, W0), mh, mwt)


if __name__ == "__main__":
    num_classes = 8
    params = init_params(num_classes=num_classes, input_channels=3)
    x = jax.random.normal(jax.random.PRNGKey(0), (2, 3, 64, 64), jnp.float32)

    out = jax.block_until_ready(jax.jit(forward)(params, x))
    assert out.shape == (2, num_classes, 64, 64), out.shape
    assert bool(jnp.all(jnp.isfinite(out)))
    print("KERNEL_OK")
</pallas_src>

<mosaic_0001>
module attributes {stable_mosaic.version = 11 : i64} {
  func.func @_entry_kernel(%arg0: i32, %arg1: memref<1x27x1024xf32, #tpu.memory_space<vmem>>, %arg2: memref<16x27xbf16, #tpu.memory_space<vmem>>, %arg3: memref<16x1xf32, #tpu.memory_space<vmem>>, %arg4: memref<1x16x1024xf32, #tpu.memory_space<vmem>>) attributes {dimension_semantics = [#tpu.dimension_semantics<parallel>], iteration_bounds = array<i64: 2>, scalar_prefetch = 0 : i64, scratch_operands = 0 : i64, tpu.core_type = #tpu.core_type<tc>, window_params = [{transform_indices = @transform_0, window_bounds = array<i64: 1, 27, 1024>}, {pipeline_mode = #tpu.pipeline_mode<synchronous>, transform_indices = @transform_1, window_bounds = array<i64: 16, 27>}, {pipeline_mode = #tpu.pipeline_mode<synchronous>, transform_indices = @transform_2, window_bounds = array<i64: 16, 1>}, {transform_indices = @transform_3, window_bounds = array<i64: 1, 16, 1024>}]} {
    %c0 = arith.constant 0 : index
    %c0_0 = arith.constant 0 : index
    %c0_1 = arith.constant 0 : index
    %0 = vector.load %arg1[%c0, %c0_0, %c0_1] : memref<1x27x1024xf32, #tpu.memory_space<vmem>>, vector<1x27x1024xf32>
    %1 = vector.shape_cast %0 : vector<1x27x1024xf32> to vector<27x1024xf32>
    %2 = arith.truncf %1 : vector<27x1024xf32> to vector<27x1024xbf16>
    %c0_2 = arith.constant 0 : index
    %c0_3 = arith.constant 0 : index
    %3 = vector.load %arg2[%c0_2, %c0_3] : memref<16x27xbf16, #tpu.memory_space<vmem>>, vector<16x27xbf16>
    %cst = arith.constant dense<0.000000e+00> : vector<16x1024xf32>
    %4 = tpu.matmul %3, %2, %cst {dimension_numbers = #tpu.dot_dimension_numbers<[1], [0], [0], [1], [0, 0, 1, 1], [], []>} : vector<16x27xbf16>, vector<27x1024xbf16>, vector<16x1024xf32> -> vector<16x1024xf32>
    %c0_4 = arith.constant 0 : index
    %c0_5 = arith.constant 0 : index
    %5 = vector.load %arg3[%c0_4, %c0_5] : memref<16x1xf32, #tpu.memory_space<vmem>>, vector<16x1xf32>
    %6 = vector.broadcast %5 : vector<16x1xf32> to vector<16x1024xf32>
    %7 = arith.addf %4, %6 : vector<16x1024xf32>
    %cst_6 = arith.constant 0.000000e+00 : f32
    %8 = vector.broadcast %cst_6 : f32 to vector<16x1024xf32>
    %9 = arith.maximumf %7, %8 : vector<16x1024xf32>
    %c0_7 = arith.constant 0 : index
    %c0_8 = arith.constant 0 : index
    %c0_9 = arith.constant 0 : index
    %10 = vector.load %arg4[%c0_7, %c0_8, %c0_9] : memref<1x16x1024xf32, #tpu.memory_space<vmem>>, vector<1x16x1024xf32>
    %11 = vector.shape_cast %10 : vector<1x16x1024xf32> to vector<16x1024xf32>
    %12 = vector.shape_cast %9 : vector<16x1024xf32> to vector<1x16x1024xf32>
    tpu.vector_store %arg4[%c0_7, %c0_8, %c0_9], %12 {strides = array<i32>} : memref<1x16x1024xf32, #tpu.memory_space<vmem>>, vector<1x16x1024xf32>,
    return
  }
  func.func @transform_0(%arg0: i32) -> (i32, i32, i32) {
    %c0_i32 = arith.constant 0 : i32
    %c0_i32_0 = arith.constant 0 : i32
    %c0_i32_1 = arith.constant 0 : i32
    return %arg0, %c0_i32, %c0_i32_0 : i32, i32, i32
  }
  func.func @transform_1(%arg0: i32) -> (i32, i32) {
    %c0_i32 = arith.constant 0 : i32
    %c0_i32_0 = arith.constant 0 : i32
    %c0_i32_1 = arith.constant 0 : i32
    return %c0_i32, %c0_i32_0 : i32, i32
  }
  func.func @transform_2(%arg0: i32) -> (i32, i32) {
    %c0_i32 = arith.constant 0 : i32
    %c0_i32_0 = arith.constant 0 : i32
    %c0_i32_1 = arith.constant 0 : i32
    return %c0_i32, %c0_i32_0 : i32, i32
  }
  func.func @transform_3(%arg0: i32) -> (i32, i32, i32) {
    %c0_i32 = arith.constant 0 : i32
    %c0_i32_0 = arith.constant 0 : i32
    %c0_i32_1 = arith.constant 0 : i32
    return %arg0, %c0_i32, %c0_i32_0 : i32, i32, i32
  }
}

module attributes {stable_mosaic.version = 11 : i64} {
  func.func @_enc_kernel(%arg0: i32, %arg1: memref<1x9x16x256xf32, #tpu.memory_space<vmem>>, %arg2: memref<16x9xf32, #tpu.memory_space<vmem>>, %arg3: memref<16x1xf32, #tpu.memory_space<vmem>>, %arg4: memref<32x16xbf16, #tpu.memory_space<vmem>>, %arg5: memref<32x1xf32, #tpu.memory_space<vmem>>, %arg6: memref<1x32x256xf32, #tpu.memory_space<vmem>>) attributes {dimension_semantics = [#tpu.dimension_semantics<parallel>], iteration_bounds = array<i64: 2>, scalar_prefetch = 0 : i64, scratch_operands = 0 : i64, tpu.core_type = #tpu.core_type<tc>, window_params = [{transform_indices = @transform_0, window_bounds = array<i64: 1, 9, 16, 256>}, {pipeline_mode = #tpu.pipeline_mode<synchronous>, transform_indices = @transform_1, window_bounds = array<i64: 16, 9>}, {pipeline_mode = #tpu.pipeline_mode<synchronous>, transform_indices = @transform_2, window_bounds = array<i64: 16, 1>}, {pipeline_mode = #tpu.pipeline_mode<synchronous>, transform_indices = @transform_3, window_bounds = array<i64: 32, 16>}, {pipeline_mode = #tpu.pipeline_mode<synchronous>, transform_indices = @transform_4, window_bounds = array<i64: 32, 1>}, {transform_indices = @transform_5, window_bounds = array<i64: 1, 32, 256>}]} {
    %c0 = arith.constant 0 : index
    %c0_0 = arith.constant 0 : index
    %0 = vector.load %arg2[%c0, %c0_0] : memref<16x9xf32, #tpu.memory_space<vmem>>, vector<16x9xf32>
    %c0_1 = arith.constant 0 : index
    %c0_2 = arith.constant 0 : index
    %c0_3 = arith.constant 0 : index
    %c0_4 = arith.constant 0 : index
    %1 = vector.load %arg1[%c0_1, %c0_2, %c0_3, %c0_4] : memref<1x9x16x256xf32, #tpu.memory_space<vmem>>, vector<1x1x16x256xf32>
    %2 = vector.shape_cast %1 : vector<1x1x16x256xf32> to vector<16x256xf32>
    %3 = vector.extract_strided_slice %0 {offsets = [0, 0], sizes = [16, 1], strides = [1, 1]} : vector<16x9xf32> to vector<16x1xf32>
    %4 = vector.broadcast %3 : vector<16x1xf32> to vector<16x256xf32>
    %5 = arith.mulf %2, %4 : vector<16x256xf32>
    %c0_5 = arith.constant 0 : index
    %c1 = arith.constant 1 : index
    %c0_6 = arith.constant 0 : index
    %c0_7 = arith.constant 0 : index
    %6 = vector.load %arg1[%c0_5, %c1, %c0_6, %c0_7] : memref<1x9x16x256xf32, #tpu.memory_space<vmem>>, vector<1x1x16x256xf32>
    %7 = vector.shape_cast %6 : vector<1x1x16x256xf32> to vector<16x256xf32>
    %8 = vector.extract_strided_slice %0 {offsets = [0, 1], sizes = [16, 1], strides = [1, 1]} : vector<16x9xf32> to vector<16x1xf32>
    %9 = vector.broadcast %8 : vector<16x1xf32> to vector<16x256xf32>
    %10 = arith.mulf %7, %9 : vector<16x256xf32>
    %11 = arith.addf %5, %10 : vector<16x256xf32>
    %c0_8 = arith.constant 0 : index
    %c2 = arith.constant 2 : index
    %c0_9 = arith.constant 0 : index
    %c0_10 = arith.constant 0 : index
    %12 = vector.load %arg1[%c0_8, %c2, %c0_9, %c0_10] : memref<1x9x16x256xf32, #tpu.memory_space<vmem>>, vector<1x1x16x256xf32>
    %13 = vector.shape_cast %12 : vector<1x1x16x256xf32> to vector<16x256xf32>
    %14 = vector.extract_strided_slice %0 {offsets = [0, 2], sizes = [16, 1], strides = [1, 1]} : vector<16x9xf32> to vector<16x1xf32>
    %15 = vector.broadcast %14 : vector<16x1xf32> to vector<16x256xf32>
    %16 = arith.mulf %13, %15 : vector<16x256xf32>
    %17 = arith.addf %11, %16 : vector<16x256xf32>
    %c0_11 = arith.constant 0 : index
    %c3 = arith.constant 3 : index
    %c0_12 = arith.constant 0 : index
    %c0_13 = arith.constant 0 : index
    %18 = vector.load %arg1[%c0_11, %c3, %c0_12, %c0_13] : memref<1x9x16x256xf32, #tpu.memory_space<vmem>>, vector<1x1x16x256xf32>
    %19 = vector.shape_cast %18 : vector<1x1x16x256xf32> to vector<16x256xf32>
    %20 = vector.extract_strided_slice %0 {offsets = [0, 3], sizes = [16, 1], strides = [1, 1]} : vector<16x9xf32> to vector<16x1xf32>
    %21 = vector.broadcast %20 : vector<16x1xf32> to vector<16x256xf32>
    %22 = arith.mulf %19, %21 : vector<16x256xf32>
    %23 = arith.addf %17, %22 : vector<16x256xf32>
    %c0_14 = arith.constant 0 : index
    %c4 = arith.constant 4 : index
    %c0_15 = arith.constant 0 : index
    %c0_16 = arith.constant 0 : index
    %24 = vector.load %arg1[%c0_14, %c4, %c0_15, %c0_16] : memref<1x9x16x256xf32, #tpu.memory_space<vmem>>, vector<1x1x16x256xf32>
    %25 = vector.shape_cast %24 : vector<1x1x16x256xf32> to vector<16x256xf32>
    %26 = vector.extract_strided_slice %0 {offsets = [0, 4], sizes = [16, 1], strides = [1, 1]} : vector<16x9xf32> to vector<16x1xf32>
    %27 = vector.broadcast %26 : vector<16x1xf32> to vector<16x256xf32>
    %28 = arith.mulf %25, %27 : vector<16x256xf32>
    %29 = arith.addf %23, %28 : vector<16x256xf32>
    %c0_17 = arith.constant 0 : index
    %c5 = arith.constant 5 : index
    %c0_18 = arith.constant 0 : index
    %c0_19 = arith.constant 0 : index
    %30 = vector.load %arg1[%c0_17, %c5, %c0_18, %c0_19] : memref<1x9x16x256xf32, #tpu.memory_space<vmem>>, vector<1x1x16x256xf32>
    %31 = vector.shape_cast %30 : vector<1x1x16x256xf32> to vector<16x256xf32>
    %32 = vector.extract_strided_slice %0 {offsets = [0, 5], sizes = [16, 1], strides = [1, 1]} : vector<16x9xf32> to vector<16x1xf32>
    %33 = vector.broadcast %32 : vector<16x1xf32> to vector<16x256xf32>
    %34 = arith.mulf %31, %33 : vector<16x256xf32>
    %35 = arith.addf %29, %34 : vector<16x256xf32>
    %c0_20 = arith.constant 0 : index
    %c6 = arith.constant 6 : index
    %c0_21 = arith.constant 0 : index
    %c0_22 = arith.constant 0 : index
    %36 = vector.load %arg1[%c0_20, %c6, %c0_21, %c0_22] : memref<1x9x16x256xf32, #tpu.memory_space<vmem>>, vector<1x1x16x256xf32>
    %37 = vector.shape_cast %36 : vector<1x1x16x256xf32> to vector<16x256xf32>
    %38 = vector.extract_strided_slice %0 {offsets = [0, 6], sizes = [16, 1], strides = [1, 1]} : vector<16x9xf32> to vector<16x1xf32>
    %39 = vector.broadcast %38 : vector<16x1xf32> to vector<16x256xf32>
    %40 = arith.mulf %37, %39 : vector<16x256xf32>
    %41 = arith.addf %35, %40 : vector<16x256xf32>
    %c0_23 = arith.constant 0 : index
    %c7 = arith.constant 7 : index
    %c0_24 = arith.constant 0 : index
    %c0_25 = arith.constant 0 : index
    %42 = vector.load %arg1[%c0_23, %c7, %c0_24, %c0_25] : memref<1x9x16x256xf32, #tpu.memory_space<vmem>>, vector<1x1x16x256xf32>
    %43 = vector.shape_cast %42 : vector<1x1x16x256xf32> to vector<16x256xf32>
    %44 = vector.extract_strided_slice %0 {offsets = [0, 7], sizes = [16, 1], strides = [1, 1]} : vector<16x9xf32> to vector<16x1xf32>
    %45 = vector.broadcast %44 : vector<16x1xf32> to vector<16x256xf32>
    %46 = arith.mulf %43, %45 : vector<16x256xf32>
    %47 = arith.addf %41, %46 : vector<16x256xf32>
    %c0_26 = arith.constant 0 : index
    %c8 = arith.constant 8 : index
    %c0_27 = arith.constant 0 : index
    %c0_28 = arith.constant 0 : index
    %48 = vector.load %arg1[%c0_26, %c8, %c0_27, %c0_28] : memref<1x9x16x256xf32, #tpu.memory_space<vmem>>, vector<1x1x16x256xf32>
    %49 = vector.shape_cast %48 : vector<1x1x16x256xf32> to vector<16x256xf32>
    %50 = vector.extract_strided_slice %0 {offsets = [0, 8], sizes = [16, 1], strides = [1, 1]} : vector<16x9xf32> to vector<16x1xf32>
    %51 = vector.broadcast %50 : vector<16x1xf32> to vector<16x256xf32>
    %52 = arith.mulf %49, %51 : vector<16x256xf32>
    %53 = arith.addf %47, %52 : vector<16x256xf32>
    %c0_29 = arith.constant 0 : index
    %c0_30 = arith.constant 0 : index
    %54 = vector.load %arg3[%c0_29, %c0_30] : memref<16x1xf32, #tpu.memory_space<vmem>>, vector<16x1xf32>
    %55 = vector.broadcast %54 : vector<16x1xf32> to vector<16x256xf32>
    %56 = arith.addf %53, %55 : vector<16x256xf32>
    %cst = arith.constant 0.000000e+00 : f32
    %57 = vector.broadcast %cst : f32 to vector<16x256xf32>
    %58 = arith.maximumf %56, %57 : vector<16x256xf32>
    %c0_31 = arith.constant 0 : index
    %c0_32 = arith.constant 0 : index
    %59 = vector.load %arg4[%c0_31, %c0_32] : memref<32x16xbf16, #tpu.memory_space<vmem>>, vector<32x16xbf16>
    %60 = arith.truncf %58 : vector<16x256xf32> to vector<16x256xbf16>
    %cst_33 = arith.constant dense<0.000000e+00> : vector<32x256xf32>
    %61 = tpu.matmul %59, %60, %cst_33 {dimension_numbers = #tpu.dot_dimension_numbers<[1], [0], [0], [1], [0, 0, 1, 1], [], []>} : vector<32x16xbf16>, vector<16x256xbf16>, vector<32x256xf32> -> vector<32x256xf32>
    %c0_34 = arith.constant 0 : index
    %c0_35 = arith.constant 0 : index
    %62 = vector.load %arg5[%c0_34, %c0_35] : memref<32x1xf32, #tpu.memory_space<vmem>>, vector<32x1xf32>
    %63 = vector.broadcast %62 : vector<32x1xf32> to vector<32x256xf32>
    %64 = arith.addf %61, %63 : vector<32x256xf32>
    %cst_36 = arith.constant 0.000000e+00 : f32
    %65 = vector.broadcast %cst_36 : f32 to vector<32x256xf32>
    %66 = arith.maximumf %64, %65 : vector<32x256xf32>
    %c0_37 = arith.constant 0 : index
    %c0_38 = arith.constant 0 : index
    %c0_39 = arith.constant 0 : index
    %67 = vector.load %arg6[%c0_37, %c0_38, %c0_39] : memref<1x32x256xf32, #tpu.memory_space<vmem>>, vector<1x32x256xf32>
    %68 = vector.shape_cast %67 : vector<1x32x256xf32> to vector<32x256xf32>
    %69 = vector.shape_cast %66 : vector<32x256xf32> to vector<1x32x256xf32>
    tpu.vector_store %arg6[%c0_37, %c0_38, %c0_39], %69 {strides = array<i32>} : memref<1x32x256xf32, #tpu.memory_space<vmem>>, vector<1x32x256xf32>,
    return
  }
  func.func @transform_0(%arg0: i32) -> (i32, i32, i32, i32) {
    %c0_i32 = arith.constant 0 : i32
    %c0_i32_0 = arith.constant 0 : i32
    %c0_i32_1 = arith.constant 0 : i32
    %c0_i32_2 = arith.constant 0 : i32
    return %arg0, %c0_i32, %c0_i32_0, %c0_i32_1 : i32, i32, i32, i32
  }
  func.func @transform_1(%arg0: i32) -> (i32, i32) {
    %c0_i32 = arith.constant 0 : i32
    %c0_i32_0 = arith.constant 0 : i32
    %c0_i32_1 = arith.constant 0 : i32
    return %c0_i32, %c0_i32_0 : i32, i32
  }
  func.func @transform_2(%arg0: i32) -> (i32, i32) {
    %c0_i32 = arith.constant 0 : i32
    %c0_i32_0 = arith.constant 0 : i32
    %c0_i32_1 = arith.constant 0 : i32
    return %c0_i32, %c0_i32_0 : i32, i32
  }
  func.func @transform_3(%arg0: i32) -> (i32, i32) {
    %c0_i32 = arith.constant 0 : i32
    %c0_i32_0 = arith.constant 0 : i32
    %c0_i32_1 = arith.constant 0 : i32
    return %c0_i32, %c0_i32_0 : i32, i32
  }
  func.func @transform_4(%arg0: i32) -> (i32, i32) {
    %c0_i32 = arith.constant 0 : i32
    %c0_i32_0 = arith.constant 0 : i32
    %c0_i32_1 = arith.constant 0 : i32
    return %c0_i32, %c0_i32_0 : i32, i32
  }
  func.func @transform_5(%arg0: i32) -> (i32, i32, i32) {
    %c0_i32 = arith.constant 0 : i32
    %c0_i32_0 = arith.constant 0 : i32
    %c0_i32_1 = arith.constant 0 : i32
    return %arg0, %c0_i32, %c0_i32_0 : i32, i32, i32
  }
}

module attributes {stable_mosaic.version = 11 : i64} {
  func.func @_enc_kernel(%arg0: i32, %arg1: memref<1x9x32x64xf32, #tpu.memory_space<vmem>>, %arg2: memref<32x9xf32, #tpu.memory_space<vmem>>, %arg3: memref<32x1xf32, #tpu.memory_space<vmem>>, %arg4: memref<64x32xbf16, #tpu.memory_space<vmem>>, %arg5: memref<64x1xf32, #tpu.memory_space<vmem>>, %arg6: memref<1x64x64xf32, #tpu.memory_space<vmem>>) attributes {dimension_semantics = [#tpu.dimension_semantics<parallel>], iteration_bounds = array<i64: 2>, scalar_prefetch = 0 : i64, scratch_operands = 0 : i64, tpu.core_type = #tpu.core_type<tc>, window_params = [{transform_indices = @transform_0, window_bounds = array<i64: 1, 9, 32, 64>}, {pipeline_mode = #tpu.pipeline_mode<synchronous>, transform_indices = @transform_1, window_bounds = array<i64: 32, 9>}, {pipeline_mode = #tpu.pipeline_mode<synchronous>, transform_indices = @transform_2, window_bounds = array<i64: 32, 1>}, {pipeline_mode = #tpu.pipeline_mode<synchronous>, transform_indices = @transform_3, window_bounds = array<i64: 64, 32>}, {pipeline_mode = #tpu.pipeline_mode<synchronous>, transform_indices = @transform_4, window_bounds = array<i64: 64, 1>}, {transform_indices = @transform_5, window_bounds = array<i64: 1, 64, 64>}]} {
    %c0 = arith.constant 0 : index
    %c0_0 = arith.constant 0 : index
    %0 = vector.load %arg2[%c0, %c0_0] : memref<32x9xf32, #tpu.memory_space<vmem>>, vector<32x9xf32>
    %c0_1 = arith.constant 0 : index
    %c0_2 = arith.constant 0 : index
    %c0_3 = arith.constant 0 : index
    %c0_4 = arith.constant 0 : index
    %1 = vector.load %arg1[%c0_1, %c0_2, %c0_3, %c0_4] : memref<1x9x32x64xf32, #tpu.memory_space<vmem>>, vector<1x1x32x64xf32>
    %2 = vector.shape_cast %1 : vector<1x1x32x64xf32> to vector<32x64xf32>
    %3 = vector.extract_strided_slice %0 {offsets = [0, 0], sizes = [32, 1], strides = [1, 1]} : vector<32x9xf32> to vector<32x1xf32>
    %4 = vector.broadcast %3 : vector<32x1xf32> to vector<32x64xf32>
    %5 = arith.mulf %2, %4 : vector<32x64xf32>
    %c0_5 = arith.constant 0 : index
    %c1 = arith.constant 1 : index
    %c0_6 = arith.constant 0 : index
    %c0_7 = arith.constant 0 : index
    %6 = vector.load %arg1[%c0_5, %c1, %c0_6, %c0_7] : memref<1x9x32x64xf32, #tpu.memory_space<vmem>>, vector<1x1x32x64xf32>
    %7 = vector.shape_cast %6 : vector<1x1x32x64xf32> to vector<32x64xf32>
    %8 = vector.extract_strided_slice %0 {offsets = [0, 1], sizes = [32, 1], strides = [1, 1]} : vector<32x9xf32> to vector<32x1xf32>
    %9 = vector.broadcast %8 : vector<32x1xf32> to vector<32x64xf32>
    %10 = arith.mulf %7, %9 : vector<32x64xf32>
    %11 = arith.addf %5, %10 : vector<32x64xf32>
    %c0_8 = arith.constant 0 : index
    %c2 = arith.constant 2 : index
    %c0_9 = arith.constant 0 : index
    %c0_10 = arith.constant 0 : index
    %12 = vector.load %arg1[%c0_8, %c2, %c0_9, %c0_10] : memref<1x9x32x64xf32, #tpu.memory_space<vmem>>, vector<1x1x32x64xf32>
    %13 = vector.shape_cast %12 : vector<1x1x32x64xf32> to vector<32x64xf32>
    %14 = vector.extract_strided_slice %0 {offsets = [0, 2], sizes = [32, 1], strides = [1, 1]} : vector<32x9xf32> to vector<32x1xf32>
    %15 = vector.broadcast %14 : vector<32x1xf32> to vector<32x64xf32>
    %16 = arith.mulf %13, %15 : vector<32x64xf32>
    %17 = arith.addf %11, %16 : vector<32x64xf32>
    %c0_11 = arith.constant 0 : index
    %c3 = arith.constant 3 : index
    %c0_12 = arith.constant 0 : index
    %c0_13 = arith.constant 0 : index
    %18 = vector.load %arg1[%c0_11, %c3, %c0_12, %c0_13] : memref<1x9x32x64xf32, #tpu.memory_space<vmem>>, vector<1x1x32x64xf32>
    %19 = vector.shape_cast %18 : vector<1x1x32x64xf32> to vector<32x64xf32>
    %20 = vector.extract_strided_slice %0 {offsets = [0, 3], sizes = [32, 1], strides = [1, 1]} : vector<32x9xf32> to vector<32x1xf32>
    %21 = vector.broadcast %20 : vector<32x1xf32> to vector<32x64xf32>
    %22 = arith.mulf %19, %21 : vector<32x64xf32>
    %23 = arith.addf %17, %22 : vector<32x64xf32>
    %c0_14 = arith.constant 0 : index
    %c4 = arith.constant 4 : index
    %c0_15 = arith.constant 0 : index
    %c0_16 = arith.constant 0 : index
    %24 = vector.load %arg1[%c0_14, %c4, %c0_15, %c0_16] : memref<1x9x32x64xf32, #tpu.memory_space<vmem>>, vector<1x1x32x64xf32>
    %25 = vector.shape_cast %24 : vector<1x1x32x64xf32> to vector<32x64xf32>
    %26 = vector.extract_strided_slice %0 {offsets = [0, 4], sizes = [32, 1], strides = [1, 1]} : vector<32x9xf32> to vector<32x1xf32>
    %27 = vector.broadcast %26 : vector<32x1xf32> to vector<32x64xf32>
    %28 = arith.mulf %25, %27 : vector<32x64xf32>
    %29 = arith.addf %23, %28 : vector<32x64xf32>
    %c0_17 = arith.constant 0 : index
    %c5 = arith.constant 5 : index
    %c0_18 = arith.constant 0 : index
    %c0_19 = arith.constant 0 : index
    %30 = vector.load %arg1[%c0_17, %c5, %c0_18, %c0_19] : memref<1x9x32x64xf32, #tpu.memory_space<vmem>>, vector<1x1x32x64xf32>
    %31 = vector.shape_cast %30 : vector<1x1x32x64xf32> to vector<32x64xf32>
    %32 = vector.extract_strided_slice %0 {offsets = [0, 5], sizes = [32, 1], strides = [1, 1]} : vector<32x9xf32> to vector<32x1xf32>
    %33 = vector.broadcast %32 : vector<32x1xf32> to vector<32x64xf32>
    %34 = arith.mulf %31, %33 : vector<32x64xf32>
    %35 = arith.addf %29, %34 : vector<32x64xf32>
    %c0_20 = arith.constant 0 : index
    %c6 = arith.constant 6 : index
    %c0_21 = arith.constant 0 : index
    %c0_22 = arith.constant 0 : index
    %36 = vector.load %arg1[%c0_20, %c6, %c0_21, %c0_22] : memref<1x9x32x64xf32, #tpu.memory_space<vmem>>, vector<1x1x32x64xf32>
    %37 = vector.shape_cast %36 : vector<1x1x32x64xf32> to vector<32x64xf32>
    %38 = vector.extract_strided_slice %0 {offsets = [0, 6], sizes = [32, 1], strides = [1, 1]} : vector<32x9xf32> to vector<32x1xf32>
    %39 = vector.broadcast %38 : vector<32x1xf32> to vector<32x64xf32>
    %40 = arith.mulf %37, %39 : vector<32x64xf32>
    %41 = arith.addf %35, %40 : vector<32x64xf32>
    %c0_23 = arith.constant 0 : index
    %c7 = arith.constant 7 : index
    %c0_24 = arith.constant 0 : index
    %c0_25 = arith.constant 0 : index
    %42 = vector.load %arg1[%c0_23, %c7, %c0_24, %c0_25] : memref<1x9x32x64xf32, #tpu.memory_space<vmem>>, vector<1x1x32x64xf32>
    %43 = vector.shape_cast %42 : vector<1x1x32x64xf32> to vector<32x64xf32>
    %44 = vector.extract_strided_slice %0 {offsets = [0, 7], sizes = [32, 1], strides = [1, 1]} : vector<32x9xf32> to vector<32x1xf32>
    %45 = vector.broadcast %44 : vector<32x1xf32> to vector<32x64xf32>
    %46 = arith.mulf %43, %45 : vector<32x64xf32>
    %47 = arith.addf %41, %46 : vector<32x64xf32>
    %c0_26 = arith.constant 0 : index
    %c8 = arith.constant 8 : index
    %c0_27 = arith.constant 0 : index
    %c0_28 = arith.constant 0 : index
    %48 = vector.load %arg1[%c0_26, %c8, %c0_27, %c0_28] : memref<1x9x32x64xf32, #tpu.memory_space<vmem>>, vector<1x1x32x64xf32>
    %49 = vector.shape_cast %48 : vector<1x1x32x64xf32> to vector<32x64xf32>
    %50 = vector.extract_strided_slice %0 {offsets = [0, 8], sizes = [32, 1], strides = [1, 1]} : vector<32x9xf32> to vector<32x1xf32>
    %51 = vector.broadcast %50 : vector<32x1xf32> to vector<32x64xf32>
    %52 = arith.mulf %49, %51 : vector<32x64xf32>
    %53 = arith.addf %47, %52 : vector<32x64xf32>
    %c0_29 = arith.constant 0 : index
    %c0_30 = arith.constant 0 : index
    %54 = vector.load %arg3[%c0_29, %c0_30] : memref<32x1xf32, #tpu.memory_space<vmem>>, vector<32x1xf32>
    %55 = vector.broadcast %54 : vector<32x1xf32> to vector<32x64xf32>
    %56 = arith.addf %53, %55 : vector<32x64xf32>
    %cst = arith.constant 0.000000e+00 : f32
    %57 = vector.broadcast %cst : f32 to vector<32x64xf32>
    %58 = arith.maximumf %56, %57 : vector<32x64xf32>
    %c0_31 = arith.constant 0 : index
    %c0_32 = arith.constant 0 : index
    %59 = vector.load %arg4[%c0_31, %c0_32] : memref<64x32xbf16, #tpu.memory_space<vmem>>, vector<64x32xbf16>
    %60 = arith.truncf %58 : vector<32x64xf32> to vector<32x64xbf16>
    %cst_33 = arith.constant dense<0.000000e+00> : vector<64x64xf32>
    %61 = tpu.matmul %59, %60, %cst_33 {dimension_numbers = #tpu.dot_dimension_numbers<[1], [0], [0], [1], [0, 0, 1, 1], [], []>} : vector<64x32xbf16>, vector<32x64xbf16>, vector<64x64xf32> -> vector<64x64xf32>
    %c0_34 = arith.constant 0 : index
    %c0_35 = arith.constant 0 : index
    %62 = vector.load %arg5[%c0_34, %c0_35] : memref<64x1xf32, #tpu.memory_space<vmem>>, vector<64x1xf32>
    %63 = vector.broadcast %62 : vector<64x1xf32> to vector<64x64xf32>
    %64 = arith.addf %61, %63 : vector<64x64xf32>
    %cst_36 = arith.constant 0.000000e+00 : f32
    %65 = vector.broadcast %cst_36 : f32 to vector<64x64xf32>
    %66 = arith.maximumf %64, %65 : vector<64x64xf32>
    %c0_37 = arith.constant 0 : index
    %c0_38 = arith.constant 0 : index
    %c0_39 = arith.constant 0 : index
    %67 = vector.load %arg6[%c0_37, %c0_38, %c0_39] : memref<1x64x64xf32, #tpu.memory_space<vmem>>, vector<1x64x64xf32>
    %68 = vector.shape_cast %67 : vector<1x64x64xf32> to vector<64x64xf32>
    %69 = vector.shape_cast %66 : vector<64x64xf32> to vector<1x64x64xf32>
    tpu.vector_store %arg6[%c0_37, %c0_38, %c0_39], %69 {strides = array<i32>} : memref<1x64x64xf32, #tpu.memory_space<vmem>>, vector<1x64x64xf32>,
    return
  }
  func.func @transform_0(%arg0: i32) -> (i32, i32, i32, i32) {
    %c0_i32 = arith.constant 0 : i32
    %c0_i32_0 = arith.constant 0 : i32
    %c0_i32_1 = arith.constant 0 : i32
    %c0_i32_2 = arith.constant 0 : i32
    return %arg0, %c0_i32, %c0_i32_0, %c0_i32_1 : i32, i32, i32, i32
  }
  func.func @transform_1(%arg0: i32) -> (i32, i32) {
    %c0_i32 = arith.constant 0 : i32
    %c0_i32_0 = arith.constant 0 : i32
    %c0_i32_1 = arith.constant 0 : i32
    return %c0_i32, %c0_i32_0 : i32, i32
  }
  func.func @transform_2(%arg0: i32) -> (i32, i32) {
    %c0_i32 = arith.constant 0 : i32
    %c0_i32_0 = arith.constant 0 : i32
    %c0_i32_1 = arith.constant 0 : i32
    return %c0_i32, %c0_i32_0 : i32, i32
  }
  func.func @transform_3(%arg0: i32) -> (i32, i32) {
    %c0_i32 = arith.constant 0 : i32
    %c0_i32_0 = arith.constant 0 : i32
    %c0_i32_1 = arith.constant 0 : i32
    return %c0_i32, %c0_i32_0 : i32, i32
  }
  func.func @transform_4(%arg0: i32) -> (i32, i32) {
    %c0_i32 = arith.constant 0 : i32
    %c0_i32_0 = arith.constant 0 : i32
    %c0_i32_1 = arith.constant 0 : i32
    return %c0_i32, %c0_i32_0 : i32, i32
  }
  func.func @transform_5(%arg0: i32) -> (i32, i32, i32) {
    %c0_i32 = arith.constant 0 : i32
    %c0_i32_0 = arith.constant 0 : i32
    %c0_i32_1 = arith.constant 0 : i32
    return %arg0, %c0_i32, %c0_i32_0 : i32, i32, i32
  }
}

module attributes {stable_mosaic.version = 11 : i64} {
  func.func @_enc_kernel(%arg0: i32, %arg1: memref<1x9x64x16xf32, #tpu.memory_space<vmem>>, %arg2: memref<64x9xf32, #tpu.memory_space<vmem>>, %arg3: memref<64x1xf32, #tpu.memory_space<vmem>>, %arg4: memref<128x64xbf16, #tpu.memory_space<vmem>>, %arg5: memref<128x1xf32, #tpu.memory_space<vmem>>, %arg6: memref<1x128x16xf32, #tpu.memory_space<vmem>>) attributes {dimension_semantics = [#tpu.dimension_semantics<parallel>], iteration_bounds = array<i64: 2>, scalar_prefetch = 0 : i64, scratch_operands = 0 : i64, tpu.core_type = #tpu.core_type<tc>, window_params = [{transform_indices = @transform_0, window_bounds = array<i64: 1, 9, 64, 16>}, {pipeline_mode = #tpu.pipeline_mode<synchronous>, transform_indices = @transform_1, window_bounds = array<i64: 64, 9>}, {pipeline_mode = #tpu.pipeline_mode<synchronous>, transform_indices = @transform_2, window_bounds = array<i64: 64, 1>}, {pipeline_mode = #tpu.pipeline_mode<synchronous>, transform_indices = @transform_3, window_bounds = array<i64: 128, 64>}, {pipeline_mode = #tpu.pipeline_mode<synchronous>, transform_indices = @transform_4, window_bounds = array<i64: 128, 1>}, {transform_indices = @transform_5, window_bounds = array<i64: 1, 128, 16>}]} {
    %c0 = arith.constant 0 : index
    %c0_0 = arith.constant 0 : index
    %0 = vector.load %arg2[%c0, %c0_0] : memref<64x9xf32, #tpu.memory_space<vmem>>, vector<64x9xf32>
    %c0_1 = arith.constant 0 : index
    %c0_2 = arith.constant 0 : index
    %c0_3 = arith.constant 0 : index
    %c0_4 = arith.constant 0 : index
    %1 = vector.load %arg1[%c0_1, %c0_2, %c0_3, %c0_4] : memref<1x9x64x16xf32, #tpu.memory_space<vmem>>, vector<1x1x64x16xf32>
    %2 = vector.shape_cast %1 : vector<1x1x64x16xf32> to vector<64x16xf32>
    %3 = vector.extract_strided_slice %0 {offsets = [0, 0], sizes = [64, 1], strides = [1, 1]} : vector<64x9xf32> to vector<64x1xf32>
    %4 = vector.broadcast %3 : vector<64x1xf32> to vector<64x16xf32>
    %5 = arith.mulf %2, %4 : vector<64x16xf32>
    %c0_5 = arith.constant 0 : index
    %c1 = arith.constant 1 : index
    %c0_6 = arith.constant 0 : index
    %c0_7 = arith.constant 0 : index
    %6 = vector.load %arg1[%c0_5, %c1, %c0_6, %c0_7] : memref<1x9x64x16xf32, #tpu.memory_space<vmem>>, vector<1x1x64x16xf32>
    %7 = vector.shape_cast %6 : vector<1x1x64x16xf32> to vector<64x16xf32>
    %8 = vector.extract_strided_slice %0 {offsets = [0, 1], sizes = [64, 1], strides = [1, 1]} : vector<64x9xf32> to vector<64x1xf32>
    %9 = vector.broadcast %8 : vector<64x1xf32> to vector<64x16xf32>
    %10 = arith.mulf %7, %9 : vector<64x16xf32>
    %11 = arith.addf %5, %10 : vector<64x16xf32>
    %c0_8 = arith.constant 0 : index
    %c2 = arith.constant 2 : index
    %c0_9 = arith.constant 0 : index
    %c0_10 = arith.constant 0 : index
    %12 = vector.load %arg1[%c0_8, %c2, %c0_9, %c0_10] : memref<1x9x64x16xf32, #tpu.memory_space<vmem>>, vector<1x1x64x16xf32>
    %13 = vector.shape_cast %12 : vector<1x1x64x16xf32> to vector<64x16xf32>
    %14 = vector.extract_strided_slice %0 {offsets = [0, 2], sizes = [64, 1], strides = [1, 1]} : vector<64x9xf32> to vector<64x1xf32>
    %15 = vector.broadcast %14 : vector<64x1xf32> to vector<64x16xf32>
    %16 = arith.mulf %13, %15 : vector<64x16xf32>
    %17 = arith.addf %11, %16 : vector<64x16xf32>
    %c0_11 = arith.constant 0 : index
    %c3 = arith.constant 3 : index
    %c0_12 = arith.constant 0 : index
    %c0_13 = arith.constant 0 : index
    %18 = vector.load %arg1[%c0_11, %c3, %c0_12, %c0_13] : memref<1x9x64x16xf32, #tpu.memory_space<vmem>>, vector<1x1x64x16xf32>
    %19 = vector.shape_cast %18 : vector<1x1x64x16xf32> to vector<64x16xf32>
    %20 = vector.extract_strided_slice %0 {offsets = [0, 3], sizes = [64, 1], strides = [1, 1]} : vector<64x9xf32> to vector<64x1xf32>
    %21 = vector.broadcast %20 : vector<64x1xf32> to vector<64x16xf32>
    %22 = arith.mulf %19, %21 : vector<64x16xf32>
    %23 = arith.addf %17, %22 : vector<64x16xf32>
    %c0_14 = arith.constant 0 : index
    %c4 = arith.constant 4 : index
    %c0_15 = arith.constant 0 : index
    %c0_16 = arith.constant 0 : index
    %24 = vector.load %arg1[%c0_14, %c4, %c0_15, %c0_16] : memref<1x9x64x16xf32, #tpu.memory_space<vmem>>, vector<1x1x64x16xf32>
    %25 = vector.shape_cast %24 : vector<1x1x64x16xf32> to vector<64x16xf32>
    %26 = vector.extract_strided_slice %0 {offsets = [0, 4], sizes = [64, 1], strides = [1, 1]} : vector<64x9xf32> to vector<64x1xf32>
    %27 = vector.broadcast %26 : vector<64x1xf32> to vector<64x16xf32>
    %28 = arith.mulf %25, %27 : vector<64x16xf32>
    %29 = arith.addf %23, %28 : vector<64x16xf32>
    %c0_17 = arith.constant 0 : index
    %c5 = arith.constant 5 : index
    %c0_18 = arith.constant 0 : index
    %c0_19 = arith.constant 0 : index
    %30 = vector.load %arg1[%c0_17, %c5, %c0_18, %c0_19] : memref<1x9x64x16xf32, #tpu.memory_space<vmem>>, vector<1x1x64x16xf32>
    %31 = vector.shape_cast %30 : vector<1x1x64x16xf32> to vector<64x16xf32>
    %32 = vector.extract_strided_slice %0 {offsets = [0, 5], sizes = [64, 1], strides = [1, 1]} : vector<64x9xf32> to vector<64x1xf32>
    %33 = vector.broadcast %32 : vector<64x1xf32> to vector<64x16xf32>
    %34 = arith.mulf %31, %33 : vector<64x16xf32>
    %35 = arith.addf %29, %34 : vector<64x16xf32>
    %c0_20 = arith.constant 0 : index
    %c6 = arith.constant 6 : index
    %c0_21 = arith.constant 0 : index
    %c0_22 = arith.constant 0 : index
    %36 = vector.load %arg1[%c0_20, %c6, %c0_21, %c0_22] : memref<1x9x64x16xf32, #tpu.memory_space<vmem>>, vector<1x1x64x16xf32>
    %37 = vector.shape_cast %36 : vector<1x1x64x16xf32> to vector<64x16xf32>
    %38 = vector.extract_strided_slice %0 {offsets = [0, 6], sizes = [64, 1], strides = [1, 1]} : vector<64x9xf32> to vector<64x1xf32>
    %39 = vector.broadcast %38 : vector<64x1xf32> to vector<64x16xf32>
    %40 = arith.mulf %37, %39 : vector<64x16xf32>
    %41 = arith.addf %35, %40 : vector<64x16xf32>
    %c0_23 = arith.constant 0 : index
    %c7 = arith.constant 7 : index
    %c0_24 = arith.constant 0 : index
    %c0_25 = arith.constant 0 : index
    %42 = vector.load %arg1[%c0_23, %c7, %c0_24, %c0_25] : memref<1x9x64x16xf32, #tpu.memory_space<vmem>>, vector<1x1x64x16xf32>
    %43 = vector.shape_cast %42 : vector<1x1x64x16xf32> to vector<64x16xf32>
    %44 = vector.extract_strided_slice %0 {offsets = [0, 7], sizes = [64, 1], strides = [1, 1]} : vector<64x9xf32> to vector<64x1xf32>
    %45 = vector.broadcast %44 : vector<64x1xf32> to vector<64x16xf32>
    %46 = arith.mulf %43, %45 : vector<64x16xf32>
    %47 = arith.addf %41, %46 : vector<64x16xf32>
    %c0_26 = arith.constant 0 : index
    %c8 = arith.constant 8 : index
    %c0_27 = arith.constant 0 : index
    %c0_28 = arith.constant 0 : index
    %48 = vector.load %arg1[%c0_26, %c8, %c0_27, %c0_28] : memref<1x9x64x16xf32, #tpu.memory_space<vmem>>, vector<1x1x64x16xf32>
    %49 = vector.shape_cast %48 : vector<1x1x64x16xf32> to vector<64x16xf32>
    %50 = vector.extract_strided_slice %0 {offsets = [0, 8], sizes = [64, 1], strides = [1, 1]} : vector<64x9xf32> to vector<64x1xf32>
    %51 = vector.broadcast %50 : vector<64x1xf32> to vector<64x16xf32>
    %52 = arith.mulf %49, %51 : vector<64x16xf32>
    %53 = arith.addf %47, %52 : vector<64x16xf32>
    %c0_29 = arith.constant 0 : index
    %c0_30 = arith.constant 0 : index
    %54 = vector.load %arg3[%c0_29, %c0_30] : memref<64x1xf32, #tpu.memory_space<vmem>>, vector<64x1xf32>
    %55 = vector.broadcast %54 : vector<64x1xf32> to vector<64x16xf32>
    %56 = arith.addf %53, %55 : vector<64x16xf32>
    %cst = arith.constant 0.000000e+00 : f32
    %57 = vector.broadcast %cst : f32 to vector<64x16xf32>
    %58 = arith.maximumf %56, %57 : vector<64x16xf32>
    %c0_31 = arith.constant 0 : index
    %c0_32 = arith.constant 0 : index
    %59 = vector.load %arg4[%c0_31, %c0_32] : memref<128x64xbf16, #tpu.memory_space<vmem>>, vector<128x64xbf16>
    %60 = arith.truncf %58 : vector<64x16xf32> to vector<64x16xbf16>
    %cst_33 = arith.constant dense<0.000000e+00> : vector<128x16xf32>
    %61 = tpu.matmul %59, %60, %cst_33 {dimension_numbers = #tpu.dot_dimension_numbers<[1], [0], [0], [1], [0, 0, 1, 1], [], []>} : vector<128x64xbf16>, vector<64x16xbf16>, vector<128x16xf32> -> vector<128x16xf32>
    %c0_34 = arith.constant 0 : index
    %c0_35 = arith.constant 0 : index
    %62 = vector.load %arg5[%c0_34, %c0_35] : memref<128x1xf32, #tpu.memory_space<vmem>>, vector<128x1xf32>
    %63 = vector.broadcast %62 : vector<128x1xf32> to vector<128x16xf32>
    %64 = arith.addf %61, %63 : vector<128x16xf32>
    %cst_36 = arith.constant 0.000000e+00 : f32
    %65 = vector.broadcast %cst_36 : f32 to vector<128x16xf32>
    %66 = arith.maximumf %64, %65 : vector<128x16xf32>
    %c0_37 = arith.constant 0 : index
    %c0_38 = arith.constant 0 : index
    %c0_39 = arith.constant 0 : index
    %67 = vector.load %arg6[%c0_37, %c0_38, %c0_39] : memref<1x128x16xf32, #tpu.memory_space<vmem>>, vector<1x128x16xf32>
    %68 = vector.shape_cast %67 : vector<1x128x16xf32> to vector<128x16xf32>
    %69 = vector.shape_cast %66 : vector<128x16xf32> to vector<1x128x16xf32>
    tpu.vector_store %arg6[%c0_37, %c0_38, %c0_39], %69 {strides = array<i32>} : memref<1x128x16xf32, #tpu.memory_space<vmem>>, vector<1x128x16xf32>,
    return
  }
  func.func @transform_0(%arg0: i32) -> (i32, i32, i32, i32) {
    %c0_i32 = arith.constant 0 : i32
    %c0_i32_0 = arith.constant 0 : i32
    %c0_i32_1 = arith.constant 0 : i32
    %c0_i32_2 = arith.constant 0 : i32
    return %arg0, %c0_i32, %c0_i32_0, %c0_i32_1 : i32, i32, i32, i32
  }
  func.func @transform_1(%arg0: i32) -> (i32, i32) {
    %c0_i32 = arith.constant 0 : i32
    %c0_i32_0 = arith.constant 0 : i32
    %c0_i32_1 = arith.constant 0 : i32
    return %c0_i32, %c0_i32_0 : i32, i32
  }
  func.func @transform_2(%arg0: i32) -> (i32, i32) {
    %c0_i32 = arith.constant 0 : i32
    %c0_i32_0 = arith.constant 0 : i32
    %c0_i32_1 = arith.constant 0 : i32
    return %c0_i32, %c0_i32_0 : i32, i32
  }
  func.func @transform_3(%arg0: i32) -> (i32, i32) {
    %c0_i32 = arith.constant 0 : i32
    %c0_i32_0 = arith.constant 0 : i32
    %c0_i32_1 = arith.constant 0 : i32
    return %c0_i32, %c0_i32_0 : i32, i32
  }
  func.func @transform_4(%arg0: i32) -> (i32, i32) {
    %c0_i32 = arith.constant 0 : i32
    %c0_i32_0 = arith.constant 0 : i32
    %c0_i32_1 = arith.constant 0 : i32
    return %c0_i32, %c0_i32_0 : i32, i32
  }
  func.func @transform_5(%arg0: i32) -> (i32, i32, i32) {
    %c0_i32 = arith.constant 0 : i32
    %c0_i32_0 = arith.constant 0 : i32
    %c0_i32_1 = arith.constant 0 : i32
    return %arg0, %c0_i32, %c0_i32_0 : i32, i32, i32
  }
}

module attributes {stable_mosaic.version = 11 : i64} {
  func.func @_enc_epi_kernel(%arg0: i32, %arg1: memref<1x9x128x4xf32, #tpu.memory_space<vmem>>, %arg2: memref<128x9xf32, #tpu.memory_space<vmem>>, %arg3: memref<128x1xf32, #tpu.memory_space<vmem>>, %arg4: memref<128x128xbf16, #tpu.memory_space<vmem>>, %arg5: memref<128x1xf32, #tpu.memory_space<vmem>>, %arg6: memref<64x128xbf16, #tpu.memory_space<vmem>>, %arg7: memref<1x64x4xf32, #tpu.memory_space<vmem>>) attributes {dimension_semantics = [#tpu.dimension_semantics<parallel>], iteration_bounds = array<i64: 2>, scalar_prefetch = 0 : i64, scratch_operands = 0 : i64, tpu.core_type = #tpu.core_type<tc>, window_params = [{transform_indices = @transform_0, window_bounds = array<i64: 1, 9, 128, 4>}, {pipeline_mode = #tpu.pipeline_mode<synchronous>, transform_indices = @transform_1, window_bounds = array<i64: 128, 9>}, {pipeline_mode = #tpu.pipeline_mode<synchronous>, transform_indices = @transform_2, window_bounds = array<i64: 128, 1>}, {pipeline_mode = #tpu.pipeline_mode<synchronous>, transform_indices = @transform_3, window_bounds = array<i64: 128, 128>}, {pipeline_mode = #tpu.pipeline_mode<synchronous>, transform_indices = @transform_4, window_bounds = array<i64: 128, 1>}, {pipeline_mode = #tpu.pipeline_mode<synchronous>, transform_indices = @transform_5, window_bounds = array<i64: 64, 128>}, {transform_indices = @transform_6, window_bounds = array<i64: 1, 64, 4>}]} {
    %c0 = arith.constant 0 : index
    %c0_0 = arith.constant 0 : index
    %0 = vector.load %arg2[%c0, %c0_0] : memref<128x9xf32, #tpu.memory_space<vmem>>, vector<128x9xf32>
    %c0_1 = arith.constant 0 : index
    %c0_2 = arith.constant 0 : index
    %c0_3 = arith.constant 0 : index
    %c0_4 = arith.constant 0 : index
    %1 = vector.load %arg1[%c0_1, %c0_2, %c0_3, %c0_4] : memref<1x9x128x4xf32, #tpu.memory_space<vmem>>, vector<1x1x128x4xf32>
    %2 = vector.shape_cast %1 : vector<1x1x128x4xf32> to vector<128x4xf32>
    %3 = vector.extract_strided_slice %0 {offsets = [0, 0], sizes = [128, 1], strides = [1, 1]} : vector<128x9xf32> to vector<128x1xf32>
    %4 = vector.broadcast %3 : vector<128x1xf32> to vector<128x4xf32>
    %5 = arith.mulf %2, %4 : vector<128x4xf32>
    %c0_5 = arith.constant 0 : index
    %c1 = arith.constant 1 : index
    %c0_6 = arith.constant 0 : index
    %c0_7 = arith.constant 0 : index
    %6 = vector.load %arg1[%c0_5, %c1, %c0_6, %c0_7] : memref<1x9x128x4xf32, #tpu.memory_space<vmem>>, vector<1x1x128x4xf32>
    %7 = vector.shape_cast %6 : vector<1x1x128x4xf32> to vector<128x4xf32>
    %8 = vector.extract_strided_slice %0 {offsets = [0, 1], sizes = [128, 1], strides = [1, 1]} : vector<128x9xf32> to vector<128x1xf32>
    %9 = vector.broadcast %8 : vector<128x1xf32> to vector<128x4xf32>
    %10 = arith.mulf %7, %9 : vector<128x4xf32>
    %11 = arith.addf %5, %10 : vector<128x4xf32>
    %c0_8 = arith.constant 0 : index
    %c2 = arith.constant 2 : index
    %c0_9 = arith.constant 0 : index
    %c0_10 = arith.constant 0 : index
    %12 = vector.load %arg1[%c0_8, %c2, %c0_9, %c0_10] : memref<1x9x128x4xf32, #tpu.memory_space<vmem>>, vector<1x1x128x4xf32>
    %13 = vector.shape_cast %12 : vector<1x1x128x4xf32> to vector<128x4xf32>
    %14 = vector.extract_strided_slice %0 {offsets = [0, 2], sizes = [128, 1], strides = [1, 1]} : vector<128x9xf32> to vector<128x1xf32>
    %15 = vector.broadcast %14 : vector<128x1xf32> to vector<128x4xf32>
    %16 = arith.mulf %13, %15 : vector<128x4xf32>
    %17 = arith.addf %11, %16 : vector<128x4xf32>
    %c0_11 = arith.constant 0 : index
    %c3 = arith.constant 3 : index
    %c0_12 = arith.constant 0 : index
    %c0_13 = arith.constant 0 : index
    %18 = vector.load %arg1[%c0_11, %c3, %c0_12, %c0_13] : memref<1x9x128x4xf32, #tpu.memory_space<vmem>>, vector<1x1x128x4xf32>
    %19 = vector.shape_cast %18 : vector<1x1x128x4xf32> to vector<128x4xf32>
    %20 = vector.extract_strided_slice %0 {offsets = [0, 3], sizes = [128, 1], strides = [1, 1]} : vector<128x9xf32> to vector<128x1xf32>
    %21 = vector.broadcast %20 : vector<128x1xf32> to vector<128x4xf32>
    %22 = arith.mulf %19, %21 : vector<128x4xf32>
    %23 = arith.addf %17, %22 : vector<128x4xf32>
    %c0_14 = arith.constant 0 : index
    %c4 = arith.constant 4 : index
    %c0_15 = arith.constant 0 : index
    %c0_16 = arith.constant 0 : index
    %24 = vector.load %arg1[%c0_14, %c4, %c0_15, %c0_16] : memref<1x9x128x4xf32, #tpu.memory_space<vmem>>, vector<1x1x128x4xf32>
    %25 = vector.shape_cast %24 : vector<1x1x128x4xf32> to vector<128x4xf32>
    %26 = vector.extract_strided_slice %0 {offsets = [0, 4], sizes = [128, 1], strides = [1, 1]} : vector<128x9xf32> to vector<128x1xf32>
    %27 = vector.broadcast %26 : vector<128x1xf32> to vector<128x4xf32>
    %28 = arith.mulf %25, %27 : vector<128x4xf32>
    %29 = arith.addf %23, %28 : vector<128x4xf32>
    %c0_17 = arith.constant 0 : index
    %c5 = arith.constant 5 : index
    %c0_18 = arith.constant 0 : index
    %c0_19 = arith.constant 0 : index
    %30 = vector.load %arg1[%c0_17, %c5, %c0_18, %c0_19] : memref<1x9x128x4xf32, #tpu.memory_space<vmem>>, vector<1x1x128x4xf32>
    %31 = vector.shape_cast %30 : vector<1x1x128x4xf32> to vector<128x4xf32>
    %32 = vector.extract_strided_slice %0 {offsets = [0, 5], sizes = [128, 1], strides = [1, 1]} : vector<128x9xf32> to vector<128x1xf32>
    %33 = vector.broadcast %32 : vector<128x1xf32> to vector<128x4xf32>
    %34 = arith.mulf %31, %33 : vector<128x4xf32>
    %35 = arith.addf %29, %34 : vector<128x4xf32>
    %c0_20 = arith.constant 0 : index
    %c6 = arith.constant 6 : index
    %c0_21 = arith.constant 0 : index
    %c0_22 = arith.constant 0 : index
    %36 = vector.load %arg1[%c0_20, %c6, %c0_21, %c0_22] : memref<1x9x128x4xf32, #tpu.memory_space<vmem>>, vector<1x1x128x4xf32>
    %37 = vector.shape_cast %36 : vector<1x1x128x4xf32> to vector<128x4xf32>
    %38 = vector.extract_strided_slice %0 {offsets = [0, 6], sizes = [128, 1], strides = [1, 1]} : vector<128x9xf32> to vector<128x1xf32>
    %39 = vector.broadcast %38 : vector<128x1xf32> to vector<128x4xf32>
    %40 = arith.mulf %37, %39 : vector<128x4xf32>
    %41 = arith.addf %35, %40 : vector<128x4xf32>
    %c0_23 = arith.constant 0 : index
    %c7 = arith.constant 7 : index
    %c0_24 = arith.constant 0 : index
    %c0_25 = arith.constant 0 : index
    %42 = vector.load %arg1[%c0_23, %c7, %c0_24, %c0_25] : memref<1x9x128x4xf32, #tpu.memory_space<vmem>>, vector<1x1x128x4xf32>
    %43 = vector.shape_cast %42 : vector<1x1x128x4xf32> to vector<128x4xf32>
    %44 = vector.extract_strided_slice %0 {offsets = [0, 7], sizes = [128, 1], strides = [1, 1]} : vector<128x9xf32> to vector<128x1xf32>
    %45 = vector.broadcast %44 : vector<128x1xf32> to vector<128x4xf32>
    %46 = arith.mulf %43, %45 : vector<128x4xf32>
    %47 = arith.addf %41, %46 : vector<128x4xf32>
    %c0_26 = arith.constant 0 : index
    %c8 = arith.constant 8 : index
    %c0_27 = arith.constant 0 : index
    %c0_28 = arith.constant 0 : index
    %48 = vector.load %arg1[%c0_26, %c8, %c0_27, %c0_28] : memref<1x9x128x4xf32, #tpu.memory_space<vmem>>, vector<1x1x128x4xf32>
    %49 = vector.shape_cast %48 : vector<1x1x128x4xf32> to vector<128x4xf32>
    %50 = vector.extract_strided_slice %0 {offsets = [0, 8], sizes = [128, 1], strides = [1, 1]} : vector<128x9xf32> to vector<128x1xf32>
    %51 = vector.broadcast %50 : vector<128x1xf32> to vector<128x4xf32>
    %52 = arith.mulf %49, %51 : vector<128x4xf32>
    %53 = arith.addf %47, %52 : vector<128x4xf32>
    %c0_29 = arith.constant 0 : index
    %c0_30 = arith.constant 0 : index
    %54 = vector.load %arg3[%c0_29, %c0_30] : memref<128x1xf32, #tpu.memory_space<vmem>>, vector<128x1xf32>
    %55 = vector.broadcast %54 : vector<128x1xf32> to vector<128x4xf32>
    %56 = arith.addf %53, %55 : vector<128x4xf32>
    %cst = arith.constant 0.000000e+00 : f32
    %57 = vector.broadcast %cst : f32 to vector<128x4xf32>
    %58 = arith.maximumf %56, %57 : vector<128x4xf32>
    %c0_31 = arith.constant 0 : index
    %c0_32 = arith.constant 0 : index
    %59 = vector.load %arg4[%c0_31, %c0_32] : memref<128x128xbf16, #tpu.memory_space<vmem>>, vector<128x128xbf16>
    %60 = arith.truncf %58 : vector<128x4xf32> to vector<128x4xbf16>
    %cst_33 = arith.constant dense<0.000000e+00> : vector<128x4xf32>
    %61 = tpu.matmul %59, %60, %cst_33 {dimension_numbers = #tpu.dot_dimension_numbers<[1], [0], [0], [1], [0, 0, 1, 1], [], []>} : vector<128x128xbf16>, vector<128x4xbf16>, vector<128x4xf32> -> vector<128x4xf32>
    %c0_34 = arith.constant 0 : index
    %c0_35 = arith.constant 0 : index
    %62 = vector.load %arg5[%c0_34, %c0_35] : memref<128x1xf32, #tpu.memory_space<vmem>>, vector<128x1xf32>
    %63 = vector.broadcast %62 : vector<128x1xf32> to vector<128x4xf32>
    %64 = arith.addf %61, %63 : vector<128x4xf32>
    %cst_36 = arith.constant 0.000000e+00 : f32
    %65 = vector.broadcast %cst_36 : f32 to vector<128x4xf32>
    %66 = arith.maximumf %64, %65 : vector<128x4xf32>
    %c0_37 = arith.constant 0 : index
    %c0_38 = arith.constant 0 : index
    %67 = vector.load %arg6[%c0_37, %c0_38] : memref<64x128xbf16, #tpu.memory_space<vmem>>, vector<64x128xbf16>
    %68 = arith.truncf %66 : vector<128x4xf32> to vector<128x4xbf16>
    %cst_39 = arith.constant dense<0.000000e+00> : vector<64x4xf32>
    %69 = tpu.matmul %67, %68, %cst_39 {dimension_numbers = #tpu.dot_dimension_numbers<[1], [0], [0], [1], [0, 0, 1, 1], [], []>} : vector<64x128xbf16>, vector<128x4xbf16>, vector<64x4xf32> -> vector<64x4xf32>
    %c0_40 = arith.constant 0 : index
    %c0_41 = arith.constant 0 : index
    %c0_42 = arith.constant 0 : index
    %70 = vector.load %arg7[%c0_40, %c0_41, %c0_42] : memref<1x64x4xf32, #tpu.memory_space<vmem>>, vector<1x64x4xf32>
    %71 = vector.shape_cast %70 : vector<1x64x4xf32> to vector<64x4xf32>
    %72 = vector.shape_cast %69 : vector<64x4xf32> to vector<1x64x4xf32>
    tpu.vector_store %arg7[%c0_40, %c0_41, %c0_42], %72 {strides = array<i32>} : memref<1x64x4xf32, #tpu.memory_space<vmem>>, vector<1x64x4xf32>,
    return
  }
  func.func @transform_0(%arg0: i32) -> (i32, i32, i32, i32) {
    %c0_i32 = arith.constant 0 : i32
    %c0_i32_0 = arith.constant 0 : i32
    %c0_i32_1 = arith.constant 0 : i32
    %c0_i32_2 = arith.constant 0 : i32
    return %arg0, %c0_i32, %c0_i32_0, %c0_i32_1 : i32, i32, i32, i32
  }
  func.func @transform_1(%arg0: i32) -> (i32, i32) {
    %c0_i32 = arith.constant 0 : i32
    %c0_i32_0 = arith.constant 0 : i32
    %c0_i32_1 = arith.constant 0 : i32
    return %c0_i32, %c0_i32_0 : i32, i32
  }
  func.func @transform_2(%arg0: i32) -> (i32, i32) {
    %c0_i32 = arith.constant 0 : i32
    %c0_i32_0 = arith.constant 0 : i32
    %c0_i32_1 = arith.constant 0 : i32
    return %c0_i32, %c0_i32_0 : i32, i32
  }
  func.func @transform_3(%arg0: i32) -> (i32, i32) {
    %c0_i32 = arith.constant 0 : i32
    %c0_i32_0 = arith.constant 0 : i32
    %c0_i32_1 = arith.constant 0 : i32
    return %c0_i32, %c0_i32_0 : i32, i32
  }
  func.func @transform_4(%arg0: i32) -> (i32, i32) {
    %c0_i32 = arith.constant 0 : i32
    %c0_i32_0 = arith.constant 0 : i32
    %c0_i32_1 = arith.constant 0 : i32
    return %c0_i32, %c0_i32_0 : i32, i32
  }
  func.func @transform_5(%arg0: i32) -> (i32, i32) {
    %c0_i32 = arith.constant 0 : i32
    %c0_i32_0 = arith.constant 0 : i32
    %c0_i32_1 = arith.constant 0 : i32
    return %c0_i32, %c0_i32_0 : i32, i32
  }
  func.func @transform_6(%arg0: i32) -> (i32, i32, i32) {
    %c0_i32 = arith.constant 0 : i32
    %c0_i32_0 = arith.constant 0 : i32
    %c0_i32_1 = arith.constant 0 : i32
    return %arg0, %c0_i32, %c0_i32_0 : i32, i32, i32
  }
}

module attributes {stable_mosaic.version = 11 : i64} {
  func.func @_dec_kernel(%arg0: i32, %arg1: memref<1x64x16xf32, #tpu.memory_space<vmem>>, %arg2: memref<1x128x16xf32, #tpu.memory_space<vmem>>, %arg3: memref<64x128xbf16, #tpu.memory_space<vmem>>, %arg4: memref<64x1xf32, #tpu.memory_space<vmem>>, %arg5: memref<32x64xbf16, #tpu.memory_space<vmem>>, %arg6: memref<1x32x16xf32, #tpu.memory_space<vmem>>) attributes {dimension_semantics = [#tpu.dimension_semantics<parallel>], iteration_bounds = array<i64: 2>, scalar_prefetch = 0 : i64, scratch_operands = 0 : i64, tpu.core_type = #tpu.core_type<tc>, window_params = [{transform_indices = @transform_0, window_bounds = array<i64: 1, 64, 16>}, {transform_indices = @transform_1, window_bounds = array<i64: 1, 128, 16>}, {pipeline_mode = #tpu.pipeline_mode<synchronous>, transform_indices = @transform_2, window_bounds = array<i64: 64, 128>}, {pipeline_mode = #tpu.pipeline_mode<synchronous>, transform_indices = @transform_3, window_bounds = array<i64: 64, 1>}, {pipeline_mode = #tpu.pipeline_mode<synchronous>, transform_indices = @transform_4, window_bounds = array<i64: 32, 64>}, {transform_indices = @transform_5, window_bounds = array<i64: 1, 32, 16>}]} {
    %c0 = arith.constant 0 : index
    %c0_0 = arith.constant 0 : index
    %0 = vector.load %arg3[%c0, %c0_0] : memref<64x128xbf16, #tpu.memory_space<vmem>>, vector<64x128xbf16>
    %c0_1 = arith.constant 0 : index
    %c0_2 = arith.constant 0 : index
    %c0_3 = arith.constant 0 : index
    %1 = vector.load %arg2[%c0_1, %c0_2, %c0_3] : memref<1x128x16xf32, #tpu.memory_space<vmem>>, vector<1x128x16xf32>
    %2 = vector.shape_cast %1 : vector<1x128x16xf32> to vector<128x16xf32>
    %3 = arith.truncf %2 : vector<128x16xf32> to vector<128x16xbf16>
    %cst = arith.constant dense<0.000000e+00> : vector<64x16xf32>
    %4 = tpu.matmul %0, %3, %cst {dimension_numbers = #tpu.dot_dimension_numbers<[1], [0], [0], [1], [0, 0, 1, 1], [], []>} : vector<64x128xbf16>, vector<128x16xbf16>, vector<64x16xf32> -> vector<64x16xf32>
    %c0_4 = arith.constant 0 : index
    %c0_5 = arith.constant 0 : index
    %c0_6 = arith.constant 0 : index
    %5 = vector.load %arg1[%c0_4, %c0_5, %c0_6] : memref<1x64x16xf32, #tpu.memory_space<vmem>>, vector<1x64x16xf32>
    %6 = vector.shape_cast %5 : vector<1x64x16xf32> to vector<64x16xf32>
    %7 = arith.addf %6, %4 : vector<64x16xf32>
    %c0_7 = arith.constant 0 : index
    %c0_8 = arith.constant 0 : index
    %8 = vector.load %arg4[%c0_7, %c0_8] : memref<64x1xf32, #tpu.memory_space<vmem>>, vector<64x1xf32>
    %9 = vector.broadcast %8 : vector<64x1xf32> to vector<64x16xf32>
    %10 = arith.addf %7, %9 : vector<64x16xf32>
    %cst_9 = arith.constant 0.000000e+00 : f32
    %11 = vector.broadcast %cst_9 : f32 to vector<64x16xf32>
    %12 = arith.maximumf %10, %11 : vector<64x16xf32>
    %c0_10 = arith.constant 0 : index
    %c0_11 = arith.constant 0 : index
    %13 = vector.load %arg5[%c0_10, %c0_11] : memref<32x64xbf16, #tpu.memory_space<vmem>>, vector<32x64xbf16>
    %14 = arith.truncf %12 : vector<64x16xf32> to vector<64x16xbf16>
    %cst_12 = arith.constant dense<0.000000e+00> : vector<32x16xf32>
    %15 = tpu.matmul %13, %14, %cst_12 {dimension_numbers = #tpu.dot_dimension_numbers<[1], [0], [0], [1], [0, 0, 1, 1], [], []>} : vector<32x64xbf16>, vector<64x16xbf16>, vector<32x16xf32> -> vector<32x16xf32>
    %c0_13 = arith.constant 0 : index
    %c0_14 = arith.constant 0 : index
    %c0_15 = arith.constant 0 : index
    %16 = vector.load %arg6[%c0_13, %c0_14, %c0_15] : memref<1x32x16xf32, #tpu.memory_space<vmem>>, vector<1x32x16xf32>
    %17 = vector.shape_cast %16 : vector<1x32x16xf32> to vector<32x16xf32>
    %18 = vector.shape_cast %15 : vector<32x16xf32> to vector<1x32x16xf32>
    tpu.vector_store %arg6[%c0_13, %c0_14, %c0_15], %18 {strides = array<i32>} : memref<1x32x16xf32, #tpu.memory_space<vmem>>, vector<1x32x16xf32>,
    return
  }
  func.func @transform_0(%arg0: i32) -> (i32, i32, i32) {
    %c0_i32 = arith.constant 0 : i32
    %c0_i32_0 = arith.constant 0 : i32
    %c0_i32_1 = arith.constant 0 : i32
    return %arg0, %c0_i32, %c0_i32_0 : i32, i32, i32
  }
  func.func @transform_1(%arg0: i32) -> (i32, i32, i32) {
    %c0_i32 = arith.constant 0 : i32
    %c0_i32_0 = arith.constant 0 : i32
    %c0_i32_1 = arith.constant 0 : i32
    return %arg0, %c0_i32, %c0_i32_0 : i32, i32, i32
  }
  func.func @transform_2(%arg0: i32) -> (i32, i32) {
    %c0_i32 = arith.constant 0 : i32
    %c0_i32_0 = arith.constant 0 : i32
    %c0_i32_1 = arith.constant 0 : i32
    return %c0_i32, %c0_i32_0 : i32, i32
  }
  func.func @transform_3(%arg0: i32) -> (i32, i32) {
    %c0_i32 = arith.constant 0 : i32
    %c0_i32_0 = arith.constant 0 : i32
    %c0_i32_1 = arith.constant 0 : i32
    return %c0_i32, %c0_i32_0 : i32, i32
  }
  func.func @transform_4(%arg0: i32) -> (i32, i32) {
    %c0_i32 = arith.constant 0 : i32
    %c0_i32_0 = arith.constant 0 : i32
    %c0_i32_1 = arith.constant 0 : i32
    return %c0_i32, %c0_i32_0 : i32, i32
  }
  func.func @transform_5(%arg0: i32) -> (i32, i32, i32) {
    %c0_i32 = arith.constant 0 : i32
    %c0_i32_0 = arith.constant 0 : i32
    %c0_i32_1 = arith.constant 0 : i32
    return %arg0, %c0_i32, %c0_i32_0 : i32, i32, i32
  }
}

module attributes {stable_mosaic.version = 11 : i64} {
  func.func @_dec_kernel(%arg0: i32, %arg1: memref<1x32x64xf32, #tpu.memory_space<vmem>>, %arg2: memref<1x64x64xf32, #tpu.memory_space<vmem>>, %arg3: memref<32x64xbf16, #tpu.memory_space<vmem>>, %arg4: memref<32x1xf32, #tpu.memory_space<vmem>>, %arg5: memref<16x32xbf16, #tpu.memory_space<vmem>>, %arg6: memref<1x16x64xf32, #tpu.memory_space<vmem>>) attributes {dimension_semantics = [#tpu.dimension_semantics<parallel>], iteration_bounds = array<i64: 2>, scalar_prefetch = 0 : i64, scratch_operands = 0 : i64, tpu.core_type = #tpu.core_type<tc>, window_params = [{transform_indices = @transform_0, window_bounds = array<i64: 1, 32, 64>}, {transform_indices = @transform_1, window_bounds = array<i64: 1, 64, 64>}, {pipeline_mode = #tpu.pipeline_mode<synchronous>, transform_indices = @transform_2, window_bounds = array<i64: 32, 64>}, {pipeline_mode = #tpu.pipeline_mode<synchronous>, transform_indices = @transform_3, window_bounds = array<i64: 32, 1>}, {pipeline_mode = #tpu.pipeline_mode<synchronous>, transform_indices = @transform_4, window_bounds = array<i64: 16, 32>}, {transform_indices = @transform_5, window_bounds = array<i64: 1, 16, 64>}]} {
    %c0 = arith.constant 0 : index
    %c0_0 = arith.constant 0 : index
    %0 = vector.load %arg3[%c0, %c0_0] : memref<32x64xbf16, #tpu.memory_space<vmem>>, vector<32x64xbf16>
    %c0_1 = arith.constant 0 : index
    %c0_2 = arith.constant 0 : index
    %c0_3 = arith.constant 0 : index
    %1 = vector.load %arg2[%c0_1, %c0_2, %c0_3] : memref<1x64x64xf32, #tpu.memory_space<vmem>>, vector<1x64x64xf32>
    %2 = vector.shape_cast %1 : vector<1x64x64xf32> to vector<64x64xf32>
    %3 = arith.truncf %2 : vector<64x64xf32> to vector<64x64xbf16>
    %cst = arith.constant dense<0.000000e+00> : vector<32x64xf32>
    %4 = tpu.matmul %0, %3, %cst {dimension_numbers = #tpu.dot_dimension_numbers<[1], [0], [0], [1], [0, 0, 1, 1], [], []>} : vector<32x64xbf16>, vector<64x64xbf16>, vector<32x64xf32> -> vector<32x64xf32>
    %c0_4 = arith.constant 0 : index
    %c0_5 = arith.constant 0 : index
    %c0_6 = arith.constant 0 : index
    %5 = vector.load %arg1[%c0_4, %c0_5, %c0_6] : memref<1x32x64xf32, #tpu.memory_space<vmem>>, vector<1x32x64xf32>
    %6 = vector.shape_cast %5 : vector<1x32x64xf32> to vector<32x64xf32>
    %7 = arith.addf %6, %4 : vector<32x64xf32>
    %c0_7 = arith.constant 0 : index
    %c0_8 = arith.constant 0 : index
    %8 = vector.load %arg4[%c0_7, %c0_8] : memref<32x1xf32, #tpu.memory_space<vmem>>, vector<32x1xf32>
    %9 = vector.broadcast %8 : vector<32x1xf32> to vector<32x64xf32>
    %10 = arith.addf %7, %9 : vector<32x64xf32>
    %cst_9 = arith.constant 0.000000e+00 : f32
    %11 = vector.broadcast %cst_9 : f32 to vector<32x64xf32>
    %12 = arith.maximumf %10, %11 : vector<32x64xf32>
    %c0_10 = arith.constant 0 : index
    %c0_11 = arith.constant 0 : index
    %13 = vector.load %arg5[%c0_10, %c0_11] : memref<16x32xbf16, #tpu.memory_space<vmem>>, vector<16x32xbf16>
    %14 = arith.truncf %12 : vector<32x64xf32> to vector<32x64xbf16>
    %cst_12 = arith.constant dense<0.000000e+00> : vector<16x64xf32>
    %15 = tpu.matmul %13, %14, %cst_12 {dimension_numbers = #tpu.dot_dimension_numbers<[1], [0], [0], [1], [0, 0, 1, 1], [], []>} : vector<16x32xbf16>, vector<32x64xbf16>, vector<16x64xf32> -> vector<16x64xf32>
    %c0_13 = arith.constant 0 : index
    %c0_14 = arith.constant 0 : index
    %c0_15 = arith.constant 0 : index
    %16 = vector.load %arg6[%c0_13, %c0_14, %c0_15] : memref<1x16x64xf32, #tpu.memory_space<vmem>>, vector<1x16x64xf32>
    %17 = vector.shape_cast %16 : vector<1x16x64xf32> to vector<16x64xf32>
    %18 = vector.shape_cast %15 : vector<16x64xf32> to vector<1x16x64xf32>
    tpu.vector_store %arg6[%c0_13, %c0_14, %c0_15], %18 {strides = array<i32>} : memref<1x16x64xf32, #tpu.memory_space<vmem>>, vector<1x16x64xf32>,
    return
  }
  func.func @transform_0(%arg0: i32) -> (i32, i32, i32) {
    %c0_i32 = arith.constant 0 : i32
    %c0_i32_0 = arith.constant 0 : i32
    %c0_i32_1 = arith.constant 0 : i32
    return %arg0, %c0_i32, %c0_i32_0 : i32, i32, i32
  }
  func.func @transform_1(%arg0: i32) -> (i32, i32, i32) {
    %c0_i32 = arith.constant 0 : i32
    %c0_i32_0 = arith.constant 0 : i32
    %c0_i32_1 = arith.constant 0 : i32
    return %arg0, %c0_i32, %c0_i32_0 : i32, i32, i32
  }
  func.func @transform_2(%arg0: i32) -> (i32, i32) {
    %c0_i32 = arith.constant 0 : i32
    %c0_i32_0 = arith.constant 0 : i32
    %c0_i32_1 = arith.constant 0 : i32
    return %c0_i32, %c0_i32_0 : i32, i32
  }
  func.func @transform_3(%arg0: i32) -> (i32, i32) {
    %c0_i32 = arith.constant 0 : i32
    %c0_i32_0 = arith.constant 0 : i32
    %c0_i32_1 = arith.constant 0 : i32
    return %c0_i32, %c0_i32_0 : i32, i32
  }
  func.func @transform_4(%arg0: i32) -> (i32, i32) {
    %c0_i32 = arith.constant 0 : i32
    %c0_i32_0 = arith.constant 0 : i32
    %c0_i32_1 = arith.constant 0 : i32
    return %c0_i32, %c0_i32_0 : i32, i32
  }
  func.func @transform_5(%arg0: i32) -> (i32, i32, i32) {
    %c0_i32 = arith.constant 0 : i32
    %c0_i32_0 = arith.constant 0 : i32
    %c0_i32_1 = arith.constant 0 : i32
    return %arg0, %c0_i32, %c0_i32_0 : i32, i32, i32
  }
}

module attributes {stable_mosaic.version = 11 : i64} {
  func.func @_dec_kernel(%arg0: i32, %arg1: memref<1x16x256xf32, #tpu.memory_space<vmem>>, %arg2: memref<1x32x256xf32, #tpu.memory_space<vmem>>, %arg3: memref<16x32xbf16, #tpu.memory_space<vmem>>, %arg4: memref<16x1xf32, #tpu.memory_space<vmem>>, %arg5: memref<16x16xbf16, #tpu.memory_space<vmem>>, %arg6: memref<1x16x256xf32, #tpu.memory_space<vmem>>) attributes {dimension_semantics = [#tpu.dimension_semantics<parallel>], iteration_bounds = array<i64: 2>, scalar_prefetch = 0 : i64, scratch_operands = 0 : i64, tpu.core_type = #tpu.core_type<tc>, window_params = [{transform_indices = @transform_0, window_bounds = array<i64: 1, 16, 256>}, {transform_indices = @transform_1, window_bounds = array<i64: 1, 32, 256>}, {pipeline_mode = #tpu.pipeline_mode<synchronous>, transform_indices = @transform_2, window_bounds = array<i64: 16, 32>}, {pipeline_mode = #tpu.pipeline_mode<synchronous>, transform_indices = @transform_3, window_bounds = array<i64: 16, 1>}, {pipeline_mode = #tpu.pipeline_mode<synchronous>, transform_indices = @transform_4, window_bounds = array<i64: 16, 16>}, {transform_indices = @transform_5, window_bounds = array<i64: 1, 16, 256>}]} {
    %c0 = arith.constant 0 : index
    %c0_0 = arith.constant 0 : index
    %0 = vector.load %arg3[%c0, %c0_0] : memref<16x32xbf16, #tpu.memory_space<vmem>>, vector<16x32xbf16>
    %c0_1 = arith.constant 0 : index
    %c0_2 = arith.constant 0 : index
    %c0_3 = arith.constant 0 : index
    %1 = vector.load %arg2[%c0_1, %c0_2, %c0_3] : memref<1x32x256xf32, #tpu.memory_space<vmem>>, vector<1x32x256xf32>
    %2 = vector.shape_cast %1 : vector<1x32x256xf32> to vector<32x256xf32>
    %3 = arith.truncf %2 : vector<32x256xf32> to vector<32x256xbf16>
    %cst = arith.constant dense<0.000000e+00> : vector<16x256xf32>
    %4 = tpu.matmul %0, %3, %cst {dimension_numbers = #tpu.dot_dimension_numbers<[1], [0], [0], [1], [0, 0, 1, 1], [], []>} : vector<16x32xbf16>, vector<32x256xbf16>, vector<16x256xf32> -> vector<16x256xf32>
    %c0_4 = arith.constant 0 : index
    %c0_5 = arith.constant 0 : index
    %c0_6 = arith.constant 0 : index
    %5 = vector.load %arg1[%c0_4, %c0_5, %c0_6] : memref<1x16x256xf32, #tpu.memory_space<vmem>>, vector<1x16x256xf32>
    %6 = vector.shape_cast %5 : vector<1x16x256xf32> to vector<16x256xf32>
    %7 = arith.addf %6, %4 : vector<16x256xf32>
    %c0_7 = arith.constant 0 : index
    %c0_8 = arith.constant 0 : index
    %8 = vector.load %arg4[%c0_7, %c0_8] : memref<16x1xf32, #tpu.memory_space<vmem>>, vector<16x1xf32>
    %9 = vector.broadcast %8 : vector<16x1xf32> to vector<16x256xf32>
    %10 = arith.addf %7, %9 : vector<16x256xf32>
    %cst_9 = arith.constant 0.000000e+00 : f32
    %11 = vector.broadcast %cst_9 : f32 to vector<16x256xf32>
    %12 = arith.maximumf %10, %11 : vector<16x256xf32>
    %c0_10 = arith.constant 0 : index
    %c0_11 = arith.constant 0 : index
    %13 = vector.load %arg5[%c0_10, %c0_11] : memref<16x16xbf16, #tpu.memory_space<vmem>>, vector<16x16xbf16>
    %14 = arith.truncf %12 : vector<16x256xf32> to vector<16x256xbf16>
    %cst_12 = arith.constant dense<0.000000e+00> : vector<16x256xf32>
    %15 = tpu.matmul %13, %14, %cst_12 {dimension_numbers = #tpu.dot_dimension_numbers<[1], [0], [0], [1], [0, 0, 1, 1], [], []>} : vector<16x16xbf16>, vector<16x256xbf16>, vector<16x256xf32> -> vector<16x256xf32>
    %c0_13 = arith.constant 0 : index
    %c0_14 = arith.constant 0 : index
    %c0_15 = arith.constant 0 : index
    %16 = vector.load %arg6[%c0_13, %c0_14, %c0_15] : memref<1x16x256xf32, #tpu.memory_space<vmem>>, vector<1x16x256xf32>
    %17 = vector.shape_cast %16 : vector<1x16x256xf32> to vector<16x256xf32>
    %18 = vector.shape_cast %15 : vector<16x256xf32> to vector<1x16x256xf32>
    tpu.vector_store %arg6[%c0_13, %c0_14, %c0_15], %18 {strides = array<i32>} : memref<1x16x256xf32, #tpu.memory_space<vmem>>, vector<1x16x256xf32>,
    return
  }
  func.func @transform_0(%arg0: i32) -> (i32, i32, i32) {
    %c0_i32 = arith.constant 0 : i32
    %c0_i32_0 = arith.constant 0 : i32
    %c0_i32_1 = arith.constant 0 : i32
    return %arg0, %c0_i32, %c0_i32_0 : i32, i32, i32
  }
  func.func @transform_1(%arg0: i32) -> (i32, i32, i32) {
    %c0_i32 = arith.constant 0 : i32
    %c0_i32_0 = arith.constant 0 : i32
    %c0_i32_1 = arith.constant 0 : i32
    return %arg0, %c0_i32, %c0_i32_0 : i32, i32, i32
  }
  func.func @transform_2(%arg0: i32) -> (i32, i32) {
    %c0_i32 = arith.constant 0 : i32
    %c0_i32_0 = arith.constant 0 : i32
    %c0_i32_1 = arith.constant 0 : i32
    return %c0_i32, %c0_i32_0 : i32, i32
  }
  func.func @transform_3(%arg0: i32) -> (i32, i32) {
    %c0_i32 = arith.constant 0 : i32
    %c0_i32_0 = arith.constant 0 : i32
    %c0_i32_1 = arith.constant 0 : i32
    return %c0_i32, %c0_i32_0 : i32, i32
  }
  func.func @transform_4(%arg0: i32) -> (i32, i32) {
    %c0_i32 = arith.constant 0 : i32
    %c0_i32_0 = arith.constant 0 : i32
    %c0_i32_1 = arith.constant 0 : i32
    return %c0_i32, %c0_i32_0 : i32, i32
  }
  func.func @transform_5(%arg0: i32) -> (i32, i32, i32) {
    %c0_i32 = arith.constant 0 : i32
    %c0_i32_0 = arith.constant 0 : i32
    %c0_i32_1 = arith.constant 0 : i32
    return %arg0, %c0_i32, %c0_i32_0 : i32, i32, i32
  }
}

module attributes {stable_mosaic.version = 11 : i64} {
  func.func @_dec_final_kernel(%arg0: i32, %arg1: memref<1x16x1024xf32, #tpu.memory_space<vmem>>, %arg2: memref<1x16x1024xf32, #tpu.memory_space<vmem>>, %arg3: memref<16x16xbf16, #tpu.memory_space<vmem>>, %arg4: memref<16x1xf32, #tpu.memory_space<vmem>>, %arg5: memref<8x16xbf16, #tpu.memory_space<vmem>>, %arg6: memref<8x1xf32, #tpu.memory_space<vmem>>, %arg7: memref<1x8x1024xf32, #tpu.memory_space<vmem>>) attributes {dimension_semantics = [#tpu.dimension_semantics<parallel>], iteration_bounds = array<i64: 2>, scalar_prefetch = 0 : i64, scratch_operands = 0 : i64, tpu.core_type = #tpu.core_type<tc>, window_params = [{transform_indices = @transform_0, window_bounds = array<i64: 1, 16, 1024>}, {transform_indices = @transform_1, window_bounds = array<i64: 1, 16, 1024>}, {pipeline_mode = #tpu.pipeline_mode<synchronous>, transform_indices = @transform_2, window_bounds = array<i64: 16, 16>}, {pipeline_mode = #tpu.pipeline_mode<synchronous>, transform_indices = @transform_3, window_bounds = array<i64: 16, 1>}, {pipeline_mode = #tpu.pipeline_mode<synchronous>, transform_indices = @transform_4, window_bounds = array<i64: 8, 16>}, {pipeline_mode = #tpu.pipeline_mode<synchronous>, transform_indices = @transform_5, window_bounds = array<i64: 8, 1>}, {transform_indices = @transform_6, window_bounds = array<i64: 1, 8, 1024>}]} {
    %c0 = arith.constant 0 : index
    %c0_0 = arith.constant 0 : index
    %0 = vector.load %arg3[%c0, %c0_0] : memref<16x16xbf16, #tpu.memory_space<vmem>>, vector<16x16xbf16>
    %c0_1 = arith.constant 0 : index
    %c0_2 = arith.constant 0 : index
    %c0_3 = arith.constant 0 : index
    %1 = vector.load %arg2[%c0_1, %c0_2, %c0_3] : memref<1x16x1024xf32, #tpu.memory_space<vmem>>, vector<1x16x1024xf32>
    %2 = vector.shape_cast %1 : vector<1x16x1024xf32> to vector<16x1024xf32>
    %3 = arith.truncf %2 : vector<16x1024xf32> to vector<16x1024xbf16>
    %cst = arith.constant dense<0.000000e+00> : vector<16x1024xf32>
    %4 = tpu.matmul %0, %3, %cst {dimension_numbers = #tpu.dot_dimension_numbers<[1], [0], [0], [1], [0, 0, 1, 1], [], []>} : vector<16x16xbf16>, vector<16x1024xbf16>, vector<16x1024xf32> -> vector<16x1024xf32>
    %c0_4 = arith.constant 0 : index
    %c0_5 = arith.constant 0 : index
    %c0_6 = arith.constant 0 : index
    %5 = vector.load %arg1[%c0_4, %c0_5, %c0_6] : memref<1x16x1024xf32, #tpu.memory_space<vmem>>, vector<1x16x1024xf32>
    %6 = vector.shape_cast %5 : vector<1x16x1024xf32> to vector<16x1024xf32>
    %7 = arith.addf %6, %4 : vector<16x1024xf32>
    %c0_7 = arith.constant 0 : index
    %c0_8 = arith.constant 0 : index
    %8 = vector.load %arg4[%c0_7, %c0_8] : memref<16x1xf32, #tpu.memory_space<vmem>>, vector<16x1xf32>
    %9 = vector.broadcast %8 : vector<16x1xf32> to vector<16x1024xf32>
    %10 = arith.addf %7, %9 : vector<16x1024xf32>
    %cst_9 = arith.constant 0.000000e+00 : f32
    %11 = vector.broadcast %cst_9 : f32 to vector<16x1024xf32>
    %12 = arith.maximumf %10, %11 : vector<16x1024xf32>
    %c0_10 = arith.constant 0 : index
    %c0_11 = arith.constant 0 : index
    %13 = vector.load %arg5[%c0_10, %c0_11] : memref<8x16xbf16, #tpu.memory_space<vmem>>, vector<8x16xbf16>
    %14 = arith.truncf %12 : vector<16x1024xf32> to vector<16x1024xbf16>
    %cst_12 = arith.constant dense<0.000000e+00> : vector<8x1024xf32>
    %15 = tpu.matmul %13, %14, %cst_12 {dimension_numbers = #tpu.dot_dimension_numbers<[1], [0], [0], [1], [0, 0, 1, 1], [], []>} : vector<8x16xbf16>, vector<16x1024xbf16>, vector<8x1024xf32> -> vector<8x1024xf32>
    %c0_13 = arith.constant 0 : index
    %c0_14 = arith.constant 0 : index
    %16 = vector.load %arg6[%c0_13, %c0_14] : memref<8x1xf32, #tpu.memory_space<vmem>>, vector<8x1xf32>
    %17 = vector.broadcast %16 : vector<8x1xf32> to vector<8x1024xf32>
    %18 = arith.addf %15, %17 : vector<8x1024xf32>
    %c0_15 = arith.constant 0 : index
    %c0_16 = arith.constant 0 : index
    %c0_17 = arith.constant 0 : index
    %19 = vector.load %arg7[%c0_15, %c0_16, %c0_17] : memref<1x8x1024xf32, #tpu.memory_space<vmem>>, vector<1x8x1024xf32>
    %20 = vector.shape_cast %19 : vector<1x8x1024xf32> to vector<8x1024xf32>
    %21 = vector.shape_cast %18 : vector<8x1024xf32> to vector<1x8x1024xf32>
    tpu.vector_store %arg7[%c0_15, %c0_16, %c0_17], %21 {strides = array<i32>} : memref<1x8x1024xf32, #tpu.memory_space<vmem>>, vector<1x8x1024xf32>,
    return
  }
  func.func @transform_0(%arg0: i32) -> (i32, i32, i32) {
    %c0_i32 = arith.constant 0 : i32
    %c0_i32_0 = arith.constant 0 : i32
    %c0_i32_1 = arith.constant 0 : i32
    return %arg0, %c0_i32, %c0_i32_0 : i32, i32, i32
  }
  func.func @transform_1(%arg0: i32) -> (i32, i32, i32) {
    %c0_i32 = arith.constant 0 : i32
    %c0_i32_0 = arith.constant 0 : i32
    %c0_i32_1 = arith.constant 0 : i32
    return %arg0, %c0_i32, %c0_i32_0 : i32, i32, i32
  }
  func.func @transform_2(%arg0: i32) -> (i32, i32) {
    %c0_i32 = arith.constant 0 : i32
    %c0_i32_0 = arith.constant 0 : i32
    %c0_i32_1 = arith.constant 0 : i32
    return %c0_i32, %c0_i32_0 : i32, i32
  }
  func.func @transform_3(%arg0: i32) -> (i32, i32) {
    %c0_i32 = arith.constant 0 : i32
    %c0_i32_0 = arith.constant 0 : i32
    %c0_i32_1 = arith.constant 0 : i32
    return %c0_i32, %c0_i32_0 : i32, i32
  }
  func.func @transform_4(%arg0: i32) -> (i32, i32) {
    %c0_i32 = arith.constant 0 : i32
    %c0_i32_0 = arith.constant 0 : i32
    %c0_i32_1 = arith.constant 0 : i32
    return %c0_i32, %c0_i32_0 : i32, i32
  }
  func.func @transform_5(%arg0: i32) -> (i32, i32) {
    %c0_i32 = arith.constant 0 : i32
    %c0_i32_0 = arith.constant 0 : i32
    %c0_i32_1 = arith.constant 0 : i32
    return %c0_i32, %c0_i32_0 : i32, i32
  }
  func.func @transform_6(%arg0: i32) -> (i32, i32, i32) {
    %c0_i32 = arith.constant 0 : i32
    %c0_i32_0 = arith.constant 0 : i32
    %c0_i32_1 = arith.constant 0 : i32
    return %arg0, %c0_i32, %c0_i32_0 : i32, i32, i32
  }
}

module attributes {stable_mosaic.version = 11 : i64} {
  func.func @_final_up_kernel(%arg0: i32, %arg1: memref<1x8x32x32xf32, #tpu.memory_space<vmem>>, %arg2: memref<64x32xf32, #tpu.memory_space<vmem>>, %arg3: memref<32x64xf32, #tpu.memory_space<vmem>>, %arg4: memref<1x8x64x64xf32, #tpu.memory_space<vmem>>) attributes {dimension_semantics = [#tpu.dimension_semantics<parallel>], iteration_bounds = array<i64: 2>, scalar_prefetch = 0 : i64, scratch_operands = 0 : i64, tpu.core_type = #tpu.core_type<tc>, window_params = [{transform_indices = @transform_0, window_bounds = array<i64: 1, 8, 32, 32>}, {pipeline_mode = #tpu.pipeline_mode<synchronous>, transform_indices = @transform_1, window_bounds = array<i64: 64, 32>}, {pipeline_mode = #tpu.pipeline_mode<synchronous>, transform_indices = @transform_2, window_bounds = array<i64: 32, 64>}, {transform_indices = @transform_3, window_bounds = array<i64: 1, 8, 64, 64>}]} {
    %c0 = arith.constant 0 : index
    %c0_0 = arith.constant 0 : index
    %c0_1 = arith.constant 0 : index
    %c0_2 = arith.constant 0 : index
    %0 = vector.load %arg1[%c0, %c0_0, %c0_1, %c0_2] : memref<1x8x32x32xf32, #tpu.memory_space<vmem>>, vector<1x1x32x32xf32>
    %1 = vector.shape_cast %0 : vector<1x1x32x32xf32> to vector<32x32xf32>
    %c0_3 = arith.constant 0 : index
    %c0_4 = arith.constant 0 : index
    %2 = vector.load %arg3[%c0_3, %c0_4] : memref<32x64xf32, #tpu.memory_space<vmem>>, vector<32x64xf32>
    %cst = arith.constant dense<0.000000e+00> : vector<32x64xf32>
    %3 = tpu.matmul %1, %2, %cst {dimension_numbers = #tpu.dot_dimension_numbers<[1], [0], [0], [1], [0, 0, 1, 1], [], []>} : vector<32x32xf32>, vector<32x64xf32>, vector<32x64xf32> -> vector<32x64xf32>
    %c0_5 = arith.constant 0 : index
    %c0_6 = arith.constant 0 : index
    %4 = vector.load %arg2[%c0_5, %c0_6] : memref<64x32xf32, #tpu.memory_space<vmem>>, vector<64x32xf32>
    %cst_7 = arith.constant dense<0.000000e+00> : vector<64x64xf32>
    %5 = tpu.matmul %4, %3, %cst_7 {dimension_numbers = #tpu.dot_dimension_numbers<[1], [0], [0], [1], [0, 0, 1, 1], [], []>} : vector<64x32xf32>, vector<32x64xf32>, vector<64x64xf32> -> vector<64x64xf32>
    %c0_8 = arith.constant 0 : index
    %c0_9 = arith.constant 0 : index
    %c0_10 = arith.constant 0 : index
    %c0_11 = arith.constant 0 : index
    %6 = vector.load %arg4[%c0_8, %c0_9, %c0_10, %c0_11] : memref<1x8x64x64xf32, #tpu.memory_space<vmem>>, vector<1x1x64x64xf32>
    %7 = vector.shape_cast %6 : vector<1x1x64x64xf32> to vector<64x64xf32>
    %8 = vector.shape_cast %5 : vector<64x64xf32> to vector<1x1x64x64xf32>
    tpu.vector_store %arg4[%c0_8, %c0_9, %c0_10, %c0_11], %8 {strides = array<i32>} : memref<1x8x64x64xf32, #tpu.memory_space<vmem>>, vector<1x1x64x64xf32>,
    %c0_12 = arith.constant 0 : index
    %c1 = arith.constant 1 : index
    %c0_13 = arith.constant 0 : index
    %c0_14 = arith.constant 0 : index
    %9 = vector.load %arg1[%c0_12, %c1, %c0_13, %c0_14] : memref<1x8x32x32xf32, #tpu.memory_space<vmem>>, vector<1x1x32x32xf32>
    %10 = vector.shape_cast %9 : vector<1x1x32x32xf32> to vector<32x32xf32>
    %c0_15 = arith.constant 0 : index
    %c0_16 = arith.constant 0 : index
    %11 = vector.load %arg3[%c0_15, %c0_16] : memref<32x64xf32, #tpu.memory_space<vmem>>, vector<32x64xf32>
    %cst_17 = arith.constant dense<0.000000e+00> : vector<32x64xf32>
    %12 = tpu.matmul %10, %11, %cst_17 {dimension_numbers = #tpu.dot_dimension_numbers<[1], [0], [0], [1], [0, 0, 1, 1], [], []>} : vector<32x32xf32>, vector<32x64xf32>, vector<32x64xf32> -> vector<32x64xf32>
    %c0_18 = arith.constant 0 : index
    %c0_19 = arith.constant 0 : index
    %13 = vector.load %arg2[%c0_18, %c0_19] : memref<64x32xf32, #tpu.memory_space<vmem>>, vector<64x32xf32>
    %cst_20 = arith.constant dense<0.000000e+00> : vector<64x64xf32>
    %14 = tpu.matmul %13, %12, %cst_20 {dimension_numbers = #tpu.dot_dimension_numbers<[1], [0], [0], [1], [0, 0, 1, 1], [], []>} : vector<64x32xf32>, vector<32x64xf32>, vector<64x64xf32> -> vector<64x64xf32>
    %c0_21 = arith.constant 0 : index
    %c1_22 = arith.constant 1 : index
    %c0_23 = arith.constant 0 : index
    %c0_24 = arith.constant 0 : index
    %15 = vector.load %arg4[%c0_21, %c1_22, %c0_23, %c0_24] : memref<1x8x64x64xf32, #tpu.memory_space<vmem>>, vector<1x1x64x64xf32>
    %16 = vector.shape_cast %15 : vector<1x1x64x64xf32> to vector<64x64xf32>
    %17 = vector.shape_cast %14 : vector<64x64xf32> to vector<1x1x64x64xf32>
    tpu.vector_store %arg4[%c0_21, %c1_22, %c0_23, %c0_24], %17 {strides = array<i32>} : memref<1x8x64x64xf32, #tpu.memory_space<vmem>>, vector<1x1x64x64xf32>,
    %c0_25 = arith.constant 0 : index
    %c2 = arith.constant 2 : index
    %c0_26 = arith.constant 0 : index
    %c0_27 = arith.constant 0 : index
    %18 = vector.load %arg1[%c0_25, %c2, %c0_26, %c0_27] : memref<1x8x32x32xf32, #tpu.memory_space<vmem>>, vector<1x1x32x32xf32>
    %19 = vector.shape_cast %18 : vector<1x1x32x32xf32> to vector<32x32xf32>
    %c0_28 = arith.constant 0 : index
    %c0_29 = arith.constant 0 : index
    %20 = vector.load %arg3[%c0_28, %c0_29] : memref<32x64xf32, #tpu.memory_space<vmem>>, vector<32x64xf32>
    %cst_30 = arith.constant dense<0.000000e+00> : vector<32x64xf32>
    %21 = tpu.matmul %19, %20, %cst_30 {dimension_numbers = #tpu.dot_dimension_numbers<[1], [0], [0], [1], [0, 0, 1, 1], [], []>} : vector<32x32xf32>, vector<32x64xf32>, vector<32x64xf32> -> vector<32x64xf32>
    %c0_31 = arith.constant 0 : index
    %c0_32 = arith.constant 0 : index
    %22 = vector.load %arg2[%c0_31, %c0_32] : memref<64x32xf32, #tpu.memory_space<vmem>>, vector<64x32xf32>
    %cst_33 = arith.constant dense<0.000000e+00> : vector<64x64xf32>
    %23 = tpu.matmul %22, %21, %cst_33 {dimension_numbers = #tpu.dot_dimension_numbers<[1], [0], [0], [1], [0, 0, 1, 1], [], []>} : vector<64x32xf32>, vector<32x64xf32>, vector<64x64xf32> -> vector<64x64xf32>
    %c0_34 = arith.constant 0 : index
    %c2_35 = arith.constant 2 : index
    %c0_36 = arith.constant 0 : index
    %c0_37 = arith.constant 0 : index
    %24 = vector.load %arg4[%c0_34, %c2_35, %c0_36, %c0_37] : memref<1x8x64x64xf32, #tpu.memory_space<vmem>>, vector<1x1x64x64xf32>
    %25 = vector.shape_cast %24 : vector<1x1x64x64xf32> to vector<64x64xf32>
    %26 = vector.shape_cast %23 : vector<64x64xf32> to vector<1x1x64x64xf32>
    tpu.vector_store %arg4[%c0_34, %c2_35, %c0_36, %c0_37], %26 {strides = array<i32>} : memref<1x8x64x64xf32, #tpu.memory_space<vmem>>, vector<1x1x64x64xf32>,
    %c0_38 = arith.constant 0 : index
    %c3 = arith.constant 3 : index
    %c0_39 = arith.constant 0 : index
    %c0_40 = arith.constant 0 : index
    %27 = vector.load %arg1[%c0_38, %c3, %c0_39, %c0_40] : memref<1x8x32x32xf32, #tpu.memory_space<vmem>>, vector<1x1x32x32xf32>
    %28 = vector.shape_cast %27 : vector<1x1x32x32xf32> to vector<32x32xf32>
    %c0_41 = arith.constant 0 : index
    %c0_42 = arith.constant 0 : index
    %29 = vector.load %arg3[%c0_41, %c0_42] : memref<32x64xf32, #tpu.memory_space<vmem>>, vector<32x64xf32>
    %cst_43 = arith.constant dense<0.000000e+00> : vector<32x64xf32>
    %30 = tpu.matmul %28, %29, %cst_43 {dimension_numbers = #tpu.dot_dimension_numbers<[1], [0], [0], [1], [0, 0, 1, 1], [], []>} : vector<32x32xf32>, vector<32x64xf32>, vector<32x64xf32> -> vector<32x64xf32>
    %c0_44 = arith.constant 0 : index
    %c0_45 = arith.constant 0 : index
    %31 = vector.load %arg2[%c0_44, %c0_45] : memref<64x32xf32, #tpu.memory_space<vmem>>, vector<64x32xf32>
    %cst_46 = arith.constant dense<0.000000e+00> : vector<64x64xf32>
    %32 = tpu.matmul %31, %30, %cst_46 {dimension_numbers = #tpu.dot_dimension_numbers<[1], [0], [0], [1], [0, 0, 1, 1], [], []>} : vector<64x32xf32>, vector<32x64xf32>, vector<64x64xf32> -> vector<64x64xf32>
    %c0_47 = arith.constant 0 : index
    %c3_48 = arith.constant 3 : index
    %c0_49 = arith.constant 0 : index
    %c0_50 = arith.constant 0 : index
    %33 = vector.load %arg4[%c0_47, %c3_48, %c0_49, %c0_50] : memref<1x8x64x64xf32, #tpu.memory_space<vmem>>, vector<1x1x64x64xf32>
    %34 = vector.shape_cast %33 : vector<1x1x64x64xf32> to vector<64x64xf32>
    %35 = vector.shape_cast %32 : vector<64x64xf32> to vector<1x1x64x64xf32>
    tpu.vector_store %arg4[%c0_47, %c3_48, %c0_49, %c0_50], %35 {strides = array<i32>} : memref<1x8x64x64xf32, #tpu.memory_space<vmem>>, vector<1x1x64x64xf32>,
    %c0_51 = arith.constant 0 : index
    %c4 = arith.constant 4 : index
    %c0_52 = arith.constant 0 : index
    %c0_53 = arith.constant 0 : index
    %36 = vector.load %arg1[%c0_51, %c4, %c0_52, %c0_53] : memref<1x8x32x32xf32, #tpu.memory_space<vmem>>, vector<1x1x32x32xf32>
    %37 = vector.shape_cast %36 : vector<1x1x32x32xf32> to vector<32x32xf32>
    %c0_54 = arith.constant 0 : index
    %c0_55 = arith.constant 0 : index
    %38 = vector.load %arg3[%c0_54, %c0_55] : memref<32x64xf32, #tpu.memory_space<vmem>>, vector<32x64xf32>
    %cst_56 = arith.constant dense<0.000000e+00> : vector<32x64xf32>
    %39 = tpu.matmul %37, %38, %cst_56 {dimension_numbers = #tpu.dot_dimension_numbers<[1], [0], [0], [1], [0, 0, 1, 1], [], []>} : vector<32x32xf32>, vector<32x64xf32>, vector<32x64xf32> -> vector<32x64xf32>
    %c0_57 = arith.constant 0 : index
    %c0_58 = arith.constant 0 : index
    %40 = vector.load %arg2[%c0_57, %c0_58] : memref<64x32xf32, #tpu.memory_space<vmem>>, vector<64x32xf32>
    %cst_59 = arith.constant dense<0.000000e+00> : vector<64x64xf32>
    %41 = tpu.matmul %40, %39, %cst_59 {dimension_numbers = #tpu.dot_dimension_numbers<[1], [0], [0], [1], [0, 0, 1, 1], [], []>} : vector<64x32xf32>, vector<32x64xf32>, vector<64x64xf32> -> vector<64x64xf32>
    %c0_60 = arith.constant 0 : index
    %c4_61 = arith.constant 4 : index
    %c0_62 = arith.constant 0 : index
    %c0_63 = arith.constant 0 : index
    %42 = vector.load %arg4[%c0_60, %c4_61, %c0_62, %c0_63] : memref<1x8x64x64xf32, #tpu.memory_space<vmem>>, vector<1x1x64x64xf32>
    %43 = vector.shape_cast %42 : vector<1x1x64x64xf32> to vector<64x64xf32>
    %44 = vector.shape_cast %41 : vector<64x64xf32> to vector<1x1x64x64xf32>
    tpu.vector_store %arg4[%c0_60, %c4_61, %c0_62, %c0_63], %44 {strides = array<i32>} : memref<1x8x64x64xf32, #tpu.memory_space<vmem>>, vector<1x1x64x64xf32>,
    %c0_64 = arith.constant 0 : index
    %c5 = arith.constant 5 : index
    %c0_65 = arith.constant 0 : index
    %c0_66 = arith.constant 0 : index
    %45 = vector.load %arg1[%c0_64, %c5, %c0_65, %c0_66] : memref<1x8x32x32xf32, #tpu.memory_space<vmem>>, vector<1x1x32x32xf32>
    %46 = vector.shape_cast %45 : vector<1x1x32x32xf32> to vector<32x32xf32>
    %c0_67 = arith.constant 0 : index
    %c0_68 = arith.constant 0 : index
    %47 = vector.load %arg3[%c0_67, %c0_68] : memref<32x64xf32, #tpu.memory_space<vmem>>, vector<32x64xf32>
    %cst_69 = arith.constant dense<0.000000e+00> : vector<32x64xf32>
    %48 = tpu.matmul %46, %47, %cst_69 {dimension_numbers = #tpu.dot_dimension_numbers<[1], [0], [0], [1], [0, 0, 1, 1], [], []>} : vector<32x32xf32>, vector<32x64xf32>, vector<32x64xf32> -> vector<32x64xf32>
    %c0_70 = arith.constant 0 : index
    %c0_71 = arith.constant 0 : index
    %49 = vector.load %arg2[%c0_70, %c0_71] : memref<64x32xf32, #tpu.memory_space<vmem>>, vector<64x32xf32>
    %cst_72 = arith.constant dense<0.000000e+00> : vector<64x64xf32>
    %50 = tpu.matmul %49, %48, %cst_72 {dimension_numbers = #tpu.dot_dimension_numbers<[1], [0], [0], [1], [0, 0, 1, 1], [], []>} : vector<64x32xf32>, vector<32x64xf32>, vector<64x64xf32> -> vector<64x64xf32>
    %c0_73 = arith.constant 0 : index
    %c5_74 = arith.constant 5 : index
    %c0_75 = arith.constant 0 : index
    %c0_76 = arith.constant 0 : index
    %51 = vector.load %arg4[%c0_73, %c5_74, %c0_75, %c0_76] : memref<1x8x64x64xf32, #tpu.memory_space<vmem>>, vector<1x1x64x64xf32>
    %52 = vector.shape_cast %51 : vector<1x1x64x64xf32> to vector<64x64xf32>
    %53 = vector.shape_cast %50 : vector<64x64xf32> to vector<1x1x64x64xf32>
    tpu.vector_store %arg4[%c0_73, %c5_74, %c0_75, %c0_76], %53 {strides = array<i32>} : memref<1x8x64x64xf32, #tpu.memory_space<vmem>>, vector<1x1x64x64xf32>,
    %c0_77 = arith.constant 0 : index
    %c6 = arith.constant 6 : index
    %c0_78 = arith.constant 0 : index
    %c0_79 = arith.constant 0 : index
    %54 = vector.load %arg1[%c0_77, %c6, %c0_78, %c0_79] : memref<1x8x32x32xf32, #tpu.memory_space<vmem>>, vector<1x1x32x32xf32>
    %55 = vector.shape_cast %54 : vector<1x1x32x32xf32> to vector<32x32xf32>
    %c0_80 = arith.constant 0 : index
    %c0_81 = arith.constant 0 : index
    %56 = vector.load %arg3[%c0_80, %c0_81] : memref<32x64xf32, #tpu.memory_space<vmem>>, vector<32x64xf32>
    %cst_82 = arith.constant dense<0.000000e+00> : vector<32x64xf32>
    %57 = tpu.matmul %55, %56, %cst_82 {dimension_numbers = #tpu.dot_dimension_numbers<[1], [0], [0], [1], [0, 0, 1, 1], [], []>} : vector<32x32xf32>, vector<32x64xf32>, vector<32x64xf32> -> vector<32x64xf32>
    %c0_83 = arith.constant 0 : index
    %c0_84 = arith.constant 0 : index
    %58 = vector.load %arg2[%c0_83, %c0_84] : memref<64x32xf32, #tpu.memory_space<vmem>>, vector<64x32xf32>
    %cst_85 = arith.constant dense<0.000000e+00> : vector<64x64xf32>
    %59 = tpu.matmul %58, %57, %cst_85 {dimension_numbers = #tpu.dot_dimension_numbers<[1], [0], [0], [1], [0, 0, 1, 1], [], []>} : vector<64x32xf32>, vector<32x64xf32>, vector<64x64xf32> -> vector<64x64xf32>
    %c0_86 = arith.constant 0 : index
    %c6_87 = arith.constant 6 : index
    %c0_88 = arith.constant 0 : index
    %c0_89 = arith.constant 0 : index
    %60 = vector.load %arg4[%c0_86, %c6_87, %c0_88, %c0_89] : memref<1x8x64x64xf32, #tpu.memory_space<vmem>>, vector<1x1x64x64xf32>
    %61 = vector.shape_cast %60 : vector<1x1x64x64xf32> to vector<64x64xf32>
    %62 = vector.shape_cast %59 : vector<64x64xf32> to vector<1x1x64x64xf32>
    tpu.vector_store %arg4[%c0_86, %c6_87, %c0_88, %c0_89], %62 {strides = array<i32>} : memref<1x8x64x64xf32, #tpu.memory_space<vmem>>, vector<1x1x64x64xf32>,
    %c0_90 = arith.constant 0 : index
    %c7 = arith.constant 7 : index
    %c0_91 = arith.constant 0 : index
    %c0_92 = arith.constant 0 : index
    %63 = vector.load %arg1[%c0_90, %c7, %c0_91, %c0_92] : memref<1x8x32x32xf32, #tpu.memory_space<vmem>>, vector<1x1x32x32xf32>
    %64 = vector.shape_cast %63 : vector<1x1x32x32xf32> to vector<32x32xf32>
    %c0_93 = arith.constant 0 : index
    %c0_94 = arith.constant 0 : index
    %65 = vector.load %arg3[%c0_93, %c0_94] : memref<32x64xf32, #tpu.memory_space<vmem>>, vector<32x64xf32>
    %cst_95 = arith.constant dense<0.000000e+00> : vector<32x64xf32>
    %66 = tpu.matmul %64, %65, %cst_95 {dimension_numbers = #tpu.dot_dimension_numbers<[1], [0], [0], [1], [0, 0, 1, 1], [], []>} : vector<32x32xf32>, vector<32x64xf32>, vector<32x64xf32> -> vector<32x64xf32>
    %c0_96 = arith.constant 0 : index
    %c0_97 = arith.constant 0 : index
    %67 = vector.load %arg2[%c0_96, %c0_97] : memref<64x32xf32, #tpu.memory_space<vmem>>, vector<64x32xf32>
    %cst_98 = arith.constant dense<0.000000e+00> : vector<64x64xf32>
    %68 = tpu.matmul %67, %66, %cst_98 {dimension_numbers = #tpu.dot_dimension_numbers<[1], [0], [0], [1], [0, 0, 1, 1], [], []>} : vector<64x32xf32>, vector<32x64xf32>, vector<64x64xf32> -> vector<64x64xf32>
    %c0_99 = arith.constant 0 : index
    %c7_100 = arith.constant 7 : index
    %c0_101 = arith.constant 0 : index
    %c0_102 = arith.constant 0 : index
    %69 = vector.load %arg4[%c0_99, %c7_100, %c0_101, %c0_102] : memref<1x8x64x64xf32, #tpu.memory_space<vmem>>, vector<1x1x64x64xf32>
    %70 = vector.shape_cast %69 : vector<1x1x64x64xf32> to vector<64x64xf32>
    %71 = vector.shape_cast %68 : vector<64x64xf32> to vector<1x1x64x64xf32>
    tpu.vector_store %arg4[%c0_99, %c7_100, %c0_101, %c0_102], %71 {strides = array<i32>} : memref<1x8x64x64xf32, #tpu.memory_space<vmem>>, vector<1x1x64x64xf32>,
    return
  }
  func.func @transform_0(%arg0: i32) -> (i32, i32, i32, i32) {
    %c0_i32 = arith.constant 0 : i32
    %c0_i32_0 = arith.constant 0 : i32
    %c0_i32_1 = arith.constant 0 : i32
    %c0_i32_2 = arith.constant 0 : i32
    return %arg0, %c0_i32, %c0_i32_0, %c0_i32_1 : i32, i32, i32, i32
  }
  func.func @transform_1(%arg0: i32) -> (i32, i32) {
    %c0_i32 = arith.constant 0 : i32
    %c0_i32_0 = arith.constant 0 : i32
    %c0_i32_1 = arith.constant 0 : i32
    return %c0_i32, %c0_i32_0 : i32, i32
  }
  func.func @transform_2(%arg0: i32) -> (i32, i32) {
    %c0_i32 = arith.constant 0 : i32
    %c0_i32_0 = arith.constant 0 : i32
    %c0_i32_1 = arith.constant 0 : i32
    return %c0_i32, %c0_i32_0 : i32, i32
  }
  func.func @transform_3(%arg0: i32) -> (i32, i32, i32, i32) {
    %c0_i32 = arith.constant 0 : i32
    %c0_i32_0 = arith.constant 0 : i32
    %c0_i32_1 = arith.constant 0 : i32
    %c0_i32_2 = arith.constant 0 : i32
    return %arg0, %c0_i32, %c0_i32_0, %c0_i32_1 : i32, i32, i32, i32
  }
}

</mosaic_0001>

<llo_original>
// kernel: forward.10
$region0: #{forward.10}
  #allocation0 [shape = 'u32[]', space=smem, size = 0x4, offset = 0x4, fixed_abs, tag = 'smem constant byte address 0x4 - core index']
  #allocation1 [shape = 'u32[144,128]{1,0:T(1,128)}', space=vmem, size = 0x12000, scoped, tag = 'internal scratch']
  %s0 = inlined_call_operand.vmem [shape: f32[2,27,1024], index: 0, kind: input, shape index: {}]
  %s1 = inlined_call_operand.vmem [shape: bf16[16,27], index: 1, kind: input, shape index: {}]
  %s2 = inlined_call_operand.vmem [shape: f32[16,1], index: 2, kind: input, shape index: {}]
  %s3 = inlined_call_operand.vmem [shape: f32[2,16,1024], index: 3, kind: output, shape index: {}]
  %s4 = sld [smem:[#allocation0]]
  $region45: #{forward.10} parent=0
    _
  %s6 = ssub.s32 1, %s4
  %s7 = scalar_select 0, %s6, %s4
  loop: start=0, step=1, limit=4
  $region2: #{forward.10} parent=0 // loop_pre_header
    _
  $region3: #{forward.10} parent=0 // loop_header
    %s9 = sphi 0, %s13
    %p10 = scmp.ge.s32.totalorder %s9, 4
    %s19 = sphi 0, %s21
    %s22 = sphi 0, %s19
    %s23 = sphi 0, %s22
    %s39 = sphi 0, %s23
    %s43 = sphi 0, %s43
    %s45 = sphi 0, %s43
    %s46 = sphi 0, %s45
    %s60 = sphi 0, %s46
    %s64 = sphi 0, %s64
    %s66 = sphi 0, %s64
    %s67 = sphi 0, %s66
    %s81 = sphi 0, %s67
    %s87 = sphi 0, %s89
    %s90 = sphi 0, %s87
    %s91 = sphi 0, %s90
    %s107 = sphi 0, %s91
  $region4: #{forward.10} parent=0 // loop_header_branch
    %12 = sbr.rel (%p10) target = $region8
  $region5: #{forward.10} parent=0 // loop_body
    %s14 = ssub.s32 %s9, 1
    %s15 = ssub.s32 %s9, 2
    %s16 = sadd.s32 %s9, 1
    %s17 = ssub.s32 %s9, %s16
    %p18 = scmp.eq.s32.totalorder %s17, 0
    %s20 = sadd.s32 %s19, 1
    %s21 = scalar_select %p18, %s19, %s20
    %p24 = pneg %p18
    %p25 = scmp.eq.s32.totalorder %s9, 1
    %p26 = por %p24, %p25
    %p27 = scmp.ne.s32.totalorder %s19, %s22
    %p28 = scmp.eq.s32.totalorder %s9, 0
    %p29 = por %p27, %p28
    %p30 = scmp.ne.s32.totalorder %s19, %s22
    %p31 = scmp.eq.s32.totalorder %s14, 1
    %p32 = por %p30, %p31
    %p33 = scmp.ne.s32.totalorder %s22, %s23
    %p34 = scmp.eq.s32.totalorder %s14, 0
    %p35 = por %p33, %p34
    %p36 = scmp.ne.s32.totalorder %s22, %s23
    %p37 = scmp.eq.s32.totalorder %s15, 1
    %p38 = por %p36, %p37
    %p40 = scmp.ne.s32.totalorder %s23, %s39
    %p41 = scmp.eq.s32.totalorder %s15, 0
    %p42 = por %p40, %p41
    %s44 = sadd.s32 %s43, 1
    %p47 = scmp.eq.s32.totalorder %s9, 1
    %p48 = scmp.ne.s32.totalorder %s43, %s45
    %p49 = scmp.eq.s32.totalorder %s9, 0
    %p50 = por %p48, %p49
    %p51 = scmp.ne.s32.totalorder %s43, %s45
    %p52 = scmp.eq.s32.totalorder %s14, 1
    %p53 = por %p51, %p52
    %p54 = scmp.ne.s32.totalorder %s45, %s46
    %p55 = scmp.eq.s32.totalorder %s14, 0
    %p56 = por %p54, %p55
    %p57 = scmp.ne.s32.totalorder %s45, %s46
    %p58 = scmp.eq.s32.totalorder %s15, 1
    %p59 = por %p57, %p58
    %p61 = scmp.ne.s32.totalorder %s46, %s60
    %p62 = scmp.eq.s32.totalorder %s15, 0
    %p63 = por %p61, %p62
    %s65 = sadd.s32 %s64, 1
    %p68 = scmp.eq.s32.totalorder %s9, 1
    %p69 = scmp.ne.s32.totalorder %s64, %s66
    %p70 = scmp.eq.s32.totalorder %s9, 0
    %p71 = por %p69, %p70
    %p72 = scmp.ne.s32.totalorder %s64, %s66
    %p73 = scmp.eq.s32.totalorder %s14, 1
    %p74 = por %p72, %p73
    %p75 = scmp.ne.s32.totalorder %s66, %s67
    %p76 = scmp.eq.s32.totalorder %s14, 0
    %p77 = por %p75, %p76
    %p78 = scmp.ne.s32.totalorder %s66, %s67
    %p79 = scmp.eq.s32.totalorder %s15, 1
    %p80 = por %p78, %p79
    %p82 = scmp.ne.s32.totalorder %s67, %s81
    %p83 = scmp.eq.s32.totalorder %s15, 0
    %p84 = por %p82, %p83
    %s85 = ssub.s32 %s9, %s16
    %p86 = scmp.eq.s32.totalorder %s85, 0
    %s88 = sadd.s32 %s87, 1
    %s89 = scalar_select %p86, %s87, %s88
    %p92 = pneg %p86
    %p93 = scmp.eq.s32.totalorder %s9, 1
    %p94 = por %p92, %p93
    %p95 = scmp.ne.s32.totalorder %s87, %s90
    %p96 = scmp.eq.s32.totalorder %s9, 0
    %p97 = por %p95, %p96
    %p98 = scmp.ne.s32.totalorder %s87, %s90
    %p99 = scmp.eq.s32.totalorder %s14, 1
    %p100 = por %p98, %p99
    %p101 = scmp.ne.s32.totalorder %s90, %s91
    %p102 = scmp.eq.s32.totalorder %s14, 0
    %p103 = por %p101, %p102
    %p104 = scmp.ne.s32.totalorder %s90, %s91
    %p105 = scmp.eq.s32.totalorder %s15, 1
    %p106 = por %p104, %p105
    %p108 = scmp.ne.s32.totalorder %s91, %s107
    %p109 = scmp.eq.s32.totalorder %s15, 0
    %p110 = por %p108, %p109
    %p111 = scmp.le.s32.totalorder 1, %s9
    %p112 = scmp.lt.s32.totalorder %s9, 3
    %p113 = pnand %p111, %p112
    %p114 = pneg %p113
    // Predicated region
    $region9: #{forward.10} parent=5 // pred_check
      _
    $region10: #{forward.10} parent=5 // pred_check_branch
      %116 = sbr.rel (%p113) target = $region12
    $region11: #{forward.10} parent=5 // pred_region
      %s117 = ssub.s32 %s9, 1
      // Predicated region
      $region13: #{forward.10} parent=11 // pred_check
        %p118 = pneg %p56
      $region14: #{forward.10} parent=11 // pred_check_branch
        %120 = sbr.rel (%p118) target = $region16
      $region15: #{forward.10} parent=11 // pred_region
        _
      $region16: #{forward.10} parent=11 // pred_fallthru
        _
      // Predicated region
      $region17: #{forward.10} parent=11 // pred_check
        %p121 = pneg %p77
      $region18: #{forward.10} parent=11 // pred_check_branch
        %123 = sbr.rel (%p121) target = $region20
      $region19: #{forward.10} parent=11 // pred_region
        _
      $region20: #{forward.10} parent=11 // pred_fallthru
        _
    $region12: #{forward.10} parent=5 // pred_fallthru
      _
    %p124 = scmp.lt.s32.totalorder %s9, 2
    // Predicated region
    $region21: #{forward.10} parent=5 // pred_check
      %p125 = pneg %p124
    $region22: #{forward.10} parent=5 // pred_check_branch
      %127 = sbr.rel (%p125) target = $region24
    $region23: #{forward.10} parent=5 // pred_region
      // Predicated region
      $region25: #{forward.10} parent=23 // pred_check
        %p128 = pneg %p29
      $region26: #{forward.10} parent=23 // pred_check_branch
        %130 = sbr.rel (%p128) target = $region28
      $region27: #{forward.10} parent=23 // pred_region
        %p131 = scmp.lt.s32.totalorder %s9, 1
        %s132 = scalar_select %p131, %s9, 1
        %s133 = smul.addr %s132, 32
        %s134 = smul.addr %s133, 8
        %s135 = scalar_lea.vmem %s0, %s134
      $region28: #{forward.10} parent=23 // pred_fallthru
        _
    $region24: #{forward.10} parent=5 // pred_fallthru
      _
    %p136 = scmp.le.s32.totalorder 1, %s9
    %p137 = scmp.lt.s32.totalorder %s9, 3
    %p138 = pnand %p136, %p137
    %p139 = pneg %p138
    // Predicated region
    $region29: #{forward.10} parent=5 // pred_check
      _
    $region30: #{forward.10} parent=5 // pred_check_branch
      %141 = sbr.rel (%p138) target = $region32
    $region31: #{forward.10} parent=5 // pred_region
      %s142 = ssub.s32 %s9, 1
      %p143 = scmp.lt.s32.totalorder %s14, 1
      %s144 = scalar_select %p143, %s14, 1
      %s145 = smul.addr %s144, 32
      %s146 = smul.addr %s145, 8
      %s147 = scalar_lea.vmem %s0, %s146
      %p148 = pneg %p35
      %p149 = pneg %p32
      %p150 = pneg %p56
      %p151 = pneg %p53
      %p152 = pneg %p77
      %p153 = pneg %p74
      %p154 = pneg %p103
      %p155 = pneg %p100
      %p156 = scmp.lt.s32.totalorder %s14, 1
      %s157 = scalar_select %p156, %s14, 1
      %s158 = smul.addr %s157, 16
      %s159 = smul.addr %s158, 8
      %s160 = scalar_lea.vmem %s3, %s159
      %p161 = scmp.lt.s32.totalorder %s14, 1
      %s162 = scalar_select %p161, %s14, 1
      %s163 = smul.addr %s162, 32
      %s164 = smul.addr %s163, 8
      %s165 = scalar_lea.vmem %s0, %s164
      %p166 = scmp.lt.s32.totalorder %s14, 1
      %s167 = scalar_select %p166, %s14, 1
      %s168 = smul.addr %s167, 16
      %s169 = smul.addr %s168, 8
      %s170 = scalar_lea.vmem %s3, %s169
      %v172 = vld [vmem:[%s165] sm:$0xff]
      %v173 = vld [vmem:[%s165 + $0x8] sm:$0xff]
      %v174 = vld [vmem:[%s165 + $0x10] sm:$0xff]
      %v175 = vld [vmem:[%s165 + $0x18] sm:$0xff]
      %v176 = vld [vmem:[%s165 + $0x20] sm:$0xff]
      %v177 = vld [vmem:[%s165 + $0x28] sm:$0xff]
      %v178 = vld [vmem:[%s165 + $0x30] sm:$0xff]
      %v179 = vld [vmem:[%s165 + $0x38] sm:$0xff]
      %v180 = vld [vmem:[%s165 + $0x40] sm:$0xff]
      %v181 = vld [vmem:[%s165 + $0x48] sm:$0xff]
      %v182 = vld [vmem:[%s165 + $0x50] sm:$0xff]
      %v183 = vld [vmem:[%s165 + $0x58] sm:$0xff]
      %v184 = vld [vmem:[%s165 + $0x60] sm:$0xff]
      %v185 = vld [vmem:[%s165 + $0x68] sm:$0xff]
      %v186 = vld [vmem:[%s165 + $0x70] sm:$0xff]
      %v187 = vld [vmem:[%s165 + $0x78] sm:$0xff]
      %v188 = vld [vmem:[%s165 + $0x80] sm:$0xff]
      %v189 = vld [vmem:[%s165 + $0x88] sm:$0xff]
      %v190 = vld [vmem:[%s165 + $0x90] sm:$0xff]
      %v191 = vld [vmem:[%s165 + $0x98] sm:$0xff]
      %v192 = vld [vmem:[%s165 + $0xa0] sm:$0xff]
      %v193 = vld [vmem:[%s165 + $0xa8] sm:$0xff]
      %v194 = vld [vmem:[%s165 + $0xb0] sm:$0xff]
      %v195 = vld [vmem:[%s165 + $0xb8] sm:$0xff]
      %v196 = vld [vmem:[%s165 + $0xc0] sm:$0x7]
      %v197 = vld [vmem:[%s165 + $0xc8] sm:$0x7]
      %v198 = vld [vmem:[%s165 + $0xd0] sm:$0x7]
      %v199 = vld [vmem:[%s165 + $0xd8] sm:$0x7]
      %v200 = vld [vmem:[%s165 + $0xe0] sm:$0x7]
      %v201 = vld [vmem:[%s165 + $0xe8] sm:$0x7]
      %v202 = vld [vmem:[%s165 + $0xf0] sm:$0x7]
      %v203 = vld [vmem:[%s165 + $0xf8] sm:$0x7]
      %v204 = vpack.c.bf16 %v180, %v172
      %v205 = vpack.c.bf16 %v181, %v173
      %v206 = vpack.c.bf16 %v182, %v174
      %v207 = vpack.c.bf16 %v183, %v175
      %v208 = vpack.c.bf16 %v184, %v176
      %v209 = vpack.c.bf16 %v185, %v177
      %v210 = vpack.c.bf16 %v186, %v178
      %v211 = vpack.c.bf16 %v187, %v179
      %v212 = vpack.c.bf16 %v196, %v188
      %v213 = vpack.c.bf16 %v197, %v189
      %v214 = vpack.c.bf16 %v198, %v190
      %v215 = vpack.c.bf16 %v199, %v191
      %v216 = vpack.c.bf16 %v200, %v192
      %v217 = vpack.c.bf16 %v201, %v193
      %v218 = vpack.c.bf16 %v202, %v194
      %v219 = vpack.c.bf16 %v203, %v195
      %v220 = vld [vmem:[%s1] sm:$0xf]
      %v221 = vld [vmem:[%s1 + $0x4] sm:$0xf]
      %v222 = vld [vmem:[%s2] sm:$0xff]
      %v223 = vld [vmem:[%s2 + $0x8] sm:$0xff]
      %225 = vset.pattern.permute.xlu0 0
      %226 = vperm.xlu0 %225, %v222
      %v227 = vpop.permute.xlu0 %226
      %230 = vset.pattern.permute.xlu0 0
      %231 = vperm.xlu0 %230, %v223
      %v232 = vpop.permute.xlu0 %231
      %v236 = vunpack.c.l.b16 %v220
      %v237 = vunpack.c.l.b16 %v221
      %v238 = vpack.c.b16 %v237, %v236
      %vm239 = vcmask 220160
      %v241 = vsel %vm239, %v238, 0
      %vm243 = vcmask 1044480
      %vm244 = vcmask 1045504
      %v245 = vsel %vm243, 4294967295, 65535
      %v246 = vsel %vm244, %v245, 0
      %v248 = vand.u32 %v212, %v246
      %v251 = vand.u32 %v213, %v246
      %v254 = vand.u32 %v214, %v246
      %v257 = vand.u32 %v215, %v246
      %v260 = vand.u32 %v216, %v246
      %v263 = vand.u32 %v217, %v246
      %v266 = vand.u32 %v218, %v246
      %v269 = vand.u32 %v219, %v246
      %271 = vmatprep.subr.bf16.mxu0 0
      %272 = vmatpush1.bf16.msra.mxu0 0
      %273 = vmatprep.subr.bf16.mxu0 0
      %274 = vmatpush1.bf16.msra.mxu0 0
      %275 = vmatprep.subr.bf16.mxu0 0
      %276 = vmatpush1.bf16.msra.mxu0 0
      %277 = vmatprep.subr.bf16.mxu0 0
      %278 = vmatpush1.bf16.msra.mxu0 0
      %279 = vmatprep.subr.bf16.mxu0 0
      %280 = vmatpush1.bf16.msra.mxu0 0
      %281 = vmatprep.subr.bf16.mxu0 0
      %282 = vmatpush1.bf16.msra.mxu0 0
      %283 = vmatprep.subr.bf16.mxu0 %v251
      %284 = vmatpush1.bf16.msra.mxu0 %v248
      %285 = vmatprep.subr.bf16.mxu0 %v205
      %286 = vmatpush1.bf16.msra.mxu0 %v204
      %287 = vmatprep.subr.bf16.mxu0 0
      %288 = vmatpush2.bf16.msra.mxu0 0
      %289 = vmatprep.subr.bf16.mxu0 0
      %290 = vmatpush2.bf16.msra.mxu0 0
      %291 = vmatprep.subr.bf16.mxu0 0
      %292 = vmatpush2.bf16.msra.mxu0 0
      %293 = vmatprep.subr.bf16.mxu0 0
      %294 = vmatpush2.bf16.msra.mxu0 0
      %295 = vmatprep.subr.bf16.mxu0 0
      %296 = vmatpush2.bf16.msra.mxu0 0
      %297 = vmatprep.subr.bf16.mxu0 0
      %298 = vmatpush2.bf16.msra.mxu0 0
      %299 = vmatprep.subr.bf16.mxu0 0
      %300 = vmatpush2.bf16.msra.mxu0 0
      %301 = vmatprep.subr.bf16.mxu0 0
      %302 = vmatpush2.bf16.msra.mxu0 0
      %303 = vmatprep.mubr.bf16.mxu0 0
      %304 = vmatmul.mubr.bf16.gmra.mxu0 %v241
      %v305 = vpop.f32.mrf.mxu0
      %v306 = vadd.f32 %v227, %v305
      %v307 = vpop.f32.mrf.mxu0
      %v308 = vadd.f32 %v227, %v307
      %v309 = vpop.f32.mrf.mxu0
      %v310 = vadd.f32 %v232, %v309
      %v311 = vpop.f32.mrf.mxu0
      %v312 = vadd.f32 %v232, %v311
      %313 = vdwg.mxu0
      %314 = vmatprep.subr.bf16.mxu0 0
      %315 = vmatpush1.bf16.msra.mxu0 0
      %316 = vmatprep.subr.bf16.mxu0 0
      %317 = vmatpush1.bf16.msra.mxu0 0
      %318 = vmatprep.subr.bf16.mxu0 0
      %319 = vmatpush1.bf16.msra.mxu0 0
      %320 = vmatprep.subr.bf16.mxu0 0
      %321 = vmatpush1.bf16.msra.mxu0 0
      %322 = vmatprep.subr.bf16.mxu0 0
      %323 = vmatpush1.bf16.msra.mxu0 0
      %324 = vmatprep.subr.bf16.mxu0 0
      %325 = vmatpush1.bf16.msra.mxu0 0
      %326 = vmatprep.subr.bf16.mxu0 %v257
      %327 = vmatpush1.bf16.msra.mxu0 %v254
      %328 = vmatprep.subr.bf16.mxu0 %v207
      %329 = vmatpush1.bf16.msra.mxu0 %v206
      %330 = vmatprep.subr.bf16.mxu0 0
      %331 = vmatpush2.bf16.msra.mxu0 0
      %332 = vmatprep.subr.bf16.mxu0 0
      %333 = vmatpush2.bf16.msra.mxu0 0
      %334 = vmatprep.subr.bf16.mxu0 0
      %335 = vmatpush2.bf16.msra.mxu0 0
      %336 = vmatprep.subr.bf16.mxu0 0
      %337 = vmatpush2.bf16.msra.mxu0 0
      %338 = vmatprep.subr.bf16.mxu0 0
      %339 = vmatpush2.bf16.msra.mxu0 0
      %340 = vmatprep.subr.bf16.mxu0 0
      %341 = vmatpush2.bf16.msra.mxu0 0
      %342 = vmatprep.subr.bf16.mxu0 0
      %343 = vmatpush2.bf16.msra.mxu0 0
      %344 = vmatprep.subr.bf16.mxu0 0
      %345 = vmatpush2.bf16.msra.mxu0 0
      %346 = vmatprep.mubr.bf16.mxu0 0
      %347 = vmatmul.mubr.bf16.gmra.mxu0 %v241
      %v348 = vpop.f32.mrf.mxu0
      %v349 = vadd.f32 %v227, %v348
      %v350 = vpop.f32.mrf.mxu0
      %v351 = vadd.f32 %v227, %v350
      %v352 = vpop.f32.mrf.mxu0
      %v353 = vadd.f32 %v232, %v352
      %v354 = vpop.f32.mrf.mxu0
      %v355 = vadd.f32 %v232, %v354
      %356 = vdwg.mxu0
      %357 = vmatprep.subr.bf16.mxu0 0
      %358 = vmatpush1.bf16.msra.mxu0 0
      %359 = vmatprep.subr.bf16.mxu0 0
      %360 = vmatpush1.bf16.msra.mxu0 0
      %361 = vmatprep.subr.bf16.mxu0 0
      %362 = vmatpush1.bf16.msra.mxu0 0
      %363 = vmatprep.subr.bf16.mxu0 0
      %364 = vmatpush1.bf16.msra.mxu0 0
      %365 = vmatprep.subr.bf16.mxu0 0
      %366 = vmatpush1.bf16.msra.mxu0 0
      %367 = vmatprep.subr.bf16.mxu0 0
      %368 = vmatpush1.bf16.msra.mxu0 0
      %369 = vmatprep.subr.bf16.mxu0 %v263
      %370 = vmatpush1.bf16.msra.mxu0 %v260
      %371 = vmatprep.subr.bf16.mxu0 %v209
      %372 = vmatpush1.bf16.msra.mxu0 %v208
      %373 = vmatprep.subr.bf16.mxu0 0
      %374 = vmatpush2.bf16.msra.mxu0 0
      %375 = vmatprep.subr.bf16.mxu0 0
      %376 = vmatpush2.bf16.msra.mxu0 0
      %377 = vmatprep.subr.bf16.mxu0 0
      %378 = vmatpush2.bf16.msra.mxu0 0
      %379 = vmatprep.subr.bf16.mxu0 0
      %380 = vmatpush2.bf16.msra.mxu0 0
      %381 = vmatprep.subr.bf16.mxu0 0
      %382 = vmatpush2.bf16.msra.mxu0 0
      %383 = vmatprep.subr.bf16.mxu0 0
      %384 = vmatpush2.bf16.msra.mxu0 0
      %385 = vmatprep.subr.bf16.mxu0 0
      %386 = vmatpush2.bf16.msra.mxu0 0
      %387 = vmatprep.subr.bf16.mxu0 0
      %388 = vmatpush2.bf16.msra.mxu0 0
      %389 = vmatprep.mubr.bf16.mxu0 0
      %390 = vmatmul.mubr.bf16.gmra.mxu0 %v241
      %v391 = vpop.f32.mrf.mxu0
      %v392 = vadd.f32 %v227, %v391
      %v393 = vpop.f32.mrf.mxu0
      %v394 = vadd.f32 %v227, %v393
      %v395 = vpop.f32.mrf.mxu0
      %v396 = vadd.f32 %v232, %v395
      %v397 = vpop.f32.mrf.mxu0
      %v398 = vadd.f32 %v232, %v397
      %399 = vdwg.mxu0
      %400 = vmatprep.subr.bf16.mxu0 0
      %401 = vmatpush1.bf16.msra.mxu0 0
      %402 = vmatprep.subr.bf16.mxu0 0
      %403 = vmatpush1.bf16.msra.mxu0 0
      %404 = vmatprep.subr.bf16.mxu0 0
      %405 = vmatpush1.bf16.msra.mxu0 0
      %406 = vmatprep.subr.bf16.mxu0 0
      %407 = vmatpush1.bf16.msra.mxu0 0
      %408 = vmatprep.subr.bf16.mxu0 0
      %409 = vmatpush1.bf16.msra.mxu0 0
      %410 = vmatprep.subr.bf16.mxu0 0
      %411 = vmatpush1.bf16.msra.mxu0 0
      %412 = vmatprep.subr.bf16.mxu0 %v269
      %413 = vmatpush1.bf16.msra.mxu0 %v266
      %414 = vmatprep.subr.bf16.mxu0 %v211
      %415 = vmatpush1.bf16.msra.mxu0 %v210
      %416 = vmatprep.subr.bf16.mxu0 0
      %417 = vmatpush2.bf16.msra.mxu0 0
      %418 = vmatprep.subr.bf16.mxu0 0
      %419 = vmatpush2.bf16.msra.mxu0 0
      %420 = vmatprep.subr.bf16.mxu0 0
      %421 = vmatpush2.bf16.msra.mxu0 0
      %422 = vmatprep.subr.bf16.mxu0 0
      %423 = vmatpush2.bf16.msra.mxu0 0
      %424 = vmatprep.subr.bf16.mxu0 0
      %425 = vmatpush2.bf16.msra.mxu0 0
      %426 = vmatprep.subr.bf16.mxu0 0
      %427 = vmatpush2.bf16.msra.mxu0 0
      %428 = vmatprep.subr.bf16.mxu0 0
      %429 = vmatpush2.bf16.msra.mxu0 0
      %430 = vmatprep.subr.bf16.mxu0 0
      %431 = vmatpush2.bf16.msra.mxu0 0
      %432 = vmatprep.mubr.bf16.mxu0 0
      %433 = vmatmul.mubr.bf16.gmra.mxu0 %v241
      %v434 = vpop.f32.mrf.mxu0
      %v435 = vadd.f32 %v227, %v434
      %v436 = vpop.f32.mrf.mxu0
      %v437 = vadd.f32 %v227, %v436
      %v438 = vpop.f32.mrf.mxu0
      %v439 = vadd.f32 %v232, %v438
      %v440 = vpop.f32.mrf.mxu0
      %v441 = vadd.f32 %v232, %v440
      %442 = vdwg.mxu0
      %v443 = vmax.f32 %v306, 0.0
      %v444 = vmax.f32 %v308, 0.0
      %v445 = vmax.f32 %v349, 0.0
      %v446 = vmax.f32 %v351, 0.0
      %v447 = vmax.f32 %v392, 0.0
      %v448 = vmax.f32 %v394, 0.0
      %v449 = vmax.f32 %v435, 0.0
      %v450 = vmax.f32 %v437, 0.0
      %v451 = vmax.f32 %v310, 0.0
      %v452 = vmax.f32 %v312, 0.0
      %v453 = vmax.f32 %v353, 0.0
      %v454 = vmax.f32 %v355, 0.0
      %v455 = vmax.f32 %v396, 0.0
      %v456 = vmax.f32 %v398, 0.0
      %v457 = vmax.f32 %v439, 0.0
      %v458 = vmax.f32 %v441, 0.0
      %459 = vst [vmem:[%s170] sm:$0xff] %v443
      %460 = vst [vmem:[%s170 + $0x8] sm:$0xff] %v444
      %461 = vst [vmem:[%s170 + $0x10] sm:$0xff] %v445
      %462 = vst [vmem:[%s170 + $0x18] sm:$0xff] %v446
      %463 = vst [vmem:[%s170 + $0x20] sm:$0xff] %v447
      %464 = vst [vmem:[%s170 + $0x28] sm:$0xff] %v448
      %465 = vst [vmem:[%s170 + $0x30] sm:$0xff] %v449
      %466 = vst [vmem:[%s170 + $0x38] sm:$0xff] %v450
      %467 = vst [vmem:[%s170 + $0x40] sm:$0xff] %v451
      %468 = vst [vmem:[%s170 + $0x48] sm:$0xff] %v452
      %469 = vst [vmem:[%s170 + $0x50] sm:$0xff] %v453
      %470 = vst [vmem:[%s170 + $0x58] sm:$0xff] %v454
      %471 = vst [vmem:[%s170 + $0x60] sm:$0xff] %v455
      %472 = vst [vmem:[%s170 + $0x68] sm:$0xff] %v456
      %473 = vst [vmem:[%s170 + $0x70] sm:$0xff] %v457
      %474 = vst [vmem:[%s170 + $0x78] sm:$0xff] %v458
      %p475 = scmp.lt.s32.totalorder %s14, 1
      %s476 = scalar_select %p475, %s14, 1
      %s477 = smul.addr %s476, 16
      %s478 = smul.addr %s477, 8
      %s479 = scalar_lea.vmem %s3, %s478
      // Predicated region
      $region33: #{forward.10} parent=31 // pred_check
        %p480 = pneg %p100
      $region34: #{forward.10} parent=31 // pred_check_branch
        %482 = sbr.rel (%p480) target = $region36
      $region35: #{forward.10} parent=31 // pred_region
        _
      $region36: #{forward.10} parent=31 // pred_fallthru
        _
    $region32: #{forward.10} parent=5 // pred_fallthru
      _
    %p483 = scmp.le.s32.totalorder 2, %s9
    // Predicated region
    $region37: #{forward.10} parent=5 // pred_check
      %p484 = pneg %p483
    $region38: #{forward.10} parent=5 // pred_check_branch
      %486 = sbr.rel (%p484) target = $region40
    $region39: #{forward.10} parent=5 // pred_region
      %s487 = ssub.s32 %s9, 2
      // Predicated region
      $region41: #{forward.10} parent=39 // pred_check
        %p488 = pneg %p106
      $region42: #{forward.10} parent=39 // pred_check_branch
        %490 = sbr.rel (%p488) target = $region44
      $region43: #{forward.10} parent=39 // pred_region
        %p491 = scmp.lt.s32.totalorder %s15, 1
        %s492 = scalar_select %p491, %s15, 1
        %s493 = smul.addr %s492, 16
        %s494 = smul.addr %s493, 8
        %s495 = scalar_lea.vmem %s3, %s494
      $region44: #{forward.10} parent=39 // pred_fallthru
        _
    $region40: #{forward.10} parent=5 // pred_fallthru
      _
  $region6: #{forward.10} parent=0 // loop_footer
    %s13 = sadd.s32 1, %s9
  $region7: #{forward.10} parent=0 // loop_footer_branch
    %8 = sbr.rel target = $region3
  $region8: #{forward.10} parent=0 // loop_exit
    _

// kernel: forward.11
$region0: #{forward.11}
  #allocation0 [shape = 'u32[]', space=smem, size = 0x4, offset = 0x4, fixed_abs, tag = 'smem constant byte address 0x4 - core index']
  #allocation1 [shape = 'u32[144,128]{1,0:T(1,128)}', space=vmem, size = 0x12000, scoped, tag = 'internal scratch']
  %s0 = inlined_call_operand.vmem [shape: f32[2,9,16,256], index: 0, kind: input, shape index: {}]
  %s1 = inlined_call_operand.vmem [shape: f32[16,9], index: 1, kind: input, shape index: {}]
  %s2 = inlined_call_operand.vmem [shape: f32[16,1], index: 2, kind: input, shape index: {}]
  %s3 = inlined_call_operand.vmem [shape: bf16[32,16], index: 3, kind: input, shape index: {}]
  %s4 = inlined_call_operand.vmem [shape: f32[32,1], index: 4, kind: input, shape index: {}]
  %s5 = inlined_call_operand.vmem [shape: f32[2,32,256], index: 5, kind: output, shape index: {}]
  %s6 = sld [smem:[#allocation0]]
  $region53: #{forward.11} parent=0
    _
  %s8 = ssub.s32 1, %s6
  %s9 = scalar_select 0, %s8, %s6
  loop: start=0, step=1, limit=4
  $region2: #{forward.11} parent=0 // loop_pre_header
    _
  $region3: #{forward.11} parent=0 // loop_header
    %s11 = sphi 0, %s15
    %p12 = scmp.ge.s32.totalorder %s11, 4
    %s21 = sphi 0, %s23
    %s24 = sphi 0, %s21
    %s25 = sphi 0, %s24
    %s41 = sphi 0, %s25
    %s45 = sphi 0, %s45
    %s47 = sphi 0, %s45
    %s48 = sphi 0, %s47
    %s62 = sphi 0, %s48
    %s66 = sphi 0, %s66
    %s68 = sphi 0, %s66
    %s69 = sphi 0, %s68
    %s83 = sphi 0, %s69
    %s87 = sphi 0, %s87
    %s89 = sphi 0, %s87
    %s90 = sphi 0, %s89
    %s104 = sphi 0, %s90
    %s108 = sphi 0, %s108
    %s110 = sphi 0, %s108
    %s111 = sphi 0, %s110
    %s125 = sphi 0, %s111
    %s131 = sphi 0, %s133
    %s134 = sphi 0, %s131
    %s135 = sphi 0, %s134
    %s151 = sphi 0, %s135
  $region4: #{forward.11} parent=0 // loop_header_branch
    %14 = sbr.rel (%p12) target = $region8
  $region5: #{forward.11} parent=0 // loop_body
    %s16 = ssub.s32 %s11, 1
    %s17 = ssub.s32 %s11, 2
    %s18 = sadd.s32 %s11, 1
    %s19 = ssub.s32 %s11, %s18
    %p20 = scmp.eq.s32.totalorder %s19, 0
    %s22 = sadd.s32 %s21, 1
    %s23 = scalar_select %p20, %s21, %s22
    %p26 = pneg %p20
    %p27 = scmp.eq.s32.totalorder %s11, 1
    %p28 = por %p26, %p27
    %p29 = scmp.ne.s32.totalorder %s21, %s24
    %p30 = scmp.eq.s32.totalorder %s11, 0
    %p31 = por %p29, %p30
    %p32 = scmp.ne.s32.totalorder %s21, %s24
    %p33 = scmp.eq.s32.totalorder %s16, 1
    %p34 = por %p32, %p33
    %p35 = scmp.ne.s32.totalorder %s24, %s25
    %p36 = scmp.eq.s32.totalorder %s16, 0
    %p37 = por %p35, %p36
    %p38 = scmp.ne.s32.totalorder %s24, %s25
    %p39 = scmp.eq.s32.totalorder %s17, 1
    %p40 = por %p38, %p39
    %p42 = scmp.ne.s32.totalorder %s25, %s41
    %p43 = scmp.eq.s32.totalorder %s17, 0
    %p44 = por %p42, %p43
    %s46 = sadd.s32 %s45, 1
    %p49 = scmp.eq.s32.totalorder %s11, 1
    %p50 = scmp.ne.s32.totalorder %s45, %s47
    %p51 = scmp.eq.s32.totalorder %s11, 0
    %p52 = por %p50, %p51
    %p53 = scmp.ne.s32.totalorder %s45, %s47
    %p54 = scmp.eq.s32.totalorder %s16, 1
    %p55 = por %p53, %p54
    %p56 = scmp.ne.s32.totalorder %s47, %s48
    %p57 = scmp.eq.s32.totalorder %s16, 0
    %p58 = por %p56, %p57
    %p59 = scmp.ne.s32.totalorder %s47, %s48
    %p60 = scmp.eq.s32.totalorder %s17, 1
    %p61 = por %p59, %p60
    %p63 = scmp.ne.s32.totalorder %s48, %s62
    %p64 = scmp.eq.s32.totalorder %s17, 0
    %p65 = por %p63, %p64
    %s67 = sadd.s32 %s66, 1
    %p70 = scmp.eq.s32.totalorder %s11, 1
    %p71 = scmp.ne.s32.totalorder %s66, %s68
    %p72 = scmp.eq.s32.totalorder %s11, 0
    %p73 = por %p71, %p72
    %p74 = scmp.ne.s32.totalorder %s66, %s68
    %p75 = scmp.eq.s32.totalorder %s16, 1
    %p76 = por %p74, %p75
    %p77 = scmp.ne.s32.totalorder %s68, %s69
    %p78 = scmp.eq.s32.totalorder %s16, 0
    %p79 = por %p77, %p78
    %p80 = scmp.ne.s32.totalorder %s68, %s69
    %p81 = scmp.eq.s32.totalorder %s17, 1
    %p82 = por %p80, %p81
    %p84 = scmp.ne.s32.totalorder %s69, %s83
    %p85 = scmp.eq.s32.totalorder %s17, 0
    %p86 = por %p84, %p85
    %s88 = sadd.s32 %s87, 1
    %p91 = scmp.eq.s32.totalorder %s11, 1
    %p92 = scmp.ne.s32.totalorder %s87, %s89
    %p93 = scmp.eq.s32.totalorder %s11, 0
    %p94 = por %p92, %p93
    %p95 = scmp.ne.s32.totalorder %s87, %s89
    %p96 = scmp.eq.s32.totalorder %s16, 1
    %p97 = por %p95, %p96
    %p98 = scmp.ne.s32.totalorder %s89, %s90
    %p99 = scmp.eq.s32.totalorder %s16, 0
    %p100 = por %p98, %p99
    %p101 = scmp.ne.s32.totalorder %s89, %s90
    %p102 = scmp.eq.s32.totalorder %s17, 1
    %p103 = por %p101, %p102
    %p105 = scmp.ne.s32.totalorder %s90, %s104
    %p106 = scmp.eq.s32.totalorder %s17, 0
    %p107 = por %p105, %p106
    %s109 = sadd.s32 %s108, 1
    %p112 = scmp.eq.s32.totalorder %s11, 1
    %p113 = scmp.ne.s32.totalorder %s108, %s110
    %p114 = scmp.eq.s32.totalorder %s11, 0
    %p115 = por %p113, %p114
    %p116 = scmp.ne.s32.totalorder %s108, %s110
    %p117 = scmp.eq.s32.totalorder %s16, 1
    %p118 = por %p116, %p117
    %p119 = scmp.ne.s32.totalorder %s110, %s111
    %p120 = scmp.eq.s32.totalorder %s16, 0
    %p121 = por %p119, %p120
    %p122 = scmp.ne.s32.totalorder %s110, %s111
    %p123 = scmp.eq.s32.totalorder %s17, 1
    %p124 = por %p122, %p123
    %p126 = scmp.ne.s32.totalorder %s111, %s125
    %p127 = scmp.eq.s32.totalorder %s17, 0
    %p128 = por %p126, %p127
    %s129 = ssub.s32 %s11, %s18
    %p130 = scmp.eq.s32.totalorder %s129, 0
    %s132 = sadd.s32 %s131, 1
    %s133 = scalar_select %p130, %s131, %s132
    %p136 = pneg %p130
    %p137 = scmp.eq.s32.totalorder %s11, 1
    %p138 = por %p136, %p137
    %p139 = scmp.ne.s32.totalorder %s131, %s134
    %p140 = scmp.eq.s32.totalorder %s11, 0
    %p141 = por %p139, %p140
    %p142 = scmp.ne.s32.totalorder %s131, %s134
    %p143 = scmp.eq.s32.totalorder %s16, 1
    %p144 = por %p142, %p143
    %p145 = scmp.ne.s32.totalorder %s134, %s135
    %p146 = scmp.eq.s32.totalorder %s16, 0
    %p147 = por %p145, %p146
    %p148 = scmp.ne.s32.totalorder %s134, %s135
    %p149 = scmp.eq.s32.totalorder %s17, 1
    %p150 = por %p148, %p149
    %p152 = scmp.ne.s32.totalorder %s135, %s151
    %p153 = scmp.eq.s32.totalorder %s17, 0
    %p154 = por %p152, %p153
    %p155 = scmp.le.s32.totalorder 1, %s11
    %p156 = scmp.lt.s32.totalorder %s11, 3
    %p157 = pnand %p155, %p156
    %p158 = pneg %p157
    // Predicated region
    $region9: #{forward.11} parent=5 // pred_check
      _
    $region10: #{forward.11} parent=5 // pred_check_branch
      %160 = sbr.rel (%p157) target = $region12
    $region11: #{forward.11} parent=5 // pred_region
      %s161 = ssub.s32 %s11, 1
      // Predicated region
      $region13: #{forward.11} parent=11 // pred_check
        %p162 = pneg %p58
      $region14: #{forward.11} parent=11 // pred_check_branch
        %164 = sbr.rel (%p162) target = $region16
      $region15: #{forward.11} parent=11 // pred_region
        _
      $region16: #{forward.11} parent=11 // pred_fallthru
        _
      // Predicated region
      $region17: #{forward.11} parent=11 // pred_check
        %p165 = pneg %p79
      $region18: #{forward.11} parent=11 // pred_check_branch
        %167 = sbr.rel (%p165) target = $region20
      $region19: #{forward.11} parent=11 // pred_region
        _
      $region20: #{forward.11} parent=11 // pred_fallthru
        _
      // Predicated region
      $region21: #{forward.11} parent=11 // pred_check
        %p168 = pneg %p100
      $region22: #{forward.11} parent=11 // pred_check_branch
        %170 = sbr.rel (%p168) target = $region24
      $region23: #{forward.11} parent=11 // pred_region
        _
      $region24: #{forward.11} parent=11 // pred_fallthru
        _
      // Predicated region
      $region25: #{forward.11} parent=11 // pred_check
        %p171 = pneg %p121
      $region26: #{forward.11} parent=11 // pred_check_branch
        %173 = sbr.rel (%p171) target = $region28
      $region27: #{forward.11} parent=11 // pred_region
        _
      $region28: #{forward.11} parent=11 // pred_fallthru
        _
    $region12: #{forward.11} parent=5 // pred_fallthru
      _
    %p174 = scmp.lt.s32.totalorder %s11, 2
    // Predicated region
    $region29: #{forward.11} parent=5 // pred_check
      %p175 = pneg %p174
    $region30: #{forward.11} parent=5 // pred_check_branch
      %177 = sbr.rel (%p175) target = $region32
    $region31: #{forward.11} parent=5 // pred_region
      // Predicated region
      $region33: #{forward.11} parent=31 // pred_check
        %p178 = pneg %p31
      $region34: #{forward.11} parent=31 // pred_check_branch
        %180 = sbr.rel (%p178) target = $region36
      $region35: #{forward.11} parent=31 // pred_region
        %p181 = scmp.lt.s32.totalorder %s11, 1
        %s182 = scalar_select %p181, %s11, 1
        %s183 = smul.addr %s182, 36
        %s184 = smul.addr %s183, 8
        %s185 = scalar_lea.vmem %s0, %s184
      $region36: #{forward.11} parent=31 // pred_fallthru
        _
    $region32: #{forward.11} parent=5 // pred_fallthru
      _
    %p186 = scmp.le.s32.totalorder 1, %s11
    %p187 = scmp.lt.s32.totalorder %s11, 3
    %p188 = pnand %p186, %p187
    %p189 = pneg %p188
    // Predicated region
    $region37: #{forward.11} parent=5 // pred_check
      _
    $region38: #{forward.11} parent=5 // pred_check_branch
      %191 = sbr.rel (%p188) target = $region40
    $region39: #{forward.11} parent=5 // pred_region
      %s192 = ssub.s32 %s11, 1
      %p193 = scmp.lt.s32.totalorder %s16, 1
      %s194 = scalar_select %p193, %s16, 1
      %s195 = smul.addr %s194, 36
      %s196 = smul.addr %s195, 8
      %s197 = scalar_lea.vmem %s0, %s196
      %p198 = pneg %p37
      %p199 = pneg %p34
      %p200 = pneg %p58
      %p201 = pneg %p55
      %p202 = pneg %p79
      %p203 = pneg %p76
      %p204 = pneg %p100
      %p205 = pneg %p97
      %p206 = pneg %p121
      %p207 = pneg %p118
      %p208 = pneg %p147
      %p209 = pneg %p144
      %p210 = scmp.lt.s32.totalorder %s16, 1
      %s211 = scalar_select %p210, %s16, 1
      %s212 = smul.addr %s211, 8
      %s213 = smul.addr %s212, 8
      %s214 = scalar_lea.vmem %s5, %s213
      %p215 = scmp.lt.s32.totalorder %s16, 1
      %s216 = scalar_select %p215, %s16, 1
      %s217 = smul.addr %s216, 36
      %s218 = smul.addr %s217, 8
      %s219 = scalar_lea.vmem %s0, %s218
      %p220 = scmp.lt.s32.totalorder %s16, 1
      %s221 = scalar_select %p220, %s16, 1
      %s222 = smul.addr %s221, 8
      %s223 = smul.addr %s222, 8
      %s224 = scalar_lea.vmem %s5, %s223
      %v226 = vld [vmem:[%s1] sm:$0xff]
      %v227 = vld [vmem:[%s1 + $0x8] sm:$0xff]
      %v228 = vld [vmem:[%s219] sm:$0xff]
      %v229 = vld [vmem:[%s219 + $0x8] sm:$0xff]
      %v230 = vld [vmem:[%s219 + $0x10] sm:$0xff]
      %v231 = vld [vmem:[%s219 + $0x18] sm:$0xff]
      %233 = vset.pattern.permute.xlu0 0
      %234 = vperm.xlu0 %233, %v226
      %v235 = vpop.permute.xlu0 %234
      %238 = vset.pattern.permute.xlu0 0
      %239 = vperm.xlu0 %238, %v227
      %v240 = vpop.permute.xlu0 %239
      %v242 = vmul.f32 %v228, %v235
      %v243 = vmul.f32 %v229, %v235
      %v244 = vmul.f32 %v230, %v240
      %v245 = vmul.f32 %v231, %v240
      %s246 = scalar_lea.vmem %s219, 32
      %v247 = vld [vmem:[%s246] sm:$0xff]
      %v248 = vld [vmem:[%s246 + $0x8] sm:$0xff]
      %v249 = vld [vmem:[%s246 + $0x10] sm:$0xff]
      %v250 = vld [vmem:[%s246 + $0x18] sm:$0xff]
      %251 = vset.pattern.permute.xlu0 1
      %252 = vperm.xlu0 %251, %v226
      %v253 = vpop.permute.xlu0 %252
      %255 = vset.pattern.permute.xlu0 1
      %256 = vperm.xlu0 %255, %v227
      %v257 = vpop.permute.xlu0 %256
      %v259 = vmul.f32 %v247, %v253
      %v260 = vmul.f32 %v248, %v253
      %v261 = vmul.f32 %v249, %v257
      %v262 = vmul.f32 %v250, %v257
      %v263 = vadd.f32 %v242, %v259
      %v264 = vadd.f32 %v243, %v260
      %v265 = vadd.f32 %v244, %v261
      %v266 = vadd.f32 %v245, %v262
      %s267 = scalar_lea.vmem %s219, 64
      %v268 = vld [vmem:[%s267] sm:$0xff]
      %v269 = vld [vmem:[%s267 + $0x8] sm:$0xff]
      %v270 = vld [vmem:[%s267 + $0x10] sm:$0xff]
      %v271 = vld [vmem:[%s267 + $0x18] sm:$0xff]
      %272 = vset.pattern.permute.xlu0 2
      %273 = vperm.xlu0 %272, %v226
      %v274 = vpop.permute.xlu0 %273
      %276 = vset.pattern.permute.xlu0 2
      %277 = vperm.xlu0 %276, %v227
      %v278 = vpop.permute.xlu0 %277
      %v280 = vmul.f32 %v268, %v274
      %v281 = vmul.f32 %v269, %v274
      %v282 = vmul.f32 %v270, %v278
      %v283 = vmul.f32 %v271, %v278
      %v284 = vadd.f32 %v263, %v280
      %v285 = vadd.f32 %v264, %v281
      %v286 = vadd.f32 %v265, %v282
      %v287 = vadd.f32 %v266, %v283
      %s288 = scalar_lea.vmem %s219, 96
      %v289 = vld [vmem:[%s288] sm:$0xff]
      %v290 = vld [vmem:[%s288 + $0x8] sm:$0xff]
      %v291 = vld [vmem:[%s288 + $0x10] sm:$0xff]
      %v292 = vld [vmem:[%s288 + $0x18] sm:$0xff]
      %293 = vset.pattern.permute.xlu0 3
      %294 = vperm.xlu0 %293, %v226
      %v295 = vpop.permute.xlu0 %294
      %297 = vset.pattern.permute.xlu0 3
      %298 = vperm.xlu0 %297, %v227
      %v299 = vpop.permute.xlu0 %298
      %v301 = vmul.f32 %v289, %v295
      %v302 = vmul.f32 %v290, %v295
      %v303 = vmul.f32 %v291, %v299
      %v304 = vmul.f32 %v292, %v299
      %v305 = vadd.f32 %v284, %v301
      %v306 = vadd.f32 %v285, %v302
      %v307 = vadd.f32 %v286, %v303
      %v308 = vadd.f32 %v287, %v304
      %s309 = scalar_lea.vmem %s219, 128
      %v310 = vld [vmem:[%s309] sm:$0xff]
      %v311 = vld [vmem:[%s309 + $0x8] sm:$0xff]
      %v312 = vld [vmem:[%s309 + $0x10] sm:$0xff]
      %v313 = vld [vmem:[%s309 + $0x18] sm:$0xff]
      %314 = vset.pattern.permute.xlu0 4
      %315 = vperm.xlu0 %314, %v226
      %v316 = vpop.permute.xlu0 %315
      %318 = vset.pattern.permute.xlu0 4
      %319 = vperm.xlu0 %318, %v227
      %v320 = vpop.permute.xlu0 %319
      %v322 = vmul.f32 %v310, %v316
      %v323 = vmul.f32 %v311, %v316
      %v324 = vmul.f32 %v312, %v320
      %v325 = vmul.f32 %v313, %v320
      %v326 = vadd.f32 %v305, %v322
      %v327 = vadd.f32 %v306, %v323
      %v328 = vadd.f32 %v307, %v324
      %v329 = vadd.f32 %v308, %v325
      %s330 = scalar_lea.vmem %s219, 160
      %v331 = vld [vmem:[%s330] sm:$0xff]
      %v332 = vld [vmem:[%s330 + $0x8] sm:$0xff]
      %v333 = vld [vmem:[%s330 + $0x10] sm:$0xff]
      %v334 = vld [vmem:[%s330 + $0x18] sm:$0xff]
      %335 = vset.pattern.permute.xlu0 5
      %336 = vperm.xlu0 %335, %v226
      %v337 = vpop.permute.xlu0 %336
      %339 = vset.pattern.permute.xlu0 5
      %340 = vperm.xlu0 %339, %v227
      %v341 = vpop.permute.xlu0 %340
      %v343 = vmul.f32 %v331, %v337
      %v344 = vmul.f32 %v332, %v337
      %v345 = vmul.f32 %v333, %v341
      %v346 = vmul.f32 %v334, %v341
      %v347 = vadd.f32 %v326, %v343
      %v348 = vadd.f32 %v327, %v344
      %v349 = vadd.f32 %v328, %v345
      %v350 = vadd.f32 %v329, %v346
      %s351 = scalar_lea.vmem %s219, 192
      %v352 = vld [vmem:[%s351] sm:$0xff]
      %v353 = vld [vmem:[%s351 + $0x8] sm:$0xff]
      %v354 = vld [vmem:[%s351 + $0x10] sm:$0xff]
      %v355 = vld [vmem:[%s351 + $0x18] sm:$0xff]
      %356 = vset.pattern.permute.xlu0 6
      %357 = vperm.xlu0 %356, %v226
      %v358 = vpop.permute.xlu0 %357
      %360 = vset.pattern.permute.xlu0 6
      %361 = vperm.xlu0 %360, %v227
      %v362 = vpop.permute.xlu0 %361
      %v364 = vmul.f32 %v352, %v358
      %v365 = vmul.f32 %v353, %v358
      %v366 = vmul.f32 %v354, %v362
      %v367 = vmul.f32 %v355, %v362
      %v368 = vadd.f32 %v347, %v364
      %v369 = vadd.f32 %v348, %v365
      %v370 = vadd.f32 %v349, %v366
      %v371 = vadd.f32 %v350, %v367
      %s372 = scalar_lea.vmem %s219, 224
      %v373 = vld [vmem:[%s372] sm:$0xff]
      %v374 = vld [vmem:[%s372 + $0x8] sm:$0xff]
      %v375 = vld [vmem:[%s372 + $0x10] sm:$0xff]
      %v376 = vld [vmem:[%s372 + $0x18] sm:$0xff]
      %377 = vset.pattern.permute.xlu0 7
      %378 = vperm.xlu0 %377, %v226
      %v379 = vpop.permute.xlu0 %378
      %381 = vset.pattern.permute.xlu0 7
      %382 = vperm.xlu0 %381, %v227
      %v383 = vpop.permute.xlu0 %382
      %v385 = vmul.f32 %v373, %v379
      %v386 = vmul.f32 %v374, %v379
      %v387 = vmul.f32 %v375, %v383
      %v388 = vmul.f32 %v376, %v383
      %v389 = vadd.f32 %v368, %v385
      %v390 = vadd.f32 %v369, %v386
      %v391 = vadd.f32 %v370, %v387
      %v392 = vadd.f32 %v371, %v388
      %s393 = scalar_lea.vmem %s219, 256
      %v394 = vld [vmem:[%s393] sm:$0xff]
      %v395 = vld [vmem:[%s393 + $0x8] sm:$0xff]
      %v396 = vld [vmem:[%s393 + $0x10] sm:$0xff]
      %v397 = vld [vmem:[%s393 + $0x18] sm:$0xff]
      %398 = vset.pattern.permute.xlu0 8
      %399 = vperm.xlu0 %398, %v226
      %v400 = vpop.permute.xlu0 %399
      %402 = vset.pattern.permute.xlu0 8
      %403 = vperm.xlu0 %402, %v227
      %v404 = vpop.permute.xlu0 %403
      %v406 = vmul.f32 %v394, %v400
      %v407 = vmul.f32 %v395, %v400
      %v408 = vmul.f32 %v396, %v404
      %v409 = vmul.f32 %v397, %v404
      %v410 = vadd.f32 %v389, %v406
      %v411 = vadd.f32 %v390, %v407
      %v412 = vadd.f32 %v391, %v408
      %v413 = vadd.f32 %v392, %v409
      %v414 = vld [vmem:[%s2] sm:$0xff]
      %v415 = vld [vmem:[%s2 + $0x8] sm:$0xff]
      %417 = vset.pattern.permute.xlu0 0
      %418 = vperm.xlu0 %417, %v414
      %v419 = vpop.permute.xlu0 %418
      %422 = vset.pattern.permute.xlu0 0
      %423 = vperm.xlu0 %422, %v415
      %v424 = vpop.permute.xlu0 %423
      %v426 = vadd.f32 %v410, %v419
      %v427 = vadd.f32 %v411, %v419
      %v428 = vadd.f32 %v412, %v424
      %v429 = vadd.f32 %v413, %v424
      %v430 = vmax.f32 %v426, 0.0
      %v431 = vmax.f32 %v427, 0.0
      %v432 = vmax.f32 %v428, 0.0
      %v433 = vmax.f32 %v429, 0.0
      %v434 = vld [vmem:[%s3] sm:$0xf]
      %v435 = vld [vmem:[%s3 + $0x4] sm:$0xf]
      %v436 = vld [vmem:[%s3 + $0x8] sm:$0xf]
      %v437 = vld [vmem:[%s3 + $0xc] sm:$0xf]
      %v438 = vpack.c.bf16 %v432, %v430
      %v439 = vpack.c.bf16 %v433, %v431
      %v440 = vld [vmem:[%s4] sm:$0xff]
      %v441 = vld [vmem:[%s4 + $0x8] sm:$0xff]
      %v442 = vld [vmem:[%s4 + $0x10] sm:$0xff]
      %v443 = vld [vmem:[%s4 + $0x18] sm:$0xff]
      %445 = vset.pattern.permute.xlu0 0
      %446 = vperm.xlu0 %445, %v440
      %v447 = vpop.permute.xlu0 %446
      %450 = vset.pattern.permute.xlu0 0
      %451 = vperm.xlu0 %450, %v441
      %v452 = vpop.permute.xlu0 %451
      %455 = vset.pattern.permute.xlu0 0
      %456 = vperm.xlu0 %455, %v442
      %v457 = vpop.permute.xlu0 %456
      %460 = vset.pattern.permute.xlu0 0
      %461 = vperm.xlu0 %460, %v443
      %v462 = vpop.permute.xlu0 %461
      %v468 = vunpack.c.l.b16 %v434
      %v469 = vunpack.c.l.b16 %v435
      %v470 = vunpack.c.l.b16 %v436
      %v471 = vunpack.c.l.b16 %v437
      %v472 = vpack.c.b16 %v469, %v468
      %v473 = vpack.c.b16 %v471, %v470
      %vm474 = vcmask 130048
      %v476 = vsel %vm474, %v472, 0
      %v479 = vsel %vm474, %v473, 0
      %481 = vmatprep.subr.bf16.mxu0 0
      %482 = vmatpush1.bf16.msra.mxu0 0
      %483 = vmatprep.subr.bf16.mxu0 0
      %484 = vmatpush1.bf16.msra.mxu0 0
      %485 = vmatprep.subr.bf16.mxu0 0
      %486 = vmatpush1.bf16.msra.mxu0 0
      %487 = vmatprep.subr.bf16.mxu0 0
      %488 = vmatpush1.bf16.msra.mxu0 0
      %489 = vmatprep.subr.bf16.mxu0 0
      %490 = vmatpush1.bf16.msra.mxu0 0
      %491 = vmatprep.subr.bf16.mxu0 0
      %492 = vmatpush1.bf16.msra.mxu0 0
      %493 = vmatprep.subr.bf16.mxu0 0
      %494 = vmatpush1.bf16.msra.mxu0 0
      %495 = vmatprep.subr.bf16.mxu0 %v439
      %496 = vmatpush1.bf16.msra.mxu0 %v438
      %497 = vmatprep.subr.bf16.mxu0 0
      %498 = vmatpush2.bf16.msra.mxu0 0
      %499 = vmatprep.subr.bf16.mxu0 0
      %500 = vmatpush2.bf16.msra.mxu0 0
      %501 = vmatprep.subr.bf16.mxu0 0
      %502 = vmatpush2.bf16.msra.mxu0 0
      %503 = vmatprep.subr.bf16.mxu0 0
      %504 = vmatpush2.bf16.msra.mxu0 0
      %505 = vmatprep.subr.bf16.mxu0 0
      %506 = vmatpush2.bf16.msra.mxu0 0
      %507 = vmatprep.subr.bf16.mxu0 0
      %508 = vmatpush2.bf16.msra.mxu0 0
      %509 = vmatprep.subr.bf16.mxu0 0
      %510 = vmatpush2.bf16.msra.mxu0 0
      %511 = vmatprep.subr.bf16.mxu0 0
      %512 = vmatpush2.bf16.msra.mxu0 0
      %513 = vmatprep.mubr.bf16.mxu0 0
      %514 = vmatmul.mubr.bf16.gmra.mxu0 %v476
      %v515 = vpop.f32.mrf.mxu0
      %v516 = vadd.f32 %v447, %v515
      %v517 = vpop.f32.mrf.mxu0
      %v518 = vadd.f32 %v447, %v517
      %v519 = vpop.f32.mrf.mxu0
      %v520 = vadd.f32 %v452, %v519
      %v521 = vpop.f32.mrf.mxu0
      %v522 = vadd.f32 %v452, %v521
      %523 = vmatprep.mubr.bf16.mxu0 0
      %524 = vmatmul.mubr.bf16.gmra.mxu0 %v479
      %v525 = vpop.f32.mrf.mxu0
      %v526 = vadd.f32 %v457, %v525
      %v527 = vpop.f32.mrf.mxu0
      %v528 = vadd.f32 %v457, %v527
      %v529 = vpop.f32.mrf.mxu0
      %v530 = vadd.f32 %v462, %v529
      %v531 = vpop.f32.mrf.mxu0
      %v532 = vadd.f32 %v462, %v531
      %533 = vdwg.mxu0
      %v534 = vmax.f32 %v516, 0.0
      %v535 = vmax.f32 %v518, 0.0
      %v536 = vmax.f32 %v520, 0.0
      %v537 = vmax.f32 %v522, 0.0
      %v538 = vmax.f32 %v526, 0.0
      %v539 = vmax.f32 %v528, 0.0
      %v540 = vmax.f32 %v530, 0.0
      %v541 = vmax.f32 %v532, 0.0
      %542 = vst [vmem:[%s224] sm:$0xff] %v534
      %543 = vst [vmem:[%s224 + $0x8] sm:$0xff] %v535
      %544 = vst [vmem:[%s224 + $0x10] sm:$0xff] %v536
      %545 = vst [vmem:[%s224 + $0x18] sm:$0xff] %v537
      %546 = vst [vmem:[%s224 + $0x20] sm:$0xff] %v538
      %547 = vst [vmem:[%s224 + $0x28] sm:$0xff] %v539
      %548 = vst [vmem:[%s224 + $0x30] sm:$0xff] %v540
      %549 = vst [vmem:[%s224 + $0x38] sm:$0xff] %v541
      %p550 = scmp.lt.s32.totalorder %s16, 1
      %s551 = scalar_select %p550, %s16, 1
      %s552 = smul.addr %s551, 8
      %s553 = smul.addr %s552, 8
      %s554 = scalar_lea.vmem %s5, %s553
      // Predicated region
      $region41: #{forward.11} parent=39 // pred_check
        %p555 = pneg %p144
      $region42: #{forward.11} parent=39 // pred_check_branch
        %557 = sbr.rel (%p555) target = $region44
      $region43: #{forward.11} parent=39 // pred_region
        _
      $region44: #{forward.11} parent=39 // pred_fallthru
        _
    $region40: #{forward.11} parent=5 // pred_fallthru
      _
    %p558 = scmp.le.s32.totalorder 2, %s11
    // Predicated region
    $region45: #{forward.11} parent=5 // pred_check
      %p559 = pneg %p558
    $region46: #{forward.11} parent=5 // pred_check_branch
      %561 = sbr.rel (%p559) target = $region48
    $region47: #{forward.11} parent=5 // pred_region
      %s562 = ssub.s32 %s11, 2
      // Predicated region
      $region49: #{forward.11} parent=47 // pred_check
        %p563 = pneg %p150
      $region50: #{forward.11} parent=47 // pred_check_branch
        %565 = sbr.rel (%p563) target = $region52
      $region51: #{forward.11} parent=47 // pred_region
        %p566 = scmp.lt.s32.totalorder %s17, 1
        %s567 = scalar_select %p566, %s17, 1
        %s568 = smul.addr %s567, 8
        %s569 = smul.addr %s568, 8
        %s570 = scalar_lea.vmem %s5, %s569
      $region52: #{forward.11} parent=47 // pred_fallthru
        _
    $region48: #{forward.11} parent=5 // pred_fallthru
      _
  $region6: #{forward.11} parent=0 // loop_footer
    %s15 = sadd.s32 1, %s11
  $region7: #{forward.11} parent=0 // loop_footer_branch
    %10 = sbr.rel target = $region3
  $region8: #{forward.11} parent=0 // loop_exit
    _

// kernel: forward.12
$region0: #{forward.12}
  #allocation0 [shape = 'u32[]', space=smem, size = 0x4, offset = 0x4, fixed_abs, tag = 'smem constant byte address 0x4 - core index']
  #allocation1 [shape = 'u32[144,128]{1,0:T(1,128)}', space=vmem, size = 0x12000, scoped, tag = 'internal scratch']
  %s0 = inlined_call_operand.vmem [shape: f32[2,9,32,64], index: 0, kind: input, shape index: {}]
  %s1 = inlined_call_operand.vmem [shape: f32[32,9], index: 1, kind: input, shape index: {}]
  %s2 = inlined_call_operand.vmem [shape: f32[32,1], index: 2, kind: input, shape index: {}]
  %s3 = inlined_call_operand.vmem [shape: bf16[64,32], index: 3, kind: input, shape index: {}]
  %s4 = inlined_call_operand.vmem [shape: f32[64,1], index: 4, kind: input, shape index: {}]
  %s5 = inlined_call_operand.vmem [shape: f32[2,64,64], index: 5, kind: output, shape index: {}]
  %s6 = sld [smem:[#allocation0]]
  $region53: #{forward.12} parent=0
    _
  %s8 = ssub.s32 1, %s6
  %s9 = scalar_select 0, %s8, %s6
  loop: start=0, step=1, limit=4
  $region2: #{forward.12} parent=0 // loop_pre_header
    _
  $region3: #{forward.12} parent=0 // loop_header
    %s11 = sphi 0, %s15
    %p12 = scmp.ge.s32.totalorder %s11, 4
    %s21 = sphi 0, %s23
    %s24 = sphi 0, %s21
    %s25 = sphi 0, %s24
    %s41 = sphi 0, %s25
    %s45 = sphi 0, %s45
    %s47 = sphi 0, %s45
    %s48 = sphi 0, %s47
    %s62 = sphi 0, %s48
    %s66 = sphi 0, %s66
    %s68 = sphi 0, %s66
    %s69 = sphi 0, %s68
    %s83 = sphi 0, %s69
    %s87 = sphi 0, %s87
    %s89 = sphi 0, %s87
    %s90 = sphi 0, %s89
    %s104 = sphi 0, %s90
    %s108 = sphi 0, %s108
    %s110 = sphi 0, %s108
    %s111 = sphi 0, %s110
    %s125 = sphi 0, %s111
    %s131 = sphi 0, %s133
    %s134 = sphi 0, %s131
    %s135 = sphi 0, %s134
    %s151 = sphi 0, %s135
  $region4: #{forward.12} parent=0 // loop_header_branch
    %14 = sbr.rel (%p12) target = $region8
  $region5: #{forward.12} parent=0 // loop_body
    %s16 = ssub.s32 %s11, 1
    %s17 = ssub.s32 %s11, 2
    %s18 = sadd.s32 %s11, 1
    %s19 = ssub.s32 %s11, %s18
    %p20 = scmp.eq.s32.totalorder %s19, 0
    %s22 = sadd.s32 %s21, 1
    %s23 = scalar_select %p20, %s21, %s22
    %p26 = pneg %p20
    %p27 = scmp.eq.s32.totalorder %s11, 1
    %p28 = por %p26, %p27
    %p29 = scmp.ne.s32.totalorder %s21, %s24
    %p30 = scmp.eq.s32.totalorder %s11, 0
    %p31 = por %p29, %p30
    %p32 = scmp.ne.s32.totalorder %s21, %s24
    %p33 = scmp.eq.s32.totalorder %s16, 1
    %p34 = por %p32, %p33
    %p35 = scmp.ne.s32.totalorder %s24, %s25
    %p36 = scmp.eq.s32.totalorder %s16, 0
    %p37 = por %p35, %p36
    %p38 = scmp.ne.s32.totalorder %s24, %s25
    %p39 = scmp.eq.s32.totalorder %s17, 1
    %p40 = por %p38, %p39
    %p42 = scmp.ne.s32.totalorder %s25, %s41
    %p43 = scmp.eq.s32.totalorder %s17, 0
    %p44 = por %p42, %p43
    %s46 = sadd.s32 %s45, 1
    %p49 = scmp.eq.s32.totalorder %s11, 1
    %p50 = scmp.ne.s32.totalorder %s45, %s47
    %p51 = scmp.eq.s32.totalorder %s11, 0
    %p52 = por %p50, %p51
    %p53 = scmp.ne.s32.totalorder %s45, %s47
    %p54 = scmp.eq.s32.totalorder %s16, 1
    %p55 = por %p53, %p54
    %p56 = scmp.ne.s32.totalorder %s47, %s48
    %p57 = scmp.eq.s32.totalorder %s16, 0
    %p58 = por %p56, %p57
    %p59 = scmp.ne.s32.totalorder %s47, %s48
    %p60 = scmp.eq.s32.totalorder %s17, 1
    %p61 = por %p59, %p60
    %p63 = scmp.ne.s32.totalorder %s48, %s62
    %p64 = scmp.eq.s32.totalorder %s17, 0
    %p65 = por %p63, %p64
    %s67 = sadd.s32 %s66, 1
    %p70 = scmp.eq.s32.totalorder %s11, 1
    %p71 = scmp.ne.s32.totalorder %s66, %s68
    %p72 = scmp.eq.s32.totalorder %s11, 0
    %p73 = por %p71, %p72
    %p74 = scmp.ne.s32.totalorder %s66, %s68
    %p75 = scmp.eq.s32.totalorder %s16, 1
    %p76 = por %p74, %p75
    %p77 = scmp.ne.s32.totalorder %s68, %s69
    %p78 = scmp.eq.s32.totalorder %s16, 0
    %p79 = por %p77, %p78
    %p80 = scmp.ne.s32.totalorder %s68, %s69
    %p81 = scmp.eq.s32.totalorder %s17, 1
    %p82 = por %p80, %p81
    %p84 = scmp.ne.s32.totalorder %s69, %s83
    %p85 = scmp.eq.s32.totalorder %s17, 0
    %p86 = por %p84, %p85
    %s88 = sadd.s32 %s87, 1
    %p91 = scmp.eq.s32.totalorder %s11, 1
    %p92 = scmp.ne.s32.totalorder %s87, %s89
    %p93 = scmp.eq.s32.totalorder %s11, 0
    %p94 = por %p92, %p93
    %p95 = scmp.ne.s32.totalorder %s87, %s89
    %p96 = scmp.eq.s32.totalorder %s16, 1
    %p97 = por %p95, %p96
    %p98 = scmp.ne.s32.totalorder %s89, %s90
    %p99 = scmp.eq.s32.totalorder %s16, 0
    %p100 = por %p98, %p99
    %p101 = scmp.ne.s32.totalorder %s89, %s90
    %p102 = scmp.eq.s32.totalorder %s17, 1
    %p103 = por %p101, %p102
    %p105 = scmp.ne.s32.totalorder %s90, %s104
    %p106 = scmp.eq.s32.totalorder %s17, 0
    %p107 = por %p105, %p106
    %s109 = sadd.s32 %s108, 1
    %p112 = scmp.eq.s32.totalorder %s11, 1
    %p113 = scmp.ne.s32.totalorder %s108, %s110
    %p114 = scmp.eq.s32.totalorder %s11, 0
    %p115 = por %p113, %p114
    %p116 = scmp.ne.s32.totalorder %s108, %s110
    %p117 = scmp.eq.s32.totalorder %s16, 1
    %p118 = por %p116, %p117
    %p119 = scmp.ne.s32.totalorder %s110, %s111
    %p120 = scmp.eq.s32.totalorder %s16, 0
    %p121 = por %p119, %p120
    %p122 = scmp.ne.s32.totalorder %s110, %s111
    %p123 = scmp.eq.s32.totalorder %s17, 1
    %p124 = por %p122, %p123
    %p126 = scmp.ne.s32.totalorder %s111, %s125
    %p127 = scmp.eq.s32.totalorder %s17, 0
    %p128 = por %p126, %p127
    %s129 = ssub.s32 %s11, %s18
    %p130 = scmp.eq.s32.totalorder %s129, 0
    %s132 = sadd.s32 %s131, 1
    %s133 = scalar_select %p130, %s131, %s132
    %p136 = pneg %p130
    %p137 = scmp.eq.s32.totalorder %s11, 1
    %p138 = por %p136, %p137
    %p139 = scmp.ne.s32.totalorder %s131, %s134
    %p140 = scmp.eq.s32.totalorder %s11, 0
    %p141 = por %p139, %p140
    %p142 = scmp.ne.s32.totalorder %s131, %s134
    %p143 = scmp.eq.s32.totalorder %s16, 1
    %p144 = por %p142, %p143
    %p145 = scmp.ne.s32.totalorder %s134, %s135
    %p146 = scmp.eq.s32.totalorder %s16, 0
    %p147 = por %p145, %p146
    %p148 = scmp.ne.s32.totalorder %s134, %s135
    %p149 = scmp.eq.s32.totalorder %s17, 1
    %p150 = por %p148, %p149
    %p152 = scmp.ne.s32.totalorder %s135, %s151
    %p153 = scmp.eq.s32.totalorder %s17, 0
    %p154 = por %p152, %p153
    %p155 = scmp.le.s32.totalorder 1, %s11
    %p156 = scmp.lt.s32.totalorder %s11, 3
    %p157 = pnand %p155, %p156
    %p158 = pneg %p157
    // Predicated region
    $region9: #{forward.12} parent=5 // pred_check
      _
    $region10: #{forward.12} parent=5 // pred_check_branch
      %160 = sbr.rel (%p157) target = $region12
    $region11: #{forward.12} parent=5 // pred_region
      %s161 = ssub.s32 %s11, 1
      // Predicated region
      $region13: #{forward.12} parent=11 // pred_check
        %p162 = pneg %p58
      $region14: #{forward.12} parent=11 // pred_check_branch
        %164 = sbr.rel (%p162) target = $region16
      $region15: #{forward.12} parent=11 // pred_region
        _
      $region16: #{forward.12} parent=11 // pred_fallthru
        _
      // Predicated region
      $region17: #{forward.12} parent=11 // pred_check
        %p165 = pneg %p79
      $region18: #{forward.12} parent=11 // pred_check_branch
        %167 = sbr.rel (%p165) target = $region20
      $region19: #{forward.12} parent=11 // pred_region
        _
      $region20: #{forward.12} parent=11 // pred_fallthru
        _
      // Predicated region
      $region21: #{forward.12} parent=11 // pred_check
        %p168 = pneg %p100
      $region22: #{forward.12} parent=11 // pred_check_branch
        %170 = sbr.rel (%p168) target = $region24
      $region23: #{forward.12} parent=11 // pred_region
        _
      $region24: #{forward.12} parent=11 // pred_fallthru
        _
      // Predicated region
      $region25: #{forward.12} parent=11 // pred_check
        %p171 = pneg %p121
      $region26: #{forward.12} parent=11 // pred_check_branch
        %173 = sbr.rel (%p171) target = $region28
      $region27: #{forward.12} parent=11 // pred_region
        _
      $region28: #{forward.12} parent=11 // pred_fallthru
        _
    $region12: #{forward.12} parent=5 // pred_fallthru
      _
    %p174 = scmp.lt.s32.totalorder %s11, 2
    // Predicated region
    $region29: #{forward.12} parent=5 // pred_check
      %p175 = pneg %p174
    $region30: #{forward.12} parent=5 // pred_check_branch
      %177 = sbr.rel (%p175) target = $region32
    $region31: #{forward.12} parent=5 // pred_region
      // Predicated region
      $region33: #{forward.12} parent=31 // pred_check
        %p178 = pneg %p31
      $region34: #{forward.12} parent=31 // pred_check_branch
        %180 = sbr.rel (%p178) target = $region36
      $region35: #{forward.12} parent=31 // pred_region
        %p181 = scmp.lt.s32.totalorder %s11, 1
        %s182 = scalar_select %p181, %s11, 1
        %s183 = smul.addr %s182, 36
        %s184 = smul.addr %s183, 8
        %s185 = scalar_lea.vmem %s0, %s184
      $region36: #{forward.12} parent=31 // pred_fallthru
        _
    $region32: #{forward.12} parent=5 // pred_fallthru
      _
    %p186 = scmp.le.s32.totalorder 1, %s11
    %p187 = scmp.lt.s32.totalorder %s11, 3
    %p188 = pnand %p186, %p187
    %p189 = pneg %p188
    // Predicated region
    $region37: #{forward.12} parent=5 // pred_check
      _
    $region38: #{forward.12} parent=5 // pred_check_branch
      %191 = sbr.rel (%p188) target = $region40
    $region39: #{forward.12} parent=5 // pred_region
      %s192 = ssub.s32 %s11, 1
      %p193 = scmp.lt.s32.totalorder %s16, 1
      %s194 = scalar_select %p193, %s16, 1
      %s195 = smul.addr %s194, 36
      %s196 = smul.addr %s195, 8
      %s197 = scalar_lea.vmem %s0, %s196
      %p198 = pneg %p37
      %p199 = pneg %p34
      %p200 = pneg %p58
      %p201 = pneg %p55
      %p202 = pneg %p79
      %p203 = pneg %p76
      %p204 = pneg %p100
      %p205 = pneg %p97
      %p206 = pneg %p121
      %p207 = pneg %p118
      %p208 = pneg %p147
      %p209 = pneg %p144
      %p210 = scmp.lt.s32.totalorder %s16, 1
      %s211 = scalar_select %p210, %s16, 1
      %s212 = smul.addr %s211, 8
      %s213 = smul.addr %s212, 8
      %s214 = scalar_lea.vmem %s5, %s213
      %p215 = scmp.lt.s32.totalorder %s16, 1
      %s216 = scalar_select %p215, %s16, 1
      %s217 = smul.addr %s216, 36
      %s218 = smul.addr %s217, 8
      %s219 = scalar_lea.vmem %s0, %s218
      %p220 = scmp.lt.s32.totalorder %s16, 1
      %s221 = scalar_select %p220, %s16, 1
      %s222 = smul.addr %s221, 8
      %s223 = smul.addr %s222, 8
      %s224 = scalar_lea.vmem %s5, %s223
      %v226 = vld [vmem:[%s1] sm:$0xff]
      %v227 = vld [vmem:[%s1 + $0x8] sm:$0xff]
      %v228 = vld [vmem:[%s1 + $0x10] sm:$0xff]
      %v229 = vld [vmem:[%s1 + $0x18] sm:$0xff]
      %v230 = vld [vmem:[%s219] sm:$0xff]
      %v231 = vld [vmem:[%s219 + $0x8] sm:$0xff]
      %v232 = vld [vmem:[%s219 + $0x10] sm:$0xff]
      %v233 = vld [vmem:[%s219 + $0x18] sm:$0xff]
      %235 = vset.pattern.permute.xlu0 0
      %236 = vperm.xlu0 %235, %v226
      %v237 = vpop.permute.xlu0 %236
      %240 = vset.pattern.permute.xlu0 0
      %241 = vperm.xlu0 %240, %v227
      %v242 = vpop.permute.xlu0 %241
      %245 = vset.pattern.permute.xlu0 0
      %246 = vperm.xlu0 %245, %v228
      %v247 = vpop.permute.xlu0 %246
      %250 = vset.pattern.permute.xlu0 0
      %251 = vperm.xlu0 %250, %v229
      %v252 = vpop.permute.xlu0 %251
      %v254 = vmul.f32 %v230, %v237
      %v255 = vmul.f32 %v231, %v242
      %v256 = vmul.f32 %v232, %v247
      %v257 = vmul.f32 %v233, %v252
      %s258 = scalar_lea.vmem %s219, 32
      %v259 = vld [vmem:[%s258] sm:$0xff]
      %v260 = vld [vmem:[%s258 + $0x8] sm:$0xff]
      %v261 = vld [vmem:[%s258 + $0x10] sm:$0xff]
      %v262 = vld [vmem:[%s258 + $0x18] sm:$0xff]
      %263 = vset.pattern.permute.xlu0 1
      %264 = vperm.xlu0 %263, %v226
      %v265 = vpop.permute.xlu0 %264
      %267 = vset.pattern.permute.xlu0 1
      %268 = vperm.xlu0 %267, %v227
      %v269 = vpop.permute.xlu0 %268
      %271 = vset.pattern.permute.xlu0 1
      %272 = vperm.xlu0 %271, %v228
      %v273 = vpop.permute.xlu0 %272
      %275 = vset.pattern.permute.xlu0 1
      %276 = vperm.xlu0 %275, %v229
      %v277 = vpop.permute.xlu0 %276
      %v279 = vmul.f32 %v259, %v265
      %v280 = vmul.f32 %v260, %v269
      %v281 = vmul.f32 %v261, %v273
      %v282 = vmul.f32 %v262, %v277
      %v283 = vadd.f32 %v254, %v279
      %v284 = vadd.f32 %v255, %v280
      %v285 = vadd.f32 %v256, %v281
      %v286 = vadd.f32 %v257, %v282
      %s287 = scalar_lea.vmem %s219, 64
      %v288 = vld [vmem:[%s287] sm:$0xff]
      %v289 = vld [vmem:[%s287 + $0x8] sm:$0xff]
      %v290 = vld [vmem:[%s287 + $0x10] sm:$0xff]
      %v291 = vld [vmem:[%s287 + $0x18] sm:$0xff]
      %292 = vset.pattern.permute.xlu0 2
      %293 = vperm.xlu0 %292, %v226
      %v294 = vpop.permute.xlu0 %293
      %296 = vset.pattern.permute.xlu0 2
      %297 = vperm.xlu0 %296, %v227
      %v298 = vpop.permute.xlu0 %297
      %300 = vset.pattern.permute.xlu0 2
      %301 = vperm.xlu0 %300, %v228
      %v302 = vpop.permute.xlu0 %301
      %304 = vset.pattern.permute.xlu0 2
      %305 = vperm.xlu0 %304, %v229
      %v306 = vpop.permute.xlu0 %305
      %v308 = vmul.f32 %v288, %v294
      %v309 = vmul.f32 %v289, %v298
      %v310 = vmul.f32 %v290, %v302
      %v311 = vmul.f32 %v291, %v306
      %v312 = vadd.f32 %v283, %v308
      %v313 = vadd.f32 %v284, %v309
      %v314 = vadd.f32 %v285, %v310
      %v315 = vadd.f32 %v286, %v311
      %s316 = scalar_lea.vmem %s219, 96
      %v317 = vld [vmem:[%s316] sm:$0xff]
      %v318 = vld [vmem:[%s316 + $0x8] sm:$0xff]
      %v319 = vld [vmem:[%s316 + $0x10] sm:$0xff]
      %v320 = vld [vmem:[%s316 + $0x18] sm:$0xff]
      %321 = vset.pattern.permute.xlu0 3
      %322 = vperm.xlu0 %321, %v226
      %v323 = vpop.permute.xlu0 %322
      %325 = vset.pattern.permute.xlu0 3
      %326 = vperm.xlu0 %325, %v227
      %v327 = vpop.permute.xlu0 %326
      %329 = vset.pattern.permute.xlu0 3
      %330 = vperm.xlu0 %329, %v228
      %v331 = vpop.permute.xlu0 %330
      %333 = vset.pattern.permute.xlu0 3
      %334 = vperm.xlu0 %333, %v229
      %v335 = vpop.permute.xlu0 %334
      %v337 = vmul.f32 %v317, %v323
      %v338 = vmul.f32 %v318, %v327
      %v339 = vmul.f32 %v319, %v331
      %v340 = vmul.f32 %v320, %v335
      %v341 = vadd.f32 %v312, %v337
      %v342 = vadd.f32 %v313, %v338
      %v343 = vadd.f32 %v314, %v339
      %v344 = vadd.f32 %v315, %v340
      %s345 = scalar_lea.vmem %s219, 128
      %v346 = vld [vmem:[%s345] sm:$0xff]
      %v347 = vld [vmem:[%s345 + $0x8] sm:$0xff]
      %v348 = vld [vmem:[%s345 + $0x10] sm:$0xff]
      %v349 = vld [vmem:[%s345 + $0x18] sm:$0xff]
      %350 = vset.pattern.permute.xlu0 4
      %351 = vperm.xlu0 %350, %v226
      %v352 = vpop.permute.xlu0 %351
      %354 = vset.pattern.permute.xlu0 4
      %355 = vperm.xlu0 %354, %v227
      %v356 = vpop.permute.xlu0 %355
      %358 = vset.pattern.permute.xlu0 4
      %359 = vperm.xlu0 %358, %v228
      %v360 = vpop.permute.xlu0 %359
      %362 = vset.pattern.permute.xlu0 4
      %363 = vperm.xlu0 %362, %v229
      %v364 = vpop.permute.xlu0 %363
      %v366 = vmul.f32 %v346, %v352
      %v367 = vmul.f32 %v347, %v356
      %v368 = vmul.f32 %v348, %v360
      %v369 = vmul.f32 %v349, %v364
      %v370 = vadd.f32 %v341, %v366
      %v371 = vadd.f32 %v342, %v367
      %v372 = vadd.f32 %v343, %v368
      %v373 = vadd.f32 %v344, %v369
      %s374 = scalar_lea.vmem %s219, 160
      %v375 = vld [vmem:[%s374] sm:$0xff]
      %v376 = vld [vmem:[%s374 + $0x8] sm:$0xff]
      %v377 = vld [vmem:[%s374 + $0x10] sm:$0xff]
      %v378 = vld [vmem:[%s374 + $0x18] sm:$0xff]
      %379 = vset.pattern.permute.xlu0 5
      %380 = vperm.xlu0 %379, %v226
      %v381 = vpop.permute.xlu0 %380
      %383 = vset.pattern.permute.xlu0 5
      %384 = vperm.xlu0 %383, %v227
      %v385 = vpop.permute.xlu0 %384
      %387 = vset.pattern.permute.xlu0 5
      %388 = vperm.xlu0 %387, %v228
      %v389 = vpop.permute.xlu0 %388
      %391 = vset.pattern.permute.xlu0 5
      %392 = vperm.xlu0 %391, %v229
      %v393 = vpop.permute.xlu0 %392
      %v395 = vmul.f32 %v375, %v381
      %v396 = vmul.f32 %v376, %v385
      %v397 = vmul.f32 %v377, %v389
      %v398 = vmul.f32 %v378, %v393
      %v399 = vadd.f32 %v370, %v395
      %v400 = vadd.f32 %v371, %v396
      %v401 = vadd.f32 %v372, %v397
      %v402 = vadd.f32 %v373, %v398
      %s403 = scalar_lea.vmem %s219, 192
      %v404 = vld [vmem:[%s403] sm:$0xff]
      %v405 = vld [vmem:[%s403 + $0x8] sm:$0xff]
      %v406 = vld [vmem:[%s403 + $0x10] sm:$0xff]
      %v407 = vld [vmem:[%s403 + $0x18] sm:$0xff]
      %408 = vset.pattern.permute.xlu0 6
      %409 = vperm.xlu0 %408, %v226
      %v410 = vpop.permute.xlu0 %409
      %412 = vset.pattern.permute.xlu0 6
      %413 = vperm.xlu0 %412, %v227
      %v414 = vpop.permute.xlu0 %413
      %416 = vset.pattern.permute.xlu0 6
      %417 = vperm.xlu0 %416, %v228
      %v418 = vpop.permute.xlu0 %417
      %420 = vset.pattern.permute.xlu0 6
      %421 = vperm.xlu0 %420, %v229
      %v422 = vpop.permute.xlu0 %421
      %v424 = vmul.f32 %v404, %v410
      %v425 = vmul.f32 %v405, %v414
      %v426 = vmul.f32 %v406, %v418
      %v427 = vmul.f32 %v407, %v422
      %v428 = vadd.f32 %v399, %v424
      %v429 = vadd.f32 %v400, %v425
      %v430 = vadd.f32 %v401, %v426
      %v431 = vadd.f32 %v402, %v427
      %s432 = scalar_lea.vmem %s219, 224
      %v433 = vld [vmem:[%s432] sm:$0xff]
      %v434 = vld [vmem:[%s432 + $0x8] sm:$0xff]
      %v435 = vld [vmem:[%s432 + $0x10] sm:$0xff]
      %v436 = vld [vmem:[%s432 + $0x18] sm:$0xff]
      %437 = vset.pattern.permute.xlu0 7
      %438 = vperm.xlu0 %437, %v226
      %v439 = vpop.permute.xlu0 %438
      %441 = vset.pattern.permute.xlu0 7
      %442 = vperm.xlu0 %441, %v227
      %v443 = vpop.permute.xlu0 %442
      %445 = vset.pattern.permute.xlu0 7
      %446 = vperm.xlu0 %445, %v228
      %v447 = vpop.permute.xlu0 %446
      %449 = vset.pattern.permute.xlu0 7
      %450 = vperm.xlu0 %449, %v229
      %v451 = vpop.permute.xlu0 %450
      %v453 = vmul.f32 %v433, %v439
      %v454 = vmul.f32 %v434, %v443
      %v455 = vmul.f32 %v435, %v447
      %v456 = vmul.f32 %v436, %v451
      %v457 = vadd.f32 %v428, %v453
      %v458 = vadd.f32 %v429, %v454
      %v459 = vadd.f32 %v430, %v455
      %v460 = vadd.f32 %v431, %v456
      %s461 = scalar_lea.vmem %s219, 256
      %v462 = vld [vmem:[%s461] sm:$0xff]
      %v463 = vld [vmem:[%s461 + $0x8] sm:$0xff]
      %v464 = vld [vmem:[%s461 + $0x10] sm:$0xff]
      %v465 = vld [vmem:[%s461 + $0x18] sm:$0xff]
      %466 = vset.pattern.permute.xlu0 8
      %467 = vperm.xlu0 %466, %v226
      %v468 = vpop.permute.xlu0 %467
      %470 = vset.pattern.permute.xlu0 8
      %471 = vperm.xlu0 %470, %v227
      %v472 = vpop.permute.xlu0 %471
      %474 = vset.pattern.permute.xlu0 8
      %475 = vperm.xlu0 %474, %v228
      %v476 = vpop.permute.xlu0 %475
      %478 = vset.pattern.permute.xlu0 8
      %479 = vperm.xlu0 %478, %v229
      %v480 = vpop.permute.xlu0 %479
      %v482 = vmul.f32 %v462, %v468
      %v483 = vmul.f32 %v463, %v472
      %v484 = vmul.f32 %v464, %v476
      %v485 = vmul.f32 %v465, %v480
      %v486 = vadd.f32 %v457, %v482
      %v487 = vadd.f32 %v458, %v483
      %v488 = vadd.f32 %v459, %v484
      %v489 = vadd.f32 %v460, %v485
      %v490 = vld [vmem:[%s2] sm:$0xff]
      %v491 = vld [vmem:[%s2 + $0x8] sm:$0xff]
      %v492 = vld [vmem:[%s2 + $0x10] sm:$0xff]
      %v493 = vld [vmem:[%s2 + $0x18] sm:$0xff]
      %495 = vset.pattern.permute.xlu0 0
      %496 = vperm.xlu0 %495, %v490
      %v497 = vpop.permute.xlu0 %496
      %500 = vset.pattern.permute.xlu0 0
      %501 = vperm.xlu0 %500, %v491
      %v502 = vpop.permute.xlu0 %501
      %505 = vset.pattern.permute.xlu0 0
      %506 = vperm.xlu0 %505, %v492
      %v507 = vpop.permute.xlu0 %506
      %510 = vset.pattern.permute.xlu0 0
      %511 = vperm.xlu0 %510, %v493
      %v512 = vpop.permute.xlu0 %511
      %v514 = vadd.f32 %v486, %v497
      %v515 = vadd.f32 %v487, %v502
      %v516 = vadd.f32 %v488, %v507
      %v517 = vadd.f32 %v489, %v512
      %v518 = vmax.f32 %v514, 0.0
      %v519 = vmax.f32 %v515, 0.0
      %v520 = vmax.f32 %v516, 0.0
      %v521 = vmax.f32 %v517, 0.0
      %v522 = vld [vmem:[%s3] sm:$0xf]
      %v523 = vld [vmem:[%s3 + $0x4] sm:$0xf]
      %v524 = vld [vmem:[%s3 + $0x8] sm:$0xf]
      %v525 = vld [vmem:[%s3 + $0xc] sm:$0xf]
      %v526 = vld [vmem:[%s3 + $0x10] sm:$0xf]
      %v527 = vld [vmem:[%s3 + $0x14] sm:$0xf]
      %v528 = vld [vmem:[%s3 + $0x18] sm:$0xf]
      %v529 = vld [vmem:[%s3 + $0x1c] sm:$0xf]
      %v530 = vpack.c.bf16 %v519, %v518
      %v531 = vpack.c.bf16 %v521, %v520
      %v532 = vld [vmem:[%s4] sm:$0xff]
      %v533 = vld [vmem:[%s4 + $0x8] sm:$0xff]
      %v534 = vld [vmem:[%s4 + $0x10] sm:$0xff]
      %v535 = vld [vmem:[%s4 + $0x18] sm:$0xff]
      %v536 = vld [vmem:[%s4 + $0x20] sm:$0xff]
      %v537 = vld [vmem:[%s4 + $0x28] sm:$0xff]
      %v538 = vld [vmem:[%s4 + $0x30] sm:$0xff]
      %v539 = vld [vmem:[%s4 + $0x38] sm:$0xff]
      %541 = vset.pattern.permute.xlu0 0
      %542 = vperm.xlu0 %541, %v532
      %v543 = vpop.permute.xlu0 %542
      %546 = vset.pattern.permute.xlu0 0
      %547 = vperm.xlu0 %546, %v533
      %v548 = vpop.permute.xlu0 %547
      %551 = vset.pattern.permute.xlu0 0
      %552 = vperm.xlu0 %551, %v534
      %v553 = vpop.permute.xlu0 %552
      %556 = vset.pattern.permute.xlu0 0
      %557 = vperm.xlu0 %556, %v535
      %v558 = vpop.permute.xlu0 %557
      %561 = vset.pattern.permute.xlu0 0
      %562 = vperm.xlu0 %561, %v536
      %v563 = vpop.permute.xlu0 %562
      %566 = vset.pattern.permute.xlu0 0
      %567 = vperm.xlu0 %566, %v537
      %v568 = vpop.permute.xlu0 %567
      %571 = vset.pattern.permute.xlu0 0
      %572 = vperm.xlu0 %571, %v538
      %v573 = vpop.permute.xlu0 %572
      %576 = vset.pattern.permute.xlu0 0
      %577 = vperm.xlu0 %576, %v539
      %v578 = vpop.permute.xlu0 %577
      %v588 = vunpack.c.l.b16 %v522
      %v589 = vunpack.c.l.b16 %v523
      %v590 = vunpack.c.l.b16 %v524
      %v591 = vunpack.c.l.b16 %v525
      %v592 = vunpack.c.l.b16 %v526
      %v593 = vunpack.c.l.b16 %v527
      %v594 = vunpack.c.l.b16 %v528
      %v595 = vunpack.c.l.b16 %v529
      %v596 = vpack.c.b16 %v589, %v588
      %v597 = vpack.c.b16 %v591, %v590
      %v598 = vpack.c.b16 %v593, %v592
      %v599 = vpack.c.b16 %v595, %v594
      %vm600 = vcmask 261120
      %v602 = vsel %vm600, %v596, 0
      %v605 = vsel %vm600, %v597, 0
      %v608 = vsel %vm600, %v598, 0
      %v611 = vsel %vm600, %v599, 0
      %613 = vmatprep.subr.bf16.mxu0 0
      %614 = vmatpush1.bf16.msra.mxu0 0
      %615 = vmatprep.subr.bf16.mxu0 0
      %616 = vmatpush1.bf16.msra.mxu0 0
      %617 = vmatprep.subr.bf16.mxu0 0
      %618 = vmatpush1.bf16.msra.mxu0 0
      %619 = vmatprep.subr.bf16.mxu0 0
      %620 = vmatpush1.bf16.msra.mxu0 0
      %621 = vmatprep.subr.bf16.mxu0 0
      %622 = vmatpush1.bf16.msra.mxu0 0
      %623 = vmatprep.subr.bf16.mxu0 0
      %624 = vmatpush1.bf16.msra.mxu0 0
      %625 = vmatprep.subr.bf16.mxu0 0
      %626 = vmatpush1.bf16.msra.mxu0 %v531
      %627 = vmatprep.subr.bf16.mxu0 0
      %628 = vmatpush1.bf16.msra.mxu0 %v530
      %629 = vmatprep.subr.bf16.mxu0 0
      %630 = vmatpush2.bf16.msra.mxu0 0
      %631 = vmatprep.subr.bf16.mxu0 0
      %632 = vmatpush2.bf16.msra.mxu0 0
      %633 = vmatprep.subr.bf16.mxu0 0
      %634 = vmatpush2.bf16.msra.mxu0 0
      %635 = vmatprep.subr.bf16.mxu0 0
      %636 = vmatpush2.bf16.msra.mxu0 0
      %637 = vmatprep.subr.bf16.mxu0 0
      %638 = vmatpush2.bf16.msra.mxu0 0
      %639 = vmatprep.subr.bf16.mxu0 0
      %640 = vmatpush2.bf16.msra.mxu0 0
      %641 = vmatprep.subr.bf16.mxu0 0
      %642 = vmatpush2.bf16.msra.mxu0 0
      %643 = vmatprep.subr.bf16.mxu0 0
      %644 = vmatpush2.bf16.msra.mxu0 0
      %645 = vmatprep.mubr.bf16.mxu0 0
      %646 = vmatmul.mubr.bf16.gmra.mxu0 %v602
      %v647 = vpop.f32.mrf.mxu0
      %v648 = vadd.f32 %v543, %v647
      %v649 = vpop.f32.mrf.mxu0
      %v650 = vpop.f32.mrf.mxu0
      %v651 = vadd.f32 %v548, %v650
      %v652 = vpop.f32.mrf.mxu0
      %653 = vmatprep.mubr.bf16.mxu0 0
      %654 = vmatmul.mubr.bf16.gmra.mxu0 %v605
      %v655 = vpop.f32.mrf.mxu0
      %v656 = vadd.f32 %v553, %v655
      %v657 = vpop.f32.mrf.mxu0
      %v658 = vpop.f32.mrf.mxu0
      %v659 = vadd.f32 %v558, %v658
      %v660 = vpop.f32.mrf.mxu0
      %661 = vmatprep.mubr.bf16.mxu0 0
      %662 = vmatmul.mubr.bf16.gmra.mxu0 %v608
      %v663 = vpop.f32.mrf.mxu0
      %v664 = vadd.f32 %v563, %v663
      %v665 = vpop.f32.mrf.mxu0
      %v666 = vpop.f32.mrf.mxu0
      %v667 = vadd.f32 %v568, %v666
      %v668 = vpop.f32.mrf.mxu0
      %669 = vmatprep.mubr.bf16.mxu0 0
      %670 = vmatmul.mubr.bf16.gmra.mxu0 %v611
      %v671 = vpop.f32.mrf.mxu0
      %v672 = vadd.f32 %v573, %v671
      %v673 = vpop.f32.mrf.mxu0
      %v674 = vpop.f32.mrf.mxu0
      %v675 = vadd.f32 %v578, %v674
      %v676 = vpop.f32.mrf.mxu0
      %677 = vdwg.mxu0
      %v678 = vmax.f32 %v648, 0.0
      %v679 = vmax.f32 %v651, 0.0
      %v680 = vmax.f32 %v656, 0.0
      %v681 = vmax.f32 %v659, 0.0
      %v682 = vmax.f32 %v664, 0.0
      %v683 = vmax.f32 %v667, 0.0
      %v684 = vmax.f32 %v672, 0.0
      %v685 = vmax.f32 %v675, 0.0
      %vm686 = vcmask 523264
      %687 = vst.msk [vmem:[%s224] sm:$0xff] %vm686, %v678
      %688 = vst.msk [vmem:[%s224 + $0x8] sm:$0xff] %vm686, %v679
      %689 = vst.msk [vmem:[%s224 + $0x10] sm:$0xff] %vm686, %v680
      %690 = vst.msk [vmem:[%s224 + $0x18] sm:$0xff] %vm686, %v681
      %691 = vst.msk [vmem:[%s224 + $0x20] sm:$0xff] %vm686, %v682
      %692 = vst.msk [vmem:[%s224 + $0x28] sm:$0xff] %vm686, %v683
      %693 = vst.msk [vmem:[%s224 + $0x30] sm:$0xff] %vm686, %v684
      %694 = vst.msk [vmem:[%s224 + $0x38] sm:$0xff] %vm686, %v685
      %p695 = scmp.lt.s32.totalorder %s16, 1
      %s696 = scalar_select %p695, %s16, 1
      %s697 = smul.addr %s696, 8
      %s698 = smul.addr %s697, 8
      %s699 = scalar_lea.vmem %s5, %s698
      // Predicated region
      $region41: #{forward.12} parent=39 // pred_check
        %p700 = pneg %p144
      $region42: #{forward.12} parent=39 // pred_check_branch
        %702 = sbr.rel (%p700) target = $region44
      $region43: #{forward.12} parent=39 // pred_region
        _
      $region44: #{forward.12} parent=39 // pred_fallthru
        _
    $region40: #{forward.12} parent=5 // pred_fallthru
      _
    %p703 = scmp.le.s32.totalorder 2, %s11
    // Predicated region
    $region45: #{forward.12} parent=5 // pred_check
      %p704 = pneg %p703
    $region46: #{forward.12} parent=5 // pred_check_branch
      %706 = sbr.rel (%p704) target = $region48
    $region47: #{forward.12} parent=5 // pred_region
      %s707 = ssub.s32 %s11, 2
      // Predicated region
      $region49: #{forward.12} parent=47 // pred_check
        %p708 = pneg %p150
      $region50: #{forward.12} parent=47 // pred_check_branch
        %710 = sbr.rel (%p708) target = $region52
      $region51: #{forward.12} parent=47 // pred_region
        %p711 = scmp.lt.s32.totalorder %s17, 1
        %s712 = scalar_select %p711, %s17, 1
        %s713 = smul.addr %s712, 8
        %s714 = smul.addr %s713, 8
        %s715 = scalar_lea.vmem %s5, %s714
      $region52: #{forward.12} parent=47 // pred_fallthru
        _
    $region48: #{forward.12} parent=5 // pred_fallthru
      _
  $region6: #{forward.12} parent=0 // loop_footer
    %s15 = sadd.s32 1, %s11
  $region7: #{forward.12} parent=0 // loop_footer_branch
    %10 = sbr.rel target = $region3
  $region8: #{forward.12} parent=0 // loop_exit
    _

// kernel: forward.13
$region0: #{forward.13}
  #allocation0 [shape = 'u32[]', space=smem, size = 0x4, offset = 0x4, fixed_abs, tag = 'smem constant byte address 0x4 - core index']
  #allocation1 [shape = 'u32[144,128]{1,0:T(1,128)}', space=vmem, size = 0x12000, scoped, tag = 'internal scratch']
  %s0 = inlined_call_operand.vmem [shape: f32[2,9,64,16], index: 0, kind: input, shape index: {}]
  %s1 = inlined_call_operand.vmem [shape: f32[64,9], index: 1, kind: input, shape index: {}]
  %s2 = inlined_call_operand.vmem [shape: f32[64,1], index: 2, kind: input, shape index: {}]
  %s3 = inlined_call_operand.vmem [shape: bf16[128,64], index: 3, kind: input, shape index: {}]
  %s4 = inlined_call_operand.vmem [shape: f32[128,1], index: 4, kind: input, shape index: {}]
  %s5 = inlined_call_operand.vmem [shape: f32[2,128,16], index: 5, kind: output, shape index: {}]
  %s6 = sld [smem:[#allocation0]]
  $region53: #{forward.13} parent=0
    _
  %s8 = ssub.s32 1, %s6
  %s9 = scalar_select 0, %s8, %s6
  loop: start=0, step=1, limit=4
  $region2: #{forward.13} parent=0 // loop_pre_header
    _
  $region3: #{forward.13} parent=0 // loop_header
    %s11 = sphi 0, %s15
    %p12 = scmp.ge.s32.totalorder %s11, 4
    %s21 = sphi 0, %s23
    %s24 = sphi 0, %s21
    %s25 = sphi 0, %s24
    %s41 = sphi 0, %s25
    %s45 = sphi 0, %s45
    %s47 = sphi 0, %s45
    %s48 = sphi 0, %s47
    %s62 = sphi 0, %s48
    %s66 = sphi 0, %s66
    %s68 = sphi 0, %s66
    %s69 = sphi 0, %s68
    %s83 = sphi 0, %s69
    %s87 = sphi 0, %s87
    %s89 = sphi 0, %s87
    %s90 = sphi 0, %s89
    %s104 = sphi 0, %s90
    %s108 = sphi 0, %s108
    %s110 = sphi 0, %s108
    %s111 = sphi 0, %s110
    %s125 = sphi 0, %s111
    %s131 = sphi 0, %s133
    %s134 = sphi 0, %s131
    %s135 = sphi 0, %s134
    %s151 = sphi 0, %s135
  $region4: #{forward.13} parent=0 // loop_header_branch
    %14 = sbr.rel (%p12) target = $region8
  $region5: #{forward.13} parent=0 // loop_body
    %s16 = ssub.s32 %s11, 1
    %s17 = ssub.s32 %s11, 2
    %s18 = sadd.s32 %s11, 1
    %s19 = ssub.s32 %s11, %s18
    %p20 = scmp.eq.s32.totalorder %s19, 0
    %s22 = sadd.s32 %s21, 1
    %s23 = scalar_select %p20, %s21, %s22
    %p26 = pneg %p20
    %p27 = scmp.eq.s32.totalorder %s11, 1
    %p28 = por %p26, %p27
    %p29 = scmp.ne.s32.totalorder %s21, %s24
    %p30 = scmp.eq.s32.totalorder %s11, 0
    %p31 = por %p29, %p30
    %p32 = scmp.ne.s32.totalorder %s21, %s24
    %p33 = scmp.eq.s32.totalorder %s16, 1
    %p34 = por %p32, %p33
    %p35 = scmp.ne.s32.totalorder %s24, %s25
    %p36 = scmp.eq.s32.totalorder %s16, 0
    %p37 = por %p35, %p36
    %p38 = scmp.ne.s32.totalorder %s24, %s25
    %p39 = scmp.eq.s32.totalorder %s17, 1
    %p40 = por %p38, %p39
    %p42 = scmp.ne.s32.totalorder %s25, %s41
    %p43 = scmp.eq.s32.totalorder %s17, 0
    %p44 = por %p42, %p43
    %s46 = sadd.s32 %s45, 1
    %p49 = scmp.eq.s32.totalorder %s11, 1
    %p50 = scmp.ne.s32.totalorder %s45, %s47
    %p51 = scmp.eq.s32.totalorder %s11, 0
    %p52 = por %p50, %p51
    %p53 = scmp.ne.s32.totalorder %s45, %s47
    %p54 = scmp.eq.s32.totalorder %s16, 1
    %p55 = por %p53, %p54
    %p56 = scmp.ne.s32.totalorder %s47, %s48
    %p57 = scmp.eq.s32.totalorder %s16, 0
    %p58 = por %p56, %p57
    %p59 = scmp.ne.s32.totalorder %s47, %s48
    %p60 = scmp.eq.s32.totalorder %s17, 1
    %p61 = por %p59, %p60
    %p63 = scmp.ne.s32.totalorder %s48, %s62
    %p64 = scmp.eq.s32.totalorder %s17, 0
    %p65 = por %p63, %p64
    %s67 = sadd.s32 %s66, 1
    %p70 = scmp.eq.s32.totalorder %s11, 1
    %p71 = scmp.ne.s32.totalorder %s66, %s68
    %p72 = scmp.eq.s32.totalorder %s11, 0
    %p73 = por %p71, %p72
    %p74 = scmp.ne.s32.totalorder %s66, %s68
    %p75 = scmp.eq.s32.totalorder %s16, 1
    %p76 = por %p74, %p75
    %p77 = scmp.ne.s32.totalorder %s68, %s69
    %p78 = scmp.eq.s32.totalorder %s16, 0
    %p79 = por %p77, %p78
    %p80 = scmp.ne.s32.totalorder %s68, %s69
    %p81 = scmp.eq.s32.totalorder %s17, 1
    %p82 = por %p80, %p81
    %p84 = scmp.ne.s32.totalorder %s69, %s83
    %p85 = scmp.eq.s32.totalorder %s17, 0
    %p86 = por %p84, %p85
    %s88 = sadd.s32 %s87, 1
    %p91 = scmp.eq.s32.totalorder %s11, 1
    %p92 = scmp.ne.s32.totalorder %s87, %s89
    %p93 = scmp.eq.s32.totalorder %s11, 0
    %p94 = por %p92, %p93
    %p95 = scmp.ne.s32.totalorder %s87, %s89
    %p96 = scmp.eq.s32.totalorder %s16, 1
    %p97 = por %p95, %p96
    %p98 = scmp.ne.s32.totalorder %s89, %s90
    %p99 = scmp.eq.s32.totalorder %s16, 0
    %p100 = por %p98, %p99
    %p101 = scmp.ne.s32.totalorder %s89, %s90
    %p102 = scmp.eq.s32.totalorder %s17, 1
    %p103 = por %p101, %p102
    %p105 = scmp.ne.s32.totalorder %s90, %s104
    %p106 = scmp.eq.s32.totalorder %s17, 0
    %p107 = por %p105, %p106
    %s109 = sadd.s32 %s108, 1
    %p112 = scmp.eq.s32.totalorder %s11, 1
    %p113 = scmp.ne.s32.totalorder %s108, %s110
    %p114 = scmp.eq.s32.totalorder %s11, 0
    %p115 = por %p113, %p114
    %p116 = scmp.ne.s32.totalorder %s108, %s110
    %p117 = scmp.eq.s32.totalorder %s16, 1
    %p118 = por %p116, %p117
    %p119 = scmp.ne.s32.totalorder %s110, %s111
    %p120 = scmp.eq.s32.totalorder %s16, 0
    %p121 = por %p119, %p120
    %p122 = scmp.ne.s32.totalorder %s110, %s111
    %p123 = scmp.eq.s32.totalorder %s17, 1
    %p124 = por %p122, %p123
    %p126 = scmp.ne.s32.totalorder %s111, %s125
    %p127 = scmp.eq.s32.totalorder %s17, 0
    %p128 = por %p126, %p127
    %s129 = ssub.s32 %s11, %s18
    %p130 = scmp.eq.s32.totalorder %s129, 0
    %s132 = sadd.s32 %s131, 1
    %s133 = scalar_select %p130, %s131, %s132
    %p136 = pneg %p130
    %p137 = scmp.eq.s32.totalorder %s11, 1
    %p138 = por %p136, %p137
    %p139 = scmp.ne.s32.totalorder %s131, %s134
    %p140 = scmp.eq.s32.totalorder %s11, 0
    %p141 = por %p139, %p140
    %p142 = scmp.ne.s32.totalorder %s131, %s134
    %p143 = scmp.eq.s32.totalorder %s16, 1
    %p144 = por %p142, %p143
    %p145 = scmp.ne.s32.totalorder %s134, %s135
    %p146 = scmp.eq.s32.totalorder %s16, 0
    %p147 = por %p145, %p146
    %p148 = scmp.ne.s32.totalorder %s134, %s135
    %p149 = scmp.eq.s32.totalorder %s17, 1
    %p150 = por %p148, %p149
    %p152 = scmp.ne.s32.totalorder %s135, %s151
    %p153 = scmp.eq.s32.totalorder %s17, 0
    %p154 = por %p152, %p153
    %p155 = scmp.le.s32.totalorder 1, %s11
    %p156 = scmp.lt.s32.totalorder %s11, 3
    %p157 = pnand %p155, %p156
    %p158 = pneg %p157
    // Predicated region
    $region9: #{forward.13} parent=5 // pred_check
      _
    $region10: #{forward.13} parent=5 // pred_check_branch
      %160 = sbr.rel (%p157) target = $region12
    $region11: #{forward.13} parent=5 // pred_region
      %s161 = ssub.s32 %s11, 1
      // Predicated region
      $region13: #{forward.13} parent=11 // pred_check
        %p162 = pneg %p58
      $region14: #{forward.13} parent=11 // pred_check_branch
        %164 = sbr.rel (%p162) target = $region16
      $region15: #{forward.13} parent=11 // pred_region
        _
      $region16: #{forward.13} parent=11 // pred_fallthru
        _
      // Predicated region
      $region17: #{forward.13} parent=11 // pred_check
        %p165 = pneg %p79
      $region18: #{forward.13} parent=11 // pred_check_branch
        %167 = sbr.rel (%p165) target = $region20
      $region19: #{forward.13} parent=11 // pred_region
        _
      $region20: #{forward.13} parent=11 // pred_fallthru
        _
      // Predicated region
      $region21: #{forward.13} parent=11 // pred_check
        %p168 = pneg %p100
      $region22: #{forward.13} parent=11 // pred_check_branch
        %170 = sbr.rel (%p168) target = $region24
      $region23: #{forward.13} parent=11 // pred_region
        _
      $region24: #{forward.13} parent=11 // pred_fallthru
        _
      // Predicated region
      $region25: #{forward.13} parent=11 // pred_check
        %p171 = pneg %p121
      $region26: #{forward.13} parent=11 // pred_check_branch
        %173 = sbr.rel (%p171) target = $region28
      $region27: #{forward.13} parent=11 // pred_region
        _
      $region28: #{forward.13} parent=11 // pred_fallthru
        _
    $region12: #{forward.13} parent=5 // pred_fallthru
      _
    %p174 = scmp.lt.s32.totalorder %s11, 2
    // Predicated region
    $region29: #{forward.13} parent=5 // pred_check
      %p175 = pneg %p174
    $region30: #{forward.13} parent=5 // pred_check_branch
      %177 = sbr.rel (%p175) target = $region32
    $region31: #{forward.13} parent=5 // pred_region
      // Predicated region
      $region33: #{forward.13} parent=31 // pred_check
        %p178 = pneg %p31
      $region34: #{forward.13} parent=31 // pred_check_branch
        %180 = sbr.rel (%p178) target = $region36
      $region35: #{forward.13} parent=31 // pred_region
        %p181 = scmp.lt.s32.totalorder %s11, 1
        %s182 = scalar_select %p181, %s11, 1
        %s183 = smul.addr %s182, 72
        %s184 = smul.addr %s183, 8
        %s185 = scalar_lea.vmem %s0, %s184
      $region36: #{forward.13} parent=31 // pred_fallthru
        _
    $region32: #{forward.13} parent=5 // pred_fallthru
      _
    %p186 = scmp.le.s32.totalorder 1, %s11
    %p187 = scmp.lt.s32.totalorder %s11, 3
    %p188 = pnand %p186, %p187
    %p189 = pneg %p188
    // Predicated region
    $region37: #{forward.13} parent=5 // pred_check
      _
    $region38: #{forward.13} parent=5 // pred_check_branch
      %191 = sbr.rel (%p188) target = $region40
    $region39: #{forward.13} parent=5 // pred_region
      %s192 = ssub.s32 %s11, 1
      %p193 = scmp.lt.s32.totalorder %s16, 1
      %s194 = scalar_select %p193, %s16, 1
      %s195 = smul.addr %s194, 72
      %s196 = smul.addr %s195, 8
      %s197 = scalar_lea.vmem %s0, %s196
      %p198 = pneg %p37
      %p199 = pneg %p34
      %p200 = pneg %p58
      %p201 = pneg %p55
      %p202 = pneg %p79
      %p203 = pneg %p76
      %p204 = pneg %p100
      %p205 = pneg %p97
      %p206 = pneg %p121
      %p207 = pneg %p118
      %p208 = pneg %p147
      %p209 = pneg %p144
      %p210 = scmp.lt.s32.totalorder %s16, 1
      %s211 = scalar_select %p210, %s16, 1
      %s212 = smul.addr %s211, 16
      %s213 = smul.addr %s212, 8
      %s214 = scalar_lea.vmem %s5, %s213
      %p215 = scmp.lt.s32.totalorder %s16, 1
      %s216 = scalar_select %p215, %s16, 1
      %s217 = smul.addr %s216, 72
      %s218 = smul.addr %s217, 8
      %s219 = scalar_lea.vmem %s0, %s218
      %p220 = scmp.lt.s32.totalorder %s16, 1
      %s221 = scalar_select %p220, %s16, 1
      %s222 = smul.addr %s221, 16
      %s223 = smul.addr %s222, 8
      %s224 = scalar_lea.vmem %s5, %s223
      %v226 = vld [vmem:[%s1] sm:$0xff]
      %v227 = vld [vmem:[%s1 + $0x8] sm:$0xff]
      %v228 = vld [vmem:[%s1 + $0x10] sm:$0xff]
      %v229 = vld [vmem:[%s1 + $0x18] sm:$0xff]
      %v230 = vld [vmem:[%s1 + $0x20] sm:$0xff]
      %v231 = vld [vmem:[%s1 + $0x28] sm:$0xff]
      %v232 = vld [vmem:[%s1 + $0x30] sm:$0xff]
      %v233 = vld [vmem:[%s1 + $0x38] sm:$0xff]
      %v234 = vld [vmem:[%s219] sm:$0xff]
      %v235 = vld [vmem:[%s219 + $0x8] sm:$0xff]
      %v236 = vld [vmem:[%s219 + $0x10] sm:$0xff]
      %v237 = vld [vmem:[%s219 + $0x18] sm:$0xff]
      %v238 = vld [vmem:[%s219 + $0x20] sm:$0xff]
      %v239 = vld [vmem:[%s219 + $0x28] sm:$0xff]
      %v240 = vld [vmem:[%s219 + $0x30] sm:$0xff]
      %v241 = vld [vmem:[%s219 + $0x38] sm:$0xff]
      %243 = vset.pattern.permute.xlu0 0
      %244 = vperm.xlu0 %243, %v226
      %v245 = vpop.permute.xlu0 %244
      %248 = vset.pattern.permute.xlu0 0
      %249 = vperm.xlu0 %248, %v227
      %v250 = vpop.permute.xlu0 %249
      %253 = vset.pattern.permute.xlu0 0
      %254 = vperm.xlu0 %253, %v228
      %v255 = vpop.permute.xlu0 %254
      %258 = vset.pattern.permute.xlu0 0
      %259 = vperm.xlu0 %258, %v229
      %v260 = vpop.permute.xlu0 %259
      %263 = vset.pattern.permute.xlu0 0
      %264 = vperm.xlu0 %263, %v230
      %v265 = vpop.permute.xlu0 %264
      %268 = vset.pattern.permute.xlu0 0
      %269 = vperm.xlu0 %268, %v231
      %v270 = vpop.permute.xlu0 %269
      %273 = vset.pattern.permute.xlu0 0
      %274 = vperm.xlu0 %273, %v232
      %v275 = vpop.permute.xlu0 %274
      %278 = vset.pattern.permute.xlu0 0
      %279 = vperm.xlu0 %278, %v233
      %v280 = vpop.permute.xlu0 %279
      %v282 = vmul.f32 %v234, %v245
      %v283 = vmul.f32 %v235, %v250
      %v284 = vmul.f32 %v236, %v255
      %v285 = vmul.f32 %v237, %v260
      %v286 = vmul.f32 %v238, %v265
      %v287 = vmul.f32 %v239, %v270
      %v288 = vmul.f32 %v240, %v275
      %v289 = vmul.f32 %v241, %v280
      %s290 = scalar_lea.vmem %s219, 64
      %v291 = vld [vmem:[%s290] sm:$0xff]
      %v292 = vld [vmem:[%s290 + $0x8] sm:$0xff]
      %v293 = vld [vmem:[%s290 + $0x10] sm:$0xff]
      %v294 = vld [vmem:[%s290 + $0x18] sm:$0xff]
      %v295 = vld [vmem:[%s290 + $0x20] sm:$0xff]
      %v296 = vld [vmem:[%s290 + $0x28] sm:$0xff]
      %v297 = vld [vmem:[%s290 + $0x30] sm:$0xff]
      %v298 = vld [vmem:[%s290 + $0x38] sm:$0xff]
      %299 = vset.pattern.permute.xlu0 1
      %300 = vperm.xlu0 %299, %v226
      %v301 = vpop.permute.xlu0 %300
      %303 = vset.pattern.permute.xlu0 1
      %304 = vperm.xlu0 %303, %v227
      %v305 = vpop.permute.xlu0 %304
      %307 = vset.pattern.permute.xlu0 1
      %308 = vperm.xlu0 %307, %v228
      %v309 = vpop.permute.xlu0 %308
      %311 = vset.pattern.permute.xlu0 1
      %312 = vperm.xlu0 %311, %v229
      %v313 = vpop.permute.xlu0 %312
      %315 = vset.pattern.permute.xlu0 1
      %316 = vperm.xlu0 %315, %v230
      %v317 = vpop.permute.xlu0 %316
      %319 = vset.pattern.permute.xlu0 1
      %320 = vperm.xlu0 %319, %v231
      %v321 = vpop.permute.xlu0 %320
      %323 = vset.pattern.permute.xlu0 1
      %324 = vperm.xlu0 %323, %v232
      %v325 = vpop.permute.xlu0 %324
      %327 = vset.pattern.permute.xlu0 1
      %328 = vperm.xlu0 %327, %v233
      %v329 = vpop.permute.xlu0 %328
      %v331 = vmul.f32 %v291, %v301
      %v332 = vmul.f32 %v292, %v305
      %v333 = vmul.f32 %v293, %v309
      %v334 = vmul.f32 %v294, %v313
      %v335 = vmul.f32 %v295, %v317
      %v336 = vmul.f32 %v296, %v321
      %v337 = vmul.f32 %v297, %v325
      %v338 = vmul.f32 %v298, %v329
      %v339 = vadd.f32 %v282, %v331
      %v340 = vadd.f32 %v283, %v332
      %v341 = vadd.f32 %v284, %v333
      %v342 = vadd.f32 %v285, %v334
      %v343 = vadd.f32 %v286, %v335
      %v344 = vadd.f32 %v287, %v336
      %v345 = vadd.f32 %v288, %v337
      %v346 = vadd.f32 %v289, %v338
      %s347 = scalar_lea.vmem %s219, 128
      %v348 = vld [vmem:[%s347] sm:$0xff]
      %v349 = vld [vmem:[%s347 + $0x8] sm:$0xff]
      %v350 = vld [vmem:[%s347 + $0x10] sm:$0xff]
      %v351 = vld [vmem:[%s347 + $0x18] sm:$0xff]
      %v352 = vld [vmem:[%s347 + $0x20] sm:$0xff]
      %v353 = vld [vmem:[%s347 + $0x28] sm:$0xff]
      %v354 = vld [vmem:[%s347 + $0x30] sm:$0xff]
      %v355 = vld [vmem:[%s347 + $0x38] sm:$0xff]
      %356 = vset.pattern.permute.xlu0 2
      %357 = vperm.xlu0 %356, %v226
      %v358 = vpop.permute.xlu0 %357
      %360 = vset.pattern.permute.xlu0 2
      %361 = vperm.xlu0 %360, %v227
      %v362 = vpop.permute.xlu0 %361
      %364 = vset.pattern.permute.xlu0 2
      %365 = vperm.xlu0 %364, %v228
      %v366 = vpop.permute.xlu0 %365
      %368 = vset.pattern.permute.xlu0 2
      %369 = vperm.xlu0 %368, %v229
      %v370 = vpop.permute.xlu0 %369
      %372 = vset.pattern.permute.xlu0 2
      %373 = vperm.xlu0 %372, %v230
      %v374 = vpop.permute.xlu0 %373
      %376 = vset.pattern.permute.xlu0 2
      %377 = vperm.xlu0 %376, %v231
      %v378 = vpop.permute.xlu0 %377
      %380 = vset.pattern.permute.xlu0 2
      %381 = vperm.xlu0 %380, %v232
      %v382 = vpop.permute.xlu0 %381
      %384 = vset.pattern.permute.xlu0 2
      %385 = vperm.xlu0 %384, %v233
      %v386 = vpop.permute.xlu0 %385
      %v388 = vmul.f32 %v348, %v358
      %v389 = vmul.f32 %v349, %v362
      %v390 = vmul.f32 %v350, %v366
      %v391 = vmul.f32 %v351, %v370
      %v392 = vmul.f32 %v352, %v374
      %v393 = vmul.f32 %v353, %v378
      %v394 = vmul.f32 %v354, %v382
      %v395 = vmul.f32 %v355, %v386
      %v396 = vadd.f32 %v339, %v388
      %v397 = vadd.f32 %v340, %v389
      %v398 = vadd.f32 %v341, %v390
      %v399 = vadd.f32 %v342, %v391
      %v400 = vadd.f32 %v343, %v392
      %v401 = vadd.f32 %v344, %v393
      %v402 = vadd.f32 %v345, %v394
      %v403 = vadd.f32 %v346, %v395
      %s404 = scalar_lea.vmem %s219, 192
      %v405 = vld [vmem:[%s404] sm:$0xff]
      %v406 = vld [vmem:[%s404 + $0x8] sm:$0xff]
      %v407 = vld [vmem:[%s404 + $0x10] sm:$0xff]
      %v408 = vld [vmem:[%s404 + $0x18] sm:$0xff]
      %v409 = vld [vmem:[%s404 + $0x20] sm:$0xff]
      %v410 = vld [vmem:[%s404 + $0x28] sm:$0xff]
      %v411 = vld [vmem:[%s404 + $0x30] sm:$0xff]
      %v412 = vld [vmem:[%s404 + $0x38] sm:$0xff]
      %413 = vset.pattern.permute.xlu0 3
      %414 = vperm.xlu0 %413, %v226
      %v415 = vpop.permute.xlu0 %414
      %417 = vset.pattern.permute.xlu0 3
      %418 = vperm.xlu0 %417, %v227
      %v419 = vpop.permute.xlu0 %418
      %421 = vset.pattern.permute.xlu0 3
      %422 = vperm.xlu0 %421, %v228
      %v423 = vpop.permute.xlu0 %422
      %425 = vset.pattern.permute.xlu0 3
      %426 = vperm.xlu0 %425, %v229
      %v427 = vpop.permute.xlu0 %426
      %429 = vset.pattern.permute.xlu0 3
      %430 = vperm.xlu0 %429, %v230
      %v431 = vpop.permute.xlu0 %430
      %433 = vset.pattern.permute.xlu0 3
      %434 = vperm.xlu0 %433, %v231
      %v435 = vpop.permute.xlu0 %434
      %437 = vset.pattern.permute.xlu0 3
      %438 = vperm.xlu0 %437, %v232
      %v439 = vpop.permute.xlu0 %438
      %441 = vset.pattern.permute.xlu0 3
      %442 = vperm.xlu0 %441, %v233
      %v443 = vpop.permute.xlu0 %442
      %v445 = vmul.f32 %v405, %v415
      %v446 = vmul.f32 %v406, %v419
      %v447 = vmul.f32 %v407, %v423
      %v448 = vmul.f32 %v408, %v427
      %v449 = vmul.f32 %v409, %v431
      %v450 = vmul.f32 %v410, %v435
      %v451 = vmul.f32 %v411, %v439
      %v452 = vmul.f32 %v412, %v443
      %v453 = vadd.f32 %v396, %v445
      %v454 = vadd.f32 %v397, %v446
      %v455 = vadd.f32 %v398, %v447
      %v456 = vadd.f32 %v399, %v448
      %v457 = vadd.f32 %v400, %v449
      %v458 = vadd.f32 %v401, %v450
      %v459 = vadd.f32 %v402, %v451
      %v460 = vadd.f32 %v403, %v452
      %s461 = scalar_lea.vmem %s219, 256
      %v462 = vld [vmem:[%s461] sm:$0xff]
      %v463 = vld [vmem:[%s461 + $0x8] sm:$0xff]
      %v464 = vld [vmem:[%s461 + $0x10] sm:$0xff]
      %v465 = vld [vmem:[%s461 + $0x18] sm:$0xff]
      %v466 = vld [vmem:[%s461 + $0x20] sm:$0xff]
      %v467 = vld [vmem:[%s461 + $0x28] sm:$0xff]
      %v468 = vld [vmem:[%s461 + $0x30] sm:$0xff]
      %v469 = vld [vmem:[%s461 + $0x38] sm:$0xff]
      %470 = vset.pattern.permute.xlu0 4
      %471 = vperm.xlu0 %470, %v226
      %v472 = vpop.permute.xlu0 %471
      %474 = vset.pattern.permute.xlu0 4
      %475 = vperm.xlu0 %474, %v227
      %v476 = vpop.permute.xlu0 %475
      %478 = vset.pattern.permute.xlu0 4
      %479 = vperm.xlu0 %478, %v228
      %v480 = vpop.permute.xlu0 %479
      %482 = vset.pattern.permute.xlu0 4
      %483 = vperm.xlu0 %482, %v229
      %v484 = vpop.permute.xlu0 %483
      %486 = vset.pattern.permute.xlu0 4
      %487 = vperm.xlu0 %486, %v230
      %v488 = vpop.permute.xlu0 %487
      %490 = vset.pattern.permute.xlu0 4
      %491 = vperm.xlu0 %490, %v231
      %v492 = vpop.permute.xlu0 %491
      %494 = vset.pattern.permute.xlu0 4
      %495 = vperm.xlu0 %494, %v232
      %v496 = vpop.permute.xlu0 %495
      %498 = vset.pattern.permute.xlu0 4
      %499 = vperm.xlu0 %498, %v233
      %v500 = vpop.permute.xlu0 %499
      %v502 = vmul.f32 %v462, %v472
      %v503 = vmul.f32 %v463, %v476
      %v504 = vmul.f32 %v464, %v480
      %v505 = vmul.f32 %v465, %v484
      %v506 = vmul.f32 %v466, %v488
      %v507 = vmul.f32 %v467, %v492
      %v508 = vmul.f32 %v468, %v496
      %v509 = vmul.f32 %v469, %v500
      %v510 = vadd.f32 %v453, %v502
      %v511 = vadd.f32 %v454, %v503
      %v512 = vadd.f32 %v455, %v504
      %v513 = vadd.f32 %v456, %v505
      %v514 = vadd.f32 %v457, %v506
      %v515 = vadd.f32 %v458, %v507
      %v516 = vadd.f32 %v459, %v508
      %v517 = vadd.f32 %v460, %v509
      %s518 = scalar_lea.vmem %s219, 320
      %v519 = vld [vmem:[%s518] sm:$0xff]
      %v520 = vld [vmem:[%s518 + $0x8] sm:$0xff]
      %v521 = vld [vmem:[%s518 + $0x10] sm:$0xff]
      %v522 = vld [vmem:[%s518 + $0x18] sm:$0xff]
      %v523 = vld [vmem:[%s518 + $0x20] sm:$0xff]
      %v524 = vld [vmem:[%s518 + $0x28] sm:$0xff]
      %v525 = vld [vmem:[%s518 + $0x30] sm:$0xff]
      %v526 = vld [vmem:[%s518 + $0x38] sm:$0xff]
      %527 = vset.pattern.permute.xlu0 5
      %528 = vperm.xlu0 %527, %v226
      %v529 = vpop.permute.xlu0 %528
      %531 = vset.pattern.permute.xlu0 5
      %532 = vperm.xlu0 %531, %v227
      %v533 = vpop.permute.xlu0 %532
      %535 = vset.pattern.permute.xlu0 5
      %536 = vperm.xlu0 %535, %v228
      %v537 = vpop.permute.xlu0 %536
      %539 = vset.pattern.permute.xlu0 5
      %540 = vperm.xlu0 %539, %v229
      %v541 = vpop.permute.xlu0 %540
      %543 = vset.pattern.permute.xlu0 5
      %544 = vperm.xlu0 %543, %v230
      %v545 = vpop.permute.xlu0 %544
      %547 = vset.pattern.permute.xlu0 5
      %548 = vperm.xlu0 %547, %v231
      %v549 = vpop.permute.xlu0 %548
      %551 = vset.pattern.permute.xlu0 5
      %552 = vperm.xlu0 %551, %v232
      %v553 = vpop.permute.xlu0 %552
      %555 = vset.pattern.permute.xlu0 5
      %556 = vperm.xlu0 %555, %v233
      %v557 = vpop.permute.xlu0 %556
      %v559 = vmul.f32 %v519, %v529
      %v560 = vmul.f32 %v520, %v533
      %v561 = vmul.f32 %v521, %v537
      %v562 = vmul.f32 %v522, %v541
      %v563 = vmul.f32 %v523, %v545
      %v564 = vmul.f32 %v524, %v549
      %v565 = vmul.f32 %v525, %v553
      %v566 = vmul.f32 %v526, %v557
      %v567 = vadd.f32 %v510, %v559
      %v568 = vadd.f32 %v511, %v560
      %v569 = vadd.f32 %v512, %v561
      %v570 = vadd.f32 %v513, %v562
      %v571 = vadd.f32 %v514, %v563
      %v572 = vadd.f32 %v515, %v564
      %v573 = vadd.f32 %v516, %v565
      %v574 = vadd.f32 %v517, %v566
      %s575 = scalar_lea.vmem %s219, 384
      %v576 = vld [vmem:[%s575] sm:$0xff]
      %v577 = vld [vmem:[%s575 + $0x8] sm:$0xff]
      %v578 = vld [vmem:[%s575 + $0x10] sm:$0xff]
      %v579 = vld [vmem:[%s575 + $0x18] sm:$0xff]
      %v580 = vld [vmem:[%s575 + $0x20] sm:$0xff]
      %v581 = vld [vmem:[%s575 + $0x28] sm:$0xff]
      %v582 = vld [vmem:[%s575 + $0x30] sm:$0xff]
      %v583 = vld [vmem:[%s575 + $0x38] sm:$0xff]
      %584 = vset.pattern.permute.xlu0 6
      %585 = vperm.xlu0 %584, %v226
      %v586 = vpop.permute.xlu0 %585
      %588 = vset.pattern.permute.xlu0 6
      %589 = vperm.xlu0 %588, %v227
      %v590 = vpop.permute.xlu0 %589
      %592 = vset.pattern.permute.xlu0 6
      %593 = vperm.xlu0 %592, %v228
      %v594 = vpop.permute.xlu0 %593
      %596 = vset.pattern.permute.xlu0 6
      %597 = vperm.xlu0 %596, %v229
      %v598 = vpop.permute.xlu0 %597
      %600 = vset.pattern.permute.xlu0 6
      %601 = vperm.xlu0 %600, %v230
      %v602 = vpop.permute.xlu0 %601
      %604 = vset.pattern.permute.xlu0 6
      %605 = vperm.xlu0 %604, %v231
      %v606 = vpop.permute.xlu0 %605
      %608 = vset.pattern.permute.xlu0 6
      %609 = vperm.xlu0 %608, %v232
      %v610 = vpop.permute.xlu0 %609
      %612 = vset.pattern.permute.xlu0 6
      %613 = vperm.xlu0 %612, %v233
      %v614 = vpop.permute.xlu0 %613
      %v616 = vmul.f32 %v576, %v586
      %v617 = vmul.f32 %v577, %v590
      %v618 = vmul.f32 %v578, %v594
      %v619 = vmul.f32 %v579, %v598
      %v620 = vmul.f32 %v580, %v602
      %v621 = vmul.f32 %v581, %v606
      %v622 = vmul.f32 %v582, %v610
      %v623 = vmul.f32 %v583, %v614
      %v624 = vadd.f32 %v567, %v616
      %v625 = vadd.f32 %v568, %v617
      %v626 = vadd.f32 %v569, %v618
      %v627 = vadd.f32 %v570, %v619
      %v628 = vadd.f32 %v571, %v620
      %v629 = vadd.f32 %v572, %v621
      %v630 = vadd.f32 %v573, %v622
      %v631 = vadd.f32 %v574, %v623
      %s632 = scalar_lea.vmem %s219, 448
      %v633 = vld [vmem:[%s632] sm:$0xff]
      %v634 = vld [vmem:[%s632 + $0x8] sm:$0xff]
      %v635 = vld [vmem:[%s632 + $0x10] sm:$0xff]
      %v636 = vld [vmem:[%s632 + $0x18] sm:$0xff]
      %v637 = vld [vmem:[%s632 + $0x20] sm:$0xff]
      %v638 = vld [vmem:[%s632 + $0x28] sm:$0xff]
      %v639 = vld [vmem:[%s632 + $0x30] sm:$0xff]
      %v640 = vld [vmem:[%s632 + $0x38] sm:$0xff]
      %641 = vset.pattern.permute.xlu0 7
      %642 = vperm.xlu0 %641, %v226
      %v643 = vpop.permute.xlu0 %642
      %645 = vset.pattern.permute.xlu0 7
      %646 = vperm.xlu0 %645, %v227
      %v647 = vpop.permute.xlu0 %646
      %649 = vset.pattern.permute.xlu0 7
      %650 = vperm.xlu0 %649, %v228
      %v651 = vpop.permute.xlu0 %650
      %653 = vset.pattern.permute.xlu0 7
      %654 = vperm.xlu0 %653, %v229
      %v655 = vpop.permute.xlu0 %654
      %657 = vset.pattern.permute.xlu0 7
      %658 = vperm.xlu0 %657, %v230
      %v659 = vpop.permute.xlu0 %658
      %661 = vset.pattern.permute.xlu0 7
      %662 = vperm.xlu0 %661, %v231
      %v663 = vpop.permute.xlu0 %662
      %665 = vset.pattern.permute.xlu0 7
      %666 = vperm.xlu0 %665, %v232
      %v667 = vpop.permute.xlu0 %666
      %669 = vset.pattern.permute.xlu0 7
      %670 = vperm.xlu0 %669, %v233
      %v671 = vpop.permute.xlu0 %670
      %v673 = vmul.f32 %v633, %v643
      %v674 = vmul.f32 %v634, %v647
      %v675 = vmul.f32 %v635, %v651
      %v676 = vmul.f32 %v636, %v655
      %v677 = vmul.f32 %v637, %v659
      %v678 = vmul.f32 %v638, %v663
      %v679 = vmul.f32 %v639, %v667
      %v680 = vmul.f32 %v640, %v671
      %v681 = vadd.f32 %v624, %v673
      %v682 = vadd.f32 %v625, %v674
      %v683 = vadd.f32 %v626, %v675
      %v684 = vadd.f32 %v627, %v676
      %v685 = vadd.f32 %v628, %v677
      %v686 = vadd.f32 %v629, %v678
      %v687 = vadd.f32 %v630, %v679
      %v688 = vadd.f32 %v631, %v680
      %s689 = scalar_lea.vmem %s219, 512
      %v690 = vld [vmem:[%s689] sm:$0xff]
      %v691 = vld [vmem:[%s689 + $0x8] sm:$0xff]
      %v692 = vld [vmem:[%s689 + $0x10] sm:$0xff]
      %v693 = vld [vmem:[%s689 + $0x18] sm:$0xff]
      %v694 = vld [vmem:[%s689 + $0x20] sm:$0xff]
      %v695 = vld [vmem:[%s689 + $0x28] sm:$0xff]
      %v696 = vld [vmem:[%s689 + $0x30] sm:$0xff]
      %v697 = vld [vmem:[%s689 + $0x38] sm:$0xff]
      %698 = vset.pattern.permute.xlu0 8
      %699 = vperm.xlu0 %698, %v226
      %v700 = vpop.permute.xlu0 %699
      %702 = vset.pattern.permute.xlu0 8
      %703 = vperm.xlu0 %702, %v227
      %v704 = vpop.permute.xlu0 %703
      %706 = vset.pattern.permute.xlu0 8
      %707 = vperm.xlu0 %706, %v228
      %v708 = vpop.permute.xlu0 %707
      %710 = vset.pattern.permute.xlu0 8
      %711 = vperm.xlu0 %710, %v229
      %v712 = vpop.permute.xlu0 %711
      %714 = vset.pattern.permute.xlu0 8
      %715 = vperm.xlu0 %714, %v230
      %v716 = vpop.permute.xlu0 %715
      %718 = vset.pattern.permute.xlu0 8
      %719 = vperm.xlu0 %718, %v231
      %v720 = vpop.permute.xlu0 %719
      %722 = vset.pattern.permute.xlu0 8
      %723 = vperm.xlu0 %722, %v232
      %v724 = vpop.permute.xlu0 %723
      %726 = vset.pattern.permute.xlu0 8
      %727 = vperm.xlu0 %726, %v233
      %v728 = vpop.permute.xlu0 %727
      %v730 = vmul.f32 %v690, %v700
      %v731 = vmul.f32 %v691, %v704
      %v732 = vmul.f32 %v692, %v708
      %v733 = vmul.f32 %v693, %v712
      %v734 = vmul.f32 %v694, %v716
      %v735 = vmul.f32 %v695, %v720
      %v736 = vmul.f32 %v696, %v724
      %v737 = vmul.f32 %v697, %v728
      %v738 = vadd.f32 %v681, %v730
      %v739 = vadd.f32 %v682, %v731
      %v740 = vadd.f32 %v683, %v732
      %v741 = vadd.f32 %v684, %v733
      %v742 = vadd.f32 %v685, %v734
      %v743 = vadd.f32 %v686, %v735
      %v744 = vadd.f32 %v687, %v736
      %v745 = vadd.f32 %v688, %v737
      %v746 = vld [vmem:[%s2] sm:$0xff]
      %v747 = vld [vmem:[%s2 + $0x8] sm:$0xff]
      %v748 = vld [vmem:[%s2 + $0x10] sm:$0xff]
      %v749 = vld [vmem:[%s2 + $0x18] sm:$0xff]
      %v750 = vld [vmem:[%s2 + $0x20] sm:$0xff]
      %v751 = vld [vmem:[%s2 + $0x28] sm:$0xff]
      %v752 = vld [vmem:[%s2 + $0x30] sm:$0xff]
      %v753 = vld [vmem:[%s2 + $0x38] sm:$0xff]
      %755 = vset.pattern.permute.xlu0 0
      %756 = vperm.xlu0 %755, %v746
      %v757 = vpop.permute.xlu0 %756
      %760 = vset.pattern.permute.xlu0 0
      %761 = vperm.xlu0 %760, %v747
      %v762 = vpop.permute.xlu0 %761
      %765 = vset.pattern.permute.xlu0 0
      %766 = vperm.xlu0 %765, %v748
      %v767 = vpop.permute.xlu0 %766
      %770 = vset.pattern.permute.xlu0 0
      %771 = vperm.xlu0 %770, %v749
      %v772 = vpop.permute.xlu0 %771
      %775 = vset.pattern.permute.xlu0 0
      %776 = vperm.xlu0 %775, %v750
      %v777 = vpop.permute.xlu0 %776
      %780 = vset.pattern.permute.xlu0 0
      %781 = vperm.xlu0 %780, %v751
      %v782 = vpop.permute.xlu0 %781
      %785 = vset.pattern.permute.xlu0 0
      %786 = vperm.xlu0 %785, %v752
      %v787 = vpop.permute.xlu0 %786
      %790 = vset.pattern.permute.xlu0 0
      %791 = vperm.xlu0 %790, %v753
      %v792 = vpop.permute.xlu0 %791
      %v794 = vadd.f32 %v738, %v757
      %v795 = vadd.f32 %v739, %v762
      %v796 = vadd.f32 %v740, %v767
      %v797 = vadd.f32 %v741, %v772
      %v798 = vadd.f32 %v742, %v777
      %v799 = vadd.f32 %v743, %v782
      %v800 = vadd.f32 %v744, %v787
      %v801 = vadd.f32 %v745, %v792
      %v802 = vmax.f32 %v794, 0.0
      %v803 = vmax.f32 %v795, 0.0
      %v804 = vmax.f32 %v796, 0.0
      %v805 = vmax.f32 %v797, 0.0
      %v806 = vmax.f32 %v798, 0.0
      %v807 = vmax.f32 %v799, 0.0
      %v808 = vmax.f32 %v800, 0.0
      %v809 = vmax.f32 %v801, 0.0
      %v810 = vld [vmem:[%s3] sm:$0xf]
      %v811 = vld [vmem:[%s3 + $0x4] sm:$0xf]
      %v812 = vld [vmem:[%s3 + $0x8] sm:$0xf]
      %v813 = vld [vmem:[%s3 + $0xc] sm:$0xf]
      %v814 = vld [vmem:[%s3 + $0x10] sm:$0xf]
      %v815 = vld [vmem:[%s3 + $0x14] sm:$0xf]
      %v816 = vld [vmem:[%s3 + $0x18] sm:$0xf]
      %v817 = vld [vmem:[%s3 + $0x1c] sm:$0xf]
      %v818 = vld [vmem:[%s3 + $0x20] sm:$0xf]
      %v819 = vld [vmem:[%s3 + $0x24] sm:$0xf]
      %v820 = vld [vmem:[%s3 + $0x28] sm:$0xf]
      %v821 = vld [vmem:[%s3 + $0x2c] sm:$0xf]
      %v822 = vld [vmem:[%s3 + $0x30] sm:$0xf]
      %v823 = vld [vmem:[%s3 + $0x34] sm:$0xf]
      %v824 = vld [vmem:[%s3 + $0x38] sm:$0xf]
      %v825 = vld [vmem:[%s3 + $0x3c] sm:$0xf]
      %v826 = vpack.c.bf16 %v803, %v802
      %v827 = vpack.c.bf16 %v805, %v804
      %v828 = vpack.c.bf16 %v807, %v806
      %v829 = vpack.c.bf16 %v809, %v808
      %v830 = vld [vmem:[%s4] sm:$0xff]
      %v831 = vld [vmem:[%s4 + $0x8] sm:$0xff]
      %v832 = vld [vmem:[%s4 + $0x10] sm:$0xff]
      %v833 = vld [vmem:[%s4 + $0x18] sm:$0xff]
      %v834 = vld [vmem:[%s4 + $0x20] sm:$0xff]
      %v835 = vld [vmem:[%s4 + $0x28] sm:$0xff]
      %v836 = vld [vmem:[%s4 + $0x30] sm:$0xff]
      %v837 = vld [vmem:[%s4 + $0x38] sm:$0xff]
      %v838 = vld [vmem:[%s4 + $0x40] sm:$0xff]
      %v839 = vld [vmem:[%s4 + $0x48] sm:$0xff]
      %v840 = vld [vmem:[%s4 + $0x50] sm:$0xff]
      %v841 = vld [vmem:[%s4 + $0x58] sm:$0xff]
      %v842 = vld [vmem:[%s4 + $0x60] sm:$0xff]
      %v843 = vld [vmem:[%s4 + $0x68] sm:$0xff]
      %v844 = vld [vmem:[%s4 + $0x70] sm:$0xff]
      %v845 = vld [vmem:[%s4 + $0x78] sm:$0xff]
      %847 = vset.pattern.permute.xlu0 0
      %848 = vperm.xlu0 %847, %v830
      %v849 = vpop.permute.xlu0 %848
      %852 = vset.pattern.permute.xlu0 0
      %853 = vperm.xlu0 %852, %v831
      %v854 = vpop.permute.xlu0 %853
      %857 = vset.pattern.permute.xlu0 0
      %858 = vperm.xlu0 %857, %v832
      %v859 = vpop.permute.xlu0 %858
      %862 = vset.pattern.permute.xlu0 0
      %863 = vperm.xlu0 %862, %v833
      %v864 = vpop.permute.xlu0 %863
      %867 = vset.pattern.permute.xlu0 0
      %868 = vperm.xlu0 %867, %v834
      %v869 = vpop.permute.xlu0 %868
      %872 = vset.pattern.permute.xlu0 0
      %873 = vperm.xlu0 %872, %v835
      %v874 = vpop.permute.xlu0 %873
      %877 = vset.pattern.permute.xlu0 0
      %878 = vperm.xlu0 %877, %v836
      %v879 = vpop.permute.xlu0 %878
      %882 = vset.pattern.permute.xlu0 0
      %883 = vperm.xlu0 %882, %v837
      %v884 = vpop.permute.xlu0 %883
      %887 = vset.pattern.permute.xlu0 0
      %888 = vperm.xlu0 %887, %v838
      %v889 = vpop.permute.xlu0 %888
      %892 = vset.pattern.permute.xlu0 0
      %893 = vperm.xlu0 %892, %v839
      %v894 = vpop.permute.xlu0 %893
      %897 = vset.pattern.permute.xlu0 0
      %898 = vperm.xlu0 %897, %v840
      %v899 = vpop.permute.xlu0 %898
      %902 = vset.pattern.permute.xlu0 0
      %903 = vperm.xlu0 %902, %v841
      %v904 = vpop.permute.xlu0 %903
      %907 = vset.pattern.permute.xlu0 0
      %908 = vperm.xlu0 %907, %v842
      %v909 = vpop.permute.xlu0 %908
      %912 = vset.pattern.permute.xlu0 0
      %913 = vperm.xlu0 %912, %v843
      %v914 = vpop.permute.xlu0 %913
      %917 = vset.pattern.permute.xlu0 0
      %918 = vperm.xlu0 %917, %v844
      %v919 = vpop.permute.xlu0 %918
      %922 = vset.pattern.permute.xlu0 0
      %923 = vperm.xlu0 %922, %v845
      %v924 = vpop.permute.xlu0 %923
      %v942 = vunpack.c.l.b16 %v810
      %v943 = vunpack.c.l.b16 %v811
      %v944 = vunpack.c.l.b16 %v812
      %v945 = vunpack.c.l.b16 %v813
      %v946 = vunpack.c.l.b16 %v814
      %v947 = vunpack.c.l.b16 %v815
      %v948 = vunpack.c.l.b16 %v816
      %v949 = vunpack.c.l.b16 %v817
      %v950 = vunpack.c.l.b16 %v818
      %v951 = vunpack.c.l.b16 %v819
      %v952 = vunpack.c.l.b16 %v820
      %v953 = vunpack.c.l.b16 %v821
      %v954 = vunpack.c.l.b16 %v822
      %v955 = vunpack.c.l.b16 %v823
      %v956 = vunpack.c.l.b16 %v824
      %v957 = vunpack.c.l.b16 %v825
      %v958 = vpack.c.b16 %v943, %v942
      %v959 = vpack.c.b16 %v945, %v944
      %v960 = vpack.c.b16 %v947, %v946
      %v961 = vpack.c.b16 %v949, %v948
      %v962 = vpack.c.b16 %v951, %v950
      %v963 = vpack.c.b16 %v953, %v952
      %v964 = vpack.c.b16 %v955, %v954
      %v965 = vpack.c.b16 %v957, %v956
      %vm966 = vcmask 523264
      %v968 = vsel %vm966, %v958, 0
      %v971 = vsel %vm966, %v959, 0
      %v974 = vsel %vm966, %v960, 0
      %v977 = vsel %vm966, %v961, 0
      %v980 = vsel %vm966, %v962, 0
      %v983 = vsel %vm966, %v963, 0
      %v986 = vsel %vm966, %v964, 0
      %v989 = vsel %vm966, %v965, 0
      %991 = vmatprep.subr.bf16.mxu0 0
      %992 = vmatpush1.bf16.msra.mxu0 0
      %993 = vmatprep.subr.bf16.mxu0 0
      %994 = vmatpush1.bf16.msra.mxu0 0
      %995 = vmatprep.subr.bf16.mxu0 0
      %996 = vmatpush1.bf16.msra.mxu0 0
      %997 = vmatprep.subr.bf16.mxu0 0
      %998 = vmatpush1.bf16.msra.mxu0 0
      %999 = vmatprep.subr.bf16.mxu0 0
      %1000 = vmatpush1.bf16.msra.mxu0 %v829
      %1001 = vmatprep.subr.bf16.mxu0 0
      %1002 = vmatpush1.bf16.msra.mxu0 %v828
      %1003 = vmatprep.subr.bf16.mxu0 0
      %1004 = vmatpush1.bf16.msra.mxu0 %v827
      %1005 = vmatprep.subr.bf16.mxu0 0
      %1006 = vmatpush1.bf16.msra.mxu0 %v826
      %1007 = vmatprep.subr.bf16.mxu0 0
      %1008 = vmatpush2.bf16.msra.mxu0 0
      %1009 = vmatprep.subr.bf16.mxu0 0
      %1010 = vmatpush2.bf16.msra.mxu0 0
      %1011 = vmatprep.subr.bf16.mxu0 0
      %1012 = vmatpush2.bf16.msra.mxu0 0
      %1013 = vmatprep.subr.bf16.mxu0 0
      %1014 = vmatpush2.bf16.msra.mxu0 0
      %1015 = vmatprep.subr.bf16.mxu0 0
      %1016 = vmatpush2.bf16.msra.mxu0 0
      %1017 = vmatprep.subr.bf16.mxu0 0
      %1018 = vmatpush2.bf16.msra.mxu0 0
      %1019 = vmatprep.subr.bf16.mxu0 0
      %1020 = vmatpush2.bf16.msra.mxu0 0
      %1021 = vmatprep.subr.bf16.mxu0 0
      %1022 = vmatpush2.bf16.msra.mxu0 0
      %1023 = vmatprep.mubr.bf16.mxu0 0
      %1024 = vmatmul.mubr.bf16.gmra.mxu0 %v968
      %v1025 = vpop.f32.mrf.mxu0
      %v1026 = vadd.f32 %v849, %v1025
      %v1027 = vpop.f32.mrf.mxu0
      %v1028 = vpop.f32.mrf.mxu0
      %v1029 = vadd.f32 %v854, %v1028
      %v1030 = vpop.f32.mrf.mxu0
      %1031 = vmatprep.mubr.bf16.mxu0 0
      %1032 = vmatmul.mubr.bf16.gmra.mxu0 %v971
      %v1033 = vpop.f32.mrf.mxu0
      %v1034 = vadd.f32 %v859, %v1033
      %v1035 = vpop.f32.mrf.mxu0
      %v1036 = vpop.f32.mrf.mxu0
      %v1037 = vadd.f32 %v864, %v1036
      %v1038 = vpop.f32.mrf.mxu0
      %1039 = vmatprep.mubr.bf16.mxu0 0
      %1040 = vmatmul.mubr.bf16.gmra.mxu0 %v974
      %v1041 = vpop.f32.mrf.mxu0
      %v1042 = vadd.f32 %v869, %v1041
      %v1043 = vpop.f32.mrf.mxu0
      %v1044 = vpop.f32.mrf.mxu0
      %v1045 = vadd.f32 %v874, %v1044
      %v1046 = vpop.f32.mrf.mxu0
      %1047 = vmatprep.mubr.bf16.mxu0 0
      %1048 = vmatmul.mubr.bf16.gmra.mxu0 %v977
      %v1049 = vpop.f32.mrf.mxu0
      %v1050 = vadd.f32 %v879, %v1049
      %v1051 = vpop.f32.mrf.mxu0
      %v1052 = vpop.f32.mrf.mxu0
      %v1053 = vadd.f32 %v884, %v1052
      %v1054 = vpop.f32.mrf.mxu0
      %1055 = vmatprep.mubr.bf16.mxu0 0
      %1056 = vmatmul.mubr.bf16.gmra.mxu0 %v980
      %v1057 = vpop.f32.mrf.mxu0
      %v1058 = vadd.f32 %v889, %v1057
      %v1059 = vpop.f32.mrf.mxu0
      %v1060 = vpop.f32.mrf.mxu0
      %v1061 = vadd.f32 %v894, %v1060
      %v1062 = vpop.f32.mrf.mxu0
      %1063 = vmatprep.mubr.bf16.mxu0 0
      %1064 = vmatmul.mubr.bf16.gmra.mxu0 %v983
      %v1065 = vpop.f32.mrf.mxu0
      %v1066 = vadd.f32 %v899, %v1065
      %v1067 = vpop.f32.mrf.mxu0
      %v1068 = vpop.f32.mrf.mxu0
      %v1069 = vadd.f32 %v904, %v1068
      %v1070 = vpop.f32.mrf.mxu0
      %1071 = vmatprep.mubr.bf16.mxu0 0
      %1072 = vmatmul.mubr.bf16.gmra.mxu0 %v986
      %v1073 = vpop.f32.mrf.mxu0
      %v1074 = vadd.f32 %v909, %v1073
      %v1075 = vpop.f32.mrf.mxu0
      %v1076 = vpop.f32.mrf.mxu0
      %v1077 = vadd.f32 %v914, %v1076
      %v1078 = vpop.f32.mrf.mxu0
      %1079 = vmatprep.mubr.bf16.mxu0 0
      %1080 = vmatmul.mubr.bf16.gmra.mxu0 %v989
      %v1081 = vpop.f32.mrf.mxu0
      %v1082 = vadd.f32 %v919, %v1081
      %v1083 = vpop.f32.mrf.mxu0
      %v1084 = vpop.f32.mrf.mxu0
      %v1085 = vadd.f32 %v924, %v1084
      %v1086 = vpop.f32.mrf.mxu0
      %1087 = vdwg.mxu0
      %v1088 = vmax.f32 %v1026, 0.0
      %v1089 = vmax.f32 %v1029, 0.0
      %v1090 = vmax.f32 %v1034, 0.0
      %v1091 = vmax.f32 %v1037, 0.0
      %v1092 = vmax.f32 %v1042, 0.0
      %v1093 = vmax.f32 %v1045, 0.0
      %v1094 = vmax.f32 %v1050, 0.0
      %v1095 = vmax.f32 %v1053, 0.0
      %v1096 = vmax.f32 %v1058, 0.0
      %v1097 = vmax.f32 %v1061, 0.0
      %v1098 = vmax.f32 %v1066, 0.0
      %v1099 = vmax.f32 %v1069, 0.0
      %v1100 = vmax.f32 %v1074, 0.0
      %v1101 = vmax.f32 %v1077, 0.0
      %v1102 = vmax.f32 %v1082, 0.0
      %v1103 = vmax.f32 %v1085, 0.0
      %vm1104 = vcmask 130048
      %1105 = vst.msk [vmem:[%s224] sm:$0xff] %vm1104, %v1088
      %1106 = vst.msk [vmem:[%s224 + $0x8] sm:$0xff] %vm1104, %v1089
      %1107 = vst.msk [vmem:[%s224 + $0x10] sm:$0xff] %vm1104, %v1090
      %1108 = vst.msk [vmem:[%s224 + $0x18] sm:$0xff] %vm1104, %v1091
      %1109 = vst.msk [vmem:[%s224 + $0x20] sm:$0xff] %vm1104, %v1092
      %1110 = vst.msk [vmem:[%s224 + $0x28] sm:$0xff] %vm1104, %v1093
      %1111 = vst.msk [vmem:[%s224 + $0x30] sm:$0xff] %vm1104, %v1094
      %1112 = vst.msk [vmem:[%s224 + $0x38] sm:$0xff] %vm1104, %v1095
      %1113 = vst.msk [vmem:[%s224 + $0x40] sm:$0xff] %vm1104, %v1096
      %1114 = vst.msk [vmem:[%s224 + $0x48] sm:$0xff] %vm1104, %v1097
      %1115 = vst.msk [vmem:[%s224 + $0x50] sm:$0xff] %vm1104, %v1098
      %1116 = vst.msk [vmem:[%s224 + $0x58] sm:$0xff] %vm1104, %v1099
      %1117 = vst.msk [vmem:[%s224 + $0x60] sm:$0xff] %vm1104, %v1100
      %1118 = vst.msk [vmem:[%s224 + $0x68] sm:$0xff] %vm1104, %v1101
      %1119 = vst.msk [vmem:[%s224 + $0x70] sm:$0xff] %vm1104, %v1102
      %1120 = vst.msk [vmem:[%s224 + $0x78] sm:$0xff] %vm1104, %v1103
      %p1121 = scmp.lt.s32.totalorder %s16, 1
      %s1122 = scalar_select %p1121, %s16, 1
      %s1123 = smul.addr %s1122, 16
      %s1124 = smul.addr %s1123, 8
      %s1125 = scalar_lea.vmem %s5, %s1124
      // Predicated region
      $region41: #{forward.13} parent=39 // pred_check
        %p1126 = pneg %p144
      $region42: #{forward.13} parent=39 // pred_check_branch
        %1128 = sbr.rel (%p1126) target = $region44
      $region43: #{forward.13} parent=39 // pred_region
        _
      $region44: #{forward.13} parent=39 // pred_fallthru
        _
    $region40: #{forward.13} parent=5 // pred_fallthru
      _
    %p1129 = scmp.le.s32.totalorder 2, %s11
    // Predicated region
    $region45: #{forward.13} parent=5 // pred_check
      %p1130 = pneg %p1129
    $region46: #{forward.13} parent=5 // pred_check_branch
      %1132 = sbr.rel (%p1130) target = $region48
    $region47: #{forward.13} parent=5 // pred_region
      %s1133 = ssub.s32 %s11, 2
      // Predicated region
      $region49: #{forward.13} parent=47 // pred_check
        %p1134 = pneg %p150
      $region50: #{forward.13} parent=47 // pred_check_branch
        %1136 = sbr.rel (%p1134) target = $region52
      $region51: #{forward.13} parent=47 // pred_region
        %p1137 = scmp.lt.s32.totalorder %s17, 1
        %s1138 = scalar_select %p1137, %s17, 1
        %s1139 = smul.addr %s1138, 16
        %s1140 = smul.addr %s1139, 8
        %s1141 = scalar_lea.vmem %s5, %s1140
      $region52: #{forward.13} parent=47 // pred_fallthru
        _
    $region48: #{forward.13} parent=5 // pred_fallthru
      _
  $region6: #{forward.13} parent=0 // loop_footer
    %s15 = sadd.s32 1, %s11
  $region7: #{forward.13} parent=0 // loop_footer_branch
    %10 = sbr.rel target = $region3
  $region8: #{forward.13} parent=0 // loop_exit
    _

// kernel: forward.15
$region0: #{forward.15}
  #allocation0 [shape = 'u32[]', space=smem, size = 0x4, offset = 0x4, fixed_abs, tag = 'smem constant byte address 0x4 - core index']
  #allocation1 [shape = 'u32[144,128]{1,0:T(1,128)}', space=vmem, size = 0x12000, scoped, tag = 'internal scratch']
  %s0 = inlined_call_operand.vmem [shape: f32[2,64,16], index: 0, kind: input, shape index: {}]
  %s1 = inlined_call_operand.vmem [shape: f32[2,128,16], index: 1, kind: input, shape index: {}]
  %s2 = inlined_call_operand.vmem [shape: bf16[64,128], index: 2, kind: input, shape index: {}]
  %s3 = inlined_call_operand.vmem [shape: f32[64,1], index: 3, kind: input, shape index: {}]
  %s4 = inlined_call_operand.vmem [shape: bf16[32,64], index: 4, kind: input, shape index: {}]
  %s5 = inlined_call_operand.vmem [shape: f32[2,32,16], index: 5, kind: output, shape index: {}]
  %s6 = sld [smem:[#allocation0]]
  $region53: #{forward.15} parent=0
    _
  %s8 = ssub.s32 1, %s6
  %s9 = scalar_select 0, %s8, %s6
  loop: start=0, step=1, limit=4
  $region2: #{forward.15} parent=0 // loop_pre_header
    _
  $region3: #{forward.15} parent=0 // loop_header
    %s11 = sphi 0, %s15
    %p12 = scmp.ge.s32.totalorder %s11, 4
    %s21 = sphi 0, %s23
    %s24 = sphi 0, %s21
    %s25 = sphi 0, %s24
    %s41 = sphi 0, %s25
    %s47 = sphi 0, %s49
    %s50 = sphi 0, %s47
    %s51 = sphi 0, %s50
    %s67 = sphi 0, %s51
    %s71 = sphi 0, %s71
    %s73 = sphi 0, %s71
    %s74 = sphi 0, %s73
    %s88 = sphi 0, %s74
    %s92 = sphi 0, %s92
    %s94 = sphi 0, %s92
    %s95 = sphi 0, %s94
    %s109 = sphi 0, %s95
    %s113 = sphi 0, %s113
    %s115 = sphi 0, %s113
    %s116 = sphi 0, %s115
    %s130 = sphi 0, %s116
    %s136 = sphi 0, %s138
    %s139 = sphi 0, %s136
    %s140 = sphi 0, %s139
    %s156 = sphi 0, %s140
  $region4: #{forward.15} parent=0 // loop_header_branch
    %14 = sbr.rel (%p12) target = $region8
  $region5: #{forward.15} parent=0 // loop_body
    %s16 = ssub.s32 %s11, 1
    %s17 = ssub.s32 %s11, 2
    %s18 = sadd.s32 %s11, 1
    %s19 = ssub.s32 %s11, %s18
    %p20 = scmp.eq.s32.totalorder %s19, 0
    %s22 = sadd.s32 %s21, 1
    %s23 = scalar_select %p20, %s21, %s22
    %p26 = pneg %p20
    %p27 = scmp.eq.s32.totalorder %s11, 1
    %p28 = por %p26, %p27
    %p29 = scmp.ne.s32.totalorder %s21, %s24
    %p30 = scmp.eq.s32.totalorder %s11, 0
    %p31 = por %p29, %p30
    %p32 = scmp.ne.s32.totalorder %s21, %s24
    %p33 = scmp.eq.s32.totalorder %s16, 1
    %p34 = por %p32, %p33
    %p35 = scmp.ne.s32.totalorder %s24, %s25
    %p36 = scmp.eq.s32.totalorder %s16, 0
    %p37 = por %p35, %p36
    %p38 = scmp.ne.s32.totalorder %s24, %s25
    %p39 = scmp.eq.s32.totalorder %s17, 1
    %p40 = por %p38, %p39
    %p42 = scmp.ne.s32.totalorder %s25, %s41
    %p43 = scmp.eq.s32.totalorder %s17, 0
    %p44 = por %p42, %p43
    %s45 = ssub.s32 %s11, %s18
    %p46 = scmp.eq.s32.totalorder %s45, 0
    %s48 = sadd.s32 %s47, 1
    %s49 = scalar_select %p46, %s47, %s48
    %p52 = pneg %p46
    %p53 = scmp.eq.s32.totalorder %s11, 1
    %p54 = por %p52, %p53
    %p55 = scmp.ne.s32.totalorder %s47, %s50
    %p56 = scmp.eq.s32.totalorder %s11, 0
    %p57 = por %p55, %p56
    %p58 = scmp.ne.s32.totalorder %s47, %s50
    %p59 = scmp.eq.s32.totalorder %s16, 1
    %p60 = por %p58, %p59
    %p61 = scmp.ne.s32.totalorder %s50, %s51
    %p62 = scmp.eq.s32.totalorder %s16, 0
    %p63 = por %p61, %p62
    %p64 = scmp.ne.s32.totalorder %s50, %s51
    %p65 = scmp.eq.s32.totalorder %s17, 1
    %p66 = por %p64, %p65
    %p68 = scmp.ne.s32.totalorder %s51, %s67
    %p69 = scmp.eq.s32.totalorder %s17, 0
    %p70 = por %p68, %p69
    %s72 = sadd.s32 %s71, 1
    %p75 = scmp.eq.s32.totalorder %s11, 1
    %p76 = scmp.ne.s32.totalorder %s71, %s73
    %p77 = scmp.eq.s32.totalorder %s11, 0
    %p78 = por %p76, %p77
    %p79 = scmp.ne.s32.totalorder %s71, %s73
    %p80 = scmp.eq.s32.totalorder %s16, 1
    %p81 = por %p79, %p80
    %p82 = scmp.ne.s32.totalorder %s73, %s74
    %p83 = scmp.eq.s32.totalorder %s16, 0
    %p84 = por %p82, %p83
    %p85 = scmp.ne.s32.totalorder %s73, %s74
    %p86 = scmp.eq.s32.totalorder %s17, 1
    %p87 = por %p85, %p86
    %p89 = scmp.ne.s32.totalorder %s74, %s88
    %p90 = scmp.eq.s32.totalorder %s17, 0
    %p91 = por %p89, %p90
    %s93 = sadd.s32 %s92, 1
    %p96 = scmp.eq.s32.totalorder %s11, 1
    %p97 = scmp.ne.s32.totalorder %s92, %s94
    %p98 = scmp.eq.s32.totalorder %s11, 0
    %p99 = por %p97, %p98
    %p100 = scmp.ne.s32.totalorder %s92, %s94
    %p101 = scmp.eq.s32.totalorder %s16, 1
    %p102 = por %p100, %p101
    %p103 = scmp.ne.s32.totalorder %s94, %s95
    %p104 = scmp.eq.s32.totalorder %s16, 0
    %p105 = por %p103, %p104
    %p106 = scmp.ne.s32.totalorder %s94, %s95
    %p107 = scmp.eq.s32.totalorder %s17, 1
    %p108 = por %p106, %p107
    %p110 = scmp.ne.s32.totalorder %s95, %s109
    %p111 = scmp.eq.s32.totalorder %s17, 0
    %p112 = por %p110, %p111
    %s114 = sadd.s32 %s113, 1
    %p117 = scmp.eq.s32.totalorder %s11, 1
    %p118 = scmp.ne.s32.totalorder %s113, %s115
    %p119 = scmp.eq.s32.totalorder %s11, 0
    %p120 = por %p118, %p119
    %p121 = scmp.ne.s32.totalorder %s113, %s115
    %p122 = scmp.eq.s32.totalorder %s16, 1
    %p123 = por %p121, %p122
    %p124 = scmp.ne.s32.totalorder %s115, %s116
    %p125 = scmp.eq.s32.totalorder %s16, 0
    %p126 = por %p124, %p125
    %p127 = scmp.ne.s32.totalorder %s115, %s116
    %p128 = scmp.eq.s32.totalorder %s17, 1
    %p129 = por %p127, %p128
    %p131 = scmp.ne.s32.totalorder %s116, %s130
    %p132 = scmp.eq.s32.totalorder %s17, 0
    %p133 = por %p131, %p132
    %s134 = ssub.s32 %s11, %s18
    %p135 = scmp.eq.s32.totalorder %s134, 0
    %s137 = sadd.s32 %s136, 1
    %s138 = scalar_select %p135, %s136, %s137
    %p141 = pneg %p135
    %p142 = scmp.eq.s32.totalorder %s11, 1
    %p143 = por %p141, %p142
    %p144 = scmp.ne.s32.totalorder %s136, %s139
    %p145 = scmp.eq.s32.totalorder %s11, 0
    %p146 = por %p144, %p145
    %p147 = scmp.ne.s32.totalorder %s136, %s139
    %p148 = scmp.eq.s32.totalorder %s16, 1
    %p149 = por %p147, %p148
    %p150 = scmp.ne.s32.totalorder %s139, %s140
    %p151 = scmp.eq.s32.totalorder %s16, 0
    %p152 = por %p150, %p151
    %p153 = scmp.ne.s32.totalorder %s139, %s140
    %p154 = scmp.eq.s32.totalorder %s17, 1
    %p155 = por %p153, %p154
    %p157 = scmp.ne.s32.totalorder %s140, %s156
    %p158 = scmp.eq.s32.totalorder %s17, 0
    %p159 = por %p157, %p158
    %p160 = scmp.le.s32.totalorder 1, %s11
    %p161 = scmp.lt.s32.totalorder %s11, 3
    %p162 = pnand %p160, %p161
    %p163 = pneg %p162
    // Predicated region
    $region9: #{forward.15} parent=5 // pred_check
      _
    $region10: #{forward.15} parent=5 // pred_check_branch
      %165 = sbr.rel (%p162) target = $region12
    $region11: #{forward.15} parent=5 // pred_region
      %s166 = ssub.s32 %s11, 1
      // Predicated region
      $region13: #{forward.15} parent=11 // pred_check
        %p167 = pneg %p84
      $region14: #{forward.15} parent=11 // pred_check_branch
        %169 = sbr.rel (%p167) target = $region16
      $region15: #{forward.15} parent=11 // pred_region
        _
      $region16: #{forward.15} parent=11 // pred_fallthru
        _
      // Predicated region
      $region17: #{forward.15} parent=11 // pred_check
        %p170 = pneg %p105
      $region18: #{forward.15} parent=11 // pred_check_branch
        %172 = sbr.rel (%p170) target = $region20
      $region19: #{forward.15} parent=11 // pred_region
        _
      $region20: #{forward.15} parent=11 // pred_fallthru
        _
      // Predicated region
      $region21: #{forward.15} parent=11 // pred_check
        %p173 = pneg %p126
      $region22: #{forward.15} parent=11 // pred_check_branch
        %175 = sbr.rel (%p173) target = $region24
      $region23: #{forward.15} parent=11 // pred_region
        _
      $region24: #{forward.15} parent=11 // pred_fallthru
        _
    $region12: #{forward.15} parent=5 // pred_fallthru
      _
    %p176 = scmp.lt.s32.totalorder %s11, 2
    // Predicated region
    $region25: #{forward.15} parent=5 // pred_check
      %p177 = pneg %p176
    $region26: #{forward.15} parent=5 // pred_check_branch
      %179 = sbr.rel (%p177) target = $region28
    $region27: #{forward.15} parent=5 // pred_region
      // Predicated region
      $region29: #{forward.15} parent=27 // pred_check
        %p180 = pneg %p31
      $region30: #{forward.15} parent=27 // pred_check_branch
        %182 = sbr.rel (%p180) target = $region32
      $region31: #{forward.15} parent=27 // pred_region
        %p183 = scmp.lt.s32.totalorder %s11, 1
        %s184 = scalar_select %p183, %s11, 1
        %s185 = smul.addr %s184, 8
        %s186 = smul.addr %s185, 8
        %s187 = scalar_lea.vmem %s0, %s186
      $region32: #{forward.15} parent=27 // pred_fallthru
        _
      // Predicated region
      $region33: #{forward.15} parent=27 // pred_check
        %p188 = pneg %p57
      $region34: #{forward.15} parent=27 // pred_check_branch
        %190 = sbr.rel (%p188) target = $region36
      $region35: #{forward.15} parent=27 // pred_region
        %p191 = scmp.lt.s32.totalorder %s11, 1
        %s192 = scalar_select %p191, %s11, 1
        %s193 = smul.addr %s192, 16
        %s194 = smul.addr %s193, 8
        %s195 = scalar_lea.vmem %s1, %s194
      $region36: #{forward.15} parent=27 // pred_fallthru
        _
    $region28: #{forward.15} parent=5 // pred_fallthru
      _
    %p196 = scmp.le.s32.totalorder 1, %s11
    %p197 = scmp.lt.s32.totalorder %s11, 3
    %p198 = pnand %p196, %p197
    %p199 = pneg %p198
    // Predicated region
    $region37: #{forward.15} parent=5 // pred_check
      _
    $region38: #{forward.15} parent=5 // pred_check_branch
      %201 = sbr.rel (%p198) target = $region40
    $region39: #{forward.15} parent=5 // pred_region
      %s202 = ssub.s32 %s11, 1
      %p203 = scmp.lt.s32.totalorder %s16, 1
      %s204 = scalar_select %p203, %s16, 1
      %s205 = smul.addr %s204, 8
      %s206 = smul.addr %s205, 8
      %s207 = scalar_lea.vmem %s0, %s206
      %p208 = pneg %p37
      %p209 = pneg %p34
      %p210 = scmp.lt.s32.totalorder %s16, 1
      %s211 = scalar_select %p210, %s16, 1
      %s212 = smul.addr %s211, 16
      %s213 = smul.addr %s212, 8
      %s214 = scalar_lea.vmem %s1, %s213
      %p215 = pneg %p63
      %p216 = pneg %p60
      %p217 = pneg %p84
      %p218 = pneg %p81
      %p219 = pneg %p105
      %p220 = pneg %p102
      %p221 = pneg %p126
      %p222 = pneg %p123
      %p223 = pneg %p152
      %p224 = pneg %p149
      %p225 = scmp.lt.s32.totalorder %s16, 1
      %s226 = scalar_select %p225, %s16, 1
      %s227 = smul.addr %s226, 4
      %s228 = smul.addr %s227, 8
      %s229 = scalar_lea.vmem %s5, %s228
      %p230 = scmp.lt.s32.totalorder %s16, 1
      %s231 = scalar_select %p230, %s16, 1
      %s232 = smul.addr %s231, 8
      %s233 = smul.addr %s232, 8
      %s234 = scalar_lea.vmem %s0, %s233
      %p235 = scmp.lt.s32.totalorder %s16, 1
      %s236 = scalar_select %p235, %s16, 1
      %s237 = smul.addr %s236, 16
      %s238 = smul.addr %s237, 8
      %s239 = scalar_lea.vmem %s1, %s238
      %p240 = scmp.lt.s32.totalorder %s16, 1
      %s241 = scalar_select %p240, %s16, 1
      %s242 = smul.addr %s241, 4
      %s243 = smul.addr %s242, 8
      %s244 = scalar_lea.vmem %s5, %s243
      %v246 = vld [vmem:[%s2] sm:$0xf]
      %v247 = vld [vmem:[%s2 + $0x4] sm:$0xf]
      %v248 = vld [vmem:[%s2 + $0x8] sm:$0xf]
      %v249 = vld [vmem:[%s2 + $0xc] sm:$0xf]
      %v250 = vld [vmem:[%s2 + $0x10] sm:$0xf]
      %v251 = vld [vmem:[%s2 + $0x14] sm:$0xf]
      %v252 = vld [vmem:[%s2 + $0x18] sm:$0xf]
      %v253 = vld [vmem:[%s2 + $0x1c] sm:$0xf]
      %v254 = vld [vmem:[%s239] sm:$0xff]
      %v255 = vld [vmem:[%s239 + $0x8] sm:$0xff]
      %v256 = vld [vmem:[%s239 + $0x10] sm:$0xff]
      %v257 = vld [vmem:[%s239 + $0x18] sm:$0xff]
      %v258 = vld [vmem:[%s239 + $0x20] sm:$0xff]
      %v259 = vld [vmem:[%s239 + $0x28] sm:$0xff]
      %v260 = vld [vmem:[%s239 + $0x30] sm:$0xff]
      %v261 = vld [vmem:[%s239 + $0x38] sm:$0xff]
      %v262 = vld [vmem:[%s239 + $0x40] sm:$0xff]
      %v263 = vld [vmem:[%s239 + $0x48] sm:$0xff]
      %v264 = vld [vmem:[%s239 + $0x50] sm:$0xff]
      %v265 = vld [vmem:[%s239 + $0x58] sm:$0xff]
      %v266 = vld [vmem:[%s239 + $0x60] sm:$0xff]
      %v267 = vld [vmem:[%s239 + $0x68] sm:$0xff]
      %v268 = vld [vmem:[%s239 + $0x70] sm:$0xff]
      %v269 = vld [vmem:[%s239 + $0x78] sm:$0xff]
      %v270 = vpack.c.bf16 %v255, %v254
      %v271 = vpack.c.bf16 %v257, %v256
      %v272 = vpack.c.bf16 %v259, %v258
      %v273 = vpack.c.bf16 %v261, %v260
      %v274 = vpack.c.bf16 %v263, %v262
      %v275 = vpack.c.bf16 %v265, %v264
      %v276 = vpack.c.bf16 %v267, %v266
      %v277 = vpack.c.bf16 %v269, %v268
      %v286 = vunpack.c.l.b16 %v246
      %v287 = vunpack.c.l.b16 %v247
      %v288 = vunpack.c.l.b16 %v248
      %v289 = vunpack.c.l.b16 %v249
      %v290 = vunpack.c.l.b16 %v250
      %v291 = vunpack.c.l.b16 %v251
      %v292 = vunpack.c.l.b16 %v252
      %v293 = vunpack.c.l.b16 %v253
      %v294 = vpack.c.b16 %v287, %v286
      %v295 = vpack.c.b16 %v289, %v288
      %v296 = vpack.c.b16 %v291, %v290
      %v297 = vpack.c.b16 %v293, %v292
      %302 = vmatprep.subr.bf16.mxu0 0
      %303 = vmatpush1.bf16.msra.mxu0 %v277
      %304 = vmatprep.subr.bf16.mxu0 0
      %305 = vmatpush1.bf16.msra.mxu0 %v276
      %306 = vmatprep.subr.bf16.mxu0 0
      %307 = vmatpush1.bf16.msra.mxu0 %v275
      %308 = vmatprep.subr.bf16.mxu0 0
      %309 = vmatpush1.bf16.msra.mxu0 %v274
      %310 = vmatprep.subr.bf16.mxu0 0
      %311 = vmatpush1.bf16.msra.mxu0 %v273
      %312 = vmatprep.subr.bf16.mxu0 0
      %313 = vmatpush1.bf16.msra.mxu0 %v272
      %314 = vmatprep.subr.bf16.mxu0 0
      %315 = vmatpush1.bf16.msra.mxu0 %v271
      %316 = vmatprep.subr.bf16.mxu0 0
      %317 = vmatpush1.bf16.msra.mxu0 %v270
      %318 = vmatprep.subr.bf16.mxu0 0
      %319 = vmatpush2.bf16.msra.mxu0 0
      %320 = vmatprep.subr.bf16.mxu0 0
      %321 = vmatpush2.bf16.msra.mxu0 0
      %322 = vmatprep.subr.bf16.mxu0 0
      %323 = vmatpush2.bf16.msra.mxu0 0
      %324 = vmatprep.subr.bf16.mxu0 0
      %325 = vmatpush2.bf16.msra.mxu0 0
      %326 = vmatprep.subr.bf16.mxu0 0
      %327 = vmatpush2.bf16.msra.mxu0 0
      %328 = vmatprep.subr.bf16.mxu0 0
      %329 = vmatpush2.bf16.msra.mxu0 0
      %330 = vmatprep.subr.bf16.mxu0 0
      %331 = vmatpush2.bf16.msra.mxu0 0
      %332 = vmatprep.subr.bf16.mxu0 0
      %333 = vmatpush2.bf16.msra.mxu0 0
      %334 = vmatprep.mubr.bf16.mxu0 0
      %335 = vmatmul.mubr.bf16.gmra.mxu0 %v294
      %v336 = vpop.f32.mrf.mxu0
      %v337 = vadd.f32 0.0, %v336
      %v338 = vpop.f32.mrf.mxu0
      %v339 = vpop.f32.mrf.mxu0
      %v340 = vadd.f32 0.0, %v339
      %v341 = vpop.f32.mrf.mxu0
      %342 = vmatprep.mubr.bf16.mxu0 0
      %343 = vmatmul.mubr.bf16.gmra.mxu0 %v295
      %v344 = vpop.f32.mrf.mxu0
      %v345 = vadd.f32 0.0, %v344
      %v346 = vpop.f32.mrf.mxu0
      %v347 = vpop.f32.mrf.mxu0
      %v348 = vadd.f32 0.0, %v347
      %v349 = vpop.f32.mrf.mxu0
      %350 = vmatprep.mubr.bf16.mxu0 0
      %351 = vmatmul.mubr.bf16.gmra.mxu0 %v296
      %v352 = vpop.f32.mrf.mxu0
      %v353 = vadd.f32 0.0, %v352
      %v354 = vpop.f32.mrf.mxu0
      %v355 = vpop.f32.mrf.mxu0
      %v356 = vadd.f32 0.0, %v355
      %v357 = vpop.f32.mrf.mxu0
      %358 = vmatprep.mubr.bf16.mxu0 0
      %359 = vmatmul.mubr.bf16.gmra.mxu0 %v297
      %v360 = vpop.f32.mrf.mxu0
      %v361 = vadd.f32 0.0, %v360
      %v362 = vpop.f32.mrf.mxu0
      %v363 = vpop.f32.mrf.mxu0
      %v364 = vadd.f32 0.0, %v363
      %v365 = vpop.f32.mrf.mxu0
      %366 = vdwg.mxu0
      %v367 = vld [vmem:[%s234] sm:$0xff]
      %v368 = vld [vmem:[%s234 + $0x8] sm:$0xff]
      %v369 = vld [vmem:[%s234 + $0x10] sm:$0xff]
      %v370 = vld [vmem:[%s234 + $0x18] sm:$0xff]
      %v371 = vld [vmem:[%s234 + $0x20] sm:$0xff]
      %v372 = vld [vmem:[%s234 + $0x28] sm:$0xff]
      %v373 = vld [vmem:[%s234 + $0x30] sm:$0xff]
      %v374 = vld [vmem:[%s234 + $0x38] sm:$0xff]
      %v375 = vadd.f32 %v367, %v337
      %v376 = vadd.f32 %v368, %v340
      %v377 = vadd.f32 %v369, %v345
      %v378 = vadd.f32 %v370, %v348
      %v379 = vadd.f32 %v371, %v353
      %v380 = vadd.f32 %v372, %v356
      %v381 = vadd.f32 %v373, %v361
      %v382 = vadd.f32 %v374, %v364
      %v383 = vld [vmem:[%s3] sm:$0xff]
      %v384 = vld [vmem:[%s3 + $0x8] sm:$0xff]
      %v385 = vld [vmem:[%s3 + $0x10] sm:$0xff]
      %v386 = vld [vmem:[%s3 + $0x18] sm:$0xff]
      %v387 = vld [vmem:[%s3 + $0x20] sm:$0xff]
      %v388 = vld [vmem:[%s3 + $0x28] sm:$0xff]
      %v389 = vld [vmem:[%s3 + $0x30] sm:$0xff]
      %v390 = vld [vmem:[%s3 + $0x38] sm:$0xff]
      %392 = vset.pattern.permute.xlu0 0
      %393 = vperm.xlu0 %392, %v383
      %v394 = vpop.permute.xlu0 %393
      %397 = vset.pattern.permute.xlu0 0
      %398 = vperm.xlu0 %397, %v384
      %v399 = vpop.permute.xlu0 %398
      %402 = vset.pattern.permute.xlu0 0
      %403 = vperm.xlu0 %402, %v385
      %v404 = vpop.permute.xlu0 %403
      %407 = vset.pattern.permute.xlu0 0
      %408 = vperm.xlu0 %407, %v386
      %v409 = vpop.permute.xlu0 %408
      %412 = vset.pattern.permute.xlu0 0
      %413 = vperm.xlu0 %412, %v387
      %v414 = vpop.permute.xlu0 %413
      %417 = vset.pattern.permute.xlu0 0
      %418 = vperm.xlu0 %417, %v388
      %v419 = vpop.permute.xlu0 %418
      %422 = vset.pattern.permute.xlu0 0
      %423 = vperm.xlu0 %422, %v389
      %v424 = vpop.permute.xlu0 %423
      %427 = vset.pattern.permute.xlu0 0
      %428 = vperm.xlu0 %427, %v390
      %v429 = vpop.permute.xlu0 %428
      %v431 = vadd.f32 %v375, %v394
      %v432 = vadd.f32 %v376, %v399
      %v433 = vadd.f32 %v377, %v404
      %v434 = vadd.f32 %v378, %v409
      %v435 = vadd.f32 %v379, %v414
      %v436 = vadd.f32 %v380, %v419
      %v437 = vadd.f32 %v381, %v424
      %v438 = vadd.f32 %v382, %v429
      %v439 = vmax.f32 %v431, 0.0
      %v440 = vmax.f32 %v432, 0.0
      %v441 = vmax.f32 %v433, 0.0
      %v442 = vmax.f32 %v434, 0.0
      %v443 = vmax.f32 %v435, 0.0
      %v444 = vmax.f32 %v436, 0.0
      %v445 = vmax.f32 %v437, 0.0
      %v446 = vmax.f32 %v438, 0.0
      %v447 = vld [vmem:[%s4] sm:$0xf]
      %v448 = vld [vmem:[%s4 + $0x4] sm:$0xf]
      %v449 = vld [vmem:[%s4 + $0x8] sm:$0xf]
      %v450 = vld [vmem:[%s4 + $0xc] sm:$0xf]
      %v451 = vpack.c.bf16 %v440, %v439
      %v452 = vpack.c.bf16 %v442, %v441
      %v453 = vpack.c.bf16 %v444, %v443
      %v454 = vpack.c.bf16 %v446, %v445
      %v459 = vunpack.c.l.b16 %v447
      %v460 = vunpack.c.l.b16 %v448
      %v461 = vunpack.c.l.b16 %v449
      %v462 = vunpack.c.l.b16 %v450
      %v463 = vpack.c.b16 %v460, %v459
      %v464 = vpack.c.b16 %v462, %v461
      %vm465 = vcmask 523264
      %v467 = vsel %vm465, %v463, 0
      %v470 = vsel %vm465, %v464, 0
      %472 = vmatprep.subr.bf16.mxu0 0
      %473 = vmatpush1.bf16.msra.mxu0 0
      %474 = vmatprep.subr.bf16.mxu0 0
      %475 = vmatpush1.bf16.msra.mxu0 0
      %476 = vmatprep.subr.bf16.mxu0 0
      %477 = vmatpush1.bf16.msra.mxu0 0
      %478 = vmatprep.subr.bf16.mxu0 0
      %479 = vmatpush1.bf16.msra.mxu0 0
      %480 = vmatprep.subr.bf16.mxu0 0
      %481 = vmatpush1.bf16.msra.mxu0 %v454
      %482 = vmatprep.subr.bf16.mxu0 0
      %483 = vmatpush1.bf16.msra.mxu0 %v453
      %484 = vmatprep.subr.bf16.mxu0 0
      %485 = vmatpush1.bf16.msra.mxu0 %v452
      %486 = vmatprep.subr.bf16.mxu0 0
      %487 = vmatpush1.bf16.msra.mxu0 %v451
      %488 = vmatprep.subr.bf16.mxu0 0
      %489 = vmatpush2.bf16.msra.mxu0 0
      %490 = vmatprep.subr.bf16.mxu0 0
      %491 = vmatpush2.bf16.msra.mxu0 0
      %492 = vmatprep.subr.bf16.mxu0 0
      %493 = vmatpush2.bf16.msra.mxu0 0
      %494 = vmatprep.subr.bf16.mxu0 0
      %495 = vmatpush2.bf16.msra.mxu0 0
      %496 = vmatprep.subr.bf16.mxu0 0
      %497 = vmatpush2.bf16.msra.mxu0 0
      %498 = vmatprep.subr.bf16.mxu0 0
      %499 = vmatpush2.bf16.msra.mxu0 0
      %500 = vmatprep.subr.bf16.mxu0 0
      %501 = vmatpush2.bf16.msra.mxu0 0
      %502 = vmatprep.subr.bf16.mxu0 0
      %503 = vmatpush2.bf16.msra.mxu0 0
      %504 = vmatprep.mubr.bf16.mxu0 0
      %505 = vmatmul.mubr.bf16.gmra.mxu0 %v467
      %v506 = vpop.f32.mrf.mxu0
      %v507 = vadd.f32 0.0, %v506
      %v508 = vpop.f32.mrf.mxu0
      %v509 = vpop.f32.mrf.mxu0
      %v510 = vadd.f32 0.0, %v509
      %v511 = vpop.f32.mrf.mxu0
      %512 = vmatprep.mubr.bf16.mxu0 0
      %513 = vmatmul.mubr.bf16.gmra.mxu0 %v470
      %v514 = vpop.f32.mrf.mxu0
      %v515 = vadd.f32 0.0, %v514
      %v516 = vpop.f32.mrf.mxu0
      %v517 = vpop.f32.mrf.mxu0
      %v518 = vadd.f32 0.0, %v517
      %v519 = vpop.f32.mrf.mxu0
      %520 = vdwg.mxu0
      %vm521 = vcmask 130048
      %522 = vst.msk [vmem:[%s244] sm:$0xff] %vm521, %v507
      %523 = vst.msk [vmem:[%s244 + $0x8] sm:$0xff] %vm521, %v510
      %524 = vst.msk [vmem:[%s244 + $0x10] sm:$0xff] %vm521, %v515
      %525 = vst.msk [vmem:[%s244 + $0x18] sm:$0xff] %vm521, %v518
      %p526 = scmp.lt.s32.totalorder %s16, 1
      %s527 = scalar_select %p526, %s16, 1
      %s528 = smul.addr %s527, 4
      %s529 = smul.addr %s528, 8
      %s530 = scalar_lea.vmem %s5, %s529
      // Predicated region
      $region41: #{forward.15} parent=39 // pred_check
        %p531 = pneg %p149
      $region42: #{forward.15} parent=39 // pred_check_branch
        %533 = sbr.rel (%p531) target = $region44
      $region43: #{forward.15} parent=39 // pred_region
        _
      $region44: #{forward.15} parent=39 // pred_fallthru
        _
    $region40: #{forward.15} parent=5 // pred_fallthru
      _
    %p534 = scmp.le.s32.totalorder 2, %s11
    // Predicated region
    $region45: #{forward.15} parent=5 // pred_check
      %p535 = pneg %p534
    $region46: #{forward.15} parent=5 // pred_check_branch
      %537 = sbr.rel (%p535) target = $region48
    $region47: #{forward.15} parent=5 // pred_region
      %s538 = ssub.s32 %s11, 2
      // Predicated region
      $region49: #{forward.15} parent=47 // pred_check
        %p539 = pneg %p155
      $region50: #{forward.15} parent=47 // pred_check_branch
        %541 = sbr.rel (%p539) target = $region52
      $region51: #{forward.15} parent=47 // pred_region
        %p542 = scmp.lt.s32.totalorder %s17, 1
        %s543 = scalar_select %p542, %s17, 1
        %s544 = smul.addr %s543, 4
        %s545 = smul.addr %s544, 8
        %s546 = scalar_lea.vmem %s5, %s545
      $region52: #{forward.15} parent=47 // pred_fallthru
        _
    $region48: #{forward.15} parent=5 // pred_fallthru
      _
  $region6: #{forward.15} parent=0 // loop_footer
    %s15 = sadd.s32 1, %s11
  $region7: #{forward.15} parent=0 // loop_footer_branch
    %10 = sbr.rel target = $region3
  $region8: #{forward.15} parent=0 // loop_exit
    _

// kernel: forward.14
$region0: #{forward.14}
  #allocation0 [shape = 'u32[]', space=smem, size = 0x4, offset = 0x4, fixed_abs, tag = 'smem constant byte address 0x4 - core index']
  #allocation1 [shape = 'u32[144,128]{1,0:T(1,128)}', space=vmem, size = 0x12000, scoped, tag = 'internal scratch']
  %s0 = inlined_call_operand.vmem [shape: f32[2,9,128,4], index: 0, kind: input, shape index: {}]
  %s1 = inlined_call_operand.vmem [shape: f32[128,9], index: 1, kind: input, shape index: {}]
  %s2 = inlined_call_operand.vmem [shape: f32[128,1], index: 2, kind: input, shape index: {}]
  %s3 = inlined_call_operand.vmem [shape: bf16[128,128], index: 3, kind: input, shape index: {}]
  %s4 = inlined_call_operand.vmem [shape: f32[128,1], index: 4, kind: input, shape index: {}]
  %s5 = inlined_call_operand.vmem [shape: bf16[64,128], index: 5, kind: input, shape index: {}]
  %s6 = inlined_call_operand.vmem [shape: f32[2,64,4], index: 6, kind: output, shape index: {}]
  %s7 = sld [smem:[#allocation0]]
  $region57: #{forward.14} parent=0
    _
  %s9 = ssub.s32 1, %s7
  %s10 = scalar_select 0, %s9, %s7
  loop: start=0, step=1, limit=4
  $region2: #{forward.14} parent=0 // loop_pre_header
    _
  $region3: #{forward.14} parent=0 // loop_header
    %s12 = sphi 0, %s16
    %p13 = scmp.ge.s32.totalorder %s12, 4
    %s22 = sphi 0, %s24
    %s25 = sphi 0, %s22
    %s26 = sphi 0, %s25
    %s42 = sphi 0, %s26
    %s46 = sphi 0, %s46
    %s48 = sphi 0, %s46
    %s49 = sphi 0, %s48
    %s63 = sphi 0, %s49
    %s67 = sphi 0, %s67
    %s69 = sphi 0, %s67
    %s70 = sphi 0, %s69
    %s84 = sphi 0, %s70
    %s88 = sphi 0, %s88
    %s90 = sphi 0, %s88
    %s91 = sphi 0, %s90
    %s105 = sphi 0, %s91
    %s109 = sphi 0, %s109
    %s111 = sphi 0, %s109
    %s112 = sphi 0, %s111
    %s126 = sphi 0, %s112
    %s130 = sphi 0, %s130
    %s132 = sphi 0, %s130
    %s133 = sphi 0, %s132
    %s147 = sphi 0, %s133
    %s153 = sphi 0, %s155
    %s156 = sphi 0, %s153
    %s157 = sphi 0, %s156
    %s173 = sphi 0, %s157
  $region4: #{forward.14} parent=0 // loop_header_branch
    %15 = sbr.rel (%p13) target = $region8
  $region5: #{forward.14} parent=0 // loop_body
    %s17 = ssub.s32 %s12, 1
    %s18 = ssub.s32 %s12, 2
    %s19 = sadd.s32 %s12, 1
    %s20 = ssub.s32 %s12, %s19
    %p21 = scmp.eq.s32.totalorder %s20, 0
    %s23 = sadd.s32 %s22, 1
    %s24 = scalar_select %p21, %s22, %s23
    %p27 = pneg %p21
    %p28 = scmp.eq.s32.totalorder %s12, 1
    %p29 = por %p27, %p28
    %p30 = scmp.ne.s32.totalorder %s22, %s25
    %p31 = scmp.eq.s32.totalorder %s12, 0
    %p32 = por %p30, %p31
    %p33 = scmp.ne.s32.totalorder %s22, %s25
    %p34 = scmp.eq.s32.totalorder %s17, 1
    %p35 = por %p33, %p34
    %p36 = scmp.ne.s32.totalorder %s25, %s26
    %p37 = scmp.eq.s32.totalorder %s17, 0
    %p38 = por %p36, %p37
    %p39 = scmp.ne.s32.totalorder %s25, %s26
    %p40 = scmp.eq.s32.totalorder %s18, 1
    %p41 = por %p39, %p40
    %p43 = scmp.ne.s32.totalorder %s26, %s42
    %p44 = scmp.eq.s32.totalorder %s18, 0
    %p45 = por %p43, %p44
    %s47 = sadd.s32 %s46, 1
    %p50 = scmp.eq.s32.totalorder %s12, 1
    %p51 = scmp.ne.s32.totalorder %s46, %s48
    %p52 = scmp.eq.s32.totalorder %s12, 0
    %p53 = por %p51, %p52
    %p54 = scmp.ne.s32.totalorder %s46, %s48
    %p55 = scmp.eq.s32.totalorder %s17, 1
    %p56 = por %p54, %p55
    %p57 = scmp.ne.s32.totalorder %s48, %s49
    %p58 = scmp.eq.s32.totalorder %s17, 0
    %p59 = por %p57, %p58
    %p60 = scmp.ne.s32.totalorder %s48, %s49
    %p61 = scmp.eq.s32.totalorder %s18, 1
    %p62 = por %p60, %p61
    %p64 = scmp.ne.s32.totalorder %s49, %s63
    %p65 = scmp.eq.s32.totalorder %s18, 0
    %p66 = por %p64, %p65
    %s68 = sadd.s32 %s67, 1
    %p71 = scmp.eq.s32.totalorder %s12, 1
    %p72 = scmp.ne.s32.totalorder %s67, %s69
    %p73 = scmp.eq.s32.totalorder %s12, 0
    %p74 = por %p72, %p73
    %p75 = scmp.ne.s32.totalorder %s67, %s69
    %p76 = scmp.eq.s32.totalorder %s17, 1
    %p77 = por %p75, %p76
    %p78 = scmp.ne.s32.totalorder %s69, %s70
    %p79 = scmp.eq.s32.totalorder %s17, 0
    %p80 = por %p78, %p79
    %p81 = scmp.ne.s32.totalorder %s69, %s70
    %p82 = scmp.eq.s32.totalorder %s18, 1
    %p83 = por %p81, %p82
    %p85 = scmp.ne.s32.totalorder %s70, %s84
    %p86 = scmp.eq.s32.totalorder %s18, 0
    %p87 = por %p85, %p86
    %s89 = sadd.s32 %s88, 1
    %p92 = scmp.eq.s32.totalorder %s12, 1
    %p93 = scmp.ne.s32.totalorder %s88, %s90
    %p94 = scmp.eq.s32.totalorder %s12, 0
    %p95 = por %p93, %p94
    %p96 = scmp.ne.s32.totalorder %s88, %s90
    %p97 = scmp.eq.s32.totalorder %s17, 1
    %p98 = por %p96, %p97
    %p99 = scmp.ne.s32.totalorder %s90, %s91
    %p100 = scmp.eq.s32.totalorder %s17, 0
    %p101 = por %p99, %p100
    %p102 = scmp.ne.s32.totalorder %s90, %s91
    %p103 = scmp.eq.s32.totalorder %s18, 1
    %p104 = por %p102, %p103
    %p106 = scmp.ne.s32.totalorder %s91, %s105
    %p107 = scmp.eq.s32.totalorder %s18, 0
    %p108 = por %p106, %p107
    %s110 = sadd.s32 %s109, 1
    %p113 = scmp.eq.s32.totalorder %s12, 1
    %p114 = scmp.ne.s32.totalorder %s109, %s111
    %p115 = scmp.eq.s32.totalorder %s12, 0
    %p116 = por %p114, %p115
    %p117 = scmp.ne.s32.totalorder %s109, %s111
    %p118 = scmp.eq.s32.totalorder %s17, 1
    %p119 = por %p117, %p118
    %p120 = scmp.ne.s32.totalorder %s111, %s112
    %p121 = scmp.eq.s32.totalorder %s17, 0
    %p122 = por %p120, %p121
    %p123 = scmp.ne.s32.totalorder %s111, %s112
    %p124 = scmp.eq.s32.totalorder %s18, 1
    %p125 = por %p123, %p124
    %p127 = scmp.ne.s32.totalorder %s112, %s126
    %p128 = scmp.eq.s32.totalorder %s18, 0
    %p129 = por %p127, %p128
    %s131 = sadd.s32 %s130, 1
    %p134 = scmp.eq.s32.totalorder %s12, 1
    %p135 = scmp.ne.s32.totalorder %s130, %s132
    %p136 = scmp.eq.s32.totalorder %s12, 0
    %p137 = por %p135, %p136
    %p138 = scmp.ne.s32.totalorder %s130, %s132
    %p139 = scmp.eq.s32.totalorder %s17, 1
    %p140 = por %p138, %p139
    %p141 = scmp.ne.s32.totalorder %s132, %s133
    %p142 = scmp.eq.s32.totalorder %s17, 0
    %p143 = por %p141, %p142
    %p144 = scmp.ne.s32.totalorder %s132, %s133
    %p145 = scmp.eq.s32.totalorder %s18, 1
    %p146 = por %p144, %p145
    %p148 = scmp.ne.s32.totalorder %s133, %s147
    %p149 = scmp.eq.s32.totalorder %s18, 0
    %p150 = por %p148, %p149
    %s151 = ssub.s32 %s12, %s19
    %p152 = scmp.eq.s32.totalorder %s151, 0
    %s154 = sadd.s32 %s153, 1
    %s155 = scalar_select %p152, %s153, %s154
    %p158 = pneg %p152
    %p159 = scmp.eq.s32.totalorder %s12, 1
    %p160 = por %p158, %p159
    %p161 = scmp.ne.s32.totalorder %s153, %s156
    %p162 = scmp.eq.s32.totalorder %s12, 0
    %p163 = por %p161, %p162
    %p164 = scmp.ne.s32.totalorder %s153, %s156
    %p165 = scmp.eq.s32.totalorder %s17, 1
    %p166 = por %p164, %p165
    %p167 = scmp.ne.s32.totalorder %s156, %s157
    %p168 = scmp.eq.s32.totalorder %s17, 0
    %p169 = por %p167, %p168
    %p170 = scmp.ne.s32.totalorder %s156, %s157
    %p171 = scmp.eq.s32.totalorder %s18, 1
    %p172 = por %p170, %p171
    %p174 = scmp.ne.s32.totalorder %s157, %s173
    %p175 = scmp.eq.s32.totalorder %s18, 0
    %p176 = por %p174, %p175
    %p177 = scmp.le.s32.totalorder 1, %s12
    %p178 = scmp.lt.s32.totalorder %s12, 3
    %p179 = pnand %p177, %p178
    %p180 = pneg %p179
    // Predicated region
    $region9: #{forward.14} parent=5 // pred_check
      _
    $region10: #{forward.14} parent=5 // pred_check_branch
      %182 = sbr.rel (%p179) target = $region12
    $region11: #{forward.14} parent=5 // pred_region
      %s183 = ssub.s32 %s12, 1
      // Predicated region
      $region13: #{forward.14} parent=11 // pred_check
        %p184 = pneg %p59
      $region14: #{forward.14} parent=11 // pred_check_branch
        %186 = sbr.rel (%p184) target = $region16
      $region15: #{forward.14} parent=11 // pred_region
        _
      $region16: #{forward.14} parent=11 // pred_fallthru
        _
      // Predicated region
      $region17: #{forward.14} parent=11 // pred_check
        %p187 = pneg %p80
      $region18: #{forward.14} parent=11 // pred_check_branch
        %189 = sbr.rel (%p187) target = $region20
      $region19: #{forward.14} parent=11 // pred_region
        _
      $region20: #{forward.14} parent=11 // pred_fallthru
        _
      // Predicated region
      $region21: #{forward.14} parent=11 // pred_check
        %p190 = pneg %p101
      $region22: #{forward.14} parent=11 // pred_check_branch
        %192 = sbr.rel (%p190) target = $region24
      $region23: #{forward.14} parent=11 // pred_region
        _
      $region24: #{forward.14} parent=11 // pred_fallthru
        _
      // Predicated region
      $region25: #{forward.14} parent=11 // pred_check
        %p193 = pneg %p122
      $region26: #{forward.14} parent=11 // pred_check_branch
        %195 = sbr.rel (%p193) target = $region28
      $region27: #{forward.14} parent=11 // pred_region
        _
      $region28: #{forward.14} parent=11 // pred_fallthru
        _
      // Predicated region
      $region29: #{forward.14} parent=11 // pred_check
        %p196 = pneg %p143
      $region30: #{forward.14} parent=11 // pred_check_branch
        %198 = sbr.rel (%p196) target = $region32
      $region31: #{forward.14} parent=11 // pred_region
        _
      $region32: #{forward.14} parent=11 // pred_fallthru
        _
    $region12: #{forward.14} parent=5 // pred_fallthru
      _
    %p199 = scmp.lt.s32.totalorder %s12, 2
    // Predicated region
    $region33: #{forward.14} parent=5 // pred_check
      %p200 = pneg %p199
    $region34: #{forward.14} parent=5 // pred_check_branch
      %202 = sbr.rel (%p200) target = $region36
    $region35: #{forward.14} parent=5 // pred_region
      // Predicated region
      $region37: #{forward.14} parent=35 // pred_check
        %p203 = pneg %p32
      $region38: #{forward.14} parent=35 // pred_check_branch
        %205 = sbr.rel (%p203) target = $region40
      $region39: #{forward.14} parent=35 // pred_region
        %p206 = scmp.lt.s32.totalorder %s12, 1
        %s207 = scalar_select %p206, %s12, 1
        %s208 = smul.addr %s207, 144
        %s209 = smul.addr %s208, 8
        %s210 = scalar_lea.vmem %s0, %s209
      $region40: #{forward.14} parent=35 // pred_fallthru
        _
    $region36: #{forward.14} parent=5 // pred_fallthru
      _
    %p211 = scmp.le.s32.totalorder 1, %s12
    %p212 = scmp.lt.s32.totalorder %s12, 3
    %p213 = pnand %p211, %p212
    %p214 = pneg %p213
    // Predicated region
    $region41: #{forward.14} parent=5 // pred_check
      _
    $region42: #{forward.14} parent=5 // pred_check_branch
      %216 = sbr.rel (%p213) target = $region44
    $region43: #{forward.14} parent=5 // pred_region
      %s217 = ssub.s32 %s12, 1
      %p218 = scmp.lt.s32.totalorder %s17, 1
      %s219 = scalar_select %p218, %s17, 1
      %s220 = smul.addr %s219, 144
      %s221 = smul.addr %s220, 8
      %s222 = scalar_lea.vmem %s0, %s221
      %p223 = pneg %p38
      %p224 = pneg %p35
      %p225 = pneg %p59
      %p226 = pneg %p56
      %p227 = pneg %p80
      %p228 = pneg %p77
      %p229 = pneg %p101
      %p230 = pneg %p98
      %p231 = pneg %p122
      %p232 = pneg %p119
      %p233 = pneg %p143
      %p234 = pneg %p140
      %p235 = pneg %p169
      %p236 = pneg %p166
      %p237 = scmp.lt.s32.totalorder %s17, 1
      %s238 = scalar_select %p237, %s17, 1
      %s239 = smul.addr %s238, 8
      %s240 = smul.addr %s239, 8
      %s241 = scalar_lea.vmem %s6, %s240
      %p242 = scmp.lt.s32.totalorder %s17, 1
      %s243 = scalar_select %p242, %s17, 1
      %s244 = smul.addr %s243, 144
      %s245 = smul.addr %s244, 8
      %s246 = scalar_lea.vmem %s0, %s245
      %p247 = scmp.lt.s32.totalorder %s17, 1
      %s248 = scalar_select %p247, %s17, 1
      %s249 = smul.addr %s248, 8
      %s250 = smul.addr %s249, 8
      %s251 = scalar_lea.vmem %s6, %s250
      %v253 = vld [vmem:[%s1] sm:$0xff]
      %v254 = vld [vmem:[%s1 + $0x8] sm:$0xff]
      %v255 = vld [vmem:[%s1 + $0x10] sm:$0xff]
      %v256 = vld [vmem:[%s1 + $0x18] sm:$0xff]
      %v257 = vld [vmem:[%s1 + $0x20] sm:$0xff]
      %v258 = vld [vmem:[%s1 + $0x28] sm:$0xff]
      %v259 = vld [vmem:[%s1 + $0x30] sm:$0xff]
      %v260 = vld [vmem:[%s1 + $0x38] sm:$0xff]
      %v261 = vld [vmem:[%s1 + $0x40] sm:$0xff]
      %v262 = vld [vmem:[%s1 + $0x48] sm:$0xff]
      %v263 = vld [vmem:[%s1 + $0x50] sm:$0xff]
      %v264 = vld [vmem:[%s1 + $0x58] sm:$0xff]
      %v265 = vld [vmem:[%s1 + $0x60] sm:$0xff]
      %v266 = vld [vmem:[%s1 + $0x68] sm:$0xff]
      %v267 = vld [vmem:[%s1 + $0x70] sm:$0xff]
      %v268 = vld [vmem:[%s1 + $0x78] sm:$0xff]
      %v269 = vld [vmem:[%s246] sm:$0xff]
      %v270 = vld [vmem:[%s246 + $0x8] sm:$0xff]
      %v271 = vld [vmem:[%s246 + $0x10] sm:$0xff]
      %v272 = vld [vmem:[%s246 + $0x18] sm:$0xff]
      %v273 = vld [vmem:[%s246 + $0x20] sm:$0xff]
      %v274 = vld [vmem:[%s246 + $0x28] sm:$0xff]
      %v275 = vld [vmem:[%s246 + $0x30] sm:$0xff]
      %v276 = vld [vmem:[%s246 + $0x38] sm:$0xff]
      %v277 = vld [vmem:[%s246 + $0x40] sm:$0xff]
      %v278 = vld [vmem:[%s246 + $0x48] sm:$0xff]
      %v279 = vld [vmem:[%s246 + $0x50] sm:$0xff]
      %v280 = vld [vmem:[%s246 + $0x58] sm:$0xff]
      %v281 = vld [vmem:[%s246 + $0x60] sm:$0xff]
      %v282 = vld [vmem:[%s246 + $0x68] sm:$0xff]
      %v283 = vld [vmem:[%s246 + $0x70] sm:$0xff]
      %v284 = vld [vmem:[%s246 + $0x78] sm:$0xff]
      %286 = vset.pattern.permute.xlu0 0
      %287 = vperm.xlu0 %286, %v253
      %v288 = vpop.permute.xlu0 %287
      %291 = vset.pattern.permute.xlu0 0
      %292 = vperm.xlu0 %291, %v254
      %v293 = vpop.permute.xlu0 %292
      %296 = vset.pattern.permute.xlu0 0
      %297 = vperm.xlu0 %296, %v255
      %v298 = vpop.permute.xlu0 %297
      %301 = vset.pattern.permute.xlu0 0
      %302 = vperm.xlu0 %301, %v256
      %v303 = vpop.permute.xlu0 %302
      %306 = vset.pattern.permute.xlu0 0
      %307 = vperm.xlu0 %306, %v257
      %v308 = vpop.permute.xlu0 %307
      %311 = vset.pattern.permute.xlu0 0
      %312 = vperm.xlu0 %311, %v258
      %v313 = vpop.permute.xlu0 %312
      %316 = vset.pattern.permute.xlu0 0
      %317 = vperm.xlu0 %316, %v259
      %v318 = vpop.permute.xlu0 %317
      %321 = vset.pattern.permute.xlu0 0
      %322 = vperm.xlu0 %321, %v260
      %v323 = vpop.permute.xlu0 %322
      %326 = vset.pattern.permute.xlu0 0
      %327 = vperm.xlu0 %326, %v261
      %v328 = vpop.permute.xlu0 %327
      %331 = vset.pattern.permute.xlu0 0
      %332 = vperm.xlu0 %331, %v262
      %v333 = vpop.permute.xlu0 %332
      %336 = vset.pattern.permute.xlu0 0
      %337 = vperm.xlu0 %336, %v263
      %v338 = vpop.permute.xlu0 %337
      %341 = vset.pattern.permute.xlu0 0
      %342 = vperm.xlu0 %341, %v264
      %v343 = vpop.permute.xlu0 %342
      %346 = vset.pattern.permute.xlu0 0
      %347 = vperm.xlu0 %346, %v265
      %v348 = vpop.permute.xlu0 %347
      %351 = vset.pattern.permute.xlu0 0
      %352 = vperm.xlu0 %351, %v266
      %v353 = vpop.permute.xlu0 %352
      %356 = vset.pattern.permute.xlu0 0
      %357 = vperm.xlu0 %356, %v267
      %v358 = vpop.permute.xlu0 %357
      %361 = vset.pattern.permute.xlu0 0
      %362 = vperm.xlu0 %361, %v268
      %v363 = vpop.permute.xlu0 %362
      %v365 = vmul.f32 %v269, %v288
      %v366 = vmul.f32 %v270, %v293
      %v367 = vmul.f32 %v271, %v298
      %v368 = vmul.f32 %v272, %v303
      %v369 = vmul.f32 %v273, %v308
      %v370 = vmul.f32 %v274, %v313
      %v371 = vmul.f32 %v275, %v318
      %v372 = vmul.f32 %v276, %v323
      %v373 = vmul.f32 %v277, %v328
      %v374 = vmul.f32 %v278, %v333
      %v375 = vmul.f32 %v279, %v338
      %v376 = vmul.f32 %v280, %v343
      %v377 = vmul.f32 %v281, %v348
      %v378 = vmul.f32 %v282, %v353
      %v379 = vmul.f32 %v283, %v358
      %v380 = vmul.f32 %v284, %v363
      %s381 = scalar_lea.vmem %s246, 128
      %v382 = vld [vmem:[%s381] sm:$0xff]
      %v383 = vld [vmem:[%s381 + $0x8] sm:$0xff]
      %v384 = vld [vmem:[%s381 + $0x10] sm:$0xff]
      %v385 = vld [vmem:[%s381 + $0x18] sm:$0xff]
      %v386 = vld [vmem:[%s381 + $0x20] sm:$0xff]
      %v387 = vld [vmem:[%s381 + $0x28] sm:$0xff]
      %v388 = vld [vmem:[%s381 + $0x30] sm:$0xff]
      %v389 = vld [vmem:[%s381 + $0x38] sm:$0xff]
      %v390 = vld [vmem:[%s381 + $0x40] sm:$0xff]
      %v391 = vld [vmem:[%s381 + $0x48] sm:$0xff]
      %v392 = vld [vmem:[%s381 + $0x50] sm:$0xff]
      %v393 = vld [vmem:[%s381 + $0x58] sm:$0xff]
      %v394 = vld [vmem:[%s381 + $0x60] sm:$0xff]
      %v395 = vld [vmem:[%s381 + $0x68] sm:$0xff]
      %v396 = vld [vmem:[%s381 + $0x70] sm:$0xff]
      %v397 = vld [vmem:[%s381 + $0x78] sm:$0xff]
      %398 = vset.pattern.permute.xlu0 1
      %399 = vperm.xlu0 %398, %v253
      %v400 = vpop.permute.xlu0 %399
      %402 = vset.pattern.permute.xlu0 1
      %403 = vperm.xlu0 %402, %v254
      %v404 = vpop.permute.xlu0 %403
      %406 = vset.pattern.permute.xlu0 1
      %407 = vperm.xlu0 %406, %v255
      %v408 = vpop.permute.xlu0 %407
      %410 = vset.pattern.permute.xlu0 1
      %411 = vperm.xlu0 %410, %v256
      %v412 = vpop.permute.xlu0 %411
      %414 = vset.pattern.permute.xlu0 1
      %415 = vperm.xlu0 %414, %v257
      %v416 = vpop.permute.xlu0 %415
      %418 = vset.pattern.permute.xlu0 1
      %419 = vperm.xlu0 %418, %v258
      %v420 = vpop.permute.xlu0 %419
      %422 = vset.pattern.permute.xlu0 1
      %423 = vperm.xlu0 %422, %v259
      %v424 = vpop.permute.xlu0 %423
      %426 = vset.pattern.permute.xlu0 1
      %427 = vperm.xlu0 %426, %v260
      %v428 = vpop.permute.xlu0 %427
      %430 = vset.pattern.permute.xlu0 1
      %431 = vperm.xlu0 %430, %v261
      %v432 = vpop.permute.xlu0 %431
      %434 = vset.pattern.permute.xlu0 1
      %435 = vperm.xlu0 %434, %v262
      %v436 = vpop.permute.xlu0 %435
      %438 = vset.pattern.permute.xlu0 1
      %439 = vperm.xlu0 %438, %v263
      %v440 = vpop.permute.xlu0 %439
      %442 = vset.pattern.permute.xlu0 1
      %443 = vperm.xlu0 %442, %v264
      %v444 = vpop.permute.xlu0 %443
      %446 = vset.pattern.permute.xlu0 1
      %447 = vperm.xlu0 %446, %v265
      %v448 = vpop.permute.xlu0 %447
      %450 = vset.pattern.permute.xlu0 1
      %451 = vperm.xlu0 %450, %v266
      %v452 = vpop.permute.xlu0 %451
      %454 = vset.pattern.permute.xlu0 1
      %455 = vperm.xlu0 %454, %v267
      %v456 = vpop.permute.xlu0 %455
      %458 = vset.pattern.permute.xlu0 1
      %459 = vperm.xlu0 %458, %v268
      %v460 = vpop.permute.xlu0 %459
      %v462 = vmul.f32 %v382, %v400
      %v463 = vmul.f32 %v383, %v404
      %v464 = vmul.f32 %v384, %v408
      %v465 = vmul.f32 %v385, %v412
      %v466 = vmul.f32 %v386, %v416
      %v467 = vmul.f32 %v387, %v420
      %v468 = vmul.f32 %v388, %v424
      %v469 = vmul.f32 %v389, %v428
      %v470 = vmul.f32 %v390, %v432
      %v471 = vmul.f32 %v391, %v436
      %v472 = vmul.f32 %v392, %v440
      %v473 = vmul.f32 %v393, %v444
      %v474 = vmul.f32 %v394, %v448
      %v475 = vmul.f32 %v395, %v452
      %v476 = vmul.f32 %v396, %v456
      %v477 = vmul.f32 %v397, %v460
      %v478 = vadd.f32 %v365, %v462
      %v479 = vadd.f32 %v366, %v463
      %v480 = vadd.f32 %v367, %v464
      %v481 = vadd.f32 %v368, %v465
      %v482 = vadd.f32 %v369, %v466
      %v483 = vadd.f32 %v370, %v467
      %v484 = vadd.f32 %v371, %v468
      %v485 = vadd.f32 %v372, %v469
      %v486 = vadd.f32 %v373, %v470
      %v487 = vadd.f32 %v374, %v471
      %v488 = vadd.f32 %v375, %v472
      %v489 = vadd.f32 %v376, %v473
      %v490 = vadd.f32 %v377, %v474
      %v491 = vadd.f32 %v378, %v475
      %v492 = vadd.f32 %v379, %v476
      %v493 = vadd.f32 %v380, %v477
      %s494 = scalar_lea.vmem %s246, 256
      %v495 = vld [vmem:[%s494] sm:$0xff]
      %v496 = vld [vmem:[%s494 + $0x8] sm:$0xff]
      %v497 = vld [vmem:[%s494 + $0x10] sm:$0xff]
      %v498 = vld [vmem:[%s494 + $0x18] sm:$0xff]
      %v499 = vld [vmem:[%s494 + $0x20] sm:$0xff]
      %v500 = vld [vmem:[%s494 + $0x28] sm:$0xff]
      %v501 = vld [vmem:[%s494 + $0x30] sm:$0xff]
      %v502 = vld [vmem:[%s494 + $0x38] sm:$0xff]
      %v503 = vld [vmem:[%s494 + $0x40] sm:$0xff]
      %v504 = vld [vmem:[%s494 + $0x48] sm:$0xff]
      %v505 = vld [vmem:[%s494 + $0x50] sm:$0xff]
      %v506 = vld [vmem:[%s494 + $0x58] sm:$0xff]
      %v507 = vld [vmem:[%s494 + $0x60] sm:$0xff]
      %v508 = vld [vmem:[%s494 + $0x68] sm:$0xff]
      %v509 = vld [vmem:[%s494 + $0x70] sm:$0xff]
      %v510 = vld [vmem:[%s494 + $0x78] sm:$0xff]
      %511 = vset.pattern.permute.xlu0 2
      %512 = vperm.xlu0 %511, %v253
      %v513 = vpop.permute.xlu0 %512
      %515 = vset.pattern.permute.xlu0 2
      %516 = vperm.xlu0 %515, %v254
      %v517 = vpop.permute.xlu0 %516
      %519 = vset.pattern.permute.xlu0 2
      %520 = vperm.xlu0 %519, %v255
      %v521 = vpop.permute.xlu0 %520
      %523 = vset.pattern.permute.xlu0 2
      %524 = vperm.xlu0 %523, %v256
      %v525 = vpop.permute.xlu0 %524
      %527 = vset.pattern.permute.xlu0 2
      %528 = vperm.xlu0 %527, %v257
      %v529 = vpop.permute.xlu0 %528
      %531 = vset.pattern.permute.xlu0 2
      %532 = vperm.xlu0 %531, %v258
      %v533 = vpop.permute.xlu0 %532
      %535 = vset.pattern.permute.xlu0 2
      %536 = vperm.xlu0 %535, %v259
      %v537 = vpop.permute.xlu0 %536
      %539 = vset.pattern.permute.xlu0 2
      %540 = vperm.xlu0 %539, %v260
      %v541 = vpop.permute.xlu0 %540
      %543 = vset.pattern.permute.xlu0 2
      %544 = vperm.xlu0 %543, %v261
      %v545 = vpop.permute.xlu0 %544
      %547 = vset.pattern.permute.xlu0 2
      %548 = vperm.xlu0 %547, %v262
      %v549 = vpop.permute.xlu0 %548
      %551 = vset.pattern.permute.xlu0 2
      %552 = vperm.xlu0 %551, %v263
      %v553 = vpop.permute.xlu0 %552
      %555 = vset.pattern.permute.xlu0 2
      %556 = vperm.xlu0 %555, %v264
      %v557 = vpop.permute.xlu0 %556
      %559 = vset.pattern.permute.xlu0 2
      %560 = vperm.xlu0 %559, %v265
      %v561 = vpop.permute.xlu0 %560
      %563 = vset.pattern.permute.xlu0 2
      %564 = vperm.xlu0 %563, %v266
      %v565 = vpop.permute.xlu0 %564
      %567 = vset.pattern.permute.xlu0 2
      %568 = vperm.xlu0 %567, %v267
      %v569 = vpop.permute.xlu0 %568
      %571 = vset.pattern.permute.xlu0 2
      %572 = vperm.xlu0 %571, %v268
      %v573 = vpop.permute.xlu0 %572
      %v575 = vmul.f32 %v495, %v513
      %v576 = vmul.f32 %v496, %v517
      %v577 = vmul.f32 %v497, %v521
      %v578 = vmul.f32 %v498, %v525
      %v579 = vmul.f32 %v499, %v529
      %v580 = vmul.f32 %v500, %v533
      %v581 = vmul.f32 %v501, %v537
      %v582 = vmul.f32 %v502, %v541
      %v583 = vmul.f32 %v503, %v545
      %v584 = vmul.f32 %v504, %v549
      %v585 = vmul.f32 %v505, %v553
      %v586 = vmul.f32 %v506, %v557
      %v587 = vmul.f32 %v507, %v561
      %v588 = vmul.f32 %v508, %v565
      %v589 = vmul.f32 %v509, %v569
      %v590 = vmul.f32 %v510, %v573
      %v591 = vadd.f32 %v478, %v575
      %v592 = vadd.f32 %v479, %v576
      %v593 = vadd.f32 %v480, %v577
      %v594 = vadd.f32 %v481, %v578
      %v595 = vadd.f32 %v482, %v579
      %v596 = vadd.f32 %v483, %v580
      %v597 = vadd.f32 %v484, %v581
      %v598 = vadd.f32 %v485, %v582
      %v599 = vadd.f32 %v486, %v583
      %v600 = vadd.f32 %v487, %v584
      %v601 = vadd.f32 %v488, %v585
      %v602 = vadd.f32 %v489, %v586
      %v603 = vadd.f32 %v490, %v587
      %v604 = vadd.f32 %v491, %v588
      %v605 = vadd.f32 %v492, %v589
      %v606 = vadd.f32 %v493, %v590
      %s607 = scalar_lea.vmem %s246, 384
      %v608 = vld [vmem:[%s607] sm:$0xff]
      %v609 = vld [vmem:[%s607 + $0x8] sm:$0xff]
      %v610 = vld [vmem:[%s607 + $0x10] sm:$0xff]
      %v611 = vld [vmem:[%s607 + $0x18] sm:$0xff]
      %v612 = vld [vmem:[%s607 + $0x20] sm:$0xff]
      %v613 = vld [vmem:[%s607 + $0x28] sm:$0xff]
      %v614 = vld [vmem:[%s607 + $0x30] sm:$0xff]
      %v615 = vld [vmem:[%s607 + $0x38] sm:$0xff]
      %v616 = vld [vmem:[%s607 + $0x40] sm:$0xff]
      %v617 = vld [vmem:[%s607 + $0x48] sm:$0xff]
      %v618 = vld [vmem:[%s607 + $0x50] sm:$0xff]
      %v619 = vld [vmem:[%s607 + $0x58] sm:$0xff]
      %v620 = vld [vmem:[%s607 + $0x60] sm:$0xff]
      %v621 = vld [vmem:[%s607 + $0x68] sm:$0xff]
      %v622 = vld [vmem:[%s607 + $0x70] sm:$0xff]
      %v623 = vld [vmem:[%s607 + $0x78] sm:$0xff]
      %624 = vset.pattern.permute.xlu0 3
      %625 = vperm.xlu0 %624, %v253
      %v626 = vpop.permute.xlu0 %625
      %628 = vset.pattern.permute.xlu0 3
      %629 = vperm.xlu0 %628, %v254
      %v630 = vpop.permute.xlu0 %629
      %632 = vset.pattern.permute.xlu0 3
      %633 = vperm.xlu0 %632, %v255
      %v634 = vpop.permute.xlu0 %633
      %636 = vset.pattern.permute.xlu0 3
      %637 = vperm.xlu0 %636, %v256
      %v638 = vpop.permute.xlu0 %637
      %640 = vset.pattern.permute.xlu0 3
      %641 = vperm.xlu0 %640, %v257
      %v642 = vpop.permute.xlu0 %641
      %644 = vset.pattern.permute.xlu0 3
      %645 = vperm.xlu0 %644, %v258
      %v646 = vpop.permute.xlu0 %645
      %648 = vset.pattern.permute.xlu0 3
      %649 = vperm.xlu0 %648, %v259
      %v650 = vpop.permute.xlu0 %649
      %652 = vset.pattern.permute.xlu0 3
      %653 = vperm.xlu0 %652, %v260
      %v654 = vpop.permute.xlu0 %653
      %656 = vset.pattern.permute.xlu0 3
      %657 = vperm.xlu0 %656, %v261
      %v658 = vpop.permute.xlu0 %657
      %660 = vset.pattern.permute.xlu0 3
      %661 = vperm.xlu0 %660, %v262
      %v662 = vpop.permute.xlu0 %661
      %664 = vset.pattern.permute.xlu0 3
      %665 = vperm.xlu0 %664, %v263
      %v666 = vpop.permute.xlu0 %665
      %668 = vset.pattern.permute.xlu0 3
      %669 = vperm.xlu0 %668, %v264
      %v670 = vpop.permute.xlu0 %669
      %672 = vset.pattern.permute.xlu0 3
      %673 = vperm.xlu0 %672, %v265
      %v674 = vpop.permute.xlu0 %673
      %676 = vset.pattern.permute.xlu0 3
      %677 = vperm.xlu0 %676, %v266
      %v678 = vpop.permute.xlu0 %677
      %680 = vset.pattern.permute.xlu0 3
      %681 = vperm.xlu0 %680, %v267
      %v682 = vpop.permute.xlu0 %681
      %684 = vset.pattern.permute.xlu0 3
      %685 = vperm.xlu0 %684, %v268
      %v686 = vpop.permute.xlu0 %685
      %v688 = vmul.f32 %v608, %v626
      %v689 = vmul.f32 %v609, %v630
      %v690 = vmul.f32 %v610, %v634
      %v691 = vmul.f32 %v611, %v638
      %v692 = vmul.f32 %v612, %v642
      %v693 = vmul.f32 %v613, %v646
      %v694 = vmul.f32 %v614, %v650
      %v695 = vmul.f32 %v615, %v654
      %v696 = vmul.f32 %v616, %v658
      %v697 = vmul.f32 %v617, %v662
      %v698 = vmul.f32 %v618, %v666
      %v699 = vmul.f32 %v619, %v670
      %v700 = vmul.f32 %v620, %v674
      %v701 = vmul.f32 %v621, %v678
      %v702 = vmul.f32 %v622, %v682
      %v703 = vmul.f32 %v623, %v686
      %v704 = vadd.f32 %v591, %v688
      %v705 = vadd.f32 %v592, %v689
      %v706 = vadd.f32 %v593, %v690
      %v707 = vadd.f32 %v594, %v691
      %v708 = vadd.f32 %v595, %v692
      %v709 = vadd.f32 %v596, %v693
      %v710 = vadd.f32 %v597, %v694
      %v711 = vadd.f32 %v598, %v695
      %v712 = vadd.f32 %v599, %v696
      %v713 = vadd.f32 %v600, %v697
      %v714 = vadd.f32 %v601, %v698
      %v715 = vadd.f32 %v602, %v699
      %v716 = vadd.f32 %v603, %v700
      %v717 = vadd.f32 %v604, %v701
      %v718 = vadd.f32 %v605, %v702
      %v719 = vadd.f32 %v606, %v703
      %s720 = scalar_lea.vmem %s246, 512
      %v721 = vld [vmem:[%s720] sm:$0xff]
      %v722 = vld [vmem:[%s720 + $0x8] sm:$0xff]
      %v723 = vld [vmem:[%s720 + $0x10] sm:$0xff]
      %v724 = vld [vmem:[%s720 + $0x18] sm:$0xff]
      %v725 = vld [vmem:[%s720 + $0x20] sm:$0xff]
      %v726 = vld [vmem:[%s720 + $0x28] sm:$0xff]
      %v727 = vld [vmem:[%s720 + $0x30] sm:$0xff]
      %v728 = vld [vmem:[%s720 + $0x38] sm:$0xff]
      %v729 = vld [vmem:[%s720 + $0x40] sm:$0xff]
      %v730 = vld [vmem:[%s720 + $0x48] sm:$0xff]
      %v731 = vld [vmem:[%s720 + $0x50] sm:$0xff]
      %v732 = vld [vmem:[%s720 + $0x58] sm:$0xff]
      %v733 = vld [vmem:[%s720 + $0x60] sm:$0xff]
      %v734 = vld [vmem:[%s720 + $0x68] sm:$0xff]
      %v735 = vld [vmem:[%s720 + $0x70] sm:$0xff]
      %v736 = vld [vmem:[%s720 + $0x78] sm:$0xff]
      %737 = vset.pattern.permute.xlu0 4
      %738 = vperm.xlu0 %737, %v253
      %v739 = vpop.permute.xlu0 %738
      %741 = vset.pattern.permute.xlu0 4
      %742 = vperm.xlu0 %741, %v254
      %v743 = vpop.permute.xlu0 %742
      %745 = vset.pattern.permute.xlu0 4
      %746 = vperm.xlu0 %745, %v255
      %v747 = vpop.permute.xlu0 %746
      %749 = vset.pattern.permute.xlu0 4
      %750 = vperm.xlu0 %749, %v256
      %v751 = vpop.permute.xlu0 %750
      %753 = vset.pattern.permute.xlu0 4
      %754 = vperm.xlu0 %753, %v257
      %v755 = vpop.permute.xlu0 %754
      %757 = vset.pattern.permute.xlu0 4
      %758 = vperm.xlu0 %757, %v258
      %v759 = vpop.permute.xlu0 %758
      %761 = vset.pattern.permute.xlu0 4
      %762 = vperm.xlu0 %761, %v259
      %v763 = vpop.permute.xlu0 %762
      %765 = vset.pattern.permute.xlu0 4
      %766 = vperm.xlu0 %765, %v260
      %v767 = vpop.permute.xlu0 %766
      %769 = vset.pattern.permute.xlu0 4
      %770 = vperm.xlu0 %769, %v261
      %v771 = vpop.permute.xlu0 %770
      %773 = vset.pattern.permute.xlu0 4
      %774 = vperm.xlu0 %773, %v262
      %v775 = vpop.permute.xlu0 %774
      %777 = vset.pattern.permute.xlu0 4
      %778 = vperm.xlu0 %777, %v263
      %v779 = vpop.permute.xlu0 %778
      %781 = vset.pattern.permute.xlu0 4
      %782 = vperm.xlu0 %781, %v264
      %v783 = vpop.permute.xlu0 %782
      %785 = vset.pattern.permute.xlu0 4
      %786 = vperm.xlu0 %785, %v265
      %v787 = vpop.permute.xlu0 %786
      %789 = vset.pattern.permute.xlu0 4
      %790 = vperm.xlu0 %789, %v266
      %v791 = vpop.permute.xlu0 %790
      %793 = vset.pattern.permute.xlu0 4
      %794 = vperm.xlu0 %793, %v267
      %v795 = vpop.permute.xlu0 %794
      %797 = vset.pattern.permute.xlu0 4
      %798 = vperm.xlu0 %797, %v268
      %v799 = vpop.permute.xlu0 %798
      %v801 = vmul.f32 %v721, %v739
      %v802 = vmul.f32 %v722, %v743
      %v803 = vmul.f32 %v723, %v747
      %v804 = vmul.f32 %v724, %v751
      %v805 = vmul.f32 %v725, %v755
      %v806 = vmul.f32 %v726, %v759
      %v807 = vmul.f32 %v727, %v763
      %v808 = vmul.f32 %v728, %v767
      %v809 = vmul.f32 %v729, %v771
      %v810 = vmul.f32 %v730, %v775
      %v811 = vmul.f32 %v731, %v779
      %v812 = vmul.f32 %v732, %v783
      %v813 = vmul.f32 %v733, %v787
      %v814 = vmul.f32 %v734, %v791
      %v815 = vmul.f32 %v735, %v795
      %v816 = vmul.f32 %v736, %v799
      %v817 = vadd.f32 %v704, %v801
      %v818 = vadd.f32 %v705, %v802
      %v819 = vadd.f32 %v706, %v803
      %v820 = vadd.f32 %v707, %v804
      %v821 = vadd.f32 %v708, %v805
      %v822 = vadd.f32 %v709, %v806
      %v823 = vadd.f32 %v710, %v807
      %v824 = vadd.f32 %v711, %v808
      %v825 = vadd.f32 %v712, %v809
      %v826 = vadd.f32 %v713, %v810
      %v827 = vadd.f32 %v714, %v811
      %v828 = vadd.f32 %v715, %v812
      %v829 = vadd.f32 %v716, %v813
      %v830 = vadd.f32 %v717, %v814
      %v831 = vadd.f32 %v718, %v815
      %v832 = vadd.f32 %v719, %v816
      %s833 = scalar_lea.vmem %s246, 640
      %v834 = vld [vmem:[%s833] sm:$0xff]
      %v835 = vld [vmem:[%s833 + $0x8] sm:$0xff]
      %v836 = vld [vmem:[%s833 + $0x10] sm:$0xff]
      %v837 = vld [vmem:[%s833 + $0x18] sm:$0xff]
      %v838 = vld [vmem:[%s833 + $0x20] sm:$0xff]
      %v839 = vld [vmem:[%s833 + $0x28] sm:$0xff]
      %v840 = vld [vmem:[%s833 + $0x30] sm:$0xff]
      %v841 = vld [vmem:[%s833 + $0x38] sm:$0xff]
      %v842 = vld [vmem:[%s833 + $0x40] sm:$0xff]
      %v843 = vld [vmem:[%s833 + $0x48] sm:$0xff]
      %v844 = vld [vmem:[%s833 + $0x50] sm:$0xff]
      %v845 = vld [vmem:[%s833 + $0x58] sm:$0xff]
      %v846 = vld [vmem:[%s833 + $0x60] sm:$0xff]
      %v847 = vld [vmem:[%s833 + $0x68] sm:$0xff]
      %v848 = vld [vmem:[%s833 + $0x70] sm:$0xff]
      %v849 = vld [vmem:[%s833 + $0x78] sm:$0xff]
      %850 = vset.pattern.permute.xlu0 5
      %851 = vperm.xlu0 %850, %v253
      %v852 = vpop.permute.xlu0 %851
      %854 = vset.pattern.permute.xlu0 5
      %855 = vperm.xlu0 %854, %v254
      %v856 = vpop.permute.xlu0 %855
      %858 = vset.pattern.permute.xlu0 5
      %859 = vperm.xlu0 %858, %v255
      %v860 = vpop.permute.xlu0 %859
      %862 = vset.pattern.permute.xlu0 5
      %863 = vperm.xlu0 %862, %v256
      %v864 = vpop.permute.xlu0 %863
      %866 = vset.pattern.permute.xlu0 5
      %867 = vperm.xlu0 %866, %v257
      %v868 = vpop.permute.xlu0 %867
      %870 = vset.pattern.permute.xlu0 5
      %871 = vperm.xlu0 %870, %v258
      %v872 = vpop.permute.xlu0 %871
      %874 = vset.pattern.permute.xlu0 5
      %875 = vperm.xlu0 %874, %v259
      %v876 = vpop.permute.xlu0 %875
      %878 = vset.pattern.permute.xlu0 5
      %879 = vperm.xlu0 %878, %v260
      %v880 = vpop.permute.xlu0 %879
      %882 = vset.pattern.permute.xlu0 5
      %883 = vperm.xlu0 %882, %v261
      %v884 = vpop.permute.xlu0 %883
      %886 = vset.pattern.permute.xlu0 5
      %887 = vperm.xlu0 %886, %v262
      %v888 = vpop.permute.xlu0 %887
      %890 = vset.pattern.permute.xlu0 5
      %891 = vperm.xlu0 %890, %v263
      %v892 = vpop.permute.xlu0 %891
      %894 = vset.pattern.permute.xlu0 5
      %895 = vperm.xlu0 %894, %v264
      %v896 = vpop.permute.xlu0 %895
      %898 = vset.pattern.permute.xlu0 5
      %899 = vperm.xlu0 %898, %v265
      %v900 = vpop.permute.xlu0 %899
      %902 = vset.pattern.permute.xlu0 5
      %903 = vperm.xlu0 %902, %v266
      %v904 = vpop.permute.xlu0 %903
      %906 = vset.pattern.permute.xlu0 5
      %907 = vperm.xlu0 %906, %v267
      %v908 = vpop.permute.xlu0 %907
      %910 = vset.pattern.permute.xlu0 5
      %911 = vperm.xlu0 %910, %v268
      %v912 = vpop.permute.xlu0 %911
      %v914 = vmul.f32 %v834, %v852
      %v915 = vmul.f32 %v835, %v856
      %v916 = vmul.f32 %v836, %v860
      %v917 = vmul.f32 %v837, %v864
      %v918 = vmul.f32 %v838, %v868
      %v919 = vmul.f32 %v839, %v872
      %v920 = vmul.f32 %v840, %v876
      %v921 = vmul.f32 %v841, %v880
      %v922 = vmul.f32 %v842, %v884
      %v923 = vmul.f32 %v843, %v888
      %v924 = vmul.f32 %v844, %v892
      %v925 = vmul.f32 %v845, %v896
      %v926 = vmul.f32 %v846, %v900
      %v927 = vmul.f32 %v847, %v904
      %v928 = vmul.f32 %v848, %v908
      %v929 = vmul.f32 %v849, %v912
      %v930 = vadd.f32 %v817, %v914
      %v931 = vadd.f32 %v818, %v915
      %v932 = vadd.f32 %v819, %v916
      %v933 = vadd.f32 %v820, %v917
      %v934 = vadd.f32 %v821, %v918
      %v935 = vadd.f32 %v822, %v919
      %v936 = vadd.f32 %v823, %v920
      %v937 = vadd.f32 %v824, %v921
      %v938 = vadd.f32 %v825, %v922
      %v939 = vadd.f32 %v826, %v923
      %v940 = vadd.f32 %v827, %v924
      %v941 = vadd.f32 %v828, %v925
      %v942 = vadd.f32 %v829, %v926
      %v943 = vadd.f32 %v830, %v927
      %v944 = vadd.f32 %v831, %v928
      %v945 = vadd.f32 %v832, %v929
      %s946 = scalar_lea.vmem %s246, 768
      %v947 = vld [vmem:[%s946] sm:$0xff]
      %v948 = vld [vmem:[%s946 + $0x8] sm:$0xff]
      %v949 = vld [vmem:[%s946 + $0x10] sm:$0xff]
      %v950 = vld [vmem:[%s946 + $0x18] sm:$0xff]
      %v951 = vld [vmem:[%s946 + $0x20] sm:$0xff]
      %v952 = vld [vmem:[%s946 + $0x28] sm:$0xff]
      %v953 = vld [vmem:[%s946 + $0x30] sm:$0xff]
      %v954 = vld [vmem:[%s946 + $0x38] sm:$0xff]
      %v955 = vld [vmem:[%s946 + $0x40] sm:$0xff]
      %v956 = vld [vmem:[%s946 + $0x48] sm:$0xff]
      %v957 = vld [vmem:[%s946 + $0x50] sm:$0xff]
      %v958 = vld [vmem:[%s946 + $0x58] sm:$0xff]
      %v959 = vld [vmem:[%s946 + $0x60] sm:$0xff]
      %v960 = vld [vmem:[%s946 + $0x68] sm:$0xff]
      %v961 = vld [vmem:[%s946 + $0x70] sm:$0xff]
      %v962 = vld [vmem:[%s946 + $0x78] sm:$0xff]
      %963 = vset.pattern.permute.xlu0 6
      %964 = vperm.xlu0 %963, %v253
      %v965 = vpop.permute.xlu0 %964
      %967 = vset.pattern.permute.xlu0 6
      %968 = vperm.xlu0 %967, %v254
      %v969 = vpop.permute.xlu0 %968
      %971 = vset.pattern.permute.xlu0 6
      %972 = vperm.xlu0 %971, %v255
      %v973 = vpop.permute.xlu0 %972
      %975 = vset.pattern.permute.xlu0 6
      %976 = vperm.xlu0 %975, %v256
      %v977 = vpop.permute.xlu0 %976
      %979 = vset.pattern.permute.xlu0 6
      %980 = vperm.xlu0 %979, %v257
      %v981 = vpop.permute.xlu0 %980
      %983 = vset.pattern.permute.xlu0 6
      %984 = vperm.xlu0 %983, %v258
      %v985 = vpop.permute.xlu0 %984
      %987 = vset.pattern.permute.xlu0 6
      %988 = vperm.xlu0 %987, %v259
      %v989 = vpop.permute.xlu0 %988
      %991 = vset.pattern.permute.xlu0 6
      %992 = vperm.xlu0 %991, %v260
      %v993 = vpop.permute.xlu0 %992
      %995 = vset.pattern.permute.xlu0 6
      %996 = vperm.xlu0 %995, %v261
      %v997 = vpop.permute.xlu0 %996
      %999 = vset.pattern.permute.xlu0 6
      %1000 = vperm.xlu0 %999, %v262
      %v1001 = vpop.permute.xlu0 %1000
      %1003 = vset.pattern.permute.xlu0 6
      %1004 = vperm.xlu0 %1003, %v263
      %v1005 = vpop.permute.xlu0 %1004
      %1007 = vset.pattern.permute.xlu0 6
      %1008 = vperm.xlu0 %1007, %v264
      %v1009 = vpop.permute.xlu0 %1008
      %1011 = vset.pattern.permute.xlu0 6
      %1012 = vperm.xlu0 %1011, %v265
      %v1013 = vpop.permute.xlu0 %1012
      %1015 = vset.pattern.permute.xlu0 6
      %1016 = vperm.xlu0 %1015, %v266
      %v1017 = vpop.permute.xlu0 %1016
      %1019 = vset.pattern.permute.xlu0 6
      %1020 = vperm.xlu0 %1019, %v267
      %v1021 = vpop.permute.xlu0 %1020
      %1023 = vset.pattern.permute.xlu0 6
      %1024 = vperm.xlu0 %1023, %v268
      %v1025 = vpop.permute.xlu0 %1024
      %v1027 = vmul.f32 %v947, %v965
      %v1028 = vmul.f32 %v948, %v969
      %v1029 = vmul.f32 %v949, %v973
      %v1030 = vmul.f32 %v950, %v977
      %v1031 = vmul.f32 %v951, %v981
      %v1032 = vmul.f32 %v952, %v985
      %v1033 = vmul.f32 %v953, %v989
      %v1034 = vmul.f32 %v954, %v993
      %v1035 = vmul.f32 %v955, %v997
      %v1036 = vmul.f32 %v956, %v1001
      %v1037 = vmul.f32 %v957, %v1005
      %v1038 = vmul.f32 %v958, %v1009
      %v1039 = vmul.f32 %v959, %v1013
      %v1040 = vmul.f32 %v960, %v1017
      %v1041 = vmul.f32 %v961, %v1021
      %v1042 = vmul.f32 %v962, %v1025
      %v1043 = vadd.f32 %v930, %v1027
      %v1044 = vadd.f32 %v931, %v1028
      %v1045 = vadd.f32 %v932, %v1029
      %v1046 = vadd.f32 %v933, %v1030
      %v1047 = vadd.f32 %v934, %v1031
      %v1048 = vadd.f32 %v935, %v1032
      %v1049 = vadd.f32 %v936, %v1033
      %v1050 = vadd.f32 %v937, %v1034
      %v1051 = vadd.f32 %v938, %v1035
      %v1052 = vadd.f32 %v939, %v1036
      %v1053 = vadd.f32 %v940, %v1037
      %v1054 = vadd.f32 %v941, %v1038
      %v1055 = vadd.f32 %v942, %v1039
      %v1056 = vadd.f32 %v943, %v1040
      %v1057 = vadd.f32 %v944, %v1041
      %v1058 = vadd.f32 %v945, %v1042
      %s1059 = scalar_lea.vmem %s246, 896
      %v1060 = vld [vmem:[%s1059] sm:$0xff]
      %v1061 = vld [vmem:[%s1059 + $0x8] sm:$0xff]
      %v1062 = vld [vmem:[%s1059 + $0x10] sm:$0xff]
      %v1063 = vld [vmem:[%s1059 + $0x18] sm:$0xff]
      %v1064 = vld [vmem:[%s1059 + $0x20] sm:$0xff]
      %v1065 = vld [vmem:[%s1059 + $0x28] sm:$0xff]
      %v1066 = vld [vmem:[%s1059 + $0x30] sm:$0xff]
      %v1067 = vld [vmem:[%s1059 + $0x38] sm:$0xff]
      %v1068 = vld [vmem:[%s1059 + $0x40] sm:$0xff]
      %v1069 = vld [vmem:[%s1059 + $0x48] sm:$0xff]
      %v1070 = vld [vmem:[%s1059 + $0x50] sm:$0xff]
      %v1071 = vld [vmem:[%s1059 + $0x58] sm:$0xff]
      %v1072 = vld [vmem:[%s1059 + $0x60] sm:$0xff]
      %v1073 = vld [vmem:[%s1059 + $0x68] sm:$0xff]
      %v1074 = vld [vmem:[%s1059 + $0x70] sm:$0xff]
      %v1075 = vld [vmem:[%s1059 + $0x78] sm:$0xff]
      %1076 = vset.pattern.permute.xlu0 7
      %1077 = vperm.xlu0 %1076, %v253
      %v1078 = vpop.permute.xlu0 %1077
      %1080 = vset.pattern.permute.xlu0 7
      %1081 = vperm.xlu0 %1080, %v254
      %v1082 = vpop.permute.xlu0 %1081
      %1084 = vset.pattern.permute.xlu0 7
      %1085 = vperm.xlu0 %1084, %v255
      %v1086 = vpop.permute.xlu0 %1085
      %1088 = vset.pattern.permute.xlu0 7
      %1089 = vperm.xlu0 %1088, %v256
      %v1090 = vpop.permute.xlu0 %1089
      %1092 = vset.pattern.permute.xlu0 7
      %1093 = vperm.xlu0 %1092, %v257
      %v1094 = vpop.permute.xlu0 %1093
      %1096 = vset.pattern.permute.xlu0 7
      %1097 = vperm.xlu0 %1096, %v258
      %v1098 = vpop.permute.xlu0 %1097
      %1100 = vset.pattern.permute.xlu0 7
      %1101 = vperm.xlu0 %1100, %v259
      %v1102 = vpop.permute.xlu0 %1101
      %1104 = vset.pattern.permute.xlu0 7
      %1105 = vperm.xlu0 %1104, %v260
      %v1106 = vpop.permute.xlu0 %1105
      %1108 = vset.pattern.permute.xlu0 7
      %1109 = vperm.xlu0 %1108, %v261
      %v1110 = vpop.permute.xlu0 %1109
      %1112 = vset.pattern.permute.xlu0 7
      %1113 = vperm.xlu0 %1112, %v262
      %v1114 = vpop.permute.xlu0 %1113
      %1116 = vset.pattern.permute.xlu0 7
      %1117 = vperm.xlu0 %1116, %v263
      %v1118 = vpop.permute.xlu0 %1117
      %1120 = vset.pattern.permute.xlu0 7
      %1121 = vperm.xlu0 %1120, %v264
      %v1122 = vpop.permute.xlu0 %1121
      %1124 = vset.pattern.permute.xlu0 7
      %1125 = vperm.xlu0 %1124, %v265
      %v1126 = vpop.permute.xlu0 %1125
      %1128 = vset.pattern.permute.xlu0 7
      %1129 = vperm.xlu0 %1128, %v266
      %v1130 = vpop.permute.xlu0 %1129
      %1132 = vset.pattern.permute.xlu0 7
      %1133 = vperm.xlu0 %1132, %v267
      %v1134 = vpop.permute.xlu0 %1133
      %1136 = vset.pattern.permute.xlu0 7
      %1137 = vperm.xlu0 %1136, %v268
      %v1138 = vpop.permute.xlu0 %1137
      %v1140 = vmul.f32 %v1060, %v1078
      %v1141 = vmul.f32 %v1061, %v1082
      %v1142 = vmul.f32 %v1062, %v1086
      %v1143 = vmul.f32 %v1063, %v1090
      %v1144 = vmul.f32 %v1064, %v1094
      %v1145 = vmul.f32 %v1065, %v1098
      %v1146 = vmul.f32 %v1066, %v1102
      %v1147 = vmul.f32 %v1067, %v1106
      %v1148 = vmul.f32 %v1068, %v1110
      %v1149 = vmul.f32 %v1069, %v1114
      %v1150 = vmul.f32 %v1070, %v1118
      %v1151 = vmul.f32 %v1071, %v1122
      %v1152 = vmul.f32 %v1072, %v1126
      %v1153 = vmul.f32 %v1073, %v1130
      %v1154 = vmul.f32 %v1074, %v1134
      %v1155 = vmul.f32 %v1075, %v1138
      %v1156 = vadd.f32 %v1043, %v1140
      %v1157 = vadd.f32 %v1044, %v1141
      %v1158 = vadd.f32 %v1045, %v1142
      %v1159 = vadd.f32 %v1046, %v1143
      %v1160 = vadd.f32 %v1047, %v1144
      %v1161 = vadd.f32 %v1048, %v1145
      %v1162 = vadd.f32 %v1049, %v1146
      %v1163 = vadd.f32 %v1050, %v1147
      %v1164 = vadd.f32 %v1051, %v1148
      %v1165 = vadd.f32 %v1052, %v1149
      %v1166 = vadd.f32 %v1053, %v1150
      %v1167 = vadd.f32 %v1054, %v1151
      %v1168 = vadd.f32 %v1055, %v1152
      %v1169 = vadd.f32 %v1056, %v1153
      %v1170 = vadd.f32 %v1057, %v1154
      %v1171 = vadd.f32 %v1058, %v1155
      %s1172 = scalar_lea.vmem %s246, 1024
      %v1173 = vld [vmem:[%s1172] sm:$0xff]
      %v1174 = vld [vmem:[%s1172 + $0x8] sm:$0xff]
      %v1175 = vld [vmem:[%s1172 + $0x10] sm:$0xff]
      %v1176 = vld [vmem:[%s1172 + $0x18] sm:$0xff]
      %v1177 = vld [vmem:[%s1172 + $0x20] sm:$0xff]
      %v1178 = vld [vmem:[%s1172 + $0x28] sm:$0xff]
      %v1179 = vld [vmem:[%s1172 + $0x30] sm:$0xff]
      %v1180 = vld [vmem:[%s1172 + $0x38] sm:$0xff]
      %v1181 = vld [vmem:[%s1172 + $0x40] sm:$0xff]
      %v1182 = vld [vmem:[%s1172 + $0x48] sm:$0xff]
      %v1183 = vld [vmem:[%s1172 + $0x50] sm:$0xff]
      %v1184 = vld [vmem:[%s1172 + $0x58] sm:$0xff]
      %v1185 = vld [vmem:[%s1172 + $0x60] sm:$0xff]
      %v1186 = vld [vmem:[%s1172 + $0x68] sm:$0xff]
      %v1187 = vld [vmem:[%s1172 + $0x70] sm:$0xff]
      %v1188 = vld [vmem:[%s1172 + $0x78] sm:$0xff]
      %1189 = vset.pattern.permute.xlu0 8
      %1190 = vperm.xlu0 %1189, %v253
      %v1191 = vpop.permute.xlu0 %1190
      %1193 = vset.pattern.permute.xlu0 8
      %1194 = vperm.xlu0 %1193, %v254
      %v1195 = vpop.permute.xlu0 %1194
      %1197 = vset.pattern.permute.xlu0 8
      %1198 = vperm.xlu0 %1197, %v255
      %v1199 = vpop.permute.xlu0 %1198
      %1201 = vset.pattern.permute.xlu0 8
      %1202 = vperm.xlu0 %1201, %v256
      %v1203 = vpop.permute.xlu0 %1202
      %1205 = vset.pattern.permute.xlu0 8
      %1206 = vperm.xlu0 %1205, %v257
      %v1207 = vpop.permute.xlu0 %1206
      %1209 = vset.pattern.permute.xlu0 8
      %1210 = vperm.xlu0 %1209, %v258
      %v1211 = vpop.permute.xlu0 %1210
      %1213 = vset.pattern.permute.xlu0 8
      %1214 = vperm.xlu0 %1213, %v259
      %v1215 = vpop.permute.xlu0 %1214
      %1217 = vset.pattern.permute.xlu0 8
      %1218 = vperm.xlu0 %1217, %v260
      %v1219 = vpop.permute.xlu0 %1218
      %1221 = vset.pattern.permute.xlu0 8
      %1222 = vperm.xlu0 %1221, %v261
      %v1223 = vpop.permute.xlu0 %1222
      %1225 = vset.pattern.permute.xlu0 8
      %1226 = vperm.xlu0 %1225, %v262
      %v1227 = vpop.permute.xlu0 %1226
      %1229 = vset.pattern.permute.xlu0 8
      %1230 = vperm.xlu0 %1229, %v263
      %v1231 = vpop.permute.xlu0 %1230
      %1233 = vset.pattern.permute.xlu0 8
      %1234 = vperm.xlu0 %1233, %v264
      %v1235 = vpop.permute.xlu0 %1234
      %1237 = vset.pattern.permute.xlu0 8
      %1238 = vperm.xlu0 %1237, %v265
      %v1239 = vpop.permute.xlu0 %1238
      %1241 = vset.pattern.permute.xlu0 8
      %1242 = vperm.xlu0 %1241, %v266
      %v1243 = vpop.permute.xlu0 %1242
      %1245 = vset.pattern.permute.xlu0 8
      %1246 = vperm.xlu0 %1245, %v267
      %v1247 = vpop.permute.xlu0 %1246
      %1249 = vset.pattern.permute.xlu0 8
      %1250 = vperm.xlu0 %1249, %v268
      %v1251 = vpop.permute.xlu0 %1250
      %v1253 = vmul.f32 %v1173, %v1191
      %v1254 = vmul.f32 %v1174, %v1195
      %v1255 = vmul.f32 %v1175, %v1199
      %v1256 = vmul.f32 %v1176, %v1203
      %v1257 = vmul.f32 %v1177, %v1207
      %v1258 = vmul.f32 %v1178, %v1211
      %v1259 = vmul.f32 %v1179, %v1215
      %v1260 = vmul.f32 %v1180, %v1219
      %v1261 = vmul.f32 %v1181, %v1223
      %v1262 = vmul.f32 %v1182, %v1227
      %v1263 = vmul.f32 %v1183, %v1231
      %v1264 = vmul.f32 %v1184, %v1235
      %v1265 = vmul.f32 %v1185, %v1239
      %v1266 = vmul.f32 %v1186, %v1243
      %v1267 = vmul.f32 %v1187, %v1247
      %v1268 = vmul.f32 %v1188, %v1251
      %v1269 = vadd.f32 %v1156, %v1253
      %v1270 = vadd.f32 %v1157, %v1254
      %v1271 = vadd.f32 %v1158, %v1255
      %v1272 = vadd.f32 %v1159, %v1256
      %v1273 = vadd.f32 %v1160, %v1257
      %v1274 = vadd.f32 %v1161, %v1258
      %v1275 = vadd.f32 %v1162, %v1259
      %v1276 = vadd.f32 %v1163, %v1260
      %v1277 = vadd.f32 %v1164, %v1261
      %v1278 = vadd.f32 %v1165, %v1262
      %v1279 = vadd.f32 %v1166, %v1263
      %v1280 = vadd.f32 %v1167, %v1264
      %v1281 = vadd.f32 %v1168, %v1265
      %v1282 = vadd.f32 %v1169, %v1266
      %v1283 = vadd.f32 %v1170, %v1267
      %v1284 = vadd.f32 %v1171, %v1268
      %v1285 = vld [vmem:[%s2] sm:$0xff]
      %v1286 = vld [vmem:[%s2 + $0x8] sm:$0xff]
      %v1287 = vld [vmem:[%s2 + $0x10] sm:$0xff]
      %v1288 = vld [vmem:[%s2 + $0x18] sm:$0xff]
      %v1289 = vld [vmem:[%s2 + $0x20] sm:$0xff]
      %v1290 = vld [vmem:[%s2 + $0x28] sm:$0xff]
      %v1291 = vld [vmem:[%s2 + $0x30] sm:$0xff]
      %v1292 = vld [vmem:[%s2 + $0x38] sm:$0xff]
      %v1293 = vld [vmem:[%s2 + $0x40] sm:$0xff]
      %v1294 = vld [vmem:[%s2 + $0x48] sm:$0xff]
      %v1295 = vld [vmem:[%s2 + $0x50] sm:$0xff]
      %v1296 = vld [vmem:[%s2 + $0x58] sm:$0xff]
      %v1297 = vld [vmem:[%s2 + $0x60] sm:$0xff]
      %v1298 = vld [vmem:[%s2 + $0x68] sm:$0xff]
      %v1299 = vld [vmem:[%s2 + $0x70] sm:$0xff]
      %v1300 = vld [vmem:[%s2 + $0x78] sm:$0xff]
      %1302 = vset.pattern.permute.xlu0 0
      %1303 = vperm.xlu0 %1302, %v1285
      %v1304 = vpop.permute.xlu0 %1303
      %1307 = vset.pattern.permute.xlu0 0
      %1308 = vperm.xlu0 %1307, %v1286
      %v1309 = vpop.permute.xlu0 %1308
      %1312 = vset.pattern.permute.xlu0 0
      %1313 = vperm.xlu0 %1312, %v1287
      %v1314 = vpop.permute.xlu0 %1313
      %1317 = vset.pattern.permute.xlu0 0
      %1318 = vperm.xlu0 %1317, %v1288
      %v1319 = vpop.permute.xlu0 %1318
      %1322 = vset.pattern.permute.xlu0 0
      %1323 = vperm.xlu0 %1322, %v1289
      %v1324 = vpop.permute.xlu0 %1323
      %1327 = vset.pattern.permute.xlu0 0
      %1328 = vperm.xlu0 %1327, %v1290
      %v1329 = vpop.permute.xlu0 %1328
      %1332 = vset.pattern.permute.xlu0 0
      %1333 = vperm.xlu0 %1332, %v1291
      %v1334 = vpop.permute.xlu0 %1333
      %1337 = vset.pattern.permute.xlu0 0
      %1338 = vperm.xlu0 %1337, %v1292
      %v1339 = vpop.permute.xlu0 %1338
      %1342 = vset.pattern.permute.xlu0 0
      %1343 = vperm.xlu0 %1342, %v1293
      %v1344 = vpop.permute.xlu0 %1343
      %1347 = vset.pattern.permute.xlu0 0
      %1348 = vperm.xlu0 %1347, %v1294
      %v1349 = vpop.permute.xlu0 %1348
      %1352 = vset.pattern.permute.xlu0 0
      %1353 = vperm.xlu0 %1352, %v1295
      %v1354 = vpop.permute.xlu0 %1353
      %1357 = vset.pattern.permute.xlu0 0
      %1358 = vperm.xlu0 %1357, %v1296
      %v1359 = vpop.permute.xlu0 %1358
      %1362 = vset.pattern.permute.xlu0 0
      %1363 = vperm.xlu0 %1362, %v1297
      %v1364 = vpop.permute.xlu0 %1363
      %1367 = vset.pattern.permute.xlu0 0
      %1368 = vperm.xlu0 %1367, %v1298
      %v1369 = vpop.permute.xlu0 %1368
      %1372 = vset.pattern.permute.xlu0 0
      %1373 = vperm.xlu0 %1372, %v1299
      %v1374 = vpop.permute.xlu0 %1373
      %1377 = vset.pattern.permute.xlu0 0
      %1378 = vperm.xlu0 %1377, %v1300
      %v1379 = vpop.permute.xlu0 %1378
      %v1381 = vadd.f32 %v1269, %v1304
      %v1382 = vadd.f32 %v1270, %v1309
      %v1383 = vadd.f32 %v1271, %v1314
      %v1384 = vadd.f32 %v1272, %v1319
      %v1385 = vadd.f32 %v1273, %v1324
      %v1386 = vadd.f32 %v1274, %v1329
      %v1387 = vadd.f32 %v1275, %v1334
      %v1388 = vadd.f32 %v1276, %v1339
      %v1389 = vadd.f32 %v1277, %v1344
      %v1390 = vadd.f32 %v1278, %v1349
      %v1391 = vadd.f32 %v1279, %v1354
      %v1392 = vadd.f32 %v1280, %v1359
      %v1393 = vadd.f32 %v1281, %v1364
      %v1394 = vadd.f32 %v1282, %v1369
      %v1395 = vadd.f32 %v1283, %v1374
      %v1396 = vadd.f32 %v1284, %v1379
      %v1397 = vmax.f32 %v1381, 0.0
      %v1398 = vmax.f32 %v1382, 0.0
      %v1399 = vmax.f32 %v1383, 0.0
      %v1400 = vmax.f32 %v1384, 0.0
      %v1401 = vmax.f32 %v1385, 0.0
      %v1402 = vmax.f32 %v1386, 0.0
      %v1403 = vmax.f32 %v1387, 0.0
      %v1404 = vmax.f32 %v1388, 0.0
      %v1405 = vmax.f32 %v1389, 0.0
      %v1406 = vmax.f32 %v1390, 0.0
      %v1407 = vmax.f32 %v1391, 0.0
      %v1408 = vmax.f32 %v1392, 0.0
      %v1409 = vmax.f32 %v1393, 0.0
      %v1410 = vmax.f32 %v1394, 0.0
      %v1411 = vmax.f32 %v1395, 0.0
      %v1412 = vmax.f32 %v1396, 0.0
      %v1413 = vld [vmem:[%s3] sm:$0xf]
      %v1414 = vld [vmem:[%s3 + $0x4] sm:$0xf]
      %v1415 = vld [vmem:[%s3 + $0x8] sm:$0xf]
      %v1416 = vld [vmem:[%s3 + $0xc] sm:$0xf]
      %v1417 = vld [vmem:[%s3 + $0x10] sm:$0xf]
      %v1418 = vld [vmem:[%s3 + $0x14] sm:$0xf]
      %v1419 = vld [vmem:[%s3 + $0x18] sm:$0xf]
      %v1420 = vld [vmem:[%s3 + $0x1c] sm:$0xf]
      %v1421 = vld [vmem:[%s3 + $0x20] sm:$0xf]
      %v1422 = vld [vmem:[%s3 + $0x24] sm:$0xf]
      %v1423 = vld [vmem:[%s3 + $0x28] sm:$0xf]
      %v1424 = vld [vmem:[%s3 + $0x2c] sm:$0xf]
      %v1425 = vld [vmem:[%s3 + $0x30] sm:$0xf]
      %v1426 = vld [vmem:[%s3 + $0x34] sm:$0xf]
      %v1427 = vld [vmem:[%s3 + $0x38] sm:$0xf]
      %v1428 = vld [vmem:[%s3 + $0x3c] sm:$0xf]
      %v1429 = vpack.c.bf16 %v1398, %v1397
      %v1430 = vpack.c.bf16 %v1400, %v1399
      %v1431 = vpack.c.bf16 %v1402, %v1401
      %v1432 = vpack.c.bf16 %v1404, %v1403
      %v1433 = vpack.c.bf16 %v1406, %v1405
      %v1434 = vpack.c.bf16 %v1408, %v1407
      %v1435 = vpack.c.bf16 %v1410, %v1409
      %v1436 = vpack.c.bf16 %v1412, %v1411
      %v1437 = vld [vmem:[%s4] sm:$0xff]
      %v1438 = vld [vmem:[%s4 + $0x8] sm:$0xff]
      %v1439 = vld [vmem:[%s4 + $0x10] sm:$0xff]
      %v1440 = vld [vmem:[%s4 + $0x18] sm:$0xff]
      %v1441 = vld [vmem:[%s4 + $0x20] sm:$0xff]
      %v1442 = vld [vmem:[%s4 + $0x28] sm:$0xff]
      %v1443 = vld [vmem:[%s4 + $0x30] sm:$0xff]
      %v1444 = vld [vmem:[%s4 + $0x38] sm:$0xff]
      %v1445 = vld [vmem:[%s4 + $0x40] sm:$0xff]
      %v1446 = vld [vmem:[%s4 + $0x48] sm:$0xff]
      %v1447 = vld [vmem:[%s4 + $0x50] sm:$0xff]
      %v1448 = vld [vmem:[%s4 + $0x58] sm:$0xff]
      %v1449 = vld [vmem:[%s4 + $0x60] sm:$0xff]
      %v1450 = vld [vmem:[%s4 + $0x68] sm:$0xff]
      %v1451 = vld [vmem:[%s4 + $0x70] sm:$0xff]
      %v1452 = vld [vmem:[%s4 + $0x78] sm:$0xff]
      %1454 = vset.pattern.permute.xlu0 0
      %1455 = vperm.xlu0 %1454, %v1437
      %v1456 = vpop.permute.xlu0 %1455
      %1459 = vset.pattern.permute.xlu0 0
      %1460 = vperm.xlu0 %1459, %v1438
      %v1461 = vpop.permute.xlu0 %1460
      %1464 = vset.pattern.permute.xlu0 0
      %1465 = vperm.xlu0 %1464, %v1439
      %v1466 = vpop.permute.xlu0 %1465
      %1469 = vset.pattern.permute.xlu0 0
      %1470 = vperm.xlu0 %1469, %v1440
      %v1471 = vpop.permute.xlu0 %1470
      %1474 = vset.pattern.permute.xlu0 0
      %1475 = vperm.xlu0 %1474, %v1441
      %v1476 = vpop.permute.xlu0 %1475
      %1479 = vset.pattern.permute.xlu0 0
      %1480 = vperm.xlu0 %1479, %v1442
      %v1481 = vpop.permute.xlu0 %1480
      %1484 = vset.pattern.permute.xlu0 0
      %1485 = vperm.xlu0 %1484, %v1443
      %v1486 = vpop.permute.xlu0 %1485
      %1489 = vset.pattern.permute.xlu0 0
      %1490 = vperm.xlu0 %1489, %v1444
      %v1491 = vpop.permute.xlu0 %1490
      %1494 = vset.pattern.permute.xlu0 0
      %1495 = vperm.xlu0 %1494, %v1445
      %v1496 = vpop.permute.xlu0 %1495
      %1499 = vset.pattern.permute.xlu0 0
      %1500 = vperm.xlu0 %1499, %v1446
      %v1501 = vpop.permute.xlu0 %1500
      %1504 = vset.pattern.permute.xlu0 0
      %1505 = vperm.xlu0 %1504, %v1447
      %v1506 = vpop.permute.xlu0 %1505
      %1509 = vset.pattern.permute.xlu0 0
      %1510 = vperm.xlu0 %1509, %v1448
      %v1511 = vpop.permute.xlu0 %1510
      %1514 = vset.pattern.permute.xlu0 0
      %1515 = vperm.xlu0 %1514, %v1449
      %v1516 = vpop.permute.xlu0 %1515
      %1519 = vset.pattern.permute.xlu0 0
      %1520 = vperm.xlu0 %1519, %v1450
      %v1521 = vpop.permute.xlu0 %1520
      %1524 = vset.pattern.permute.xlu0 0
      %1525 = vperm.xlu0 %1524, %v1451
      %v1526 = vpop.permute.xlu0 %1525
      %1529 = vset.pattern.permute.xlu0 0
      %1530 = vperm.xlu0 %1529, %v1452
      %v1531 = vpop.permute.xlu0 %1530
      %v1549 = vunpack.c.l.b16 %v1413
      %v1550 = vunpack.c.l.b16 %v1414
      %v1551 = vunpack.c.l.b16 %v1415
      %v1552 = vunpack.c.l.b16 %v1416
      %v1553 = vunpack.c.l.b16 %v1417
      %v1554 = vunpack.c.l.b16 %v1418
      %v1555 = vunpack.c.l.b16 %v1419
      %v1556 = vunpack.c.l.b16 %v1420
      %v1557 = vunpack.c.l.b16 %v1421
      %v1558 = vunpack.c.l.b16 %v1422
      %v1559 = vunpack.c.l.b16 %v1423
      %v1560 = vunpack.c.l.b16 %v1424
      %v1561 = vunpack.c.l.b16 %v1425
      %v1562 = vunpack.c.l.b16 %v1426
      %v1563 = vunpack.c.l.b16 %v1427
      %v1564 = vunpack.c.l.b16 %v1428
      %v1565 = vpack.c.b16 %v1550, %v1549
      %v1566 = vpack.c.b16 %v1552, %v1551
      %v1567 = vpack.c.b16 %v1554, %v1553
      %v1568 = vpack.c.b16 %v1556, %v1555
      %v1569 = vpack.c.b16 %v1558, %v1557
      %v1570 = vpack.c.b16 %v1560, %v1559
      %v1571 = vpack.c.b16 %v1562, %v1561
      %v1572 = vpack.c.b16 %v1564, %v1563
      %1581 = vmatprep.subr.bf16.mxu0 0
      %1582 = vmatpush1.bf16.msra.mxu0 %v1436
      %1583 = vmatprep.subr.bf16.mxu0 0
      %1584 = vmatpush1.bf16.msra.mxu0 %v1435
      %1585 = vmatprep.subr.bf16.mxu0 0
      %1586 = vmatpush1.bf16.msra.mxu0 %v1434
      %1587 = vmatprep.subr.bf16.mxu0 0
      %1588 = vmatpush1.bf16.msra.mxu0 %v1433
      %1589 = vmatprep.subr.bf16.mxu0 0
      %1590 = vmatpush1.bf16.msra.mxu0 %v1432
      %1591 = vmatprep.subr.bf16.mxu0 0
      %1592 = vmatpush1.bf16.msra.mxu0 %v1431
      %1593 = vmatprep.subr.bf16.mxu0 0
      %1594 = vmatpush1.bf16.msra.mxu0 %v1430
      %1595 = vmatprep.subr.bf16.mxu0 0
      %1596 = vmatpush1.bf16.msra.mxu0 %v1429
      %1597 = vmatprep.subr.bf16.mxu0 0
      %1598 = vmatpush2.bf16.msra.mxu0 0
      %1599 = vmatprep.subr.bf16.mxu0 0
      %1600 = vmatpush2.bf16.msra.mxu0 0
      %1601 = vmatprep.subr.bf16.mxu0 0
      %1602 = vmatpush2.bf16.msra.mxu0 0
      %1603 = vmatprep.subr.bf16.mxu0 0
      %1604 = vmatpush2.bf16.msra.mxu0 0
      %1605 = vmatprep.subr.bf16.mxu0 0
      %1606 = vmatpush2.bf16.msra.mxu0 0
      %1607 = vmatprep.subr.bf16.mxu0 0
      %1608 = vmatpush2.bf16.msra.mxu0 0
      %1609 = vmatprep.subr.bf16.mxu0 0
      %1610 = vmatpush2.bf16.msra.mxu0 0
      %1611 = vmatprep.subr.bf16.mxu0 0
      %1612 = vmatpush2.bf16.msra.mxu0 0
      %1613 = vmatprep.mubr.bf16.mxu0 0
      %1614 = vmatmul.mubr.bf16.gmra.mxu0 %v1565
      %v1615 = vpop.f32.mrf.mxu0
      %v1616 = vadd.f32 %v1456, %v1615
      %v1617 = vpop.f32.mrf.mxu0
      %v1618 = vpop.f32.mrf.mxu0
      %v1619 = vadd.f32 %v1461, %v1618
      %v1620 = vpop.f32.mrf.mxu0
      %1621 = vmatprep.mubr.bf16.mxu0 0
      %1622 = vmatmul.mubr.bf16.gmra.mxu0 %v1566
      %v1623 = vpop.f32.mrf.mxu0
      %v1624 = vadd.f32 %v1466, %v1623
      %v1625 = vpop.f32.mrf.mxu0
      %v1626 = vpop.f32.mrf.mxu0
      %v1627 = vadd.f32 %v1471, %v1626
      %v1628 = vpop.f32.mrf.mxu0
      %1629 = vmatprep.mubr.bf16.mxu0 0
      %1630 = vmatmul.mubr.bf16.gmra.mxu0 %v1567
      %v1631 = vpop.f32.mrf.mxu0
      %v1632 = vadd.f32 %v1476, %v1631
      %v1633 = vpop.f32.mrf.mxu0
      %v1634 = vpop.f32.mrf.mxu0
      %v1635 = vadd.f32 %v1481, %v1634
      %v1636 = vpop.f32.mrf.mxu0
      %1637 = vmatprep.mubr.bf16.mxu0 0
      %1638 = vmatmul.mubr.bf16.gmra.mxu0 %v1568
      %v1639 = vpop.f32.mrf.mxu0
      %v1640 = vadd.f32 %v1486, %v1639
      %v1641 = vpop.f32.mrf.mxu0
      %v1642 = vpop.f32.mrf.mxu0
      %v1643 = vadd.f32 %v1491, %v1642
      %v1644 = vpop.f32.mrf.mxu0
      %1645 = vmatprep.mubr.bf16.mxu0 0
      %1646 = vmatmul.mubr.bf16.gmra.mxu0 %v1569
      %v1647 = vpop.f32.mrf.mxu0
      %v1648 = vadd.f32 %v1496, %v1647
      %v1649 = vpop.f32.mrf.mxu0
      %v1650 = vpop.f32.mrf.mxu0
      %v1651 = vadd.f32 %v1501, %v1650
      %v1652 = vpop.f32.mrf.mxu0
      %1653 = vmatprep.mubr.bf16.mxu0 0
      %1654 = vmatmul.mubr.bf16.gmra.mxu0 %v1570
      %v1655 = vpop.f32.mrf.mxu0
      %v1656 = vadd.f32 %v1506, %v1655
      %v1657 = vpop.f32.mrf.mxu0
      %v1658 = vpop.f32.mrf.mxu0
      %v1659 = vadd.f32 %v1511, %v1658
      %v1660 = vpop.f32.mrf.mxu0
      %1661 = vmatprep.mubr.bf16.mxu0 0
      %1662 = vmatmul.mubr.bf16.gmra.mxu0 %v1571
      %v1663 = vpop.f32.mrf.mxu0
      %v1664 = vadd.f32 %v1516, %v1663
      %v1665 = vpop.f32.mrf.mxu0
      %v1666 = vpop.f32.mrf.mxu0
      %v1667 = vadd.f32 %v1521, %v1666
      %v1668 = vpop.f32.mrf.mxu0
      %1669 = vmatprep.mubr.bf16.mxu0 0
      %1670 = vmatmul.mubr.bf16.gmra.mxu0 %v1572
      %v1671 = vpop.f32.mrf.mxu0
      %v1672 = vadd.f32 %v1526, %v1671
      %v1673 = vpop.f32.mrf.mxu0
      %v1674 = vpop.f32.mrf.mxu0
      %v1675 = vadd.f32 %v1531, %v1674
      %v1676 = vpop.f32.mrf.mxu0
      %1677 = vdwg.mxu0
      %v1678 = vmax.f32 %v1616, 0.0
      %v1679 = vmax.f32 %v1619, 0.0
      %v1680 = vmax.f32 %v1624, 0.0
      %v1681 = vmax.f32 %v1627, 0.0
      %v1682 = vmax.f32 %v1632, 0.0
      %v1683 = vmax.f32 %v1635, 0.0
      %v1684 = vmax.f32 %v1640, 0.0
      %v1685 = vmax.f32 %v1643, 0.0
      %v1686 = vmax.f32 %v1648, 0.0
      %v1687 = vmax.f32 %v1651, 0.0
      %v1688 = vmax.f32 %v1656, 0.0
      %v1689 = vmax.f32 %v1659, 0.0
      %v1690 = vmax.f32 %v1664, 0.0
      %v1691 = vmax.f32 %v1667, 0.0
      %v1692 = vmax.f32 %v1672, 0.0
      %v1693 = vmax.f32 %v1675, 0.0
      %v1694 = vld [vmem:[%s5] sm:$0xf]
      %v1695 = vld [vmem:[%s5 + $0x4] sm:$0xf]
      %v1696 = vld [vmem:[%s5 + $0x8] sm:$0xf]
      %v1697 = vld [vmem:[%s5 + $0xc] sm:$0xf]
      %v1698 = vld [vmem:[%s5 + $0x10] sm:$0xf]
      %v1699 = vld [vmem:[%s5 + $0x14] sm:$0xf]
      %v1700 = vld [vmem:[%s5 + $0x18] sm:$0xf]
      %v1701 = vld [vmem:[%s5 + $0x1c] sm:$0xf]
      %v1702 = vpack.c.bf16 %v1679, %v1678
      %v1703 = vpack.c.bf16 %v1681, %v1680
      %v1704 = vpack.c.bf16 %v1683, %v1682
      %v1705 = vpack.c.bf16 %v1685, %v1684
      %v1706 = vpack.c.bf16 %v1687, %v1686
      %v1707 = vpack.c.bf16 %v1689, %v1688
      %v1708 = vpack.c.bf16 %v1691, %v1690
      %v1709 = vpack.c.bf16 %v1693, %v1692
      %v1718 = vunpack.c.l.b16 %v1694
      %v1719 = vunpack.c.l.b16 %v1695
      %v1720 = vunpack.c.l.b16 %v1696
      %v1721 = vunpack.c.l.b16 %v1697
      %v1722 = vunpack.c.l.b16 %v1698
      %v1723 = vunpack.c.l.b16 %v1699
      %v1724 = vunpack.c.l.b16 %v1700
      %v1725 = vunpack.c.l.b16 %v1701
      %v1726 = vpack.c.b16 %v1719, %v1718
      %v1727 = vpack.c.b16 %v1721, %v1720
      %v1728 = vpack.c.b16 %v1723, %v1722
      %v1729 = vpack.c.b16 %v1725, %v1724
      %1734 = vmatprep.subr.bf16.mxu0 0
      %1735 = vmatpush1.bf16.msra.mxu0 %v1709
      %1736 = vmatprep.subr.bf16.mxu0 0
      %1737 = vmatpush1.bf16.msra.mxu0 %v1708
      %1738 = vmatprep.subr.bf16.mxu0 0
      %1739 = vmatpush1.bf16.msra.mxu0 %v1707
      %1740 = vmatprep.subr.bf16.mxu0 0
      %1741 = vmatpush1.bf16.msra.mxu0 %v1706
      %1742 = vmatprep.subr.bf16.mxu0 0
      %1743 = vmatpush1.bf16.msra.mxu0 %v1705
      %1744 = vmatprep.subr.bf16.mxu0 0
      %1745 = vmatpush1.bf16.msra.mxu0 %v1704
      %1746 = vmatprep.subr.bf16.mxu0 0
      %1747 = vmatpush1.bf16.msra.mxu0 %v1703
      %1748 = vmatprep.subr.bf16.mxu0 0
      %1749 = vmatpush1.bf16.msra.mxu0 %v1702
      %1750 = vmatprep.subr.bf16.mxu0 0
      %1751 = vmatpush2.bf16.msra.mxu0 0
      %1752 = vmatprep.subr.bf16.mxu0 0
      %1753 = vmatpush2.bf16.msra.mxu0 0
      %1754 = vmatprep.subr.bf16.mxu0 0
      %1755 = vmatpush2.bf16.msra.mxu0 0
      %1756 = vmatprep.subr.bf16.mxu0 0
      %1757 = vmatpush2.bf16.msra.mxu0 0
      %1758 = vmatprep.subr.bf16.mxu0 0
      %1759 = vmatpush2.bf16.msra.mxu0 0
      %1760 = vmatprep.subr.bf16.mxu0 0
      %1761 = vmatpush2.bf16.msra.mxu0 0
      %1762 = vmatprep.subr.bf16.mxu0 0
      %1763 = vmatpush2.bf16.msra.mxu0 0
      %1764 = vmatprep.subr.bf16.mxu0 0
      %1765 = vmatpush2.bf16.msra.mxu0 0
      %1766 = vmatprep.mubr.bf16.mxu0 0
      %1767 = vmatmul.mubr.bf16.gmra.mxu0 %v1726
      %v1768 = vpop.f32.mrf.mxu0
      %v1769 = vadd.f32 0.0, %v1768
      %v1770 = vpop.f32.mrf.mxu0
      %v1771 = vpop.f32.mrf.mxu0
      %v1772 = vadd.f32 0.0, %v1771
      %v1773 = vpop.f32.mrf.mxu0
      %1774 = vmatprep.mubr.bf16.mxu0 0
      %1775 = vmatmul.mubr.bf16.gmra.mxu0 %v1727
      %v1776 = vpop.f32.mrf.mxu0
      %v1777 = vadd.f32 0.0, %v1776
      %v1778 = vpop.f32.mrf.mxu0
      %v1779 = vpop.f32.mrf.mxu0
      %v1780 = vadd.f32 0.0, %v1779
      %v1781 = vpop.f32.mrf.mxu0
      %1782 = vmatprep.mubr.bf16.mxu0 0
      %1783 = vmatmul.mubr.bf16.gmra.mxu0 %v1728
      %v1784 = vpop.f32.mrf.mxu0
      %v1785 = vadd.f32 0.0, %v1784
      %v1786 = vpop.f32.mrf.mxu0
      %v1787 = vpop.f32.mrf.mxu0
      %v1788 = vadd.f32 0.0, %v1787
      %v1789 = vpop.f32.mrf.mxu0
      %1790 = vmatprep.mubr.bf16.mxu0 0
      %1791 = vmatmul.mubr.bf16.gmra.mxu0 %v1729
      %v1792 = vpop.f32.mrf.mxu0
      %v1793 = vadd.f32 0.0, %v1792
      %v1794 = vpop.f32.mrf.mxu0
      %v1795 = vpop.f32.mrf.mxu0
      %v1796 = vadd.f32 0.0, %v1795
      %v1797 = vpop.f32.mrf.mxu0
      %1798 = vdwg.mxu0
      %vm1799 = vcmask 31744
      %1800 = vst.msk [vmem:[%s251] sm:$0xff] %vm1799, %v1769
      %1801 = vst.msk [vmem:[%s251 + $0x8] sm:$0xff] %vm1799, %v1772
      %1802 = vst.msk [vmem:[%s251 + $0x10] sm:$0xff] %vm1799, %v1777
      %1803 = vst.msk [vmem:[%s251 + $0x18] sm:$0xff] %vm1799, %v1780
      %1804 = vst.msk [vmem:[%s251 + $0x20] sm:$0xff] %vm1799, %v1785
      %1805 = vst.msk [vmem:[%s251 + $0x28] sm:$0xff] %vm1799, %v1788
      %1806 = vst.msk [vmem:[%s251 + $0x30] sm:$0xff] %vm1799, %v1793
      %1807 = vst.msk [vmem:[%s251 + $0x38] sm:$0xff] %vm1799, %v1796
      %p1808 = scmp.lt.s32.totalorder %s17, 1
      %s1809 = scalar_select %p1808, %s17, 1
      %s1810 = smul.addr %s1809, 8
      %s1811 = smul.addr %s1810, 8
      %s1812 = scalar_lea.vmem %s6, %s1811
      // Predicated region
      $region45: #{forward.14} parent=43 // pred_check
        %p1813 = pneg %p166
      $region46: #{forward.14} parent=43 // pred_check_branch
        %1815 = sbr.rel (%p1813) target = $region48
      $region47: #{forward.14} parent=43 // pred_region
        _
      $region48: #{forward.14} parent=43 // pred_fallthru
        _
    $region44: #{forward.14} parent=5 // pred_fallthru
      _
    %p1816 = scmp.le.s32.totalorder 2, %s12
    // Predicated region
    $region49: #{forward.14} parent=5 // pred_check
      %p1817 = pneg %p1816
    $region50: #{forward.14} parent=5 // pred_check_branch
      %1819 = sbr.rel (%p1817) target = $region52
    $region51: #{forward.14} parent=5 // pred_region
      %s1820 = ssub.s32 %s12, 2
      // Predicated region
      $region53: #{forward.14} parent=51 // pred_check
        %p1821 = pneg %p172
      $region54: #{forward.14} parent=51 // pred_check_branch
        %1823 = sbr.rel (%p1821) target = $region56
      $region55: #{forward.14} parent=51 // pred_region
        %p1824 = scmp.lt.s32.totalorder %s18, 1
        %s1825 = scalar_select %p1824, %s18, 1
        %s1826 = smul.addr %s1825, 8
        %s1827 = smul.addr %s1826, 8
        %s1828 = scalar_lea.vmem %s6, %s1827
      $region56: #{forward.14} parent=51 // pred_fallthru
        _
    $region52: #{forward.14} parent=5 // pred_fallthru
      _
  $region6: #{forward.14} parent=0 // loop_footer
    %s16 = sadd.s32 1, %s12
  $region7: #{forward.14} parent=0 // loop_footer_branch
    %11 = sbr.rel target = $region3
  $region8: #{forward.14} parent=0 // loop_exit
    _

// kernel: forward.16
$region0: #{forward.16}
  #allocation0 [shape = 'u32[]', space=smem, size = 0x4, offset = 0x4, fixed_abs, tag = 'smem constant byte address 0x4 - core index']
  #allocation1 [shape = 'u32[144,128]{1,0:T(1,128)}', space=vmem, size = 0x12000, scoped, tag = 'internal scratch']
  %s0 = inlined_call_operand.vmem [shape: f32[2,32,64], index: 0, kind: input, shape index: {}]
  %s1 = inlined_call_operand.vmem [shape: f32[2,64,64], index: 1, kind: input, shape index: {}]
  %s2 = inlined_call_operand.vmem [shape: bf16[32,64], index: 2, kind: input, shape index: {}]
  %s3 = inlined_call_operand.vmem [shape: f32[32,1], index: 3, kind: input, shape index: {}]
  %s4 = inlined_call_operand.vmem [shape: bf16[16,32], index: 4, kind: input, shape index: {}]
  %s5 = inlined_call_operand.vmem [shape: f32[2,16,64], index: 5, kind: output, shape index: {}]
  %s6 = sld [smem:[#allocation0]]
  $region53: #{forward.16} parent=0
    _
  %s8 = ssub.s32 1, %s6
  %s9 = scalar_select 0, %s8, %s6
  loop: start=0, step=1, limit=4
  $region2: #{forward.16} parent=0 // loop_pre_header
    _
  $region3: #{forward.16} parent=0 // loop_header
    %s11 = sphi 0, %s15
    %p12 = scmp.ge.s32.totalorder %s11, 4
    %s21 = sphi 0, %s23
    %s24 = sphi 0, %s21
    %s25 = sphi 0, %s24
    %s41 = sphi 0, %s25
    %s47 = sphi 0, %s49
    %s50 = sphi 0, %s47
    %s51 = sphi 0, %s50
    %s67 = sphi 0, %s51
    %s71 = sphi 0, %s71
    %s73 = sphi 0, %s71
    %s74 = sphi 0, %s73
    %s88 = sphi 0, %s74
    %s92 = sphi 0, %s92
    %s94 = sphi 0, %s92
    %s95 = sphi 0, %s94
    %s109 = sphi 0, %s95
    %s113 = sphi 0, %s113
    %s115 = sphi 0, %s113
    %s116 = sphi 0, %s115
    %s130 = sphi 0, %s116
    %s136 = sphi 0, %s138
    %s139 = sphi 0, %s136
    %s140 = sphi 0, %s139
    %s156 = sphi 0, %s140
  $region4: #{forward.16} parent=0 // loop_header_branch
    %14 = sbr.rel (%p12) target = $region8
  $region5: #{forward.16} parent=0 // loop_body
    %s16 = ssub.s32 %s11, 1
    %s17 = ssub.s32 %s11, 2
    %s18 = sadd.s32 %s11, 1
    %s19 = ssub.s32 %s11, %s18
    %p20 = scmp.eq.s32.totalorder %s19, 0
    %s22 = sadd.s32 %s21, 1
    %s23 = scalar_select %p20, %s21, %s22
    %p26 = pneg %p20
    %p27 = scmp.eq.s32.totalorder %s11, 1
    %p28 = por %p26, %p27
    %p29 = scmp.ne.s32.totalorder %s21, %s24
    %p30 = scmp.eq.s32.totalorder %s11, 0
    %p31 = por %p29, %p30
    %p32 = scmp.ne.s32.totalorder %s21, %s24
    %p33 = scmp.eq.s32.totalorder %s16, 1
    %p34 = por %p32, %p33
    %p35 = scmp.ne.s32.totalorder %s24, %s25
    %p36 = scmp.eq.s32.totalorder %s16, 0
    %p37 = por %p35, %p36
    %p38 = scmp.ne.s32.totalorder %s24, %s25
    %p39 = scmp.eq.s32.totalorder %s17, 1
    %p40 = por %p38, %p39
    %p42 = scmp.ne.s32.totalorder %s25, %s41
    %p43 = scmp.eq.s32.totalorder %s17, 0
    %p44 = por %p42, %p43
    %s45 = ssub.s32 %s11, %s18
    %p46 = scmp.eq.s32.totalorder %s45, 0
    %s48 = sadd.s32 %s47, 1
    %s49 = scalar_select %p46, %s47, %s48
    %p52 = pneg %p46
    %p53 = scmp.eq.s32.totalorder %s11, 1
    %p54 = por %p52, %p53
    %p55 = scmp.ne.s32.totalorder %s47, %s50
    %p56 = scmp.eq.s32.totalorder %s11, 0
    %p57 = por %p55, %p56
    %p58 = scmp.ne.s32.totalorder %s47, %s50
    %p59 = scmp.eq.s32.totalorder %s16, 1
    %p60 = por %p58, %p59
    %p61 = scmp.ne.s32.totalorder %s50, %s51
    %p62 = scmp.eq.s32.totalorder %s16, 0
    %p63 = por %p61, %p62
    %p64 = scmp.ne.s32.totalorder %s50, %s51
    %p65 = scmp.eq.s32.totalorder %s17, 1
    %p66 = por %p64, %p65
    %p68 = scmp.ne.s32.totalorder %s51, %s67
    %p69 = scmp.eq.s32.totalorder %s17, 0
    %p70 = por %p68, %p69
    %s72 = sadd.s32 %s71, 1
    %p75 = scmp.eq.s32.totalorder %s11, 1
    %p76 = scmp.ne.s32.totalorder %s71, %s73
    %p77 = scmp.eq.s32.totalorder %s11, 0
    %p78 = por %p76, %p77
    %p79 = scmp.ne.s32.totalorder %s71, %s73
    %p80 = scmp.eq.s32.totalorder %s16, 1
    %p81 = por %p79, %p80
    %p82 = scmp.ne.s32.totalorder %s73, %s74
    %p83 = scmp.eq.s32.totalorder %s16, 0
    %p84 = por %p82, %p83
    %p85 = scmp.ne.s32.totalorder %s73, %s74
    %p86 = scmp.eq.s32.totalorder %s17, 1
    %p87 = por %p85, %p86
    %p89 = scmp.ne.s32.totalorder %s74, %s88
    %p90 = scmp.eq.s32.totalorder %s17, 0
    %p91 = por %p89, %p90
    %s93 = sadd.s32 %s92, 1
    %p96 = scmp.eq.s32.totalorder %s11, 1
    %p97 = scmp.ne.s32.totalorder %s92, %s94
    %p98 = scmp.eq.s32.totalorder %s11, 0
    %p99 = por %p97, %p98
    %p100 = scmp.ne.s32.totalorder %s92, %s94
    %p101 = scmp.eq.s32.totalorder %s16, 1
    %p102 = por %p100, %p101
    %p103 = scmp.ne.s32.totalorder %s94, %s95
    %p104 = scmp.eq.s32.totalorder %s16, 0
    %p105 = por %p103, %p104
    %p106 = scmp.ne.s32.totalorder %s94, %s95
    %p107 = scmp.eq.s32.totalorder %s17, 1
    %p108 = por %p106, %p107
    %p110 = scmp.ne.s32.totalorder %s95, %s109
    %p111 = scmp.eq.s32.totalorder %s17, 0
    %p112 = por %p110, %p111
    %s114 = sadd.s32 %s113, 1
    %p117 = scmp.eq.s32.totalorder %s11, 1
    %p118 = scmp.ne.s32.totalorder %s113, %s115
    %p119 = scmp.eq.s32.totalorder %s11, 0
    %p120 = por %p118, %p119
    %p121 = scmp.ne.s32.totalorder %s113, %s115
    %p122 = scmp.eq.s32.totalorder %s16, 1
    %p123 = por %p121, %p122
    %p124 = scmp.ne.s32.totalorder %s115, %s116
    %p125 = scmp.eq.s32.totalorder %s16, 0
    %p126 = por %p124, %p125
    %p127 = scmp.ne.s32.totalorder %s115, %s116
    %p128 = scmp.eq.s32.totalorder %s17, 1
    %p129 = por %p127, %p128
    %p131 = scmp.ne.s32.totalorder %s116, %s130
    %p132 = scmp.eq.s32.totalorder %s17, 0
    %p133 = por %p131, %p132
    %s134 = ssub.s32 %s11, %s18
    %p135 = scmp.eq.s32.totalorder %s134, 0
    %s137 = sadd.s32 %s136, 1
    %s138 = scalar_select %p135, %s136, %s137
    %p141 = pneg %p135
    %p142 = scmp.eq.s32.totalorder %s11, 1
    %p143 = por %p141, %p142
    %p144 = scmp.ne.s32.totalorder %s136, %s139
    %p145 = scmp.eq.s32.totalorder %s11, 0
    %p146 = por %p144, %p145
    %p147 = scmp.ne.s32.totalorder %s136, %s139
    %p148 = scmp.eq.s32.totalorder %s16, 1
    %p149 = por %p147, %p148
    %p150 = scmp.ne.s32.totalorder %s139, %s140
    %p151 = scmp.eq.s32.totalorder %s16, 0
    %p152 = por %p150, %p151
    %p153 = scmp.ne.s32.totalorder %s139, %s140
    %p154 = scmp.eq.s32.totalorder %s17, 1
    %p155 = por %p153, %p154
    %p157 = scmp.ne.s32.totalorder %s140, %s156
    %p158 = scmp.eq.s32.totalorder %s17, 0
    %p159 = por %p157, %p158
    %p160 = scmp.le.s32.totalorder 1, %s11
    %p161 = scmp.lt.s32.totalorder %s11, 3
    %p162 = pnand %p160, %p161
    %p163 = pneg %p162
    // Predicated region
    $region9: #{forward.16} parent=5 // pred_check
      _
    $region10: #{forward.16} parent=5 // pred_check_branch
      %165 = sbr.rel (%p162) target = $region12
    $region11: #{forward.16} parent=5 // pred_region
      %s166 = ssub.s32 %s11, 1
      // Predicated region
      $region13: #{forward.16} parent=11 // pred_check
        %p167 = pneg %p84
      $region14: #{forward.16} parent=11 // pred_check_branch
        %169 = sbr.rel (%p167) target = $region16
      $region15: #{forward.16} parent=11 // pred_region
        _
      $region16: #{forward.16} parent=11 // pred_fallthru
        _
      // Predicated region
      $region17: #{forward.16} parent=11 // pred_check
        %p170 = pneg %p105
      $region18: #{forward.16} parent=11 // pred_check_branch
        %172 = sbr.rel (%p170) target = $region20
      $region19: #{forward.16} parent=11 // pred_region
        _
      $region20: #{forward.16} parent=11 // pred_fallthru
        _
      // Predicated region
      $region21: #{forward.16} parent=11 // pred_check
        %p173 = pneg %p126
      $region22: #{forward.16} parent=11 // pred_check_branch
        %175 = sbr.rel (%p173) target = $region24
      $region23: #{forward.16} parent=11 // pred_region
        _
      $region24: #{forward.16} parent=11 // pred_fallthru
        _
    $region12: #{forward.16} parent=5 // pred_fallthru
      _
    %p176 = scmp.lt.s32.totalorder %s11, 2
    // Predicated region
    $region25: #{forward.16} parent=5 // pred_check
      %p177 = pneg %p176
    $region26: #{forward.16} parent=5 // pred_check_branch
      %179 = sbr.rel (%p177) target = $region28
    $region27: #{forward.16} parent=5 // pred_region
      // Predicated region
      $region29: #{forward.16} parent=27 // pred_check
        %p180 = pneg %p31
      $region30: #{forward.16} parent=27 // pred_check_branch
        %182 = sbr.rel (%p180) target = $region32
      $region31: #{forward.16} parent=27 // pred_region
        %p183 = scmp.lt.s32.totalorder %s11, 1
        %s184 = scalar_select %p183, %s11, 1
        %s185 = smul.addr %s184, 4
        %s186 = smul.addr %s185, 8
        %s187 = scalar_lea.vmem %s0, %s186
      $region32: #{forward.16} parent=27 // pred_fallthru
        _
      // Predicated region
      $region33: #{forward.16} parent=27 // pred_check
        %p188 = pneg %p57
      $region34: #{forward.16} parent=27 // pred_check_branch
        %190 = sbr.rel (%p188) target = $region36
      $region35: #{forward.16} parent=27 // pred_region
        %p191 = scmp.lt.s32.totalorder %s11, 1
        %s192 = scalar_select %p191, %s11, 1
        %s193 = smul.addr %s192, 8
        %s194 = smul.addr %s193, 8
        %s195 = scalar_lea.vmem %s1, %s194
      $region36: #{forward.16} parent=27 // pred_fallthru
        _
    $region28: #{forward.16} parent=5 // pred_fallthru
      _
    %p196 = scmp.le.s32.totalorder 1, %s11
    %p197 = scmp.lt.s32.totalorder %s11, 3
    %p198 = pnand %p196, %p197
    %p199 = pneg %p198
    // Predicated region
    $region37: #{forward.16} parent=5 // pred_check
      _
    $region38: #{forward.16} parent=5 // pred_check_branch
      %201 = sbr.rel (%p198) target = $region40
    $region39: #{forward.16} parent=5 // pred_region
      %s202 = ssub.s32 %s11, 1
      %p203 = scmp.lt.s32.totalorder %s16, 1
      %s204 = scalar_select %p203, %s16, 1
      %s205 = smul.addr %s204, 4
      %s206 = smul.addr %s205, 8
      %s207 = scalar_lea.vmem %s0, %s206
      %p208 = pneg %p37
      %p209 = pneg %p34
      %p210 = scmp.lt.s32.totalorder %s16, 1
      %s211 = scalar_select %p210, %s16, 1
      %s212 = smul.addr %s211, 8
      %s213 = smul.addr %s212, 8
      %s214 = scalar_lea.vmem %s1, %s213
      %p215 = pneg %p63
      %p216 = pneg %p60
      %p217 = pneg %p84
      %p218 = pneg %p81
      %p219 = pneg %p105
      %p220 = pneg %p102
      %p221 = pneg %p126
      %p222 = pneg %p123
      %p223 = pneg %p152
      %p224 = pneg %p149
      %p225 = scmp.lt.s32.totalorder %s16, 1
      %s226 = scalar_select %p225, %s16, 1
      %s227 = smul.addr %s226, 2
      %s228 = smul.addr %s227, 8
      %s229 = scalar_lea.vmem %s5, %s228
      %p230 = scmp.lt.s32.totalorder %s16, 1
      %s231 = scalar_select %p230, %s16, 1
      %s232 = smul.addr %s231, 4
      %s233 = smul.addr %s232, 8
      %s234 = scalar_lea.vmem %s0, %s233
      %p235 = scmp.lt.s32.totalorder %s16, 1
      %s236 = scalar_select %p235, %s16, 1
      %s237 = smul.addr %s236, 8
      %s238 = smul.addr %s237, 8
      %s239 = scalar_lea.vmem %s1, %s238
      %p240 = scmp.lt.s32.totalorder %s16, 1
      %s241 = scalar_select %p240, %s16, 1
      %s242 = smul.addr %s241, 2
      %s243 = smul.addr %s242, 8
      %s244 = scalar_lea.vmem %s5, %s243
      %v246 = vld [vmem:[%s2] sm:$0xf]
      %v247 = vld [vmem:[%s2 + $0x4] sm:$0xf]
      %v248 = vld [vmem:[%s2 + $0x8] sm:$0xf]
      %v249 = vld [vmem:[%s2 + $0xc] sm:$0xf]
      %v250 = vld [vmem:[%s239] sm:$0xff]
      %v251 = vld [vmem:[%s239 + $0x8] sm:$0xff]
      %v252 = vld [vmem:[%s239 + $0x10] sm:$0xff]
      %v253 = vld [vmem:[%s239 + $0x18] sm:$0xff]
      %v254 = vld [vmem:[%s239 + $0x20] sm:$0xff]
      %v255 = vld [vmem:[%s239 + $0x28] sm:$0xff]
      %v256 = vld [vmem:[%s239 + $0x30] sm:$0xff]
      %v257 = vld [vmem:[%s239 + $0x38] sm:$0xff]
      %v258 = vpack.c.bf16 %v251, %v250
      %v259 = vpack.c.bf16 %v253, %v252
      %v260 = vpack.c.bf16 %v255, %v254
      %v261 = vpack.c.bf16 %v257, %v256
      %v266 = vunpack.c.l.b16 %v246
      %v267 = vunpack.c.l.b16 %v247
      %v268 = vunpack.c.l.b16 %v248
      %v269 = vunpack.c.l.b16 %v249
      %v270 = vpack.c.b16 %v267, %v266
      %v271 = vpack.c.b16 %v269, %v268
      %vm272 = vcmask 523264
      %v274 = vsel %vm272, %v270, 0
      %v277 = vsel %vm272, %v271, 0
      %279 = vmatprep.subr.bf16.mxu0 0
      %280 = vmatpush1.bf16.msra.mxu0 0
      %281 = vmatprep.subr.bf16.mxu0 0
      %282 = vmatpush1.bf16.msra.mxu0 0
      %283 = vmatprep.subr.bf16.mxu0 0
      %284 = vmatpush1.bf16.msra.mxu0 0
      %285 = vmatprep.subr.bf16.mxu0 0
      %286 = vmatpush1.bf16.msra.mxu0 0
      %287 = vmatprep.subr.bf16.mxu0 0
      %288 = vmatpush1.bf16.msra.mxu0 %v261
      %289 = vmatprep.subr.bf16.mxu0 0
      %290 = vmatpush1.bf16.msra.mxu0 %v260
      %291 = vmatprep.subr.bf16.mxu0 0
      %292 = vmatpush1.bf16.msra.mxu0 %v259
      %293 = vmatprep.subr.bf16.mxu0 0
      %294 = vmatpush1.bf16.msra.mxu0 %v258
      %295 = vmatprep.subr.bf16.mxu0 0
      %296 = vmatpush2.bf16.msra.mxu0 0
      %297 = vmatprep.subr.bf16.mxu0 0
      %298 = vmatpush2.bf16.msra.mxu0 0
      %299 = vmatprep.subr.bf16.mxu0 0
      %300 = vmatpush2.bf16.msra.mxu0 0
      %301 = vmatprep.subr.bf16.mxu0 0
      %302 = vmatpush2.bf16.msra.mxu0 0
      %303 = vmatprep.subr.bf16.mxu0 0
      %304 = vmatpush2.bf16.msra.mxu0 0
      %305 = vmatprep.subr.bf16.mxu0 0
      %306 = vmatpush2.bf16.msra.mxu0 0
      %307 = vmatprep.subr.bf16.mxu0 0
      %308 = vmatpush2.bf16.msra.mxu0 0
      %309 = vmatprep.subr.bf16.mxu0 0
      %310 = vmatpush2.bf16.msra.mxu0 0
      %311 = vmatprep.mubr.bf16.mxu0 0
      %312 = vmatmul.mubr.bf16.gmra.mxu0 %v274
      %v313 = vpop.f32.mrf.mxu0
      %v314 = vadd.f32 0.0, %v313
      %v315 = vpop.f32.mrf.mxu0
      %v316 = vpop.f32.mrf.mxu0
      %v317 = vadd.f32 0.0, %v316
      %v318 = vpop.f32.mrf.mxu0
      %319 = vmatprep.mubr.bf16.mxu0 0
      %320 = vmatmul.mubr.bf16.gmra.mxu0 %v277
      %v321 = vpop.f32.mrf.mxu0
      %v322 = vadd.f32 0.0, %v321
      %v323 = vpop.f32.mrf.mxu0
      %v324 = vpop.f32.mrf.mxu0
      %v325 = vadd.f32 0.0, %v324
      %v326 = vpop.f32.mrf.mxu0
      %327 = vdwg.mxu0
      %v328 = vld [vmem:[%s234] sm:$0xff]
      %v329 = vld [vmem:[%s234 + $0x8] sm:$0xff]
      %v330 = vld [vmem:[%s234 + $0x10] sm:$0xff]
      %v331 = vld [vmem:[%s234 + $0x18] sm:$0xff]
      %v332 = vadd.f32 %v328, %v314
      %v333 = vadd.f32 %v329, %v317
      %v334 = vadd.f32 %v330, %v322
      %v335 = vadd.f32 %v331, %v325
      %v336 = vld [vmem:[%s3] sm:$0xff]
      %v337 = vld [vmem:[%s3 + $0x8] sm:$0xff]
      %v338 = vld [vmem:[%s3 + $0x10] sm:$0xff]
      %v339 = vld [vmem:[%s3 + $0x18] sm:$0xff]
      %341 = vset.pattern.permute.xlu0 0
      %342 = vperm.xlu0 %341, %v336
      %v343 = vpop.permute.xlu0 %342
      %346 = vset.pattern.permute.xlu0 0
      %347 = vperm.xlu0 %346, %v337
      %v348 = vpop.permute.xlu0 %347
      %351 = vset.pattern.permute.xlu0 0
      %352 = vperm.xlu0 %351, %v338
      %v353 = vpop.permute.xlu0 %352
      %356 = vset.pattern.permute.xlu0 0
      %357 = vperm.xlu0 %356, %v339
      %v358 = vpop.permute.xlu0 %357
      %v360 = vadd.f32 %v332, %v343
      %v361 = vadd.f32 %v333, %v348
      %v362 = vadd.f32 %v334, %v353
      %v363 = vadd.f32 %v335, %v358
      %v364 = vmax.f32 %v360, 0.0
      %v365 = vmax.f32 %v361, 0.0
      %v366 = vmax.f32 %v362, 0.0
      %v367 = vmax.f32 %v363, 0.0
      %v368 = vld [vmem:[%s4] sm:$0xf]
      %v369 = vld [vmem:[%s4 + $0x4] sm:$0xf]
      %v370 = vpack.c.bf16 %v365, %v364
      %v371 = vpack.c.bf16 %v367, %v366
      %v374 = vunpack.c.l.b16 %v368
      %v375 = vunpack.c.l.b16 %v369
      %v376 = vpack.c.b16 %v375, %v374
      %vm377 = vcmask 261120
      %v379 = vsel %vm377, %v376, 0
      %381 = vmatprep.subr.bf16.mxu0 0
      %382 = vmatpush1.bf16.msra.mxu0 0
      %383 = vmatprep.subr.bf16.mxu0 0
      %384 = vmatpush1.bf16.msra.mxu0 0
      %385 = vmatprep.subr.bf16.mxu0 0
      %386 = vmatpush1.bf16.msra.mxu0 0
      %387 = vmatprep.subr.bf16.mxu0 0
      %388 = vmatpush1.bf16.msra.mxu0 0
      %389 = vmatprep.subr.bf16.mxu0 0
      %390 = vmatpush1.bf16.msra.mxu0 0
      %391 = vmatprep.subr.bf16.mxu0 0
      %392 = vmatpush1.bf16.msra.mxu0 0
      %393 = vmatprep.subr.bf16.mxu0 0
      %394 = vmatpush1.bf16.msra.mxu0 %v371
      %395 = vmatprep.subr.bf16.mxu0 0
      %396 = vmatpush1.bf16.msra.mxu0 %v370
      %397 = vmatprep.subr.bf16.mxu0 0
      %398 = vmatpush2.bf16.msra.mxu0 0
      %399 = vmatprep.subr.bf16.mxu0 0
      %400 = vmatpush2.bf16.msra.mxu0 0
      %401 = vmatprep.subr.bf16.mxu0 0
      %402 = vmatpush2.bf16.msra.mxu0 0
      %403 = vmatprep.subr.bf16.mxu0 0
      %404 = vmatpush2.bf16.msra.mxu0 0
      %405 = vmatprep.subr.bf16.mxu0 0
      %406 = vmatpush2.bf16.msra.mxu0 0
      %407 = vmatprep.subr.bf16.mxu0 0
      %408 = vmatpush2.bf16.msra.mxu0 0
      %409 = vmatprep.subr.bf16.mxu0 0
      %410 = vmatpush2.bf16.msra.mxu0 0
      %411 = vmatprep.subr.bf16.mxu0 0
      %412 = vmatpush2.bf16.msra.mxu0 0
      %413 = vmatprep.mubr.bf16.mxu0 0
      %414 = vmatmul.mubr.bf16.gmra.mxu0 %v379
      %v415 = vpop.f32.mrf.mxu0
      %v416 = vadd.f32 0.0, %v415
      %v417 = vpop.f32.mrf.mxu0
      %v418 = vpop.f32.mrf.mxu0
      %v419 = vadd.f32 0.0, %v418
      %v420 = vpop.f32.mrf.mxu0
      %421 = vdwg.mxu0
      %422 = vst.msk [vmem:[%s244] sm:$0xff] %vm272, %v416
      %423 = vst.msk [vmem:[%s244 + $0x8] sm:$0xff] %vm272, %v419
      %p424 = scmp.lt.s32.totalorder %s16, 1
      %s425 = scalar_select %p424, %s16, 1
      %s426 = smul.addr %s425, 2
      %s427 = smul.addr %s426, 8
      %s428 = scalar_lea.vmem %s5, %s427
      // Predicated region
      $region41: #{forward.16} parent=39 // pred_check
        %p429 = pneg %p149
      $region42: #{forward.16} parent=39 // pred_check_branch
        %431 = sbr.rel (%p429) target = $region44
      $region43: #{forward.16} parent=39 // pred_region
        _
      $region44: #{forward.16} parent=39 // pred_fallthru
        _
    $region40: #{forward.16} parent=5 // pred_fallthru
      _
    %p432 = scmp.le.s32.totalorder 2, %s11
    // Predicated region
    $region45: #{forward.16} parent=5 // pred_check
      %p433 = pneg %p432
    $region46: #{forward.16} parent=5 // pred_check_branch
      %435 = sbr.rel (%p433) target = $region48
    $region47: #{forward.16} parent=5 // pred_region
      %s436 = ssub.s32 %s11, 2
      // Predicated region
      $region49: #{forward.16} parent=47 // pred_check
        %p437 = pneg %p155
      $region50: #{forward.16} parent=47 // pred_check_branch
        %439 = sbr.rel (%p437) target = $region52
      $region51: #{forward.16} parent=47 // pred_region
        %p440 = scmp.lt.s32.totalorder %s17, 1
        %s441 = scalar_select %p440, %s17, 1
        %s442 = smul.addr %s441, 2
        %s443 = smul.addr %s442, 8
        %s444 = scalar_lea.vmem %s5, %s443
      $region52: #{forward.16} parent=47 // pred_fallthru
        _
    $region48: #{forward.16} parent=5 // pred_fallthru
      _
  $region6: #{forward.16} parent=0 // loop_footer
    %s15 = sadd.s32 1, %s11
  $region7: #{forward.16} parent=0 // loop_footer_branch
    %10 = sbr.rel target = $region3
  $region8: #{forward.16} parent=0 // loop_exit
    _

// kernel: forward.17
$region0: #{forward.17}
  #allocation0 [shape = 'u32[]', space=smem, size = 0x4, offset = 0x4, fixed_abs, tag = 'smem constant byte address 0x4 - core index']
  #allocation1 [shape = 'u32[144,128]{1,0:T(1,128)}', space=vmem, size = 0x12000, scoped, tag = 'internal scratch']
  %s0 = inlined_call_operand.vmem [shape: f32[2,16,256], index: 0, kind: input, shape index: {}]
  %s1 = inlined_call_operand.vmem [shape: f32[2,32,256], index: 1, kind: input, shape index: {}]
  %s2 = inlined_call_operand.vmem [shape: bf16[16,32], index: 2, kind: input, shape index: {}]
  %s3 = inlined_call_operand.vmem [shape: f32[16,1], index: 3, kind: input, shape index: {}]
  %s4 = inlined_call_operand.vmem [shape: bf16[16,16], index: 4, kind: input, shape index: {}]
  %s5 = inlined_call_operand.vmem [shape: f32[2,16,256], index: 5, kind: output, shape index: {}]
  %s6 = sld [smem:[#allocation0]]
  $region53: #{forward.17} parent=0
    _
  %s8 = ssub.s32 1, %s6
  %s9 = scalar_select 0, %s8, %s6
  loop: start=0, step=1, limit=4
  $region2: #{forward.17} parent=0 // loop_pre_header
    _
  $region3: #{forward.17} parent=0 // loop_header
    %s11 = sphi 0, %s15
    %p12 = scmp.ge.s32.totalorder %s11, 4
    %s21 = sphi 0, %s23
    %s24 = sphi 0, %s21
    %s25 = sphi 0, %s24
    %s41 = sphi 0, %s25
    %s47 = sphi 0, %s49
    %s50 = sphi 0, %s47
    %s51 = sphi 0, %s50
    %s67 = sphi 0, %s51
    %s71 = sphi 0, %s71
    %s73 = sphi 0, %s71
    %s74 = sphi 0, %s73
    %s88 = sphi 0, %s74
    %s92 = sphi 0, %s92
    %s94 = sphi 0, %s92
    %s95 = sphi 0, %s94
    %s109 = sphi 0, %s95
    %s113 = sphi 0, %s113
    %s115 = sphi 0, %s113
    %s116 = sphi 0, %s115
    %s130 = sphi 0, %s116
    %s136 = sphi 0, %s138
    %s139 = sphi 0, %s136
    %s140 = sphi 0, %s139
    %s156 = sphi 0, %s140
  $region4: #{forward.17} parent=0 // loop_header_branch
    %14 = sbr.rel (%p12) target = $region8
  $region5: #{forward.17} parent=0 // loop_body
    %s16 = ssub.s32 %s11, 1
    %s17 = ssub.s32 %s11, 2
    %s18 = sadd.s32 %s11, 1
    %s19 = ssub.s32 %s11, %s18
    %p20 = scmp.eq.s32.totalorder %s19, 0
    %s22 = sadd.s32 %s21, 1
    %s23 = scalar_select %p20, %s21, %s22
    %p26 = pneg %p20
    %p27 = scmp.eq.s32.totalorder %s11, 1
    %p28 = por %p26, %p27
    %p29 = scmp.ne.s32.totalorder %s21, %s24
    %p30 = scmp.eq.s32.totalorder %s11, 0
    %p31 = por %p29, %p30
    %p32 = scmp.ne.s32.totalorder %s21, %s24
    %p33 = scmp.eq.s32.totalorder %s16, 1
    %p34 = por %p32, %p33
    %p35 = scmp.ne.s32.totalorder %s24, %s25
    %p36 = scmp.eq.s32.totalorder %s16, 0
    %p37 = por %p35, %p36
    %p38 = scmp.ne.s32.totalorder %s24, %s25
    %p39 = scmp.eq.s32.totalorder %s17, 1
    %p40 = por %p38, %p39
    %p42 = scmp.ne.s32.totalorder %s25, %s41
    %p43 = scmp.eq.s32.totalorder %s17, 0
    %p44 = por %p42, %p43
    %s45 = ssub.s32 %s11, %s18
    %p46 = scmp.eq.s32.totalorder %s45, 0
    %s48 = sadd.s32 %s47, 1
    %s49 = scalar_select %p46, %s47, %s48
    %p52 = pneg %p46
    %p53 = scmp.eq.s32.totalorder %s11, 1
    %p54 = por %p52, %p53
    %p55 = scmp.ne.s32.totalorder %s47, %s50
    %p56 = scmp.eq.s32.totalorder %s11, 0
    %p57 = por %p55, %p56
    %p58 = scmp.ne.s32.totalorder %s47, %s50
    %p59 = scmp.eq.s32.totalorder %s16, 1
    %p60 = por %p58, %p59
    %p61 = scmp.ne.s32.totalorder %s50, %s51
    %p62 = scmp.eq.s32.totalorder %s16, 0
    %p63 = por %p61, %p62
    %p64 = scmp.ne.s32.totalorder %s50, %s51
    %p65 = scmp.eq.s32.totalorder %s17, 1
    %p66 = por %p64, %p65
    %p68 = scmp.ne.s32.totalorder %s51, %s67
    %p69 = scmp.eq.s32.totalorder %s17, 0
    %p70 = por %p68, %p69
    %s72 = sadd.s32 %s71, 1
    %p75 = scmp.eq.s32.totalorder %s11, 1
    %p76 = scmp.ne.s32.totalorder %s71, %s73
    %p77 = scmp.eq.s32.totalorder %s11, 0
    %p78 = por %p76, %p77
    %p79 = scmp.ne.s32.totalorder %s71, %s73
    %p80 = scmp.eq.s32.totalorder %s16, 1
    %p81 = por %p79, %p80
    %p82 = scmp.ne.s32.totalorder %s73, %s74
    %p83 = scmp.eq.s32.totalorder %s16, 0
    %p84 = por %p82, %p83
    %p85 = scmp.ne.s32.totalorder %s73, %s74
    %p86 = scmp.eq.s32.totalorder %s17, 1
    %p87 = por %p85, %p86
    %p89 = scmp.ne.s32.totalorder %s74, %s88
    %p90 = scmp.eq.s32.totalorder %s17, 0
    %p91 = por %p89, %p90
    %s93 = sadd.s32 %s92, 1
    %p96 = scmp.eq.s32.totalorder %s11, 1
    %p97 = scmp.ne.s32.totalorder %s92, %s94
    %p98 = scmp.eq.s32.totalorder %s11, 0
    %p99 = por %p97, %p98
    %p100 = scmp.ne.s32.totalorder %s92, %s94
    %p101 = scmp.eq.s32.totalorder %s16, 1
    %p102 = por %p100, %p101
    %p103 = scmp.ne.s32.totalorder %s94, %s95
    %p104 = scmp.eq.s32.totalorder %s16, 0
    %p105 = por %p103, %p104
    %p106 = scmp.ne.s32.totalorder %s94, %s95
    %p107 = scmp.eq.s32.totalorder %s17, 1
    %p108 = por %p106, %p107
    %p110 = scmp.ne.s32.totalorder %s95, %s109
    %p111 = scmp.eq.s32.totalorder %s17, 0
    %p112 = por %p110, %p111
    %s114 = sadd.s32 %s113, 1
    %p117 = scmp.eq.s32.totalorder %s11, 1
    %p118 = scmp.ne.s32.totalorder %s113, %s115
    %p119 = scmp.eq.s32.totalorder %s11, 0
    %p120 = por %p118, %p119
    %p121 = scmp.ne.s32.totalorder %s113, %s115
    %p122 = scmp.eq.s32.totalorder %s16, 1
    %p123 = por %p121, %p122
    %p124 = scmp.ne.s32.totalorder %s115, %s116
    %p125 = scmp.eq.s32.totalorder %s16, 0
    %p126 = por %p124, %p125
    %p127 = scmp.ne.s32.totalorder %s115, %s116
    %p128 = scmp.eq.s32.totalorder %s17, 1
    %p129 = por %p127, %p128
    %p131 = scmp.ne.s32.totalorder %s116, %s130
    %p132 = scmp.eq.s32.totalorder %s17, 0
    %p133 = por %p131, %p132
    %s134 = ssub.s32 %s11, %s18
    %p135 = scmp.eq.s32.totalorder %s134, 0
    %s137 = sadd.s32 %s136, 1
    %s138 = scalar_select %p135, %s136, %s137
    %p141 = pneg %p135
    %p142 = scmp.eq.s32.totalorder %s11, 1
    %p143 = por %p141, %p142
    %p144 = scmp.ne.s32.totalorder %s136, %s139
    %p145 = scmp.eq.s32.totalorder %s11, 0
    %p146 = por %p144, %p145
    %p147 = scmp.ne.s32.totalorder %s136, %s139
    %p148 = scmp.eq.s32.totalorder %s16, 1
    %p149 = por %p147, %p148
    %p150 = scmp.ne.s32.totalorder %s139, %s140
    %p151 = scmp.eq.s32.totalorder %s16, 0
    %p152 = por %p150, %p151
    %p153 = scmp.ne.s32.totalorder %s139, %s140
    %p154 = scmp.eq.s32.totalorder %s17, 1
    %p155 = por %p153, %p154
    %p157 = scmp.ne.s32.totalorder %s140, %s156
    %p158 = scmp.eq.s32.totalorder %s17, 0
    %p159 = por %p157, %p158
    %p160 = scmp.le.s32.totalorder 1, %s11
    %p161 = scmp.lt.s32.totalorder %s11, 3
    %p162 = pnand %p160, %p161
    %p163 = pneg %p162
    // Predicated region
    $region9: #{forward.17} parent=5 // pred_check
      _
    $region10: #{forward.17} parent=5 // pred_check_branch
      %165 = sbr.rel (%p162) target = $region12
    $region11: #{forward.17} parent=5 // pred_region
      %s166 = ssub.s32 %s11, 1
      // Predicated region
      $region13: #{forward.17} parent=11 // pred_check
        %p167 = pneg %p84
      $region14: #{forward.17} parent=11 // pred_check_branch
        %169 = sbr.rel (%p167) target = $region16
      $region15: #{forward.17} parent=11 // pred_region
        _
      $region16: #{forward.17} parent=11 // pred_fallthru
        _
      // Predicated region
      $region17: #{forward.17} parent=11 // pred_check
        %p170 = pneg %p105
      $region18: #{forward.17} parent=11 // pred_check_branch
        %172 = sbr.rel (%p170) target = $region20
      $region19: #{forward.17} parent=11 // pred_region
        _
      $region20: #{forward.17} parent=11 // pred_fallthru
        _
      // Predicated region
      $region21: #{forward.17} parent=11 // pred_check
        %p173 = pneg %p126
      $region22: #{forward.17} parent=11 // pred_check_branch
        %175 = sbr.rel (%p173) target = $region24
      $region23: #{forward.17} parent=11 // pred_region
        _
      $region24: #{forward.17} parent=11 // pred_fallthru
        _
    $region12: #{forward.17} parent=5 // pred_fallthru
      _
    %p176 = scmp.lt.s32.totalorder %s11, 2
    // Predicated region
    $region25: #{forward.17} parent=5 // pred_check
      %p177 = pneg %p176
    $region26: #{forward.17} parent=5 // pred_check_branch
      %179 = sbr.rel (%p177) target = $region28
    $region27: #{forward.17} parent=5 // pred_region
      // Predicated region
      $region29: #{forward.17} parent=27 // pred_check
        %p180 = pneg %p31
      $region30: #{forward.17} parent=27 // pred_check_branch
        %182 = sbr.rel (%p180) target = $region32
      $region31: #{forward.17} parent=27 // pred_region
        %p183 = scmp.lt.s32.totalorder %s11, 1
        %s184 = scalar_select %p183, %s11, 1
        %s185 = smul.addr %s184, 4
        %s186 = smul.addr %s185, 8
        %s187 = scalar_lea.vmem %s0, %s186
      $region32: #{forward.17} parent=27 // pred_fallthru
        _
      // Predicated region
      $region33: #{forward.17} parent=27 // pred_check
        %p188 = pneg %p57
      $region34: #{forward.17} parent=27 // pred_check_branch
        %190 = sbr.rel (%p188) target = $region36
      $region35: #{forward.17} parent=27 // pred_region
        %p191 = scmp.lt.s32.totalorder %s11, 1
        %s192 = scalar_select %p191, %s11, 1
        %s193 = smul.addr %s192, 8
        %s194 = smul.addr %s193, 8
        %s195 = scalar_lea.vmem %s1, %s194
      $region36: #{forward.17} parent=27 // pred_fallthru
        _
    $region28: #{forward.17} parent=5 // pred_fallthru
      _
    %p196 = scmp.le.s32.totalorder 1, %s11
    %p197 = scmp.lt.s32.totalorder %s11, 3
    %p198 = pnand %p196, %p197
    %p199 = pneg %p198
    // Predicated region
    $region37: #{forward.17} parent=5 // pred_check
      _
    $region38: #{forward.17} parent=5 // pred_check_branch
      %201 = sbr.rel (%p198) target = $region40
    $region39: #{forward.17} parent=5 // pred_region
      %s202 = ssub.s32 %s11, 1
      %p203 = scmp.lt.s32.totalorder %s16, 1
      %s204 = scalar_select %p203, %s16, 1
      %s205 = smul.addr %s204, 4
      %s206 = smul.addr %s205, 8
      %s207 = scalar_lea.vmem %s0, %s206
      %p208 = pneg %p37
      %p209 = pneg %p34
      %p210 = scmp.lt.s32.totalorder %s16, 1
      %s211 = scalar_select %p210, %s16, 1
      %s212 = smul.addr %s211, 8
      %s213 = smul.addr %s212, 8
      %s214 = scalar_lea.vmem %s1, %s213
      %p215 = pneg %p63
      %p216 = pneg %p60
      %p217 = pneg %p84
      %p218 = pneg %p81
      %p219 = pneg %p105
      %p220 = pneg %p102
      %p221 = pneg %p126
      %p222 = pneg %p123
      %p223 = pneg %p152
      %p224 = pneg %p149
      %p225 = scmp.lt.s32.totalorder %s16, 1
      %s226 = scalar_select %p225, %s16, 1
      %s227 = smul.addr %s226, 4
      %s228 = smul.addr %s227, 8
      %s229 = scalar_lea.vmem %s5, %s228
      %p230 = scmp.lt.s32.totalorder %s16, 1
      %s231 = scalar_select %p230, %s16, 1
      %s232 = smul.addr %s231, 4
      %s233 = smul.addr %s232, 8
      %s234 = scalar_lea.vmem %s0, %s233
      %p235 = scmp.lt.s32.totalorder %s16, 1
      %s236 = scalar_select %p235, %s16, 1
      %s237 = smul.addr %s236, 8
      %s238 = smul.addr %s237, 8
      %s239 = scalar_lea.vmem %s1, %s238
      %p240 = scmp.lt.s32.totalorder %s16, 1
      %s241 = scalar_select %p240, %s16, 1
      %s242 = smul.addr %s241, 4
      %s243 = smul.addr %s242, 8
      %s244 = scalar_lea.vmem %s5, %s243
      %v246 = vld [vmem:[%s2] sm:$0xf]
      %v247 = vld [vmem:[%s2 + $0x4] sm:$0xf]
      %v248 = vld [vmem:[%s239] sm:$0xff]
      %v249 = vld [vmem:[%s239 + $0x8] sm:$0xff]
      %v250 = vld [vmem:[%s239 + $0x10] sm:$0xff]
      %v251 = vld [vmem:[%s239 + $0x18] sm:$0xff]
      %v252 = vld [vmem:[%s239 + $0x20] sm:$0xff]
      %v253 = vld [vmem:[%s239 + $0x28] sm:$0xff]
      %v254 = vld [vmem:[%s239 + $0x30] sm:$0xff]
      %v255 = vld [vmem:[%s239 + $0x38] sm:$0xff]
      %v256 = vpack.c.bf16 %v250, %v248
      %v257 = vpack.c.bf16 %v251, %v249
      %v258 = vpack.c.bf16 %v254, %v252
      %v259 = vpack.c.bf16 %v255, %v253
      %v262 = vunpack.c.l.b16 %v246
      %v263 = vunpack.c.l.b16 %v247
      %v264 = vpack.c.b16 %v263, %v262
      %vm265 = vcmask 261120
      %v267 = vsel %vm265, %v264, 0
      %269 = vmatprep.subr.bf16.mxu0 0
      %270 = vmatpush1.bf16.msra.mxu0 0
      %271 = vmatprep.subr.bf16.mxu0 0
      %272 = vmatpush1.bf16.msra.mxu0 0
      %273 = vmatprep.subr.bf16.mxu0 0
      %274 = vmatpush1.bf16.msra.mxu0 0
      %275 = vmatprep.subr.bf16.mxu0 0
      %276 = vmatpush1.bf16.msra.mxu0 0
      %277 = vmatprep.subr.bf16.mxu0 0
      %278 = vmatpush1.bf16.msra.mxu0 0
      %279 = vmatprep.subr.bf16.mxu0 0
      %280 = vmatpush1.bf16.msra.mxu0 0
      %281 = vmatprep.subr.bf16.mxu0 %v259
      %282 = vmatpush1.bf16.msra.mxu0 %v258
      %283 = vmatprep.subr.bf16.mxu0 %v257
      %284 = vmatpush1.bf16.msra.mxu0 %v256
      %285 = vmatprep.subr.bf16.mxu0 0
      %286 = vmatpush2.bf16.msra.mxu0 0
      %287 = vmatprep.subr.bf16.mxu0 0
      %288 = vmatpush2.bf16.msra.mxu0 0
      %289 = vmatprep.subr.bf16.mxu0 0
      %290 = vmatpush2.bf16.msra.mxu0 0
      %291 = vmatprep.subr.bf16.mxu0 0
      %292 = vmatpush2.bf16.msra.mxu0 0
      %293 = vmatprep.subr.bf16.mxu0 0
      %294 = vmatpush2.bf16.msra.mxu0 0
      %295 = vmatprep.subr.bf16.mxu0 0
      %296 = vmatpush2.bf16.msra.mxu0 0
      %297 = vmatprep.subr.bf16.mxu0 0
      %298 = vmatpush2.bf16.msra.mxu0 0
      %299 = vmatprep.subr.bf16.mxu0 0
      %300 = vmatpush2.bf16.msra.mxu0 0
      %301 = vmatprep.mubr.bf16.mxu0 0
      %302 = vmatmul.mubr.bf16.gmra.mxu0 %v267
      %v303 = vpop.f32.mrf.mxu0
      %v304 = vadd.f32 0.0, %v303
      %v305 = vpop.f32.mrf.mxu0
      %v306 = vadd.f32 0.0, %v305
      %v307 = vpop.f32.mrf.mxu0
      %v308 = vadd.f32 0.0, %v307
      %v309 = vpop.f32.mrf.mxu0
      %v310 = vadd.f32 0.0, %v309
      %311 = vdwg.mxu0
      %v312 = vld [vmem:[%s234] sm:$0xff]
      %v313 = vld [vmem:[%s234 + $0x8] sm:$0xff]
      %v314 = vld [vmem:[%s234 + $0x10] sm:$0xff]
      %v315 = vld [vmem:[%s234 + $0x18] sm:$0xff]
      %v316 = vadd.f32 %v312, %v304
      %v317 = vadd.f32 %v313, %v306
      %v318 = vadd.f32 %v314, %v308
      %v319 = vadd.f32 %v315, %v310
      %v320 = vld [vmem:[%s3] sm:$0xff]
      %v321 = vld [vmem:[%s3 + $0x8] sm:$0xff]
      %323 = vset.pattern.permute.xlu0 0
      %324 = vperm.xlu0 %323, %v320
      %v325 = vpop.permute.xlu0 %324
      %328 = vset.pattern.permute.xlu0 0
      %329 = vperm.xlu0 %328, %v321
      %v330 = vpop.permute.xlu0 %329
      %v332 = vadd.f32 %v316, %v325
      %v333 = vadd.f32 %v317, %v325
      %v334 = vadd.f32 %v318, %v330
      %v335 = vadd.f32 %v319, %v330
      %v336 = vmax.f32 %v332, 0.0
      %v337 = vmax.f32 %v333, 0.0
      %v338 = vmax.f32 %v334, 0.0
      %v339 = vmax.f32 %v335, 0.0
      %v340 = vld [vmem:[%s4] sm:$0xf]
      %v341 = vld [vmem:[%s4 + $0x4] sm:$0xf]
      %v342 = vpack.c.bf16 %v338, %v336
      %v343 = vpack.c.bf16 %v339, %v337
      %v346 = vunpack.c.l.b16 %v340
      %v347 = vunpack.c.l.b16 %v341
      %v348 = vpack.c.b16 %v347, %v346
      %vm349 = vcmask 130048
      %v351 = vsel %vm349, %v348, 0
      %353 = vmatprep.subr.bf16.mxu0 0
      %354 = vmatpush1.bf16.msra.mxu0 0
      %355 = vmatprep.subr.bf16.mxu0 0
      %356 = vmatpush1.bf16.msra.mxu0 0
      %357 = vmatprep.subr.bf16.mxu0 0
      %358 = vmatpush1.bf16.msra.mxu0 0
      %359 = vmatprep.subr.bf16.mxu0 0
      %360 = vmatpush1.bf16.msra.mxu0 0
      %361 = vmatprep.subr.bf16.mxu0 0
      %362 = vmatpush1.bf16.msra.mxu0 0
      %363 = vmatprep.subr.bf16.mxu0 0
      %364 = vmatpush1.bf16.msra.mxu0 0
      %365 = vmatprep.subr.bf16.mxu0 0
      %366 = vmatpush1.bf16.msra.mxu0 0
      %367 = vmatprep.subr.bf16.mxu0 %v343
      %368 = vmatpush1.bf16.msra.mxu0 %v342
      %369 = vmatprep.subr.bf16.mxu0 0
      %370 = vmatpush2.bf16.msra.mxu0 0
      %371 = vmatprep.subr.bf16.mxu0 0
      %372 = vmatpush2.bf16.msra.mxu0 0
      %373 = vmatprep.subr.bf16.mxu0 0
      %374 = vmatpush2.bf16.msra.mxu0 0
      %375 = vmatprep.subr.bf16.mxu0 0
      %376 = vmatpush2.bf16.msra.mxu0 0
      %377 = vmatprep.subr.bf16.mxu0 0
      %378 = vmatpush2.bf16.msra.mxu0 0
      %379 = vmatprep.subr.bf16.mxu0 0
      %380 = vmatpush2.bf16.msra.mxu0 0
      %381 = vmatprep.subr.bf16.mxu0 0
      %382 = vmatpush2.bf16.msra.mxu0 0
      %383 = vmatprep.subr.bf16.mxu0 0
      %384 = vmatpush2.bf16.msra.mxu0 0
      %385 = vmatprep.mubr.bf16.mxu0 0
      %386 = vmatmul.mubr.bf16.gmra.mxu0 %v351
      %v387 = vpop.f32.mrf.mxu0
      %v388 = vadd.f32 0.0, %v387
      %v389 = vpop.f32.mrf.mxu0
      %v390 = vadd.f32 0.0, %v389
      %v391 = vpop.f32.mrf.mxu0
      %v392 = vadd.f32 0.0, %v391
      %v393 = vpop.f32.mrf.mxu0
      %v394 = vadd.f32 0.0, %v393
      %395 = vdwg.mxu0
      %396 = vst [vmem:[%s244] sm:$0xff] %v388
      %397 = vst [vmem:[%s244 + $0x8] sm:$0xff] %v390
      %398 = vst [vmem:[%s244 + $0x10] sm:$0xff] %v392
      %399 = vst [vmem:[%s244 + $0x18] sm:$0xff] %v394
      %p400 = scmp.lt.s32.totalorder %s16, 1
      %s401 = scalar_select %p400, %s16, 1
      %s402 = smul.addr %s401, 4
      %s403 = smul.addr %s402, 8
      %s404 = scalar_lea.vmem %s5, %s403
      // Predicated region
      $region41: #{forward.17} parent=39 // pred_check
        %p405 = pneg %p149
      $region42: #{forward.17} parent=39 // pred_check_branch
        %407 = sbr.rel (%p405) target = $region44
      $region43: #{forward.17} parent=39 // pred_region
        _
      $region44: #{forward.17} parent=39 // pred_fallthru
        _
    $region40: #{forward.17} parent=5 // pred_fallthru
      _
    %p408 = scmp.le.s32.totalorder 2, %s11
    // Predicated region
    $region45: #{forward.17} parent=5 // pred_check
      %p409 = pneg %p408
    $region46: #{forward.17} parent=5 // pred_check_branch
      %411 = sbr.rel (%p409) target = $region48
    $region47: #{forward.17} parent=5 // pred_region
      %s412 = ssub.s32 %s11, 2
      // Predicated region
      $region49: #{forward.17} parent=47 // pred_check
        %p413 = pneg %p155
      $region50: #{forward.17} parent=47 // pred_check_branch
        %415 = sbr.rel (%p413) target = $region52
      $region51: #{forward.17} parent=47 // pred_region
        %p416 = scmp.lt.s32.totalorder %s17, 1
        %s417 = scalar_select %p416, %s17, 1
        %s418 = smul.addr %s417, 4
        %s419 = smul.addr %s418, 8
        %s420 = scalar_lea.vmem %s5, %s419
      $region52: #{forward.17} parent=47 // pred_fallthru
        _
    $region48: #{forward.17} parent=5 // pred_fallthru
      _
  $region6: #{forward.17} parent=0 // loop_footer
    %s15 = sadd.s32 1, %s11
  $region7: #{forward.17} parent=0 // loop_footer_branch
    %10 = sbr.rel target = $region3
  $region8: #{forward.17} parent=0 // loop_exit
    _

// kernel: forward.18
$region0: #{forward.18}
  #allocation0 [shape = 'u32[]', space=smem, size = 0x4, offset = 0x4, fixed_abs, tag = 'smem constant byte address 0x4 - core index']
  #allocation1 [shape = 'u32[144,128]{1,0:T(1,128)}', space=vmem, size = 0x12000, scoped, tag = 'internal scratch']
  %s0 = inlined_call_operand.vmem [shape: f32[2,16,1024], index: 0, kind: input, shape index: {}]
  %s1 = inlined_call_operand.vmem [shape: f32[2,16,1024], index: 1, kind: input, shape index: {}]
  %s2 = inlined_call_operand.vmem [shape: bf16[16,16], index: 2, kind: input, shape index: {}]
  %s3 = inlined_call_operand.vmem [shape: f32[16,1], index: 3, kind: input, shape index: {}]
  %s4 = inlined_call_operand.vmem [shape: bf16[8,16], index: 4, kind: input, shape index: {}]
  %s5 = inlined_call_operand.vmem [shape: f32[8,1], index: 5, kind: input, shape index: {}]
  %s6 = inlined_call_operand.vmem [shape: f32[2,8,1024], index: 6, kind: output, shape index: {}]
  %s7 = sld [smem:[#allocation0]]
  $region57: #{forward.18} parent=0
    _
  %s9 = ssub.s32 1, %s7
  %s10 = scalar_select 0, %s9, %s7
  loop: start=0, step=1, limit=4
  $region2: #{forward.18} parent=0 // loop_pre_header
    _
  $region3: #{forward.18} parent=0 // loop_header
    %s12 = sphi 0, %s16
    %p13 = scmp.ge.s32.totalorder %s12, 4
    %s22 = sphi 0, %s24
    %s25 = sphi 0, %s22
    %s26 = sphi 0, %s25
    %s42 = sphi 0, %s26
    %s48 = sphi 0, %s50
    %s51 = sphi 0, %s48
    %s52 = sphi 0, %s51
    %s68 = sphi 0, %s52
    %s72 = sphi 0, %s72
    %s74 = sphi 0, %s72
    %s75 = sphi 0, %s74
    %s89 = sphi 0, %s75
    %s93 = sphi 0, %s93
    %s95 = sphi 0, %s93
    %s96 = sphi 0, %s95
    %s110 = sphi 0, %s96
    %s114 = sphi 0, %s114
    %s116 = sphi 0, %s114
    %s117 = sphi 0, %s116
    %s131 = sphi 0, %s117
    %s135 = sphi 0, %s135
    %s137 = sphi 0, %s135
    %s138 = sphi 0, %s137
    %s152 = sphi 0, %s138
    %s158 = sphi 0, %s160
    %s161 = sphi 0, %s158
    %s162 = sphi 0, %s161
    %s178 = sphi 0, %s162
  $region4: #{forward.18} parent=0 // loop_header_branch
    %15 = sbr.rel (%p13) target = $region8
  $region5: #{forward.18} parent=0 // loop_body
    %s17 = ssub.s32 %s12, 1
    %s18 = ssub.s32 %s12, 2
    %s19 = sadd.s32 %s12, 1
    %s20 = ssub.s32 %s12, %s19
    %p21 = scmp.eq.s32.totalorder %s20, 0
    %s23 = sadd.s32 %s22, 1
    %s24 = scalar_select %p21, %s22, %s23
    %p27 = pneg %p21
    %p28 = scmp.eq.s32.totalorder %s12, 1
    %p29 = por %p27, %p28
    %p30 = scmp.ne.s32.totalorder %s22, %s25
    %p31 = scmp.eq.s32.totalorder %s12, 0
    %p32 = por %p30, %p31
    %p33 = scmp.ne.s32.totalorder %s22, %s25
    %p34 = scmp.eq.s32.totalorder %s17, 1
    %p35 = por %p33, %p34
    %p36 = scmp.ne.s32.totalorder %s25, %s26
    %p37 = scmp.eq.s32.totalorder %s17, 0
    %p38 = por %p36, %p37
    %p39 = scmp.ne.s32.totalorder %s25, %s26
    %p40 = scmp.eq.s32.totalorder %s18, 1
    %p41 = por %p39, %p40
    %p43 = scmp.ne.s32.totalorder %s26, %s42
    %p44 = scmp.eq.s32.totalorder %s18, 0
    %p45 = por %p43, %p44
    %s46 = ssub.s32 %s12, %s19
    %p47 = scmp.eq.s32.totalorder %s46, 0
    %s49 = sadd.s32 %s48, 1
    %s50 = scalar_select %p47, %s48, %s49
    %p53 = pneg %p47
    %p54 = scmp.eq.s32.totalorder %s12, 1
    %p55 = por %p53, %p54
    %p56 = scmp.ne.s32.totalorder %s48, %s51
    %p57 = scmp.eq.s32.totalorder %s12, 0
    %p58 = por %p56, %p57
    %p59 = scmp.ne.s32.totalorder %s48, %s51
    %p60 = scmp.eq.s32.totalorder %s17, 1
    %p61 = por %p59, %p60
    %p62 = scmp.ne.s32.totalorder %s51, %s52
    %p63 = scmp.eq.s32.totalorder %s17, 0
    %p64 = por %p62, %p63
    %p65 = scmp.ne.s32.totalorder %s51, %s52
    %p66 = scmp.eq.s32.totalorder %s18, 1
    %p67 = por %p65, %p66
    %p69 = scmp.ne.s32.totalorder %s52, %s68
    %p70 = scmp.eq.s32.totalorder %s18, 0
    %p71 = por %p69, %p70
    %s73 = sadd.s32 %s72, 1
    %p76 = scmp.eq.s32.totalorder %s12, 1
    %p77 = scmp.ne.s32.totalorder %s72, %s74
    %p78 = scmp.eq.s32.totalorder %s12, 0
    %p79 = por %p77, %p78
    %p80 = scmp.ne.s32.totalorder %s72, %s74
    %p81 = scmp.eq.s32.totalorder %s17, 1
    %p82 = por %p80, %p81
    %p83 = scmp.ne.s32.totalorder %s74, %s75
    %p84 = scmp.eq.s32.totalorder %s17, 0
    %p85 = por %p83, %p84
    %p86 = scmp.ne.s32.totalorder %s74, %s75
    %p87 = scmp.eq.s32.totalorder %s18, 1
    %p88 = por %p86, %p87
    %p90 = scmp.ne.s32.totalorder %s75, %s89
    %p91 = scmp.eq.s32.totalorder %s18, 0
    %p92 = por %p90, %p91
    %s94 = sadd.s32 %s93, 1
    %p97 = scmp.eq.s32.totalorder %s12, 1
    %p98 = scmp.ne.s32.totalorder %s93, %s95
    %p99 = scmp.eq.s32.totalorder %s12, 0
    %p100 = por %p98, %p99
    %p101 = scmp.ne.s32.totalorder %s93, %s95
    %p102 = scmp.eq.s32.totalorder %s17, 1
    %p103 = por %p101, %p102
    %p104 = scmp.ne.s32.totalorder %s95, %s96
    %p105 = scmp.eq.s32.totalorder %s17, 0
    %p106 = por %p104, %p105
    %p107 = scmp.ne.s32.totalorder %s95, %s96
    %p108 = scmp.eq.s32.totalorder %s18, 1
    %p109 = por %p107, %p108
    %p111 = scmp.ne.s32.totalorder %s96, %s110
    %p112 = scmp.eq.s32.totalorder %s18, 0
    %p113 = por %p111, %p112
    %s115 = sadd.s32 %s114, 1
    %p118 = scmp.eq.s32.totalorder %s12, 1
    %p119 = scmp.ne.s32.totalorder %s114, %s116
    %p120 = scmp.eq.s32.totalorder %s12, 0
    %p121 = por %p119, %p120
    %p122 = scmp.ne.s32.totalorder %s114, %s116
    %p123 = scmp.eq.s32.totalorder %s17, 1
    %p124 = por %p122, %p123
    %p125 = scmp.ne.s32.totalorder %s116, %s117
    %p126 = scmp.eq.s32.totalorder %s17, 0
    %p127 = por %p125, %p126
    %p128 = scmp.ne.s32.totalorder %s116, %s117
    %p129 = scmp.eq.s32.totalorder %s18, 1
    %p130 = por %p128, %p129
    %p132 = scmp.ne.s32.totalorder %s117, %s131
    %p133 = scmp.eq.s32.totalorder %s18, 0
    %p134 = por %p132, %p133
    %s136 = sadd.s32 %s135, 1
    %p139 = scmp.eq.s32.totalorder %s12, 1
    %p140 = scmp.ne.s32.totalorder %s135, %s137
    %p141 = scmp.eq.s32.totalorder %s12, 0
    %p142 = por %p140, %p141
    %p143 = scmp.ne.s32.totalorder %s135, %s137
    %p144 = scmp.eq.s32.totalorder %s17, 1
    %p145 = por %p143, %p144
    %p146 = scmp.ne.s32.totalorder %s137, %s138
    %p147 = scmp.eq.s32.totalorder %s17, 0
    %p148 = por %p146, %p147
    %p149 = scmp.ne.s32.totalorder %s137, %s138
    %p150 = scmp.eq.s32.totalorder %s18, 1
    %p151 = por %p149, %p150
    %p153 = scmp.ne.s32.totalorder %s138, %s152
    %p154 = scmp.eq.s32.totalorder %s18, 0
    %p155 = por %p153, %p154
    %s156 = ssub.s32 %s12, %s19
    %p157 = scmp.eq.s32.totalorder %s156, 0
    %s159 = sadd.s32 %s158, 1
    %s160 = scalar_select %p157, %s158, %s159
    %p163 = pneg %p157
    %p164 = scmp.eq.s32.totalorder %s12, 1
    %p165 = por %p163, %p164
    %p166 = scmp.ne.s32.totalorder %s158, %s161
    %p167 = scmp.eq.s32.totalorder %s12, 0
    %p168 = por %p166, %p167
    %p169 = scmp.ne.s32.totalorder %s158, %s161
    %p170 = scmp.eq.s32.totalorder %s17, 1
    %p171 = por %p169, %p170
    %p172 = scmp.ne.s32.totalorder %s161, %s162
    %p173 = scmp.eq.s32.totalorder %s17, 0
    %p174 = por %p172, %p173
    %p175 = scmp.ne.s32.totalorder %s161, %s162
    %p176 = scmp.eq.s32.totalorder %s18, 1
    %p177 = por %p175, %p176
    %p179 = scmp.ne.s32.totalorder %s162, %s178
    %p180 = scmp.eq.s32.totalorder %s18, 0
    %p181 = por %p179, %p180
    %p182 = scmp.le.s32.totalorder 1, %s12
    %p183 = scmp.lt.s32.totalorder %s12, 3
    %p184 = pnand %p182, %p183
    %p185 = pneg %p184
    // Predicated region
    $region9: #{forward.18} parent=5 // pred_check
      _
    $region10: #{forward.18} parent=5 // pred_check_branch
      %187 = sbr.rel (%p184) target = $region12
    $region11: #{forward.18} parent=5 // pred_region
      %s188 = ssub.s32 %s12, 1
      // Predicated region
      $region13: #{forward.18} parent=11 // pred_check
        %p189 = pneg %p85
      $region14: #{forward.18} parent=11 // pred_check_branch
        %191 = sbr.rel (%p189) target = $region16
      $region15: #{forward.18} parent=11 // pred_region
        _
      $region16: #{forward.18} parent=11 // pred_fallthru
        _
      // Predicated region
      $region17: #{forward.18} parent=11 // pred_check
        %p192 = pneg %p106
      $region18: #{forward.18} parent=11 // pred_check_branch
        %194 = sbr.rel (%p192) target = $region20
      $region19: #{forward.18} parent=11 // pred_region
        _
      $region20: #{forward.18} parent=11 // pred_fallthru
        _
      // Predicated region
      $region21: #{forward.18} parent=11 // pred_check
        %p195 = pneg %p127
      $region22: #{forward.18} parent=11 // pred_check_branch
        %197 = sbr.rel (%p195) target = $region24
      $region23: #{forward.18} parent=11 // pred_region
        _
      $region24: #{forward.18} parent=11 // pred_fallthru
        _
      // Predicated region
      $region25: #{forward.18} parent=11 // pred_check
        %p198 = pneg %p148
      $region26: #{forward.18} parent=11 // pred_check_branch
        %200 = sbr.rel (%p198) target = $region28
      $region27: #{forward.18} parent=11 // pred_region
        _
      $region28: #{forward.18} parent=11 // pred_fallthru
        _
    $region12: #{forward.18} parent=5 // pred_fallthru
      _
    %p201 = scmp.lt.s32.totalorder %s12, 2
    // Predicated region
    $region29: #{forward.18} parent=5 // pred_check
      %p202 = pneg %p201
    $region30: #{forward.18} parent=5 // pred_check_branch
      %204 = sbr.rel (%p202) target = $region32
    $region31: #{forward.18} parent=5 // pred_region
      // Predicated region
      $region33: #{forward.18} parent=31 // pred_check
        %p205 = pneg %p32
      $region34: #{forward.18} parent=31 // pred_check_branch
        %207 = sbr.rel (%p205) target = $region36
      $region35: #{forward.18} parent=31 // pred_region
        %p208 = scmp.lt.s32.totalorder %s12, 1
        %s209 = scalar_select %p208, %s12, 1
        %s210 = smul.addr %s209, 16
        %s211 = smul.addr %s210, 8
        %s212 = scalar_lea.vmem %s0, %s211
      $region36: #{forward.18} parent=31 // pred_fallthru
        _
      // Predicated region
      $region37: #{forward.18} parent=31 // pred_check
        %p213 = pneg %p58
      $region38: #{forward.18} parent=31 // pred_check_branch
        %215 = sbr.rel (%p213) target = $region40
      $region39: #{forward.18} parent=31 // pred_region
        %p216 = scmp.lt.s32.totalorder %s12, 1
        %s217 = scalar_select %p216, %s12, 1
        %s218 = smul.addr %s217, 16
        %s219 = smul.addr %s218, 8
        %s220 = scalar_lea.vmem %s1, %s219
      $region40: #{forward.18} parent=31 // pred_fallthru
        _
    $region32: #{forward.18} parent=5 // pred_fallthru
      _
    %p221 = scmp.le.s32.totalorder 1, %s12
    %p222 = scmp.lt.s32.totalorder %s12, 3
    %p223 = pnand %p221, %p222
    %p224 = pneg %p223
    // Predicated region
    $region41: #{forward.18} parent=5 // pred_check
      _
    $region42: #{forward.18} parent=5 // pred_check_branch
      %226 = sbr.rel (%p223) target = $region44
    $region43: #{forward.18} parent=5 // pred_region
      %s227 = ssub.s32 %s12, 1
      %p228 = scmp.lt.s32.totalorder %s17, 1
      %s229 = scalar_select %p228, %s17, 1
      %s230 = smul.addr %s229, 16
      %s231 = smul.addr %s230, 8
      %s232 = scalar_lea.vmem %s0, %s231
      %p233 = pneg %p38
      %p234 = pneg %p35
      %p235 = scmp.lt.s32.totalorder %s17, 1
      %s236 = scalar_select %p235, %s17, 1
      %s237 = smul.addr %s236, 16
      %s238 = smul.addr %s237, 8
      %s239 = scalar_lea.vmem %s1, %s238
      %p240 = pneg %p64
      %p241 = pneg %p61
      %p242 = pneg %p85
      %p243 = pneg %p82
      %p244 = pneg %p106
      %p245 = pneg %p103
      %p246 = pneg %p127
      %p247 = pneg %p124
      %p248 = pneg %p148
      %p249 = pneg %p145
      %p250 = pneg %p174
      %p251 = pneg %p171
      %p252 = scmp.lt.s32.totalorder %s17, 1
      %s253 = scalar_select %p252, %s17, 1
      %s254 = smul.addr %s253, 8
      %s255 = smul.addr %s254, 8
      %s256 = scalar_lea.vmem %s6, %s255
      %p257 = scmp.lt.s32.totalorder %s17, 1
      %s258 = scalar_select %p257, %s17, 1
      %s259 = smul.addr %s258, 16
      %s260 = smul.addr %s259, 8
      %s261 = scalar_lea.vmem %s0, %s260
      %p262 = scmp.lt.s32.totalorder %s17, 1
      %s263 = scalar_select %p262, %s17, 1
      %s264 = smul.addr %s263, 16
      %s265 = smul.addr %s264, 8
      %s266 = scalar_lea.vmem %s1, %s265
      %p267 = scmp.lt.s32.totalorder %s17, 1
      %s268 = scalar_select %p267, %s17, 1
      %s269 = smul.addr %s268, 8
      %s270 = smul.addr %s269, 8
      %s271 = scalar_lea.vmem %s6, %s270
      %v273 = vld [vmem:[%s2] sm:$0xf]
      %v274 = vld [vmem:[%s2 + $0x4] sm:$0xf]
      %v275 = vld [vmem:[%s266] sm:$0xff]
      %v276 = vld [vmem:[%s266 + $0x8] sm:$0xff]
      %v277 = vld [vmem:[%s266 + $0x10] sm:$0xff]
      %v278 = vld [vmem:[%s266 + $0x18] sm:$0xff]
      %v279 = vld [vmem:[%s266 + $0x20] sm:$0xff]
      %v280 = vld [vmem:[%s266 + $0x28] sm:$0xff]
      %v281 = vld [vmem:[%s266 + $0x30] sm:$0xff]
      %v282 = vld [vmem:[%s266 + $0x38] sm:$0xff]
      %v283 = vld [vmem:[%s266 + $0x40] sm:$0xff]
      %v284 = vld [vmem:[%s266 + $0x48] sm:$0xff]
      %v285 = vld [vmem:[%s266 + $0x50] sm:$0xff]
      %v286 = vld [vmem:[%s266 + $0x58] sm:$0xff]
      %v287 = vld [vmem:[%s266 + $0x60] sm:$0xff]
      %v288 = vld [vmem:[%s266 + $0x68] sm:$0xff]
      %v289 = vld [vmem:[%s266 + $0x70] sm:$0xff]
      %v290 = vld [vmem:[%s266 + $0x78] sm:$0xff]
      %v291 = vpack.c.bf16 %v283, %v275
      %v292 = vpack.c.bf16 %v284, %v276
      %v293 = vpack.c.bf16 %v285, %v277
      %v294 = vpack.c.bf16 %v286, %v278
      %v295 = vpack.c.bf16 %v287, %v279
      %v296 = vpack.c.bf16 %v288, %v280
      %v297 = vpack.c.bf16 %v289, %v281
      %v298 = vpack.c.bf16 %v290, %v282
      %v301 = vunpack.c.l.b16 %v273
      %v302 = vunpack.c.l.b16 %v274
      %v303 = vpack.c.b16 %v302, %v301
      %vm304 = vcmask 130048
      %v306 = vsel %vm304, %v303, 0
      %308 = vmatprep.subr.bf16.mxu0 0
      %309 = vmatpush1.bf16.msra.mxu0 0
      %310 = vmatprep.subr.bf16.mxu0 0
      %311 = vmatpush1.bf16.msra.mxu0 0
      %312 = vmatprep.subr.bf16.mxu0 0
      %313 = vmatpush1.bf16.msra.mxu0 0
      %314 = vmatprep.subr.bf16.mxu0 0
      %315 = vmatpush1.bf16.msra.mxu0 0
      %316 = vmatprep.subr.bf16.mxu0 0
      %317 = vmatpush1.bf16.msra.mxu0 0
      %318 = vmatprep.subr.bf16.mxu0 0
      %319 = vmatpush1.bf16.msra.mxu0 0
      %320 = vmatprep.subr.bf16.mxu0 0
      %321 = vmatpush1.bf16.msra.mxu0 0
      %322 = vmatprep.subr.bf16.mxu0 %v292
      %323 = vmatpush1.bf16.msra.mxu0 %v291
      %324 = vmatprep.subr.bf16.mxu0 0
      %325 = vmatpush2.bf16.msra.mxu0 0
      %326 = vmatprep.subr.bf16.mxu0 0
      %327 = vmatpush2.bf16.msra.mxu0 0
      %328 = vmatprep.subr.bf16.mxu0 0
      %329 = vmatpush2.bf16.msra.mxu0 0
      %330 = vmatprep.subr.bf16.mxu0 0
      %331 = vmatpush2.bf16.msra.mxu0 0
      %332 = vmatprep.subr.bf16.mxu0 0
      %333 = vmatpush2.bf16.msra.mxu0 0
      %334 = vmatprep.subr.bf16.mxu0 0
      %335 = vmatpush2.bf16.msra.mxu0 0
      %336 = vmatprep.subr.bf16.mxu0 0
      %337 = vmatpush2.bf16.msra.mxu0 0
      %338 = vmatprep.subr.bf16.mxu0 0
      %339 = vmatpush2.bf16.msra.mxu0 0
      %340 = vmatprep.mubr.bf16.mxu0 0
      %341 = vmatmul.mubr.bf16.gmra.mxu0 %v306
      %v342 = vpop.f32.mrf.mxu0
      %v343 = vadd.f32 0.0, %v342
      %v344 = vpop.f32.mrf.mxu0
      %v345 = vadd.f32 0.0, %v344
      %v346 = vpop.f32.mrf.mxu0
      %v347 = vadd.f32 0.0, %v346
      %v348 = vpop.f32.mrf.mxu0
      %v349 = vadd.f32 0.0, %v348
      %350 = vdwg.mxu0
      %351 = vmatprep.subr.bf16.mxu0 0
      %352 = vmatpush1.bf16.msra.mxu0 0
      %353 = vmatprep.subr.bf16.mxu0 0
      %354 = vmatpush1.bf16.msra.mxu0 0
      %355 = vmatprep.subr.bf16.mxu0 0
      %356 = vmatpush1.bf16.msra.mxu0 0
      %357 = vmatprep.subr.bf16.mxu0 0
      %358 = vmatpush1.bf16.msra.mxu0 0
      %359 = vmatprep.subr.bf16.mxu0 0
      %360 = vmatpush1.bf16.msra.mxu0 0
      %361 = vmatprep.subr.bf16.mxu0 0
      %362 = vmatpush1.bf16.msra.mxu0 0
      %363 = vmatprep.subr.bf16.mxu0 0
      %364 = vmatpush1.bf16.msra.mxu0 0
      %365 = vmatprep.subr.bf16.mxu0 %v294
      %366 = vmatpush1.bf16.msra.mxu0 %v293
      %367 = vmatprep.subr.bf16.mxu0 0
      %368 = vmatpush2.bf16.msra.mxu0 0
      %369 = vmatprep.subr.bf16.mxu0 0
      %370 = vmatpush2.bf16.msra.mxu0 0
      %371 = vmatprep.subr.bf16.mxu0 0
      %372 = vmatpush2.bf16.msra.mxu0 0
      %373 = vmatprep.subr.bf16.mxu0 0
      %374 = vmatpush2.bf16.msra.mxu0 0
      %375 = vmatprep.subr.bf16.mxu0 0
      %376 = vmatpush2.bf16.msra.mxu0 0
      %377 = vmatprep.subr.bf16.mxu0 0
      %378 = vmatpush2.bf16.msra.mxu0 0
      %379 = vmatprep.subr.bf16.mxu0 0
      %380 = vmatpush2.bf16.msra.mxu0 0
      %381 = vmatprep.subr.bf16.mxu0 0
      %382 = vmatpush2.bf16.msra.mxu0 0
      %383 = vmatprep.mubr.bf16.mxu0 0
      %384 = vmatmul.mubr.bf16.gmra.mxu0 %v306
      %v385 = vpop.f32.mrf.mxu0
      %v386 = vadd.f32 0.0, %v385
      %v387 = vpop.f32.mrf.mxu0
      %v388 = vadd.f32 0.0, %v387
      %v389 = vpop.f32.mrf.mxu0
      %v390 = vadd.f32 0.0, %v389
      %v391 = vpop.f32.mrf.mxu0
      %v392 = vadd.f32 0.0, %v391
      %393 = vdwg.mxu0
      %394 = vmatprep.subr.bf16.mxu0 0
      %395 = vmatpush1.bf16.msra.mxu0 0
      %396 = vmatprep.subr.bf16.mxu0 0
      %397 = vmatpush1.bf16.msra.mxu0 0
      %398 = vmatprep.subr.bf16.mxu0 0
      %399 = vmatpush1.bf16.msra.mxu0 0
      %400 = vmatprep.subr.bf16.mxu0 0
      %401 = vmatpush1.bf16.msra.mxu0 0
      %402 = vmatprep.subr.bf16.mxu0 0
      %403 = vmatpush1.bf16.msra.mxu0 0
      %404 = vmatprep.subr.bf16.mxu0 0
      %405 = vmatpush1.bf16.msra.mxu0 0
      %406 = vmatprep.subr.bf16.mxu0 0
      %407 = vmatpush1.bf16.msra.mxu0 0
      %408 = vmatprep.subr.bf16.mxu0 %v296
      %409 = vmatpush1.bf16.msra.mxu0 %v295
      %410 = vmatprep.subr.bf16.mxu0 0
      %411 = vmatpush2.bf16.msra.mxu0 0
      %412 = vmatprep.subr.bf16.mxu0 0
      %413 = vmatpush2.bf16.msra.mxu0 0
      %414 = vmatprep.subr.bf16.mxu0 0
      %415 = vmatpush2.bf16.msra.mxu0 0
      %416 = vmatprep.subr.bf16.mxu0 0
      %417 = vmatpush2.bf16.msra.mxu0 0
      %418 = vmatprep.subr.bf16.mxu0 0
      %419 = vmatpush2.bf16.msra.mxu0 0
      %420 = vmatprep.subr.bf16.mxu0 0
      %421 = vmatpush2.bf16.msra.mxu0 0
      %422 = vmatprep.subr.bf16.mxu0 0
      %423 = vmatpush2.bf16.msra.mxu0 0
      %424 = vmatprep.subr.bf16.mxu0 0
      %425 = vmatpush2.bf16.msra.mxu0 0
      %426 = vmatprep.mubr.bf16.mxu0 0
      %427 = vmatmul.mubr.bf16.gmra.mxu0 %v306
      %v428 = vpop.f32.mrf.mxu0
      %v429 = vadd.f32 0.0, %v428
      %v430 = vpop.f32.mrf.mxu0
      %v431 = vadd.f32 0.0, %v430
      %v432 = vpop.f32.mrf.mxu0
      %v433 = vadd.f32 0.0, %v432
      %v434 = vpop.f32.mrf.mxu0
      %v435 = vadd.f32 0.0, %v434
      %436 = vdwg.mxu0
      %437 = vmatprep.subr.bf16.mxu0 0
      %438 = vmatpush1.bf16.msra.mxu0 0
      %439 = vmatprep.subr.bf16.mxu0 0
      %440 = vmatpush1.bf16.msra.mxu0 0
      %441 = vmatprep.subr.bf16.mxu0 0
      %442 = vmatpush1.bf16.msra.mxu0 0
      %443 = vmatprep.subr.bf16.mxu0 0
      %444 = vmatpush1.bf16.msra.mxu0 0
      %445 = vmatprep.subr.bf16.mxu0 0
      %446 = vmatpush1.bf16.msra.mxu0 0
      %447 = vmatprep.subr.bf16.mxu0 0
      %448 = vmatpush1.bf16.msra.mxu0 0
      %449 = vmatprep.subr.bf16.mxu0 0
      %450 = vmatpush1.bf16.msra.mxu0 0
      %451 = vmatprep.subr.bf16.mxu0 %v298
      %452 = vmatpush1.bf16.msra.mxu0 %v297
      %453 = vmatprep.subr.bf16.mxu0 0
      %454 = vmatpush2.bf16.msra.mxu0 0
      %455 = vmatprep.subr.bf16.mxu0 0
      %456 = vmatpush2.bf16.msra.mxu0 0
      %457 = vmatprep.subr.bf16.mxu0 0
      %458 = vmatpush2.bf16.msra.mxu0 0
      %459 = vmatprep.subr.bf16.mxu0 0
      %460 = vmatpush2.bf16.msra.mxu0 0
      %461 = vmatprep.subr.bf16.mxu0 0
      %462 = vmatpush2.bf16.msra.mxu0 0
      %463 = vmatprep.subr.bf16.mxu0 0
      %464 = vmatpush2.bf16.msra.mxu0 0
      %465 = vmatprep.subr.bf16.mxu0 0
      %466 = vmatpush2.bf16.msra.mxu0 0
      %467 = vmatprep.subr.bf16.mxu0 0
      %468 = vmatpush2.bf16.msra.mxu0 0
      %469 = vmatprep.mubr.bf16.mxu0 0
      %470 = vmatmul.mubr.bf16.gmra.mxu0 %v306
      %v471 = vpop.f32.mrf.mxu0
      %v472 = vadd.f32 0.0, %v471
      %v473 = vpop.f32.mrf.mxu0
      %v474 = vadd.f32 0.0, %v473
      %v475 = vpop.f32.mrf.mxu0
      %v476 = vadd.f32 0.0, %v475
      %v477 = vpop.f32.mrf.mxu0
      %v478 = vadd.f32 0.0, %v477
      %479 = vdwg.mxu0
      %v480 = vld [vmem:[%s261] sm:$0xff]
      %v481 = vld [vmem:[%s261 + $0x8] sm:$0xff]
      %v482 = vld [vmem:[%s261 + $0x10] sm:$0xff]
      %v483 = vld [vmem:[%s261 + $0x18] sm:$0xff]
      %v484 = vld [vmem:[%s261 + $0x20] sm:$0xff]
      %v485 = vld [vmem:[%s261 + $0x28] sm:$0xff]
      %v486 = vld [vmem:[%s261 + $0x30] sm:$0xff]
      %v487 = vld [vmem:[%s261 + $0x38] sm:$0xff]
      %v488 = vld [vmem:[%s261 + $0x40] sm:$0xff]
      %v489 = vld [vmem:[%s261 + $0x48] sm:$0xff]
      %v490 = vld [vmem:[%s261 + $0x50] sm:$0xff]
      %v491 = vld [vmem:[%s261 + $0x58] sm:$0xff]
      %v492 = vld [vmem:[%s261 + $0x60] sm:$0xff]
      %v493 = vld [vmem:[%s261 + $0x68] sm:$0xff]
      %v494 = vld [vmem:[%s261 + $0x70] sm:$0xff]
      %v495 = vld [vmem:[%s261 + $0x78] sm:$0xff]
      %v496 = vadd.f32 %v480, %v343
      %v497 = vadd.f32 %v481, %v345
      %v498 = vadd.f32 %v482, %v386
      %v499 = vadd.f32 %v483, %v388
      %v500 = vadd.f32 %v484, %v429
      %v501 = vadd.f32 %v485, %v431
      %v502 = vadd.f32 %v486, %v472
      %v503 = vadd.f32 %v487, %v474
      %v504 = vadd.f32 %v488, %v347
      %v505 = vadd.f32 %v489, %v349
      %v506 = vadd.f32 %v490, %v390
      %v507 = vadd.f32 %v491, %v392
      %v508 = vadd.f32 %v492, %v433
      %v509 = vadd.f32 %v493, %v435
      %v510 = vadd.f32 %v494, %v476
      %v511 = vadd.f32 %v495, %v478
      %v512 = vld [vmem:[%s3] sm:$0xff]
      %v513 = vld [vmem:[%s3 + $0x8] sm:$0xff]
      %515 = vset.pattern.permute.xlu0 0
      %516 = vperm.xlu0 %515, %v512
      %v517 = vpop.permute.xlu0 %516
      %520 = vset.pattern.permute.xlu0 0
      %521 = vperm.xlu0 %520, %v513
      %v522 = vpop.permute.xlu0 %521
      %v524 = vadd.f32 %v496, %v517
      %v525 = vadd.f32 %v497, %v517
      %v526 = vadd.f32 %v498, %v517
      %v527 = vadd.f32 %v499, %v517
      %v528 = vadd.f32 %v500, %v517
      %v529 = vadd.f32 %v501, %v517
      %v530 = vadd.f32 %v502, %v517
      %v531 = vadd.f32 %v503, %v517
      %v532 = vadd.f32 %v504, %v522
      %v533 = vadd.f32 %v505, %v522
      %v534 = vadd.f32 %v506, %v522
      %v535 = vadd.f32 %v507, %v522
      %v536 = vadd.f32 %v508, %v522
      %v537 = vadd.f32 %v509, %v522
      %v538 = vadd.f32 %v510, %v522
      %v539 = vadd.f32 %v511, %v522
      %v540 = vmax.f32 %v524, 0.0
      %v541 = vmax.f32 %v525, 0.0
      %v542 = vmax.f32 %v526, 0.0
      %v543 = vmax.f32 %v527, 0.0
      %v544 = vmax.f32 %v528, 0.0
      %v545 = vmax.f32 %v529, 0.0
      %v546 = vmax.f32 %v530, 0.0
      %v547 = vmax.f32 %v531, 0.0
      %v548 = vmax.f32 %v532, 0.0
      %v549 = vmax.f32 %v533, 0.0
      %v550 = vmax.f32 %v534, 0.0
      %v551 = vmax.f32 %v535, 0.0
      %v552 = vmax.f32 %v536, 0.0
      %v553 = vmax.f32 %v537, 0.0
      %v554 = vmax.f32 %v538, 0.0
      %v555 = vmax.f32 %v539, 0.0
      %v556 = vld [vmem:[%s4] sm:$0xf]
      %v557 = vpack.c.bf16 %v548, %v540
      %v558 = vpack.c.bf16 %v549, %v541
      %v559 = vpack.c.bf16 %v550, %v542
      %v560 = vpack.c.bf16 %v551, %v543
      %v561 = vpack.c.bf16 %v552, %v544
      %v562 = vpack.c.bf16 %v553, %v545
      %v563 = vpack.c.bf16 %v554, %v546
      %v564 = vpack.c.bf16 %v555, %v547
      %v565 = vld [vmem:[%s5] sm:$0xff]
      %567 = vset.pattern.permute.xlu0 0
      %568 = vperm.xlu0 %567, %v565
      %v569 = vpop.permute.xlu0 %568
      %v572 = vsel %vm304, %v556, 0
      %574 = vmatprep.subr.bf16.mxu0 0
      %575 = vmatpush1.bf16.msra.mxu0 0
      %576 = vmatprep.subr.bf16.mxu0 0
      %577 = vmatpush1.bf16.msra.mxu0 0
      %578 = vmatprep.subr.bf16.mxu0 0
      %579 = vmatpush1.bf16.msra.mxu0 0
      %580 = vmatprep.subr.bf16.mxu0 0
      %581 = vmatpush1.bf16.msra.mxu0 0
      %582 = vmatprep.subr.bf16.mxu0 0
      %583 = vmatpush1.bf16.msra.mxu0 0
      %584 = vmatprep.subr.bf16.mxu0 0
      %585 = vmatpush1.bf16.msra.mxu0 0
      %586 = vmatprep.subr.bf16.mxu0 0
      %587 = vmatpush1.bf16.msra.mxu0 0
      %588 = vmatprep.subr.bf16.mxu0 %v558
      %589 = vmatpush1.bf16.msra.mxu0 %v557
      %590 = vmatprep.subr.bf16.mxu0 0
      %591 = vmatpush2.bf16.msra.mxu0 0
      %592 = vmatprep.subr.bf16.mxu0 0
      %593 = vmatpush2.bf16.msra.mxu0 0
      %594 = vmatprep.subr.bf16.mxu0 0
      %595 = vmatpush2.bf16.msra.mxu0 0
      %596 = vmatprep.subr.bf16.mxu0 0
      %597 = vmatpush2.bf16.msra.mxu0 0
      %598 = vmatprep.subr.bf16.mxu0 0
      %599 = vmatpush2.bf16.msra.mxu0 0
      %600 = vmatprep.subr.bf16.mxu0 0
      %601 = vmatpush2.bf16.msra.mxu0 0
      %602 = vmatprep.subr.bf16.mxu0 0
      %603 = vmatpush2.bf16.msra.mxu0 0
      %604 = vmatprep.subr.bf16.mxu0 0
      %605 = vmatpush2.bf16.msra.mxu0 0
      %606 = vmatprep.mubr.bf16.mxu0 0
      %607 = vmatmul.mubr.bf16.gmra.mxu0 %v572
      %v608 = vpop.f32.mrf.mxu0
      %v609 = vadd.f32 %v569, %v608
      %v610 = vpop.f32.mrf.mxu0
      %v611 = vadd.f32 %v569, %v610
      %v612 = vpop.f32.mrf.mxu0
      %v613 = vpop.f32.mrf.mxu0
      %614 = vdwg.mxu0
      %615 = vmatprep.subr.bf16.mxu0 0
      %616 = vmatpush1.bf16.msra.mxu0 0
      %617 = vmatprep.subr.bf16.mxu0 0
      %618 = vmatpush1.bf16.msra.mxu0 0
      %619 = vmatprep.subr.bf16.mxu0 0
      %620 = vmatpush1.bf16.msra.mxu0 0
      %621 = vmatprep.subr.bf16.mxu0 0
      %622 = vmatpush1.bf16.msra.mxu0 0
      %623 = vmatprep.subr.bf16.mxu0 0
      %624 = vmatpush1.bf16.msra.mxu0 0
      %625 = vmatprep.subr.bf16.mxu0 0
      %626 = vmatpush1.bf16.msra.mxu0 0
      %627 = vmatprep.subr.bf16.mxu0 0
      %628 = vmatpush1.bf16.msra.mxu0 0
      %629 = vmatprep.subr.bf16.mxu0 %v560
      %630 = vmatpush1.bf16.msra.mxu0 %v559
      %631 = vmatprep.subr.bf16.mxu0 0
      %632 = vmatpush2.bf16.msra.mxu0 0
      %633 = vmatprep.subr.bf16.mxu0 0
      %634 = vmatpush2.bf16.msra.mxu0 0
      %635 = vmatprep.subr.bf16.mxu0 0
      %636 = vmatpush2.bf16.msra.mxu0 0
      %637 = vmatprep.subr.bf16.mxu0 0
      %638 = vmatpush2.bf16.msra.mxu0 0
      %639 = vmatprep.subr.bf16.mxu0 0
      %640 = vmatpush2.bf16.msra.mxu0 0
      %641 = vmatprep.subr.bf16.mxu0 0
      %642 = vmatpush2.bf16.msra.mxu0 0
      %643 = vmatprep.subr.bf16.mxu0 0
      %644 = vmatpush2.bf16.msra.mxu0 0
      %645 = vmatprep.subr.bf16.mxu0 0
      %646 = vmatpush2.bf16.msra.mxu0 0
      %647 = vmatprep.mubr.bf16.mxu0 0
      %648 = vmatmul.mubr.bf16.gmra.mxu0 %v572
      %v649 = vpop.f32.mrf.mxu0
      %v650 = vadd.f32 %v569, %v649
      %v651 = vpop.f32.mrf.mxu0
      %v652 = vadd.f32 %v569, %v651
      %v653 = vpop.f32.mrf.mxu0
      %v654 = vpop.f32.mrf.mxu0
      %655 = vdwg.mxu0
      %656 = vmatprep.subr.bf16.mxu0 0
      %657 = vmatpush1.bf16.msra.mxu0 0
      %658 = vmatprep.subr.bf16.mxu0 0
      %659 = vmatpush1.bf16.msra.mxu0 0
      %660 = vmatprep.subr.bf16.mxu0 0
      %661 = vmatpush1.bf16.msra.mxu0 0
      %662 = vmatprep.subr.bf16.mxu0 0
      %663 = vmatpush1.bf16.msra.mxu0 0
      %664 = vmatprep.subr.bf16.mxu0 0
      %665 = vmatpush1.bf16.msra.mxu0 0
      %666 = vmatprep.subr.bf16.mxu0 0
      %667 = vmatpush1.bf16.msra.mxu0 0
      %668 = vmatprep.subr.bf16.mxu0 0
      %669 = vmatpush1.bf16.msra.mxu0 0
      %670 = vmatprep.subr.bf16.mxu0 %v562
      %671 = vmatpush1.bf16.msra.mxu0 %v561
      %672 = vmatprep.subr.bf16.mxu0 0
      %673 = vmatpush2.bf16.msra.mxu0 0
      %674 = vmatprep.subr.bf16.mxu0 0
      %675 = vmatpush2.bf16.msra.mxu0 0
      %676 = vmatprep.subr.bf16.mxu0 0
      %677 = vmatpush2.bf16.msra.mxu0 0
      %678 = vmatprep.subr.bf16.mxu0 0
      %679 = vmatpush2.bf16.msra.mxu0 0
      %680 = vmatprep.subr.bf16.mxu0 0
      %681 = vmatpush2.bf16.msra.mxu0 0
      %682 = vmatprep.subr.bf16.mxu0 0
      %683 = vmatpush2.bf16.msra.mxu0 0
      %684 = vmatprep.subr.bf16.mxu0 0
      %685 = vmatpush2.bf16.msra.mxu0 0
      %686 = vmatprep.subr.bf16.mxu0 0
      %687 = vmatpush2.bf16.msra.mxu0 0
      %688 = vmatprep.mubr.bf16.mxu0 0
      %689 = vmatmul.mubr.bf16.gmra.mxu0 %v572
      %v690 = vpop.f32.mrf.mxu0
      %v691 = vadd.f32 %v569, %v690
      %v692 = vpop.f32.mrf.mxu0
      %v693 = vadd.f32 %v569, %v692
      %v694 = vpop.f32.mrf.mxu0
      %v695 = vpop.f32.mrf.mxu0
      %696 = vdwg.mxu0
      %697 = vmatprep.subr.bf16.mxu0 0
      %698 = vmatpush1.bf16.msra.mxu0 0
      %699 = vmatprep.subr.bf16.mxu0 0
      %700 = vmatpush1.bf16.msra.mxu0 0
      %701 = vmatprep.subr.bf16.mxu0 0
      %702 = vmatpush1.bf16.msra.mxu0 0
      %703 = vmatprep.subr.bf16.mxu0 0
      %704 = vmatpush1.bf16.msra.mxu0 0
      %705 = vmatprep.subr.bf16.mxu0 0
      %706 = vmatpush1.bf16.msra.mxu0 0
      %707 = vmatprep.subr.bf16.mxu0 0
      %708 = vmatpush1.bf16.msra.mxu0 0
      %709 = vmatprep.subr.bf16.mxu0 0
      %710 = vmatpush1.bf16.msra.mxu0 0
      %711 = vmatprep.subr.bf16.mxu0 %v564
      %712 = vmatpush1.bf16.msra.mxu0 %v563
      %713 = vmatprep.subr.bf16.mxu0 0
      %714 = vmatpush2.bf16.msra.mxu0 0
      %715 = vmatprep.subr.bf16.mxu0 0
      %716 = vmatpush2.bf16.msra.mxu0 0
      %717 = vmatprep.subr.bf16.mxu0 0
      %718 = vmatpush2.bf16.msra.mxu0 0
      %719 = vmatprep.subr.bf16.mxu0 0
      %720 = vmatpush2.bf16.msra.mxu0 0
      %721 = vmatprep.subr.bf16.mxu0 0
      %722 = vmatpush2.bf16.msra.mxu0 0
      %723 = vmatprep.subr.bf16.mxu0 0
      %724 = vmatpush2.bf16.msra.mxu0 0
      %725 = vmatprep.subr.bf16.mxu0 0
      %726 = vmatpush2.bf16.msra.mxu0 0
      %727 = vmatprep.subr.bf16.mxu0 0
      %728 = vmatpush2.bf16.msra.mxu0 0
      %729 = vmatprep.mubr.bf16.mxu0 0
      %730 = vmatmul.mubr.bf16.gmra.mxu0 %v572
      %v731 = vpop.f32.mrf.mxu0
      %v732 = vadd.f32 %v569, %v731
      %v733 = vpop.f32.mrf.mxu0
      %v734 = vadd.f32 %v569, %v733
      %v735 = vpop.f32.mrf.mxu0
      %v736 = vpop.f32.mrf.mxu0
      %737 = vdwg.mxu0
      %738 = vst [vmem:[%s271] sm:$0xff] %v609
      %739 = vst [vmem:[%s271 + $0x8] sm:$0xff] %v611
      %740 = vst [vmem:[%s271 + $0x10] sm:$0xff] %v650
      %741 = vst [vmem:[%s271 + $0x18] sm:$0xff] %v652
      %742 = vst [vmem:[%s271 + $0x20] sm:$0xff] %v691
      %743 = vst [vmem:[%s271 + $0x28] sm:$0xff] %v693
      %744 = vst [vmem:[%s271 + $0x30] sm:$0xff] %v732
      %745 = vst [vmem:[%s271 + $0x38] sm:$0xff] %v734
      %p746 = scmp.lt.s32.totalorder %s17, 1
      %s747 = scalar_select %p746, %s17, 1
      %s748 = smul.addr %s747, 8
      %s749 = smul.addr %s748, 8
      %s750 = scalar_lea.vmem %s6, %s749
      // Predicated region
      $region45: #{forward.18} parent=43 // pred_check
        %p751 = pneg %p171
      $region46: #{forward.18} parent=43 // pred_check_branch
        %753 = sbr.rel (%p751) target = $region48
      $region47: #{forward.18} parent=43 // pred_region
        _
      $region48: #{forward.18} parent=43 // pred_fallthru
        _
    $region44: #{forward.18} parent=5 // pred_fallthru
      _
    %p754 = scmp.le.s32.totalorder 2, %s12
    // Predicated region
    $region49: #{forward.18} parent=5 // pred_check
      %p755 = pneg %p754
    $region50: #{forward.18} parent=5 // pred_check_branch
      %757 = sbr.rel (%p755) target = $region52
    $region51: #{forward.18} parent=5 // pred_region
      %s758 = ssub.s32 %s12, 2
      // Predicated region
      $region53: #{forward.18} parent=51 // pred_check
        %p759 = pneg %p177
      $region54: #{forward.18} parent=51 // pred_check_branch
        %761 = sbr.rel (%p759) target = $region56
      $region55: #{forward.18} parent=51 // pred_region
        %p762 = scmp.lt.s32.totalorder %s18, 1
        %s763 = scalar_select %p762, %s18, 1
        %s764 = smul.addr %s763, 8
        %s765 = smul.addr %s764, 8
        %s766 = scalar_lea.vmem %s6, %s765
      $region56: #{forward.18} parent=51 // pred_fallthru
        _
    $region52: #{forward.18} parent=5 // pred_fallthru
      _
  $region6: #{forward.18} parent=0 // loop_footer
    %s16 = sadd.s32 1, %s12
  $region7: #{forward.18} parent=0 // loop_footer_branch
    %11 = sbr.rel target = $region3
  $region8: #{forward.18} parent=0 // loop_exit
    _

// kernel: forward.19
$region0: #{forward.19}
  #allocation0 [shape = 'u32[]', space=smem, size = 0x4, offset = 0x4, fixed_abs, tag = 'smem constant byte address 0x4 - core index']
  #allocation1 [shape = 'u32[144,128]{1,0:T(1,128)}', space=vmem, size = 0x12000, scoped, tag = 'internal scratch']
  %s0 = inlined_call_operand.vmem [shape: f32[2,8,32,32], index: 0, kind: input, shape index: {}]
  %s1 = inlined_call_operand.vmem [shape: f32[64,32], index: 1, kind: input, shape index: {}]
  %s2 = inlined_call_operand.vmem [shape: f32[32,64], index: 2, kind: input, shape index: {}]
  %s3 = inlined_call_operand.hbm [shape: f32[2,8,64,64], index: 3, kind: output, shape index: {}]
  %s4 = sld [smem:[#allocation0]]
  $region45: #{forward.19} parent=0
    _
  %s6 = ssub.s32 1, %s4
  %s7 = scalar_select 0, %s6, %s4
  $region1: #{forward.19} parent=0
    #allocation2 [shape = 'u8[524288]{0}', space=vmem, size = 0x80000, scoped, tag = 'output window, operand 0']
    #allocation3 [shape = 's32[2]{0}', space=sflag, size = 0x8, scoped, tag = 'scoped memory for forward.19']
    %8 = vsyncpa [#allocation3], 0
    %s9 = scalar_lea.sflag [#allocation3], 1
    %10 = vsyncpa %s9, 0
    loop: start=0, step=1, limit=4
    $region2: #{forward.19} parent=1 // loop_pre_header
      _
    $region3: #{forward.19} parent=1 // loop_header
      %s12 = sphi 0, %s16
      %p13 = scmp.ge.s32.totalorder %s12, 4
      %s22 = sphi 0, %s24
      %s25 = sphi 0, %s22
      %s26 = sphi 0, %s25
      %s42 = sphi 0, %s26
      %s46 = sphi 0, %s46
      %s48 = sphi 0, %s46
      %s49 = sphi 0, %s48
      %s63 = sphi 0, %s49
      %s67 = sphi 0, %s67
      %s69 = sphi 0, %s67
      %s70 = sphi 0, %s69
      %s84 = sphi 0, %s70
      %s90 = sphi 0, %s92
      %s93 = sphi 0, %s90
      %s94 = sphi 0, %s93
      %s110 = sphi 0, %s94
    $region4: #{forward.19} parent=1 // loop_header_branch
      %15 = sbr.rel (%p13) target = $region8
    $region5: #{forward.19} parent=1 // loop_body
      %s17 = ssub.s32 %s12, 1
      %s18 = ssub.s32 %s12, 2
      %s19 = sadd.s32 %s12, 1
      %s20 = ssub.s32 %s12, %s19
      %p21 = scmp.eq.s32.totalorder %s20, 0
      %s23 = sadd.s32 %s22, 1
      %s24 = scalar_select %p21, %s22, %s23
      %p27 = pneg %p21
      %p28 = scmp.eq.s32.totalorder %s12, 1
      %p29 = por %p27, %p28
      %p30 = scmp.ne.s32.totalorder %s22, %s25
      %p31 = scmp.eq.s32.totalorder %s12, 0
      %p32 = por %p30, %p31
      %p33 = scmp.ne.s32.totalorder %s22, %s25
      %p34 = scmp.eq.s32.totalorder %s17, 1
      %p35 = por %p33, %p34
      %p36 = scmp.ne.s32.totalorder %s25, %s26
      %p37 = scmp.eq.s32.totalorder %s17, 0
      %p38 = por %p36, %p37
      %p39 = scmp.ne.s32.totalorder %s25, %s26
      %p40 = scmp.eq.s32.totalorder %s18, 1
      %p41 = por %p39, %p40
      %p43 = scmp.ne.s32.totalorder %s26, %s42
      %p44 = scmp.eq.s32.totalorder %s18, 0
      %p45 = por %p43, %p44
      %s47 = sadd.s32 %s46, 1
      %p50 = scmp.eq.s32.totalorder %s12, 1
      %p51 = scmp.ne.s32.totalorder %s46, %s48
      %p52 = scmp.eq.s32.totalorder %s12, 0
      %p53 = por %p51, %p52
      %p54 = scmp.ne.s32.totalorder %s46, %s48
      %p55 = scmp.eq.s32.totalorder %s17, 1
      %p56 = por %p54, %p55
      %p57 = scmp.ne.s32.totalorder %s48, %s49
      %p58 = scmp.eq.s32.totalorder %s17, 0
      %p59 = por %p57, %p58
      %p60 = scmp.ne.s32.totalorder %s48, %s49
      %p61 = scmp.eq.s32.totalorder %s18, 1
      %p62 = por %p60, %p61
      %p64 = scmp.ne.s32.totalorder %s49, %s63
      %p65 = scmp.eq.s32.totalorder %s18, 0
      %p66 = por %p64, %p65
      %s68 = sadd.s32 %s67, 1
      %p71 = scmp.eq.s32.totalorder %s12, 1
      %p72 = scmp.ne.s32.totalorder %s67, %s69
      %p73 = scmp.eq.s32.totalorder %s12, 0
      %p74 = por %p72, %p73
      %p75 = scmp.ne.s32.totalorder %s67, %s69
      %p76 = scmp.eq.s32.totalorder %s17, 1
      %p77 = por %p75, %p76
      %p78 = scmp.ne.s32.totalorder %s69, %s70
      %p79 = scmp.eq.s32.totalorder %s17, 0
      %p80 = por %p78, %p79
      %p81 = scmp.ne.s32.totalorder %s69, %s70
      %p82 = scmp.eq.s32.totalorder %s18, 1
      %p83 = por %p81, %p82
      %p85 = scmp.ne.s32.totalorder %s70, %s84
      %p86 = scmp.eq.s32.totalorder %s18, 0
      %p87 = por %p85, %p86
      %s88 = ssub.s32 %s12, %s19
      %p89 = scmp.eq.s32.totalorder %s88, 0
      %s91 = sadd.s32 %s90, 1
      %s92 = scalar_select %p89, %s90, %s91
      %p95 = pneg %p89
      %p96 = scmp.eq.s32.totalorder %s12, 1
      %p97 = por %p95, %p96
      %p98 = scmp.ne.s32.totalorder %s90, %s93
      %p99 = scmp.eq.s32.totalorder %s12, 0
      %p100 = por %p98, %p99
      %p101 = scmp.ne.s32.totalorder %s90, %s93
      %p102 = scmp.eq.s32.totalorder %s17, 1
      %p103 = por %p101, %p102
      %p104 = scmp.ne.s32.totalorder %s93, %s94
      %p105 = scmp.eq.s32.totalorder %s17, 0
      %p106 = por %p104, %p105
      %p107 = scmp.ne.s32.totalorder %s93, %s94
      %p108 = scmp.eq.s32.totalorder %s18, 1
      %p109 = por %p107, %p108
      %p111 = scmp.ne.s32.totalorder %s94, %s110
      %p112 = scmp.eq.s32.totalorder %s18, 0
      %p113 = por %p111, %p112
      %p114 = scmp.le.s32.totalorder 1, %s12
      %p115 = scmp.lt.s32.totalorder %s12, 3
      %p116 = pnand %p114, %p115
      %p117 = pneg %p116
      // Predicated region
      $region9: #{forward.19} parent=5 // pred_check
        _
      $region10: #{forward.19} parent=5 // pred_check_branch
        %119 = sbr.rel (%p116) target = $region12
      $region11: #{forward.19} parent=5 // pred_region
        %s120 = ssub.s32 %s12, 1
        // Predicated region
        $region13: #{forward.19} parent=11 // pred_check
          %p121 = pneg %p59
        $region14: #{forward.19} parent=11 // pred_check_branch
          %123 = sbr.rel (%p121) target = $region16
        $region15: #{forward.19} parent=11 // pred_region
          _
        $region16: #{forward.19} parent=11 // pred_fallthru
          _
        // Predicated region
        $region17: #{forward.19} parent=11 // pred_check
          %p124 = pneg %p80
        $region18: #{forward.19} parent=11 // pred_check_branch
          %126 = sbr.rel (%p124) target = $region20
        $region19: #{forward.19} parent=11 // pred_region
          _
        $region20: #{forward.19} parent=11 // pred_fallthru
          _
      $region12: #{forward.19} parent=5 // pred_fallthru
        _
      %p127 = scmp.lt.s32.totalorder %s12, 2
      // Predicated region
      $region21: #{forward.19} parent=5 // pred_check
        %p128 = pneg %p127
      $region22: #{forward.19} parent=5 // pred_check_branch
        %130 = sbr.rel (%p128) target = $region24
      $region23: #{forward.19} parent=5 // pred_region
        // Predicated region
        $region25: #{forward.19} parent=23 // pred_check
          %p131 = pneg %p32
        $region26: #{forward.19} parent=23 // pred_check_branch
          %133 = sbr.rel (%p131) target = $region28
        $region27: #{forward.19} parent=23 // pred_region
          %p134 = scmp.lt.s32.totalorder %s12, 1
          %s135 = scalar_select %p134, %s12, 1
          %s136 = smul.addr %s135, 32
          %s137 = smul.addr %s136, 8
          %s138 = scalar_lea.vmem %s0, %s137
        $region28: #{forward.19} parent=23 // pred_fallthru
          _
      $region24: #{forward.19} parent=5 // pred_fallthru
        _
      %p139 = scmp.le.s32.totalorder 1, %s12
      %p140 = scmp.lt.s32.totalorder %s12, 3
      %p141 = pnand %p139, %p140
      %p142 = pneg %p141
      // Predicated region
      $region29: #{forward.19} parent=5 // pred_check
        _
      $region30: #{forward.19} parent=5 // pred_check_branch
        %144 = sbr.rel (%p141) target = $region32
      $region31: #{forward.19} parent=5 // pred_region
        %s145 = ssub.s32 %s12, 1
        %p146 = scmp.lt.s32.totalorder %s17, 1
        %s147 = scalar_select %p146, %s17, 1
        %s148 = smul.addr %s147, 32
        %s149 = smul.addr %s148, 8
        %s150 = scalar_lea.vmem %s0, %s149
        %p151 = pneg %p38
        %p152 = pneg %p35
        %p153 = pneg %p59
        %p154 = pneg %p56
        %p155 = pneg %p80
        %p156 = pneg %p77
        %p157 = pneg %p106
        %p158 = pneg %p103
        %s159 = sand.u32 %s93, 1
        %s160 = scalar_lea.sflag [#allocation3], %s159
        %s161 = sand.u32 %s93, 1
        %s162 = smul.addr %s161, 512
        %s163 = scalar_lea.vmem [#allocation2], %s162
        %p164 = scmp.lt.s32.totalorder %s17, 1
        %s165 = scalar_select %p164, %s17, 1
        %s166 = smul.addr %s165, 32
        %s167 = smul.addr %s166, 8
        %s168 = scalar_lea.vmem %s0, %s167
        %v169 = vld [vmem:[%s168] sm:$0xff]
        %v170 = vld [vmem:[%s168 + $0x8] sm:$0xff]
        %v171 = vld [vmem:[%s168 + $0x10] sm:$0xff]
        %v172 = vld [vmem:[%s168 + $0x18] sm:$0xff]
        %v173 = vld [vmem:[%s2] sm:$0xff]
        %v174 = vld [vmem:[%s2 + $0x8] sm:$0xff]
        %v175 = vld [vmem:[%s2 + $0x10] sm:$0xff]
        %v176 = vld [vmem:[%s2 + $0x18] sm:$0xff]
        %vm177 = vcmask 261120
        %v179 = vsel %vm177, %v169, 0
        %v182 = vsel %vm177, %v170, 0
        %v185 = vsel %vm177, %v171, 0
        %v188 = vsel %vm177, %v172, 0
        %190 = vmatprep.subr.mxu0 0.0
        %191 = vmatpush1.msra.mxu0 0.0
        %192 = vmatprep.subr.mxu0 0.0
        %193 = vmatpush1.msra.mxu0 0.0
        %194 = vmatprep.subr.mxu0 0.0
        %195 = vmatpush1.msra.mxu0 0.0
        %196 = vmatprep.subr.mxu0 0.0
        %197 = vmatpush1.msra.mxu0 0.0
        %198 = vmatprep.subr.mxu0 0.0
        %199 = vmatpush1.msra.mxu0 0.0
        %200 = vmatprep.subr.mxu0 0.0
        %201 = vmatpush1.msra.mxu0 0.0
        %202 = vmatprep.subr.mxu0 0.0
        %203 = vmatpush1.msra.mxu0 0.0
        %204 = vmatprep.subr.mxu0 0.0
        %205 = vmatpush1.msra.mxu0 0.0
        %206 = vmatprep.subr.mxu0 0.0
        %207 = vmatpush1.msra.mxu0 0.0
        %208 = vmatprep.subr.mxu0 0.0
        %209 = vmatpush1.msra.mxu0 0.0
        %210 = vmatprep.subr.mxu0 0.0
        %211 = vmatpush1.msra.mxu0 0.0
        %212 = vmatprep.subr.mxu0 0.0
        %213 = vmatpush1.msra.mxu0 0.0
        %214 = vmatprep.subr.mxu0 0.0
        %215 = vmatpush1.msra.mxu0 %v176
        %216 = vmatprep.subr.mxu0 0.0
        %217 = vmatpush1.msra.mxu0 %v175
        %218 = vmatprep.subr.mxu0 0.0
        %219 = vmatpush1.msra.mxu0 %v174
        %220 = vmatprep.subr.mxu0 0.0
        %221 = vmatpush1.msra.mxu0 %v173
        %222 = vmatprep.subr.mxu0 0.0
        %223 = vmatpush2.msra.mxu0 0.0
        %224 = vmatprep.subr.mxu0 0.0
        %225 = vmatpush2.msra.mxu0 0.0
        %226 = vmatprep.subr.mxu0 0.0
        %227 = vmatpush2.msra.mxu0 0.0
        %228 = vmatprep.subr.mxu0 0.0
        %229 = vmatpush2.msra.mxu0 0.0
        %230 = vmatprep.subr.mxu0 0.0
        %231 = vmatpush2.msra.mxu0 0.0
        %232 = vmatprep.subr.mxu0 0.0
        %233 = vmatpush2.msra.mxu0 0.0
        %234 = vmatprep.subr.mxu0 0.0
        %235 = vmatpush2.msra.mxu0 0.0
        %236 = vmatprep.subr.mxu0 0.0
        %237 = vmatpush2.msra.mxu0 0.0
        %238 = vmatprep.subr.mxu0 0.0
        %239 = vmatpush2.msra.mxu0 0.0
        %240 = vmatprep.subr.mxu0 0.0
        %241 = vmatpush2.msra.mxu0 0.0
        %242 = vmatprep.subr.mxu0 0.0
        %243 = vmatpush2.msra.mxu0 0.0
        %244 = vmatprep.subr.mxu0 0.0
        %245 = vmatpush2.msra.mxu0 0.0
        %246 = vmatprep.subr.mxu0 0.0
        %247 = vmatpush2.msra.mxu0 0.0
        %248 = vmatprep.subr.mxu0 0.0
        %249 = vmatpush2.msra.mxu0 0.0
        %250 = vmatprep.subr.mxu0 0.0
        %251 = vmatpush2.msra.mxu0 0.0
        %252 = vmatprep.subr.mxu0 0.0
        %253 = vmatpush2.msra.mxu0 0.0
        %254 = vmatprep.mubr.f32.mxu0 0.0
        %255 = vmatmul.mubr.f32.gmra.mxu0 %v179
        %v256 = vpop.f32.mrf.mxu0
        %v257 = vadd.f32 0.0, %v256
        %v258 = vpop.f32.mrf.mxu0
        %259 = vmatprep.mubr.f32.mxu0 0.0
        %260 = vmatmul.mubr.f32.gmra.mxu0 %v182
        %v261 = vpop.f32.mrf.mxu0
        %v262 = vadd.f32 0.0, %v261
        %v263 = vpop.f32.mrf.mxu0
        %264 = vmatprep.mubr.f32.mxu0 0.0
        %265 = vmatmul.mubr.f32.gmra.mxu0 %v185
        %v266 = vpop.f32.mrf.mxu0
        %v267 = vadd.f32 0.0, %v266
        %v268 = vpop.f32.mrf.mxu0
        %269 = vmatprep.mubr.f32.mxu0 0.0
        %270 = vmatmul.mubr.f32.gmra.mxu0 %v188
        %v271 = vpop.f32.mrf.mxu0
        %v272 = vadd.f32 0.0, %v271
        %v273 = vpop.f32.mrf.mxu0
        %274 = vdwg.mxu0
        %v275 = vld [vmem:[%s1] sm:$0xff]
        %v276 = vld [vmem:[%s1 + $0x8] sm:$0xff]
        %v277 = vld [vmem:[%s1 + $0x10] sm:$0xff]
        %v278 = vld [vmem:[%s1 + $0x18] sm:$0xff]
        %v279 = vld [vmem:[%s1 + $0x20] sm:$0xff]
        %v280 = vld [vmem:[%s1 + $0x28] sm:$0xff]
        %v281 = vld [vmem:[%s1 + $0x30] sm:$0xff]
        %v282 = vld [vmem:[%s1 + $0x38] sm:$0xff]
        %v284 = vsel %vm177, %v275, 0
        %v287 = vsel %vm177, %v276, 0
        %v290 = vsel %vm177, %v277, 0
        %v293 = vsel %vm177, %v278, 0
        %v296 = vsel %vm177, %v279, 0
        %v299 = vsel %vm177, %v280, 0
        %v302 = vsel %vm177, %v281, 0
        %v305 = vsel %vm177, %v282, 0
        %307 = vmatprep.subr.mxu0 0.0
        %308 = vmatpush1.msra.mxu0 0.0
        %309 = vmatprep.subr.mxu0 0.0
        %310 = vmatpush1.msra.mxu0 0.0
        %311 = vmatprep.subr.mxu0 0.0
        %312 = vmatpush1.msra.mxu0 0.0
        %313 = vmatprep.subr.mxu0 0.0
        %314 = vmatpush1.msra.mxu0 0.0
        %315 = vmatprep.subr.mxu0 0.0
        %316 = vmatpush1.msra.mxu0 0.0
        %317 = vmatprep.subr.mxu0 0.0
        %318 = vmatpush1.msra.mxu0 0.0
        %319 = vmatprep.subr.mxu0 0.0
        %320 = vmatpush1.msra.mxu0 0.0
        %321 = vmatprep.subr.mxu0 0.0
        %322 = vmatpush1.msra.mxu0 0.0
        %323 = vmatprep.subr.mxu0 0.0
        %324 = vmatpush1.msra.mxu0 0.0
        %325 = vmatprep.subr.mxu0 0.0
        %326 = vmatpush1.msra.mxu0 0.0
        %327 = vmatprep.subr.mxu0 0.0
        %328 = vmatpush1.msra.mxu0 0.0
        %329 = vmatprep.subr.mxu0 0.0
        %330 = vmatpush1.msra.mxu0 0.0
        %331 = vmatprep.subr.mxu0 0.0
        %332 = vmatpush1.msra.mxu0 %v272
        %333 = vmatprep.subr.mxu0 0.0
        %334 = vmatpush1.msra.mxu0 %v267
        %335 = vmatprep.subr.mxu0 0.0
        %336 = vmatpush1.msra.mxu0 %v262
        %337 = vmatprep.subr.mxu0 0.0
        %338 = vmatpush1.msra.mxu0 %v257
        %339 = vmatprep.subr.mxu0 0.0
        %340 = vmatpush2.msra.mxu0 0.0
        %341 = vmatprep.subr.mxu0 0.0
        %342 = vmatpush2.msra.mxu0 0.0
        %343 = vmatprep.subr.mxu0 0.0
        %344 = vmatpush2.msra.mxu0 0.0
        %345 = vmatprep.subr.mxu0 0.0
        %346 = vmatpush2.msra.mxu0 0.0
        %347 = vmatprep.subr.mxu0 0.0
        %348 = vmatpush2.msra.mxu0 0.0
        %349 = vmatprep.subr.mxu0 0.0
        %350 = vmatpush2.msra.mxu0 0.0
        %351 = vmatprep.subr.mxu0 0.0
        %352 = vmatpush2.msra.mxu0 0.0
        %353 = vmatprep.subr.mxu0 0.0
        %354 = vmatpush2.msra.mxu0 0.0
        %355 = vmatprep.subr.mxu0 0.0
        %356 = vmatpush2.msra.mxu0 0.0
        %357 = vmatprep.subr.mxu0 0.0
        %358 = vmatpush2.msra.mxu0 0.0
        %359 = vmatprep.subr.mxu0 0.0
        %360 = vmatpush2.msra.mxu0 0.0
        %361 = vmatprep.subr.mxu0 0.0
        %362 = vmatpush2.msra.mxu0 0.0
        %363 = vmatprep.subr.mxu0 0.0
        %364 = vmatpush2.msra.mxu0 0.0
        %365 = vmatprep.subr.mxu0 0.0
        %366 = vmatpush2.msra.mxu0 0.0
        %367 = vmatprep.subr.mxu0 0.0
        %368 = vmatpush2.msra.mxu0 0.0
        %369 = vmatprep.subr.mxu0 0.0
        %370 = vmatpush2.msra.mxu0 0.0
        %371 = vmatprep.mubr.f32.mxu0 0.0
        %372 = vmatmul.mubr.f32.gmra.mxu0 %v284
        %v373 = vpop.f32.mrf.mxu0
        %v374 = vadd.f32 0.0, %v373
        %v375 = vpop.f32.mrf.mxu0
        %376 = vmatprep.mubr.f32.mxu0 0.0
        %377 = vmatmul.mubr.f32.gmra.mxu0 %v287
        %v378 = vpop.f32.mrf.mxu0
        %v379 = vadd.f32 0.0, %v378
        %v380 = vpop.f32.mrf.mxu0
        %381 = vmatprep.mubr.f32.mxu0 0.0
        %382 = vmatmul.mubr.f32.gmra.mxu0 %v290
        %v383 = vpop.f32.mrf.mxu0
        %v384 = vadd.f32 0.0, %v383
        %v385 = vpop.f32.mrf.mxu0
        %386 = vmatprep.mubr.f32.mxu0 0.0
        %387 = vmatmul.mubr.f32.gmra.mxu0 %v293
        %v388 = vpop.f32.mrf.mxu0
        %v389 = vadd.f32 0.0, %v388
        %v390 = vpop.f32.mrf.mxu0
        %391 = vmatprep.mubr.f32.mxu0 0.0
        %392 = vmatmul.mubr.f32.gmra.mxu0 %v296
        %v393 = vpop.f32.mrf.mxu0
        %v394 = vadd.f32 0.0, %v393
        %v395 = vpop.f32.mrf.mxu0
        %396 = vmatprep.mubr.f32.mxu0 0.0
        %397 = vmatmul.mubr.f32.gmra.mxu0 %v299
        %v398 = vpop.f32.mrf.mxu0
        %v399 = vadd.f32 0.0, %v398
        %v400 = vpop.f32.mrf.mxu0
        %401 = vmatprep.mubr.f32.mxu0 0.0
        %402 = vmatmul.mubr.f32.gmra.mxu0 %v302
        %v403 = vpop.f32.mrf.mxu0
        %v404 = vadd.f32 0.0, %v403
        %v405 = vpop.f32.mrf.mxu0
        %406 = vmatprep.mubr.f32.mxu0 0.0
        %407 = vmatmul.mubr.f32.gmra.mxu0 %v305
        %v408 = vpop.f32.mrf.mxu0
        %v409 = vadd.f32 0.0, %v408
        %v410 = vpop.f32.mrf.mxu0
        %411 = vdwg.mxu0
        %vm412 = vcmask 523264
        %413 = vst.msk [vmem:[%s163] sm:$0xff] %vm412, %v374
        %414 = vst.msk [vmem:[%s163 + $0x8] sm:$0xff] %vm412, %v379
        %415 = vst.msk [vmem:[%s163 + $0x10] sm:$0xff] %vm412, %v384
        %416 = vst.msk [vmem:[%s163 + $0x18] sm:$0xff] %vm412, %v389
        %417 = vst.msk [vmem:[%s163 + $0x20] sm:$0xff] %vm412, %v394
        %418 = vst.msk [vmem:[%s163 + $0x28] sm:$0xff] %vm412, %v399
        %419 = vst.msk [vmem:[%s163 + $0x30] sm:$0xff] %vm412, %v404
        %420 = vst.msk [vmem:[%s163 + $0x38] sm:$0xff] %vm412, %v409
        %s421 = scalar_lea.vmem %s168, 32
        %v422 = vld [vmem:[%s421] sm:$0xff]
        %v423 = vld [vmem:[%s421 + $0x8] sm:$0xff]
        %v424 = vld [vmem:[%s421 + $0x10] sm:$0xff]
        %v425 = vld [vmem:[%s421 + $0x18] sm:$0xff]
        %v426 = vld [vmem:[%s2] sm:$0xff]
        %v427 = vld [vmem:[%s2 + $0x8] sm:$0xff]
        %v428 = vld [vmem:[%s2 + $0x10] sm:$0xff]
        %v429 = vld [vmem:[%s2 + $0x18] sm:$0xff]
        %v431 = vsel %vm177, %v422, 0
        %v434 = vsel %vm177, %v423, 0
        %v437 = vsel %vm177, %v424, 0
        %v440 = vsel %vm177, %v425, 0
        %442 = vmatprep.subr.mxu0 0.0
        %443 = vmatpush1.msra.mxu0 0.0
        %444 = vmatprep.subr.mxu0 0.0
        %445 = vmatpush1.msra.mxu0 0.0
        %446 = vmatprep.subr.mxu0 0.0
        %447 = vmatpush1.msra.mxu0 0.0
        %448 = vmatprep.subr.mxu0 0.0
        %449 = vmatpush1.msra.mxu0 0.0
        %450 = vmatprep.subr.mxu0 0.0
        %451 = vmatpush1.msra.mxu0 0.0
        %452 = vmatprep.subr.mxu0 0.0
        %453 = vmatpush1.msra.mxu0 0.0
        %454 = vmatprep.subr.mxu0 0.0
        %455 = vmatpush1.msra.mxu0 0.0
        %456 = vmatprep.subr.mxu0 0.0
        %457 = vmatpush1.msra.mxu0 0.0
        %458 = vmatprep.subr.mxu0 0.0
        %459 = vmatpush1.msra.mxu0 0.0
        %460 = vmatprep.subr.mxu0 0.0
        %461 = vmatpush1.msra.mxu0 0.0
        %462 = vmatprep.subr.mxu0 0.0
        %463 = vmatpush1.msra.mxu0 0.0
        %464 = vmatprep.subr.mxu0 0.0
        %465 = vmatpush1.msra.mxu0 0.0
        %466 = vmatprep.subr.mxu0 0.0
        %467 = vmatpush1.msra.mxu0 %v429
        %468 = vmatprep.subr.mxu0 0.0
        %469 = vmatpush1.msra.mxu0 %v428
        %470 = vmatprep.subr.mxu0 0.0
        %471 = vmatpush1.msra.mxu0 %v427
        %472 = vmatprep.subr.mxu0 0.0
        %473 = vmatpush1.msra.mxu0 %v426
        %474 = vmatprep.subr.mxu0 0.0
        %475 = vmatpush2.msra.mxu0 0.0
        %476 = vmatprep.subr.mxu0 0.0
        %477 = vmatpush2.msra.mxu0 0.0
        %478 = vmatprep.subr.mxu0 0.0
        %479 = vmatpush2.msra.mxu0 0.0
        %480 = vmatprep.subr.mxu0 0.0
        %481 = vmatpush2.msra.mxu0 0.0
        %482 = vmatprep.subr.mxu0 0.0
        %483 = vmatpush2.msra.mxu0 0.0
        %484 = vmatprep.subr.mxu0 0.0
        %485 = vmatpush2.msra.mxu0 0.0
        %486 = vmatprep.subr.mxu0 0.0
        %487 = vmatpush2.msra.mxu0 0.0
        %488 = vmatprep.subr.mxu0 0.0
        %489 = vmatpush2.msra.mxu0 0.0
        %490 = vmatprep.subr.mxu0 0.0
        %491 = vmatpush2.msra.mxu0 0.0
        %492 = vmatprep.subr.mxu0 0.0
        %493 = vmatpush2.msra.mxu0 0.0
        %494 = vmatprep.subr.mxu0 0.0
        %495 = vmatpush2.msra.mxu0 0.0
        %496 = vmatprep.subr.mxu0 0.0
        %497 = vmatpush2.msra.mxu0 0.0
        %498 = vmatprep.subr.mxu0 0.0
        %499 = vmatpush2.msra.mxu0 0.0
        %500 = vmatprep.subr.mxu0 0.0
        %501 = vmatpush2.msra.mxu0 0.0
        %502 = vmatprep.subr.mxu0 0.0
        %503 = vmatpush2.msra.mxu0 0.0
        %504 = vmatprep.subr.mxu0 0.0
        %505 = vmatpush2.msra.mxu0 0.0
        %506 = vmatprep.mubr.f32.mxu0 0.0
        %507 = vmatmul.mubr.f32.gmra.mxu0 %v431
        %v508 = vpop.f32.mrf.mxu0
        %v509 = vadd.f32 0.0, %v508
        %v510 = vpop.f32.mrf.mxu0
        %511 = vmatprep.mubr.f32.mxu0 0.0
        %512 = vmatmul.mubr.f32.gmra.mxu0 %v434
        %v513 = vpop.f32.mrf.mxu0
        %v514 = vadd.f32 0.0, %v513
        %v515 = vpop.f32.mrf.mxu0
        %516 = vmatprep.mubr.f32.mxu0 0.0
        %517 = vmatmul.mubr.f32.gmra.mxu0 %v437
        %v518 = vpop.f32.mrf.mxu0
        %v519 = vadd.f32 0.0, %v518
        %v520 = vpop.f32.mrf.mxu0
        %521 = vmatprep.mubr.f32.mxu0 0.0
        %522 = vmatmul.mubr.f32.gmra.mxu0 %v440
        %v523 = vpop.f32.mrf.mxu0
        %v524 = vadd.f32 0.0, %v523
        %v525 = vpop.f32.mrf.mxu0
        %526 = vdwg.mxu0
        %v527 = vld [vmem:[%s1] sm:$0xff]
        %v528 = vld [vmem:[%s1 + $0x8] sm:$0xff]
        %v529 = vld [vmem:[%s1 + $0x10] sm:$0xff]
        %v530 = vld [vmem:[%s1 + $0x18] sm:$0xff]
        %v531 = vld [vmem:[%s1 + $0x20] sm:$0xff]
        %v532 = vld [vmem:[%s1 + $0x28] sm:$0xff]
        %v533 = vld [vmem:[%s1 + $0x30] sm:$0xff]
        %v534 = vld [vmem:[%s1 + $0x38] sm:$0xff]
        %v536 = vsel %vm177, %v527, 0
        %v539 = vsel %vm177, %v528, 0
        %v542 = vsel %vm177, %v529, 0
        %v545 = vsel %vm177, %v530, 0
        %v548 = vsel %vm177, %v531, 0
        %v551 = vsel %vm177, %v532, 0
        %v554 = vsel %vm177, %v533, 0
        %v557 = vsel %vm177, %v534, 0
        %559 = vmatprep.subr.mxu0 0.0
        %560 = vmatpush1.msra.mxu0 0.0
        %561 = vmatprep.subr.mxu0 0.0
        %562 = vmatpush1.msra.mxu0 0.0
        %563 = vmatprep.subr.mxu0 0.0
        %564 = vmatpush1.msra.mxu0 0.0
        %565 = vmatprep.subr.mxu0 0.0
        %566 = vmatpush1.msra.mxu0 0.0
        %567 = vmatprep.subr.mxu0 0.0
        %568 = vmatpush1.msra.mxu0 0.0
        %569 = vmatprep.subr.mxu0 0.0
        %570 = vmatpush1.msra.mxu0 0.0
        %571 = vmatprep.subr.mxu0 0.0
        %572 = vmatpush1.msra.mxu0 0.0
        %573 = vmatprep.subr.mxu0 0.0
        %574 = vmatpush1.msra.mxu0 0.0
        %575 = vmatprep.subr.mxu0 0.0
        %576 = vmatpush1.msra.mxu0 0.0
        %577 = vmatprep.subr.mxu0 0.0
        %578 = vmatpush1.msra.mxu0 0.0
        %579 = vmatprep.subr.mxu0 0.0
        %580 = vmatpush1.msra.mxu0 0.0
        %581 = vmatprep.subr.mxu0 0.0
        %582 = vmatpush1.msra.mxu0 0.0
        %583 = vmatprep.subr.mxu0 0.0
        %584 = vmatpush1.msra.mxu0 %v524
        %585 = vmatprep.subr.mxu0 0.0
        %586 = vmatpush1.msra.mxu0 %v519
        %587 = vmatprep.subr.mxu0 0.0
        %588 = vmatpush1.msra.mxu0 %v514
        %589 = vmatprep.subr.mxu0 0.0
        %590 = vmatpush1.msra.mxu0 %v509
        %591 = vmatprep.subr.mxu0 0.0
        %592 = vmatpush2.msra.mxu0 0.0
        %593 = vmatprep.subr.mxu0 0.0
        %594 = vmatpush2.msra.mxu0 0.0
        %595 = vmatprep.subr.mxu0 0.0
        %596 = vmatpush2.msra.mxu0 0.0
        %597 = vmatprep.subr.mxu0 0.0
        %598 = vmatpush2.msra.mxu0 0.0
        %599 = vmatprep.subr.mxu0 0.0
        %600 = vmatpush2.msra.mxu0 0.0
        %601 = vmatprep.subr.mxu0 0.0
        %602 = vmatpush2.msra.mxu0 0.0
        %603 = vmatprep.subr.mxu0 0.0
        %604 = vmatpush2.msra.mxu0 0.0
        %605 = vmatprep.subr.mxu0 0.0
        %606 = vmatpush2.msra.mxu0 0.0
        %607 = vmatprep.subr.mxu0 0.0
        %608 = vmatpush2.msra.mxu0 0.0
        %609 = vmatprep.subr.mxu0 0.0
        %610 = vmatpush2.msra.mxu0 0.0
        %611 = vmatprep.subr.mxu0 0.0
        %612 = vmatpush2.msra.mxu0 0.0
        %613 = vmatprep.subr.mxu0 0.0
        %614 = vmatpush2.msra.mxu0 0.0
        %615 = vmatprep.subr.mxu0 0.0
        %616 = vmatpush2.msra.mxu0 0.0
        %617 = vmatprep.subr.mxu0 0.0
        %618 = vmatpush2.msra.mxu0 0.0
        %619 = vmatprep.subr.mxu0 0.0
        %620 = vmatpush2.msra.mxu0 0.0
        %621 = vmatprep.subr.mxu0 0.0
        %622 = vmatpush2.msra.mxu0 0.0
        %623 = vmatprep.mubr.f32.mxu0 0.0
        %624 = vmatmul.mubr.f32.gmra.mxu0 %v536
        %v625 = vpop.f32.mrf.mxu0
        %v626 = vadd.f32 0.0, %v625
        %v627 = vpop.f32.mrf.mxu0
        %628 = vmatprep.mubr.f32.mxu0 0.0
        %629 = vmatmul.mubr.f32.gmra.mxu0 %v539
        %v630 = vpop.f32.mrf.mxu0
        %v631 = vadd.f32 0.0, %v630
        %v632 = vpop.f32.mrf.mxu0
        %633 = vmatprep.mubr.f32.mxu0 0.0
        %634 = vmatmul.mubr.f32.gmra.mxu0 %v542
        %v635 = vpop.f32.mrf.mxu0
        %v636 = vadd.f32 0.0, %v635
        %v637 = vpop.f32.mrf.mxu0
        %638 = vmatprep.mubr.f32.mxu0 0.0
        %639 = vmatmul.mubr.f32.gmra.mxu0 %v545
        %v640 = vpop.f32.mrf.mxu0
        %v641 = vadd.f32 0.0, %v640
        %v642 = vpop.f32.mrf.mxu0
        %643 = vmatprep.mubr.f32.mxu0 0.0
        %644 = vmatmul.mubr.f32.gmra.mxu0 %v548
        %v645 = vpop.f32.mrf.mxu0
        %v646 = vadd.f32 0.0, %v645
        %v647 = vpop.f32.mrf.mxu0
        %648 = vmatprep.mubr.f32.mxu0 0.0
        %649 = vmatmul.mubr.f32.gmra.mxu0 %v551
        %v650 = vpop.f32.mrf.mxu0
        %v651 = vadd.f32 0.0, %v650
        %v652 = vpop.f32.mrf.mxu0
        %653 = vmatprep.mubr.f32.mxu0 0.0
        %654 = vmatmul.mubr.f32.gmra.mxu0 %v554
        %v655 = vpop.f32.mrf.mxu0
        %v656 = vadd.f32 0.0, %v655
        %v657 = vpop.f32.mrf.mxu0
        %658 = vmatprep.mubr.f32.mxu0 0.0
        %659 = vmatmul.mubr.f32.gmra.mxu0 %v557
        %v660 = vpop.f32.mrf.mxu0
        %v661 = vadd.f32 0.0, %v660
        %v662 = vpop.f32.mrf.mxu0
        %663 = vdwg.mxu0
        %s664 = scalar_lea.vmem %s163, 64 [#allocation2]
        %665 = vst.msk [vmem:[%s664] sm:$0xff] %vm412, %v626
        %666 = vst.msk [vmem:[%s664 + $0x8] sm:$0xff] %vm412, %v631
        %667 = vst.msk [vmem:[%s664 + $0x10] sm:$0xff] %vm412, %v636
        %668 = vst.msk [vmem:[%s664 + $0x18] sm:$0xff] %vm412, %v641
        %669 = vst.msk [vmem:[%s664 + $0x20] sm:$0xff] %vm412, %v646
        %670 = vst.msk [vmem:[%s664 + $0x28] sm:$0xff] %vm412, %v651
        %671 = vst.msk [vmem:[%s664 + $0x30] sm:$0xff] %vm412, %v656
        %672 = vst.msk [vmem:[%s664 + $0x38] sm:$0xff] %vm412, %v661
        %s673 = scalar_lea.vmem %s168, 64
        %v674 = vld [vmem:[%s673] sm:$0xff]
        %v675 = vld [vmem:[%s673 + $0x8] sm:$0xff]
        %v676 = vld [vmem:[%s673 + $0x10] sm:$0xff]
        %v677 = vld [vmem:[%s673 + $0x18] sm:$0xff]
        %v678 = vld [vmem:[%s2] sm:$0xff]
        %v679 = vld [vmem:[%s2 + $0x8] sm:$0xff]
        %v680 = vld [vmem:[%s2 + $0x10] sm:$0xff]
        %v681 = vld [vmem:[%s2 + $0x18] sm:$0xff]
        %v683 = vsel %vm177, %v674, 0
        %v686 = vsel %vm177, %v675, 0
        %v689 = vsel %vm177, %v676, 0
        %v692 = vsel %vm177, %v677, 0
        %694 = vmatprep.subr.mxu0 0.0
        %695 = vmatpush1.msra.mxu0 0.0
        %696 = vmatprep.subr.mxu0 0.0
        %697 = vmatpush1.msra.mxu0 0.0
        %698 = vmatprep.subr.mxu0 0.0
        %699 = vmatpush1.msra.mxu0 0.0
        %700 = vmatprep.subr.mxu0 0.0
        %701 = vmatpush1.msra.mxu0 0.0
        %702 = vmatprep.subr.mxu0 0.0
        %703 = vmatpush1.msra.mxu0 0.0
        %704 = vmatprep.subr.mxu0 0.0
        %705 = vmatpush1.msra.mxu0 0.0
        %706 = vmatprep.subr.mxu0 0.0
        %707 = vmatpush1.msra.mxu0 0.0
        %708 = vmatprep.subr.mxu0 0.0
        %709 = vmatpush1.msra.mxu0 0.0
        %710 = vmatprep.subr.mxu0 0.0
        %711 = vmatpush1.msra.mxu0 0.0
        %712 = vmatprep.subr.mxu0 0.0
        %713 = vmatpush1.msra.mxu0 0.0
        %714 = vmatprep.subr.mxu0 0.0
        %715 = vmatpush1.msra.mxu0 0.0
        %716 = vmatprep.subr.mxu0 0.0
        %717 = vmatpush1.msra.mxu0 0.0
        %718 = vmatprep.subr.mxu0 0.0
        %719 = vmatpush1.msra.mxu0 %v681
        %720 = vmatprep.subr.mxu0 0.0
        %721 = vmatpush1.msra.mxu0 %v680
        %722 = vmatprep.subr.mxu0 0.0
        %723 = vmatpush1.msra.mxu0 %v679
        %724 = vmatprep.subr.mxu0 0.0
        %725 = vmatpush1.msra.mxu0 %v678
        %726 = vmatprep.subr.mxu0 0.0
        %727 = vmatpush2.msra.mxu0 0.0
        %728 = vmatprep.subr.mxu0 0.0
        %729 = vmatpush2.msra.mxu0 0.0
        %730 = vmatprep.subr.mxu0 0.0
        %731 = vmatpush2.msra.mxu0 0.0
        %732 = vmatprep.subr.mxu0 0.0
        %733 = vmatpush2.msra.mxu0 0.0
        %734 = vmatprep.subr.mxu0 0.0
        %735 = vmatpush2.msra.mxu0 0.0
        %736 = vmatprep.subr.mxu0 0.0
        %737 = vmatpush2.msra.mxu0 0.0
        %738 = vmatprep.subr.mxu0 0.0
        %739 = vmatpush2.msra.mxu0 0.0
        %740 = vmatprep.subr.mxu0 0.0
        %741 = vmatpush2.msra.mxu0 0.0
        %742 = vmatprep.subr.mxu0 0.0
        %743 = vmatpush2.msra.mxu0 0.0
        %744 = vmatprep.subr.mxu0 0.0
        %745 = vmatpush2.msra.mxu0 0.0
        %746 = vmatprep.subr.mxu0 0.0
        %747 = vmatpush2.msra.mxu0 0.0
        %748 = vmatprep.subr.mxu0 0.0
        %749 = vmatpush2.msra.mxu0 0.0
        %750 = vmatprep.subr.mxu0 0.0
        %751 = vmatpush2.msra.mxu0 0.0
        %752 = vmatprep.subr.mxu0 0.0
        %753 = vmatpush2.msra.mxu0 0.0
        %754 = vmatprep.subr.mxu0 0.0
        %755 = vmatpush2.msra.mxu0 0.0
        %756 = vmatprep.subr.mxu0 0.0
        %757 = vmatpush2.msra.mxu0 0.0
        %758 = vmatprep.mubr.f32.mxu0 0.0
        %759 = vmatmul.mubr.f32.gmra.mxu0 %v683
        %v760 = vpop.f32.mrf.mxu0
        %v761 = vadd.f32 0.0, %v760
        %v762 = vpop.f32.mrf.mxu0
        %763 = vmatprep.mubr.f32.mxu0 0.0
        %764 = vmatmul.mubr.f32.gmra.mxu0 %v686
        %v765 = vpop.f32.mrf.mxu0
        %v766 = vadd.f32 0.0, %v765
        %v767 = vpop.f32.mrf.mxu0
        %768 = vmatprep.mubr.f32.mxu0 0.0
        %769 = vmatmul.mubr.f32.gmra.mxu0 %v689
        %v770 = vpop.f32.mrf.mxu0
        %v771 = vadd.f32 0.0, %v770
        %v772 = vpop.f32.mrf.mxu0
        %773 = vmatprep.mubr.f32.mxu0 0.0
        %774 = vmatmul.mubr.f32.gmra.mxu0 %v692
        %v775 = vpop.f32.mrf.mxu0
        %v776 = vadd.f32 0.0, %v775
        %v777 = vpop.f32.mrf.mxu0
        %778 = vdwg.mxu0
        %v779 = vld [vmem:[%s1] sm:$0xff]
        %v780 = vld [vmem:[%s1 + $0x8] sm:$0xff]
        %v781 = vld [vmem:[%s1 + $0x10] sm:$0xff]
        %v782 = vld [vmem:[%s1 + $0x18] sm:$0xff]
        %v783 = vld [vmem:[%s1 + $0x20] sm:$0xff]
        %v784 = vld [vmem:[%s1 + $0x28] sm:$0xff]
        %v785 = vld [vmem:[%s1 + $0x30] sm:$0xff]
        %v786 = vld [vmem:[%s1 + $0x38] sm:$0xff]
        %v788 = vsel %vm177, %v779, 0
        %v791 = vsel %vm177, %v780, 0
        %v794 = vsel %vm177, %v781, 0
        %v797 = vsel %vm177, %v782, 0
        %v800 = vsel %vm177, %v783, 0
        %v803 = vsel %vm177, %v784, 0
        %v806 = vsel %vm177, %v785, 0
        %v809 = vsel %vm177, %v786, 0
        %811 = vmatprep.subr.mxu0 0.0
        %812 = vmatpush1.msra.mxu0 0.0
        %813 = vmatprep.subr.mxu0 0.0
        %814 = vmatpush1.msra.mxu0 0.0
        %815 = vmatprep.subr.mxu0 0.0
        %816 = vmatpush1.msra.mxu0 0.0
        %817 = vmatprep.subr.mxu0 0.0
        %818 = vmatpush1.msra.mxu0 0.0
        %819 = vmatprep.subr.mxu0 0.0
        %820 = vmatpush1.msra.mxu0 0.0
        %821 = vmatprep.subr.mxu0 0.0
        %822 = vmatpush1.msra.mxu0 0.0
        %823 = vmatprep.subr.mxu0 0.0
        %824 = vmatpush1.msra.mxu0 0.0
        %825 = vmatprep.subr.mxu0 0.0
        %826 = vmatpush1.msra.mxu0 0.0
        %827 = vmatprep.subr.mxu0 0.0
        %828 = vmatpush1.msra.mxu0 0.0
        %829 = vmatprep.subr.mxu0 0.0
        %830 = vmatpush1.msra.mxu0 0.0
        %831 = vmatprep.subr.mxu0 0.0
        %832 = vmatpush1.msra.mxu0 0.0
        %833 = vmatprep.subr.mxu0 0.0
        %834 = vmatpush1.msra.mxu0 0.0
        %835 = vmatprep.subr.mxu0 0.0
        %836 = vmatpush1.msra.mxu0 %v776
        %837 = vmatprep.subr.mxu0 0.0
        %838 = vmatpush1.msra.mxu0 %v771
        %839 = vmatprep.subr.mxu0 0.0
        %840 = vmatpush1.msra.mxu0 %v766
        %841 = vmatprep.subr.mxu0 0.0
        %842 = vmatpush1.msra.mxu0 %v761
        %843 = vmatprep.subr.mxu0 0.0
        %844 = vmatpush2.msra.mxu0 0.0
        %845 = vmatprep.subr.mxu0 0.0
        %846 = vmatpush2.msra.mxu0 0.0
        %847 = vmatprep.subr.mxu0 0.0
        %848 = vmatpush2.msra.mxu0 0.0
        %849 = vmatprep.subr.mxu0 0.0
        %850 = vmatpush2.msra.mxu0 0.0
        %851 = vmatprep.subr.mxu0 0.0
        %852 = vmatpush2.msra.mxu0 0.0
        %853 = vmatprep.subr.mxu0 0.0
        %854 = vmatpush2.msra.mxu0 0.0
        %855 = vmatprep.subr.mxu0 0.0
        %856 = vmatpush2.msra.mxu0 0.0
        %857 = vmatprep.subr.mxu0 0.0
        %858 = vmatpush2.msra.mxu0 0.0
        %859 = vmatprep.subr.mxu0 0.0
        %860 = vmatpush2.msra.mxu0 0.0
        %861 = vmatprep.subr.mxu0 0.0
        %862 = vmatpush2.msra.mxu0 0.0
        %863 = vmatprep.subr.mxu0 0.0
        %864 = vmatpush2.msra.mxu0 0.0
        %865 = vmatprep.subr.mxu0 0.0
        %866 = vmatpush2.msra.mxu0 0.0
        %867 = vmatprep.subr.mxu0 0.0
        %868 = vmatpush2.msra.mxu0 0.0
        %869 = vmatprep.subr.mxu0 0.0
        %870 = vmatpush2.msra.mxu0 0.0
        %871 = vmatprep.subr.mxu0 0.0
        %872 = vmatpush2.msra.mxu0 0.0
        %873 = vmatprep.subr.mxu0 0.0
        %874 = vmatpush2.msra.mxu0 0.0
        %875 = vmatprep.mubr.f32.mxu0 0.0
        %876 = vmatmul.mubr.f32.gmra.mxu0 %v788
        %v877 = vpop.f32.mrf.mxu0
        %v878 = vadd.f32 0.0, %v877
        %v879 = vpop.f32.mrf.mxu0
        %880 = vmatprep.mubr.f32.mxu0 0.0
        %881 = vmatmul.mubr.f32.gmra.mxu0 %v791
        %v882 = vpop.f32.mrf.mxu0
        %v883 = vadd.f32 0.0, %v882
        %v884 = vpop.f32.mrf.mxu0
        %885 = vmatprep.mubr.f32.mxu0 0.0
        %886 = vmatmul.mubr.f32.gmra.mxu0 %v794
        %v887 = vpop.f32.mrf.mxu0
        %v888 = vadd.f32 0.0, %v887
        %v889 = vpop.f32.mrf.mxu0
        %890 = vmatprep.mubr.f32.mxu0 0.0
        %891 = vmatmul.mubr.f32.gmra.mxu0 %v797
        %v892 = vpop.f32.mrf.mxu0
        %v893 = vadd.f32 0.0, %v892
        %v894 = vpop.f32.mrf.mxu0
        %895 = vmatprep.mubr.f32.mxu0 0.0
        %896 = vmatmul.mubr.f32.gmra.mxu0 %v800
        %v897 = vpop.f32.mrf.mxu0
        %v898 = vadd.f32 0.0, %v897
        %v899 = vpop.f32.mrf.mxu0
        %900 = vmatprep.mubr.f32.mxu0 0.0
        %901 = vmatmul.mubr.f32.gmra.mxu0 %v803
        %v902 = vpop.f32.mrf.mxu0
        %v903 = vadd.f32 0.0, %v902
        %v904 = vpop.f32.mrf.mxu0
        %905 = vmatprep.mubr.f32.mxu0 0.0
        %906 = vmatmul.mubr.f32.gmra.mxu0 %v806
        %v907 = vpop.f32.mrf.mxu0
        %v908 = vadd.f32 0.0, %v907
        %v909 = vpop.f32.mrf.mxu0
        %910 = vmatprep.mubr.f32.mxu0 0.0
        %911 = vmatmul.mubr.f32.gmra.mxu0 %v809
        %v912 = vpop.f32.mrf.mxu0
        %v913 = vadd.f32 0.0, %v912
        %v914 = vpop.f32.mrf.mxu0
        %915 = vdwg.mxu0
        %s916 = scalar_lea.vmem %s163, 128 [#allocation2]
        %917 = vst.msk [vmem:[%s916] sm:$0xff] %vm412, %v878
        %918 = vst.msk [vmem:[%s916 + $0x8] sm:$0xff] %vm412, %v883
        %919 = vst.msk [vmem:[%s916 + $0x10] sm:$0xff] %vm412, %v888
        %920 = vst.msk [vmem:[%s916 + $0x18] sm:$0xff] %vm412, %v893
        %921 = vst.msk [vmem:[%s916 + $0x20] sm:$0xff] %vm412, %v898
        %922 = vst.msk [vmem:[%s916 + $0x28] sm:$0xff] %vm412, %v903
        %923 = vst.msk [vmem:[%s916 + $0x30] sm:$0xff] %vm412, %v908
        %924 = vst.msk [vmem:[%s916 + $0x38] sm:$0xff] %vm412, %v913
        %s925 = scalar_lea.vmem %s168, 96
        %v926 = vld [vmem:[%s925] sm:$0xff]
        %v927 = vld [vmem:[%s925 + $0x8] sm:$0xff]
        %v928 = vld [vmem:[%s925 + $0x10] sm:$0xff]
        %v929 = vld [vmem:[%s925 + $0x18] sm:$0xff]
        %v930 = vld [vmem:[%s2] sm:$0xff]
        %v931 = vld [vmem:[%s2 + $0x8] sm:$0xff]
        %v932 = vld [vmem:[%s2 + $0x10] sm:$0xff]
        %v933 = vld [vmem:[%s2 + $0x18] sm:$0xff]
        %v935 = vsel %vm177, %v926, 0
        %v938 = vsel %vm177, %v927, 0
        %v941 = vsel %vm177, %v928, 0
        %v944 = vsel %vm177, %v929, 0
        %946 = vmatprep.subr.mxu0 0.0
        %947 = vmatpush1.msra.mxu0 0.0
        %948 = vmatprep.subr.mxu0 0.0
        %949 = vmatpush1.msra.mxu0 0.0
        %950 = vmatprep.subr.mxu0 0.0
        %951 = vmatpush1.msra.mxu0 0.0
        %952 = vmatprep.subr.mxu0 0.0
        %953 = vmatpush1.msra.mxu0 0.0
        %954 = vmatprep.subr.mxu0 0.0
        %955 = vmatpush1.msra.mxu0 0.0
        %956 = vmatprep.subr.mxu0 0.0
        %957 = vmatpush1.msra.mxu0 0.0
        %958 = vmatprep.subr.mxu0 0.0
        %959 = vmatpush1.msra.mxu0 0.0
        %960 = vmatprep.subr.mxu0 0.0
        %961 = vmatpush1.msra.mxu0 0.0
        %962 = vmatprep.subr.mxu0 0.0
        %963 = vmatpush1.msra.mxu0 0.0
        %964 = vmatprep.subr.mxu0 0.0
        %965 = vmatpush1.msra.mxu0 0.0
        %966 = vmatprep.subr.mxu0 0.0
        %967 = vmatpush1.msra.mxu0 0.0
        %968 = vmatprep.subr.mxu0 0.0
        %969 = vmatpush1.msra.mxu0 0.0
        %970 = vmatprep.subr.mxu0 0.0
        %971 = vmatpush1.msra.mxu0 %v933
        %972 = vmatprep.subr.mxu0 0.0
        %973 = vmatpush1.msra.mxu0 %v932
        %974 = vmatprep.subr.mxu0 0.0
        %975 = vmatpush1.msra.mxu0 %v931
        %976 = vmatprep.subr.mxu0 0.0
        %977 = vmatpush1.msra.mxu0 %v930
        %978 = vmatprep.subr.mxu0 0.0
        %979 = vmatpush2.msra.mxu0 0.0
        %980 = vmatprep.subr.mxu0 0.0
        %981 = vmatpush2.msra.mxu0 0.0
        %982 = vmatprep.subr.mxu0 0.0
        %983 = vmatpush2.msra.mxu0 0.0
        %984 = vmatprep.subr.mxu0 0.0
        %985 = vmatpush2.msra.mxu0 0.0
        %986 = vmatprep.subr.mxu0 0.0
        %987 = vmatpush2.msra.mxu0 0.0
        %988 = vmatprep.subr.mxu0 0.0
        %989 = vmatpush2.msra.mxu0 0.0
        %990 = vmatprep.subr.mxu0 0.0
        %991 = vmatpush2.msra.mxu0 0.0
        %992 = vmatprep.subr.mxu0 0.0
        %993 = vmatpush2.msra.mxu0 0.0
        %994 = vmatprep.subr.mxu0 0.0
        %995 = vmatpush2.msra.mxu0 0.0
        %996 = vmatprep.subr.mxu0 0.0
        %997 = vmatpush2.msra.mxu0 0.0
        %998 = vmatprep.subr.mxu0 0.0
        %999 = vmatpush2.msra.mxu0 0.0
        %1000 = vmatprep.subr.mxu0 0.0
        %1001 = vmatpush2.msra.mxu0 0.0
        %1002 = vmatprep.subr.mxu0 0.0
        %1003 = vmatpush2.msra.mxu0 0.0
        %1004 = vmatprep.subr.mxu0 0.0
        %1005 = vmatpush2.msra.mxu0 0.0
        %1006 = vmatprep.subr.mxu0 0.0
        %1007 = vmatpush2.msra.mxu0 0.0
        %1008 = vmatprep.subr.mxu0 0.0
        %1009 = vmatpush2.msra.mxu0 0.0
        %1010 = vmatprep.mubr.f32.mxu0 0.0
        %1011 = vmatmul.mubr.f32.gmra.mxu0 %v935
        %v1012 = vpop.f32.mrf.mxu0
        %v1013 = vadd.f32 0.0, %v1012
        %v1014 = vpop.f32.mrf.mxu0
        %1015 = vmatprep.mubr.f32.mxu0 0.0
        %1016 = vmatmul.mubr.f32.gmra.mxu0 %v938
        %v1017 = vpop.f32.mrf.mxu0
        %v1018 = vadd.f32 0.0, %v1017
        %v1019 = vpop.f32.mrf.mxu0
        %1020 = vmatprep.mubr.f32.mxu0 0.0
        %1021 = vmatmul.mubr.f32.gmra.mxu0 %v941
        %v1022 = vpop.f32.mrf.mxu0
        %v1023 = vadd.f32 0.0, %v1022
        %v1024 = vpop.f32.mrf.mxu0
        %1025 = vmatprep.mubr.f32.mxu0 0.0
        %1026 = vmatmul.mubr.f32.gmra.mxu0 %v944
        %v1027 = vpop.f32.mrf.mxu0
        %v1028 = vadd.f32 0.0, %v1027
        %v1029 = vpop.f32.mrf.mxu0
        %1030 = vdwg.mxu0
        %v1031 = vld [vmem:[%s1] sm:$0xff]
        %v1032 = vld [vmem:[%s1 + $0x8] sm:$0xff]
        %v1033 = vld [vmem:[%s1 + $0x10] sm:$0xff]
        %v1034 = vld [vmem:[%s1 + $0x18] sm:$0xff]
        %v1035 = vld [vmem:[%s1 + $0x20] sm:$0xff]
        %v1036 = vld [vmem:[%s1 + $0x28] sm:$0xff]
        %v1037 = vld [vmem:[%s1 + $0x30] sm:$0xff]
        %v1038 = vld [vmem:[%s1 + $0x38] sm:$0xff]
        %v1040 = vsel %vm177, %v1031, 0
        %v1043 = vsel %vm177, %v1032, 0
        %v1046 = vsel %vm177, %v1033, 0
        %v1049 = vsel %vm177, %v1034, 0
        %v1052 = vsel %vm177, %v1035, 0
        %v1055 = vsel %vm177, %v1036, 0
        %v1058 = vsel %vm177, %v1037, 0
        %v1061 = vsel %vm177, %v1038, 0
        %1063 = vmatprep.subr.mxu0 0.0
        %1064 = vmatpush1.msra.mxu0 0.0
        %1065 = vmatprep.subr.mxu0 0.0
        %1066 = vmatpush1.msra.mxu0 0.0
        %1067 = vmatprep.subr.mxu0 0.0
        %1068 = vmatpush1.msra.mxu0 0.0
        %1069 = vmatprep.subr.mxu0 0.0
        %1070 = vmatpush1.msra.mxu0 0.0
        %1071 = vmatprep.subr.mxu0 0.0
        %1072 = vmatpush1.msra.mxu0 0.0
        %1073 = vmatprep.subr.mxu0 0.0
        %1074 = vmatpush1.msra.mxu0 0.0
        %1075 = vmatprep.subr.mxu0 0.0
        %1076 = vmatpush1.msra.mxu0 0.0
        %1077 = vmatprep.subr.mxu0 0.0
        %1078 = vmatpush1.msra.mxu0 0.0
        %1079 = vmatprep.subr.mxu0 0.0
        %1080 = vmatpush1.msra.mxu0 0.0
        %1081 = vmatprep.subr.mxu0 0.0
        %1082 = vmatpush1.msra.mxu0 0.0
        %1083 = vmatprep.subr.mxu0 0.0
        %1084 = vmatpush1.msra.mxu0 0.0
        %1085 = vmatprep.subr.mxu0 0.0
        %1086 = vmatpush1.msra.mxu0 0.0
        %1087 = vmatprep.subr.mxu0 0.0
        %1088 = vmatpush1.msra.mxu0 %v1028
        %1089 = vmatprep.subr.mxu0 0.0
        %1090 = vmatpush1.msra.mxu0 %v1023
        %1091 = vmatprep.subr.mxu0 0.0
        %1092 = vmatpush1.msra.mxu0 %v1018
        %1093 = vmatprep.subr.mxu0 0.0
        %1094 = vmatpush1.msra.mxu0 %v1013
        %1095 = vmatprep.subr.mxu0 0.0
        %1096 = vmatpush2.msra.mxu0 0.0
        %1097 = vmatprep.subr.mxu0 0.0
        %1098 = vmatpush2.msra.mxu0 0.0
        %1099 = vmatprep.subr.mxu0 0.0
        %1100 = vmatpush2.msra.mxu0 0.0
        %1101 = vmatprep.subr.mxu0 0.0
        %1102 = vmatpush2.msra.mxu0 0.0
        %1103 = vmatprep.subr.mxu0 0.0
        %1104 = vmatpush2.msra.mxu0 0.0
        %1105 = vmatprep.subr.mxu0 0.0
        %1106 = vmatpush2.msra.mxu0 0.0
        %1107 = vmatprep.subr.mxu0 0.0
        %1108 = vmatpush2.msra.mxu0 0.0
        %1109 = vmatprep.subr.mxu0 0.0
        %1110 = vmatpush2.msra.mxu0 0.0
        %1111 = vmatprep.subr.mxu0 0.0
        %1112 = vmatpush2.msra.mxu0 0.0
        %1113 = vmatprep.subr.mxu0 0.0
        %1114 = vmatpush2.msra.mxu0 0.0
        %1115 = vmatprep.subr.mxu0 0.0
        %1116 = vmatpush2.msra.mxu0 0.0
        %1117 = vmatprep.subr.mxu0 0.0
        %1118 = vmatpush2.msra.mxu0 0.0
        %1119 = vmatprep.subr.mxu0 0.0
        %1120 = vmatpush2.msra.mxu0 0.0
        %1121 = vmatprep.subr.mxu0 0.0
        %1122 = vmatpush2.msra.mxu0 0.0
        %1123 = vmatprep.subr.mxu0 0.0
        %1124 = vmatpush2.msra.mxu0 0.0
        %1125 = vmatprep.subr.mxu0 0.0
        %1126 = vmatpush2.msra.mxu0 0.0
        %1127 = vmatprep.mubr.f32.mxu0 0.0
        %1128 = vmatmul.mubr.f32.gmra.mxu0 %v1040
        %v1129 = vpop.f32.mrf.mxu0
        %v1130 = vadd.f32 0.0, %v1129
        %v1131 = vpop.f32.mrf.mxu0
        %1132 = vmatprep.mubr.f32.mxu0 0.0
        %1133 = vmatmul.mubr.f32.gmra.mxu0 %v1043
        %v1134 = vpop.f32.mrf.mxu0
        %v1135 = vadd.f32 0.0, %v1134
        %v1136 = vpop.f32.mrf.mxu0
        %1137 = vmatprep.mubr.f32.mxu0 0.0
        %1138 = vmatmul.mubr.f32.gmra.mxu0 %v1046
        %v1139 = vpop.f32.mrf.mxu0
        %v1140 = vadd.f32 0.0, %v1139
        %v1141 = vpop.f32.mrf.mxu0
        %1142 = vmatprep.mubr.f32.mxu0 0.0
        %1143 = vmatmul.mubr.f32.gmra.mxu0 %v1049
        %v1144 = vpop.f32.mrf.mxu0
        %v1145 = vadd.f32 0.0, %v1144
        %v1146 = vpop.f32.mrf.mxu0
        %1147 = vmatprep.mubr.f32.mxu0 0.0
        %1148 = vmatmul.mubr.f32.gmra.mxu0 %v1052
        %v1149 = vpop.f32.mrf.mxu0
        %v1150 = vadd.f32 0.0, %v1149
        %v1151 = vpop.f32.mrf.mxu0
        %1152 = vmatprep.mubr.f32.mxu0 0.0
        %1153 = vmatmul.mubr.f32.gmra.mxu0 %v1055
        %v1154 = vpop.f32.mrf.mxu0
        %v1155 = vadd.f32 0.0, %v1154
        %v1156 = vpop.f32.mrf.mxu0
        %1157 = vmatprep.mubr.f32.mxu0 0.0
        %1158 = vmatmul.mubr.f32.gmra.mxu0 %v1058
        %v1159 = vpop.f32.mrf.mxu0
        %v1160 = vadd.f32 0.0, %v1159
        %v1161 = vpop.f32.mrf.mxu0
        %1162 = vmatprep.mubr.f32.mxu0 0.0
        %1163 = vmatmul.mubr.f32.gmra.mxu0 %v1061
        %v1164 = vpop.f32.mrf.mxu0
        %v1165 = vadd.f32 0.0, %v1164
        %v1166 = vpop.f32.mrf.mxu0
        %1167 = vdwg.mxu0
        %s1168 = scalar_lea.vmem %s163, 192 [#allocation2]
        %1169 = vst.msk [vmem:[%s1168] sm:$0xff] %vm412, %v1130
        %1170 = vst.msk [vmem:[%s1168 + $0x8] sm:$0xff] %vm412, %v1135
        %1171 = vst.msk [vmem:[%s1168 + $0x10] sm:$0xff] %vm412, %v1140
        %1172 = vst.msk [vmem:[%s1168 + $0x18] sm:$0xff] %vm412, %v1145
        %1173 = vst.msk [vmem:[%s1168 + $0x20] sm:$0xff] %vm412, %v1150
        %1174 = vst.msk [vmem:[%s1168 + $0x28] sm:$0xff] %vm412, %v1155
        %1175 = vst.msk [vmem:[%s1168 + $0x30] sm:$0xff] %vm412, %v1160
        %1176 = vst.msk [vmem:[%s1168 + $0x38] sm:$0xff] %vm412, %v1165
        %s1177 = scalar_lea.vmem %s168, 128
        %v1178 = vld [vmem:[%s1177] sm:$0xff]
        %v1179 = vld [vmem:[%s1177 + $0x8] sm:$0xff]
        %v1180 = vld [vmem:[%s1177 + $0x10] sm:$0xff]
        %v1181 = vld [vmem:[%s1177 + $0x18] sm:$0xff]
        %v1182 = vld [vmem:[%s2] sm:$0xff]
        %v1183 = vld [vmem:[%s2 + $0x8] sm:$0xff]
        %v1184 = vld [vmem:[%s2 + $0x10] sm:$0xff]
        %v1185 = vld [vmem:[%s2 + $0x18] sm:$0xff]
        %v1187 = vsel %vm177, %v1178, 0
        %v1190 = vsel %vm177, %v1179, 0
        %v1193 = vsel %vm177, %v1180, 0
        %v1196 = vsel %vm177, %v1181, 0
        %1198 = vmatprep.subr.mxu0 0.0
        %1199 = vmatpush1.msra.mxu0 0.0
        %1200 = vmatprep.subr.mxu0 0.0
        %1201 = vmatpush1.msra.mxu0 0.0
        %1202 = vmatprep.subr.mxu0 0.0
        %1203 = vmatpush1.msra.mxu0 0.0
        %1204 = vmatprep.subr.mxu0 0.0
        %1205 = vmatpush1.msra.mxu0 0.0
        %1206 = vmatprep.subr.mxu0 0.0
        %1207 = vmatpush1.msra.mxu0 0.0
        %1208 = vmatprep.subr.mxu0 0.0
        %1209 = vmatpush1.msra.mxu0 0.0
        %1210 = vmatprep.subr.mxu0 0.0
        %1211 = vmatpush1.msra.mxu0 0.0
        %1212 = vmatprep.subr.mxu0 0.0
        %1213 = vmatpush1.msra.mxu0 0.0
        %1214 = vmatprep.subr.mxu0 0.0
        %1215 = vmatpush1.msra.mxu0 0.0
        %1216 = vmatprep.subr.mxu0 0.0
        %1217 = vmatpush1.msra.mxu0 0.0
        %1218 = vmatprep.subr.mxu0 0.0
        %1219 = vmatpush1.msra.mxu0 0.0
        %1220 = vmatprep.subr.mxu0 0.0
        %1221 = vmatpush1.msra.mxu0 0.0
        %1222 = vmatprep.subr.mxu0 0.0
        %1223 = vmatpush1.msra.mxu0 %v1185
        %1224 = vmatprep.subr.mxu0 0.0
        %1225 = vmatpush1.msra.mxu0 %v1184
        %1226 = vmatprep.subr.mxu0 0.0
        %1227 = vmatpush1.msra.mxu0 %v1183
        %1228 = vmatprep.subr.mxu0 0.0
        %1229 = vmatpush1.msra.mxu0 %v1182
        %1230 = vmatprep.subr.mxu0 0.0
        %1231 = vmatpush2.msra.mxu0 0.0
        %1232 = vmatprep.subr.mxu0 0.0
        %1233 = vmatpush2.msra.mxu0 0.0
        %1234 = vmatprep.subr.mxu0 0.0
        %1235 = vmatpush2.msra.mxu0 0.0
        %1236 = vmatprep.subr.mxu0 0.0
        %1237 = vmatpush2.msra.mxu0 0.0
        %1238 = vmatprep.subr.mxu0 0.0
        %1239 = vmatpush2.msra.mxu0 0.0
        %1240 = vmatprep.subr.mxu0 0.0
        %1241 = vmatpush2.msra.mxu0 0.0
        %1242 = vmatprep.subr.mxu0 0.0
        %1243 = vmatpush2.msra.mxu0 0.0
        %1244 = vmatprep.subr.mxu0 0.0
        %1245 = vmatpush2.msra.mxu0 0.0
        %1246 = vmatprep.subr.mxu0 0.0
        %1247 = vmatpush2.msra.mxu0 0.0
        %1248 = vmatprep.subr.mxu0 0.0
        %1249 = vmatpush2.msra.mxu0 0.0
        %1250 = vmatprep.subr.mxu0 0.0
        %1251 = vmatpush2.msra.mxu0 0.0
        %1252 = vmatprep.subr.mxu0 0.0
        %1253 = vmatpush2.msra.mxu0 0.0
        %1254 = vmatprep.subr.mxu0 0.0
        %1255 = vmatpush2.msra.mxu0 0.0
        %1256 = vmatprep.subr.mxu0 0.0
        %1257 = vmatpush2.msra.mxu0 0.0
        %1258 = vmatprep.subr.mxu0 0.0
        %1259 = vmatpush2.msra.mxu0 0.0
        %1260 = vmatprep.subr.mxu0 0.0
        %1261 = vmatpush2.msra.mxu0 0.0
        %1262 = vmatprep.mubr.f32.mxu0 0.0
        %1263 = vmatmul.mubr.f32.gmra.mxu0 %v1187
        %v1264 = vpop.f32.mrf.mxu0
        %v1265 = vadd.f32 0.0, %v1264
        %v1266 = vpop.f32.mrf.mxu0
        %1267 = vmatprep.mubr.f32.mxu0 0.0
        %1268 = vmatmul.mubr.f32.gmra.mxu0 %v1190
        %v1269 = vpop.f32.mrf.mxu0
        %v1270 = vadd.f32 0.0, %v1269
        %v1271 = vpop.f32.mrf.mxu0
        %1272 = vmatprep.mubr.f32.mxu0 0.0
        %1273 = vmatmul.mubr.f32.gmra.mxu0 %v1193
        %v1274 = vpop.f32.mrf.mxu0
        %v1275 = vadd.f32 0.0, %v1274
        %v1276 = vpop.f32.mrf.mxu0
        %1277 = vmatprep.mubr.f32.mxu0 0.0
        %1278 = vmatmul.mubr.f32.gmra.mxu0 %v1196
        %v1279 = vpop.f32.mrf.mxu0
        %v1280 = vadd.f32 0.0, %v1279
        %v1281 = vpop.f32.mrf.mxu0
        %1282 = vdwg.mxu0
        %v1283 = vld [vmem:[%s1] sm:$0xff]
        %v1284 = vld [vmem:[%s1 + $0x8] sm:$0xff]
        %v1285 = vld [vmem:[%s1 + $0x10] sm:$0xff]
        %v1286 = vld [vmem:[%s1 + $0x18] sm:$0xff]
        %v1287 = vld [vmem:[%s1 + $0x20] sm:$0xff]
        %v1288 = vld [vmem:[%s1 + $0x28] sm:$0xff]
        %v1289 = vld [vmem:[%s1 + $0x30] sm:$0xff]
        %v1290 = vld [vmem:[%s1 + $0x38] sm:$0xff]
        %v1292 = vsel %vm177, %v1283, 0
        %v1295 = vsel %vm177, %v1284, 0
        %v1298 = vsel %vm177, %v1285, 0
        %v1301 = vsel %vm177, %v1286, 0
        %v1304 = vsel %vm177, %v1287, 0
        %v1307 = vsel %vm177, %v1288, 0
        %v1310 = vsel %vm177, %v1289, 0
        %v1313 = vsel %vm177, %v1290, 0
        %1315 = vmatprep.subr.mxu0 0.0
        %1316 = vmatpush1.msra.mxu0 0.0
        %1317 = vmatprep.subr.mxu0 0.0
        %1318 = vmatpush1.msra.mxu0 0.0
        %1319 = vmatprep.subr.mxu0 0.0
        %1320 = vmatpush1.msra.mxu0 0.0
        %1321 = vmatprep.subr.mxu0 0.0
        %1322 = vmatpush1.msra.mxu0 0.0
        %1323 = vmatprep.subr.mxu0 0.0
        %1324 = vmatpush1.msra.mxu0 0.0
        %1325 = vmatprep.subr.mxu0 0.0
        %1326 = vmatpush1.msra.mxu0 0.0
        %1327 = vmatprep.subr.mxu0 0.0
        %1328 = vmatpush1.msra.mxu0 0.0
        %1329 = vmatprep.subr.mxu0 0.0
        %1330 = vmatpush1.msra.mxu0 0.0
        %1331 = vmatprep.subr.mxu0 0.0
        %1332 = vmatpush1.msra.mxu0 0.0
        %1333 = vmatprep.subr.mxu0 0.0
        %1334 = vmatpush1.msra.mxu0 0.0
        %1335 = vmatprep.subr.mxu0 0.0
        %1336 = vmatpush1.msra.mxu0 0.0
        %1337 = vmatprep.subr.mxu0 0.0
        %1338 = vmatpush1.msra.mxu0 0.0
        %1339 = vmatprep.subr.mxu0 0.0
        %1340 = vmatpush1.msra.mxu0 %v1280
        %1341 = vmatprep.subr.mxu0 0.0
        %1342 = vmatpush1.msra.mxu0 %v1275
        %1343 = vmatprep.subr.mxu0 0.0
        %1344 = vmatpush1.msra.mxu0 %v1270
        %1345 = vmatprep.subr.mxu0 0.0
        %1346 = vmatpush1.msra.mxu0 %v1265
        %1347 = vmatprep.subr.mxu0 0.0
        %1348 = vmatpush2.msra.mxu0 0.0
        %1349 = vmatprep.subr.mxu0 0.0
        %1350 = vmatpush2.msra.mxu0 0.0
        %1351 = vmatprep.subr.mxu0 0.0
        %1352 = vmatpush2.msra.mxu0 0.0
        %1353 = vmatprep.subr.mxu0 0.0
        %1354 = vmatpush2.msra.mxu0 0.0
        %1355 = vmatprep.subr.mxu0 0.0
        %1356 = vmatpush2.msra.mxu0 0.0
        %1357 = vmatprep.subr.mxu0 0.0
        %1358 = vmatpush2.msra.mxu0 0.0
        %1359 = vmatprep.subr.mxu0 0.0
        %1360 = vmatpush2.msra.mxu0 0.0
        %1361 = vmatprep.subr.mxu0 0.0
        %1362 = vmatpush2.msra.mxu0 0.0
        %1363 = vmatprep.subr.mxu0 0.0
        %1364 = vmatpush2.msra.mxu0 0.0
        %1365 = vmatprep.subr.mxu0 0.0
        %1366 = vmatpush2.msra.mxu0 0.0
        %1367 = vmatprep.subr.mxu0 0.0
        %1368 = vmatpush2.msra.mxu0 0.0
        %1369 = vmatprep.subr.mxu0 0.0
        %1370 = vmatpush2.msra.mxu0 0.0
        %1371 = vmatprep.subr.mxu0 0.0
        %1372 = vmatpush2.msra.mxu0 0.0
        %1373 = vmatprep.subr.mxu0 0.0
        %1374 = vmatpush2.msra.mxu0 0.0
        %1375 = vmatprep.subr.mxu0 0.0
        %1376 = vmatpush2.msra.mxu0 0.0
        %1377 = vmatprep.subr.mxu0 0.0
        %1378 = vmatpush2.msra.mxu0 0.0
        %1379 = vmatprep.mubr.f32.mxu0 0.0
        %1380 = vmatmul.mubr.f32.gmra.mxu0 %v1292
        %v1381 = vpop.f32.mrf.mxu0
        %v1382 = vadd.f32 0.0, %v1381
        %v1383 = vpop.f32.mrf.mxu0
        %1384 = vmatprep.mubr.f32.mxu0 0.0
        %1385 = vmatmul.mubr.f32.gmra.mxu0 %v1295
        %v1386 = vpop.f32.mrf.mxu0
        %v1387 = vadd.f32 0.0, %v1386
        %v1388 = vpop.f32.mrf.mxu0
        %1389 = vmatprep.mubr.f32.mxu0 0.0
        %1390 = vmatmul.mubr.f32.gmra.mxu0 %v1298
        %v1391 = vpop.f32.mrf.mxu0
        %v1392 = vadd.f32 0.0, %v1391
        %v1393 = vpop.f32.mrf.mxu0
        %1394 = vmatprep.mubr.f32.mxu0 0.0
        %1395 = vmatmul.mubr.f32.gmra.mxu0 %v1301
        %v1396 = vpop.f32.mrf.mxu0
        %v1397 = vadd.f32 0.0, %v1396
        %v1398 = vpop.f32.mrf.mxu0
        %1399 = vmatprep.mubr.f32.mxu0 0.0
        %1400 = vmatmul.mubr.f32.gmra.mxu0 %v1304
        %v1401 = vpop.f32.mrf.mxu0
        %v1402 = vadd.f32 0.0, %v1401
        %v1403 = vpop.f32.mrf.mxu0
        %1404 = vmatprep.mubr.f32.mxu0 0.0
        %1405 = vmatmul.mubr.f32.gmra.mxu0 %v1307
        %v1406 = vpop.f32.mrf.mxu0
        %v1407 = vadd.f32 0.0, %v1406
        %v1408 = vpop.f32.mrf.mxu0
        %1409 = vmatprep.mubr.f32.mxu0 0.0
        %1410 = vmatmul.mubr.f32.gmra.mxu0 %v1310
        %v1411 = vpop.f32.mrf.mxu0
        %v1412 = vadd.f32 0.0, %v1411
        %v1413 = vpop.f32.mrf.mxu0
        %1414 = vmatprep.mubr.f32.mxu0 0.0
        %1415 = vmatmul.mubr.f32.gmra.mxu0 %v1313
        %v1416 = vpop.f32.mrf.mxu0
        %v1417 = vadd.f32 0.0, %v1416
        %v1418 = vpop.f32.mrf.mxu0
        %1419 = vdwg.mxu0
        %s1420 = scalar_lea.vmem %s163, 256 [#allocation2]
        %1421 = vst.msk [vmem:[%s1420] sm:$0xff] %vm412, %v1382
        %1422 = vst.msk [vmem:[%s1420 + $0x8] sm:$0xff] %vm412, %v1387
        %1423 = vst.msk [vmem:[%s1420 + $0x10] sm:$0xff] %vm412, %v1392
        %1424 = vst.msk [vmem:[%s1420 + $0x18] sm:$0xff] %vm412, %v1397
        %1425 = vst.msk [vmem:[%s1420 + $0x20] sm:$0xff] %vm412, %v1402
        %1426 = vst.msk [vmem:[%s1420 + $0x28] sm:$0xff] %vm412, %v1407
        %1427 = vst.msk [vmem:[%s1420 + $0x30] sm:$0xff] %vm412, %v1412
        %1428 = vst.msk [vmem:[%s1420 + $0x38] sm:$0xff] %vm412, %v1417
        %s1429 = scalar_lea.vmem %s168, 160
        %v1430 = vld [vmem:[%s1429] sm:$0xff]
        %v1431 = vld [vmem:[%s1429 + $0x8] sm:$0xff]
        %v1432 = vld [vmem:[%s1429 + $0x10] sm:$0xff]
        %v1433 = vld [vmem:[%s1429 + $0x18] sm:$0xff]
        %v1434 = vld [vmem:[%s2] sm:$0xff]
        %v1435 = vld [vmem:[%s2 + $0x8] sm:$0xff]
        %v1436 = vld [vmem:[%s2 + $0x10] sm:$0xff]
        %v1437 = vld [vmem:[%s2 + $0x18] sm:$0xff]
        %v1439 = vsel %vm177, %v1430, 0
        %v1442 = vsel %vm177, %v1431, 0
        %v1445 = vsel %vm177, %v1432, 0
        %v1448 = vsel %vm177, %v1433, 0
        %1450 = vmatprep.subr.mxu0 0.0
        %1451 = vmatpush1.msra.mxu0 0.0
        %1452 = vmatprep.subr.mxu0 0.0
        %1453 = vmatpush1.msra.mxu0 0.0
        %1454 = vmatprep.subr.mxu0 0.0
        %1455 = vmatpush1.msra.mxu0 0.0
        %1456 = vmatprep.subr.mxu0 0.0
        %1457 = vmatpush1.msra.mxu0 0.0
        %1458 = vmatprep.subr.mxu0 0.0
        %1459 = vmatpush1.msra.mxu0 0.0
        %1460 = vmatprep.subr.mxu0 0.0
        %1461 = vmatpush1.msra.mxu0 0.0
        %1462 = vmatprep.subr.mxu0 0.0
        %1463 = vmatpush1.msra.mxu0 0.0
        %1464 = vmatprep.subr.mxu0 0.0
        %1465 = vmatpush1.msra.mxu0 0.0
        %1466 = vmatprep.subr.mxu0 0.0
        %1467 = vmatpush1.msra.mxu0 0.0
        %1468 = vmatprep.subr.mxu0 0.0
        %1469 = vmatpush1.msra.mxu0 0.0
        %1470 = vmatprep.subr.mxu0 0.0
        %1471 = vmatpush1.msra.mxu0 0.0
        %1472 = vmatprep.subr.mxu0 0.0
        %1473 = vmatpush1.msra.mxu0 0.0
        %1474 = vmatprep.subr.mxu0 0.0
        %1475 = vmatpush1.msra.mxu0 %v1437
        %1476 = vmatprep.subr.mxu0 0.0
        %1477 = vmatpush1.msra.mxu0 %v1436
        %1478 = vmatprep.subr.mxu0 0.0
        %1479 = vmatpush1.msra.mxu0 %v1435
        %1480 = vmatprep.subr.mxu0 0.0
        %1481 = vmatpush1.msra.mxu0 %v1434
        %1482 = vmatprep.subr.mxu0 0.0
        %1483 = vmatpush2.msra.mxu0 0.0
        %1484 = vmatprep.subr.mxu0 0.0
        %1485 = vmatpush2.msra.mxu0 0.0
        %1486 = vmatprep.subr.mxu0 0.0
        %1487 = vmatpush2.msra.mxu0 0.0
        %1488 = vmatprep.subr.mxu0 0.0
        %1489 = vmatpush2.msra.mxu0 0.0
        %1490 = vmatprep.subr.mxu0 0.0
        %1491 = vmatpush2.msra.mxu0 0.0
        %1492 = vmatprep.subr.mxu0 0.0
        %1493 = vmatpush2.msra.mxu0 0.0
        %1494 = vmatprep.subr.mxu0 0.0
        %1495 = vmatpush2.msra.mxu0 0.0
        %1496 = vmatprep.subr.mxu0 0.0
        %1497 = vmatpush2.msra.mxu0 0.0
        %1498 = vmatprep.subr.mxu0 0.0
        %1499 = vmatpush2.msra.mxu0 0.0
        %1500 = vmatprep.subr.mxu0 0.0
        %1501 = vmatpush2.msra.mxu0 0.0
        %1502 = vmatprep.subr.mxu0 0.0
        %1503 = vmatpush2.msra.mxu0 0.0
        %1504 = vmatprep.subr.mxu0 0.0
        %1505 = vmatpush2.msra.mxu0 0.0
        %1506 = vmatprep.subr.mxu0 0.0
        %1507 = vmatpush2.msra.mxu0 0.0
        %1508 = vmatprep.subr.mxu0 0.0
        %1509 = vmatpush2.msra.mxu0 0.0
        %1510 = vmatprep.subr.mxu0 0.0
        %1511 = vmatpush2.msra.mxu0 0.0
        %1512 = vmatprep.subr.mxu0 0.0
        %1513 = vmatpush2.msra.mxu0 0.0
        %1514 = vmatprep.mubr.f32.mxu0 0.0
        %1515 = vmatmul.mubr.f32.gmra.mxu0 %v1439
        %v1516 = vpop.f32.mrf.mxu0
        %v1517 = vadd.f32 0.0, %v1516
        %v1518 = vpop.f32.mrf.mxu0
        %1519 = vmatprep.mubr.f32.mxu0 0.0
        %1520 = vmatmul.mubr.f32.gmra.mxu0 %v1442
        %v1521 = vpop.f32.mrf.mxu0
        %v1522 = vadd.f32 0.0, %v1521
        %v1523 = vpop.f32.mrf.mxu0
        %1524 = vmatprep.mubr.f32.mxu0 0.0
        %1525 = vmatmul.mubr.f32.gmra.mxu0 %v1445
        %v1526 = vpop.f32.mrf.mxu0
        %v1527 = vadd.f32 0.0, %v1526
        %v1528 = vpop.f32.mrf.mxu0
        %1529 = vmatprep.mubr.f32.mxu0 0.0
        %1530 = vmatmul.mubr.f32.gmra.mxu0 %v1448
        %v1531 = vpop.f32.mrf.mxu0
        %v1532 = vadd.f32 0.0, %v1531
        %v1533 = vpop.f32.mrf.mxu0
        %1534 = vdwg.mxu0
        %v1535 = vld [vmem:[%s1] sm:$0xff]
        %v1536 = vld [vmem:[%s1 + $0x8] sm:$0xff]
        %v1537 = vld [vmem:[%s1 + $0x10] sm:$0xff]
        %v1538 = vld [vmem:[%s1 + $0x18] sm:$0xff]
        %v1539 = vld [vmem:[%s1 + $0x20] sm:$0xff]
        %v1540 = vld [vmem:[%s1 + $0x28] sm:$0xff]
        %v1541 = vld [vmem:[%s1 + $0x30] sm:$0xff]
        %v1542 = vld [vmem:[%s1 + $0x38] sm:$0xff]
        %v1544 = vsel %vm177, %v1535, 0
        %v1547 = vsel %vm177, %v1536, 0
        %v1550 = vsel %vm177, %v1537, 0
        %v1553 = vsel %vm177, %v1538, 0
        %v1556 = vsel %vm177, %v1539, 0
        %v1559 = vsel %vm177, %v1540, 0
        %v1562 = vsel %vm177, %v1541, 0
        %v1565 = vsel %vm177, %v1542, 0
        %1567 = vmatprep.subr.mxu0 0.0
        %1568 = vmatpush1.msra.mxu0 0.0
        %1569 = vmatprep.subr.mxu0 0.0
        %1570 = vmatpush1.msra.mxu0 0.0
        %1571 = vmatprep.subr.mxu0 0.0
        %1572 = vmatpush1.msra.mxu0 0.0
        %1573 = vmatprep.subr.mxu0 0.0
        %1574 = vmatpush1.msra.mxu0 0.0
        %1575 = vmatprep.subr.mxu0 0.0
        %1576 = vmatpush1.msra.mxu0 0.0
        %1577 = vmatprep.subr.mxu0 0.0
        %1578 = vmatpush1.msra.mxu0 0.0
        %1579 = vmatprep.subr.mxu0 0.0
        %1580 = vmatpush1.msra.mxu0 0.0
        %1581 = vmatprep.subr.mxu0 0.0
        %1582 = vmatpush1.msra.mxu0 0.0
        %1583 = vmatprep.subr.mxu0 0.0
        %1584 = vmatpush1.msra.mxu0 0.0
        %1585 = vmatprep.subr.mxu0 0.0
        %1586 = vmatpush1.msra.mxu0 0.0
        %1587 = vmatprep.subr.mxu0 0.0
        %1588 = vmatpush1.msra.mxu0 0.0
        %1589 = vmatprep.subr.mxu0 0.0
        %1590 = vmatpush1.msra.mxu0 0.0
        %1591 = vmatprep.subr.mxu0 0.0
        %1592 = vmatpush1.msra.mxu0 %v1532
        %1593 = vmatprep.subr.mxu0 0.0
        %1594 = vmatpush1.msra.mxu0 %v1527
        %1595 = vmatprep.subr.mxu0 0.0
        %1596 = vmatpush1.msra.mxu0 %v1522
        %1597 = vmatprep.subr.mxu0 0.0
        %1598 = vmatpush1.msra.mxu0 %v1517
        %1599 = vmatprep.subr.mxu0 0.0
        %1600 = vmatpush2.msra.mxu0 0.0
        %1601 = vmatprep.subr.mxu0 0.0
        %1602 = vmatpush2.msra.mxu0 0.0
        %1603 = vmatprep.subr.mxu0 0.0
        %1604 = vmatpush2.msra.mxu0 0.0
        %1605 = vmatprep.subr.mxu0 0.0
        %1606 = vmatpush2.msra.mxu0 0.0
        %1607 = vmatprep.subr.mxu0 0.0
        %1608 = vmatpush2.msra.mxu0 0.0
        %1609 = vmatprep.subr.mxu0 0.0
        %1610 = vmatpush2.msra.mxu0 0.0
        %1611 = vmatprep.subr.mxu0 0.0
        %1612 = vmatpush2.msra.mxu0 0.0
        %1613 = vmatprep.subr.mxu0 0.0
        %1614 = vmatpush2.msra.mxu0 0.0
        %1615 = vmatprep.subr.mxu0 0.0
        %1616 = vmatpush2.msra.mxu0 0.0
        %1617 = vmatprep.subr.mxu0 0.0
        %1618 = vmatpush2.msra.mxu0 0.0
        %1619 = vmatprep.subr.mxu0 0.0
        %1620 = vmatpush2.msra.mxu0 0.0
        %1621 = vmatprep.subr.mxu0 0.0
        %1622 = vmatpush2.msra.mxu0 0.0
        %1623 = vmatprep.subr.mxu0 0.0
        %1624 = vmatpush2.msra.mxu0 0.0
        %1625 = vmatprep.subr.mxu0 0.0
        %1626 = vmatpush2.msra.mxu0 0.0
        %1627 = vmatprep.subr.mxu0 0.0
        %1628 = vmatpush2.msra.mxu0 0.0
        %1629 = vmatprep.subr.mxu0 0.0
        %1630 = vmatpush2.msra.mxu0 0.0
        %1631 = vmatprep.mubr.f32.mxu0 0.0
        %1632 = vmatmul.mubr.f32.gmra.mxu0 %v1544
        %v1633 = vpop.f32.mrf.mxu0
        %v1634 = vadd.f32 0.0, %v1633
        %v1635 = vpop.f32.mrf.mxu0
        %1636 = vmatprep.mubr.f32.mxu0 0.0
        %1637 = vmatmul.mubr.f32.gmra.mxu0 %v1547
        %v1638 = vpop.f32.mrf.mxu0
        %v1639 = vadd.f32 0.0, %v1638
        %v1640 = vpop.f32.mrf.mxu0
        %1641 = vmatprep.mubr.f32.mxu0 0.0
        %1642 = vmatmul.mubr.f32.gmra.mxu0 %v1550
        %v1643 = vpop.f32.mrf.mxu0
        %v1644 = vadd.f32 0.0, %v1643
        %v1645 = vpop.f32.mrf.mxu0
        %1646 = vmatprep.mubr.f32.mxu0 0.0
        %1647 = vmatmul.mubr.f32.gmra.mxu0 %v1553
        %v1648 = vpop.f32.mrf.mxu0
        %v1649 = vadd.f32 0.0, %v1648
        %v1650 = vpop.f32.mrf.mxu0
        %1651 = vmatprep.mubr.f32.mxu0 0.0
        %1652 = vmatmul.mubr.f32.gmra.mxu0 %v1556
        %v1653 = vpop.f32.mrf.mxu0
        %v1654 = vadd.f32 0.0, %v1653
        %v1655 = vpop.f32.mrf.mxu0
        %1656 = vmatprep.mubr.f32.mxu0 0.0
        %1657 = vmatmul.mubr.f32.gmra.mxu0 %v1559
        %v1658 = vpop.f32.mrf.mxu0
        %v1659 = vadd.f32 0.0, %v1658
        %v1660 = vpop.f32.mrf.mxu0
        %1661 = vmatprep.mubr.f32.mxu0 0.0
        %1662 = vmatmul.mubr.f32.gmra.mxu0 %v1562
        %v1663 = vpop.f32.mrf.mxu0
        %v1664 = vadd.f32 0.0, %v1663
        %v1665 = vpop.f32.mrf.mxu0
        %1666 = vmatprep.mubr.f32.mxu0 0.0
        %1667 = vmatmul.mubr.f32.gmra.mxu0 %v1565
        %v1668 = vpop.f32.mrf.mxu0
        %v1669 = vadd.f32 0.0, %v1668
        %v1670 = vpop.f32.mrf.mxu0
        %1671 = vdwg.mxu0
        %s1672 = scalar_lea.vmem %s163, 320 [#allocation2]
        %1673 = vst.msk [vmem:[%s1672] sm:$0xff] %vm412, %v1634
        %1674 = vst.msk [vmem:[%s1672 + $0x8] sm:$0xff] %vm412, %v1639
        %1675 = vst.msk [vmem:[%s1672 + $0x10] sm:$0xff] %vm412, %v1644
        %1676 = vst.msk [vmem:[%s1672 + $0x18] sm:$0xff] %vm412, %v1649
        %1677 = vst.msk [vmem:[%s1672 + $0x20] sm:$0xff] %vm412, %v1654
        %1678 = vst.msk [vmem:[%s1672 + $0x28] sm:$0xff] %vm412, %v1659
        %1679 = vst.msk [vmem:[%s1672 + $0x30] sm:$0xff] %vm412, %v1664
        %1680 = vst.msk [vmem:[%s1672 + $0x38] sm:$0xff] %vm412, %v1669
        %s1681 = scalar_lea.vmem %s168, 192
        %v1682 = vld [vmem:[%s1681] sm:$0xff]
        %v1683 = vld [vmem:[%s1681 + $0x8] sm:$0xff]
        %v1684 = vld [vmem:[%s1681 + $0x10] sm:$0xff]
        %v1685 = vld [vmem:[%s1681 + $0x18] sm:$0xff]
        %v1686 = vld [vmem:[%s2] sm:$0xff]
        %v1687 = vld [vmem:[%s2 + $0x8] sm:$0xff]
        %v1688 = vld [vmem:[%s2 + $0x10] sm:$0xff]
        %v1689 = vld [vmem:[%s2 + $0x18] sm:$0xff]
        %v1691 = vsel %vm177, %v1682, 0
        %v1694 = vsel %vm177, %v1683, 0
        %v1697 = vsel %vm177, %v1684, 0
        %v1700 = vsel %vm177, %v1685, 0
        %1702 = vmatprep.subr.mxu0 0.0
        %1703 = vmatpush1.msra.mxu0 0.0
        %1704 = vmatprep.subr.mxu0 0.0
        %1705 = vmatpush1.msra.mxu0 0.0
        %1706 = vmatprep.subr.mxu0 0.0
        %1707 = vmatpush1.msra.mxu0 0.0
        %1708 = vmatprep.subr.mxu0 0.0
        %1709 = vmatpush1.msra.mxu0 0.0
        %1710 = vmatprep.subr.mxu0 0.0
        %1711 = vmatpush1.msra.mxu0 0.0
        %1712 = vmatprep.subr.mxu0 0.0
        %1713 = vmatpush1.msra.mxu0 0.0
        %1714 = vmatprep.subr.mxu0 0.0
        %1715 = vmatpush1.msra.mxu0 0.0
        %1716 = vmatprep.subr.mxu0 0.0
        %1717 = vmatpush1.msra.mxu0 0.0
        %1718 = vmatprep.subr.mxu0 0.0
        %1719 = vmatpush1.msra.mxu0 0.0
        %1720 = vmatprep.subr.mxu0 0.0
        %1721 = vmatpush1.msra.mxu0 0.0
        %1722 = vmatprep.subr.mxu0 0.0
        %1723 = vmatpush1.msra.mxu0 0.0
        %1724 = vmatprep.subr.mxu0 0.0
        %1725 = vmatpush1.msra.mxu0 0.0
        %1726 = vmatprep.subr.mxu0 0.0
        %1727 = vmatpush1.msra.mxu0 %v1689
        %1728 = vmatprep.subr.mxu0 0.0
        %1729 = vmatpush1.msra.mxu0 %v1688
        %1730 = vmatprep.subr.mxu0 0.0
        %1731 = vmatpush1.msra.mxu0 %v1687
        %1732 = vmatprep.subr.mxu0 0.0
        %1733 = vmatpush1.msra.mxu0 %v1686
        %1734 = vmatprep.subr.mxu0 0.0
        %1735 = vmatpush2.msra.mxu0 0.0
        %1736 = vmatprep.subr.mxu0 0.0
        %1737 = vmatpush2.msra.mxu0 0.0
        %1738 = vmatprep.subr.mxu0 0.0
        %1739 = vmatpush2.msra.mxu0 0.0
        %1740 = vmatprep.subr.mxu0 0.0
        %1741 = vmatpush2.msra.mxu0 0.0
        %1742 = vmatprep.subr.mxu0 0.0
        %1743 = vmatpush2.msra.mxu0 0.0
        %1744 = vmatprep.subr.mxu0 0.0
        %1745 = vmatpush2.msra.mxu0 0.0
        %1746 = vmatprep.subr.mxu0 0.0
        %1747 = vmatpush2.msra.mxu0 0.0
        %1748 = vmatprep.subr.mxu0 0.0
        %1749 = vmatpush2.msra.mxu0 0.0
        %1750 = vmatprep.subr.mxu0 0.0
        %1751 = vmatpush2.msra.mxu0 0.0
        %1752 = vmatprep.subr.mxu0 0.0
        %1753 = vmatpush2.msra.mxu0 0.0
        %1754 = vmatprep.subr.mxu0 0.0
        %1755 = vmatpush2.msra.mxu0 0.0
        %1756 = vmatprep.subr.mxu0 0.0
        %1757 = vmatpush2.msra.mxu0 0.0
        %1758 = vmatprep.subr.mxu0 0.0
        %1759 = vmatpush2.msra.mxu0 0.0
        %1760 = vmatprep.subr.mxu0 0.0
        %1761 = vmatpush2.msra.mxu0 0.0
        %1762 = vmatprep.subr.mxu0 0.0
        %1763 = vmatpush2.msra.mxu0 0.0
        %1764 = vmatprep.subr.mxu0 0.0
        %1765 = vmatpush2.msra.mxu0 0.0
        %1766 = vmatprep.mubr.f32.mxu0 0.0
        %1767 = vmatmul.mubr.f32.gmra.mxu0 %v1691
        %v1768 = vpop.f32.mrf.mxu0
        %v1769 = vadd.f32 0.0, %v1768
        %v1770 = vpop.f32.mrf.mxu0
        %1771 = vmatprep.mubr.f32.mxu0 0.0
        %1772 = vmatmul.mubr.f32.gmra.mxu0 %v1694
        %v1773 = vpop.f32.mrf.mxu0
        %v1774 = vadd.f32 0.0, %v1773
        %v1775 = vpop.f32.mrf.mxu0
        %1776 = vmatprep.mubr.f32.mxu0 0.0
        %1777 = vmatmul.mubr.f32.gmra.mxu0 %v1697
        %v1778 = vpop.f32.mrf.mxu0
        %v1779 = vadd.f32 0.0, %v1778
        %v1780 = vpop.f32.mrf.mxu0
        %1781 = vmatprep.mubr.f32.mxu0 0.0
        %1782 = vmatmul.mubr.f32.gmra.mxu0 %v1700
        %v1783 = vpop.f32.mrf.mxu0
        %v1784 = vadd.f32 0.0, %v1783
        %v1785 = vpop.f32.mrf.mxu0
        %1786 = vdwg.mxu0
        %v1787 = vld [vmem:[%s1] sm:$0xff]
        %v1788 = vld [vmem:[%s1 + $0x8] sm:$0xff]
        %v1789 = vld [vmem:[%s1 + $0x10] sm:$0xff]
        %v1790 = vld [vmem:[%s1 + $0x18] sm:$0xff]
        %v1791 = vld [vmem:[%s1 + $0x20] sm:$0xff]
        %v1792 = vld [vmem:[%s1 + $0x28] sm:$0xff]
        %v1793 = vld [vmem:[%s1 + $0x30] sm:$0xff]
        %v1794 = vld [vmem:[%s1 + $0x38] sm:$0xff]
        %v1796 = vsel %vm177, %v1787, 0
        %v1799 = vsel %vm177, %v1788, 0
        %v1802 = vsel %vm177, %v1789, 0
        %v1805 = vsel %vm177, %v1790, 0
        %v1808 = vsel %vm177, %v1791, 0
        %v1811 = vsel %vm177, %v1792, 0
        %v1814 = vsel %vm177, %v1793, 0
        %v1817 = vsel %vm177, %v1794, 0
        %1819 = vmatprep.subr.mxu0 0.0
        %1820 = vmatpush1.msra.mxu0 0.0
        %1821 = vmatprep.subr.mxu0 0.0
        %1822 = vmatpush1.msra.mxu0 0.0
        %1823 = vmatprep.subr.mxu0 0.0
        %1824 = vmatpush1.msra.mxu0 0.0
        %1825 = vmatprep.subr.mxu0 0.0
        %1826 = vmatpush1.msra.mxu0 0.0
        %1827 = vmatprep.subr.mxu0 0.0
        %1828 = vmatpush1.msra.mxu0 0.0
        %1829 = vmatprep.subr.mxu0 0.0
        %1830 = vmatpush1.msra.mxu0 0.0
        %1831 = vmatprep.subr.mxu0 0.0
        %1832 = vmatpush1.msra.mxu0 0.0
        %1833 = vmatprep.subr.mxu0 0.0
        %1834 = vmatpush1.msra.mxu0 0.0
        %1835 = vmatprep.subr.mxu0 0.0
        %1836 = vmatpush1.msra.mxu0 0.0
        %1837 = vmatprep.subr.mxu0 0.0
        %1838 = vmatpush1.msra.mxu0 0.0
        %1839 = vmatprep.subr.mxu0 0.0
        %1840 = vmatpush1.msra.mxu0 0.0
        %1841 = vmatprep.subr.mxu0 0.0
        %1842 = vmatpush1.msra.mxu0 0.0
        %1843 = vmatprep.subr.mxu0 0.0
        %1844 = vmatpush1.msra.mxu0 %v1784
        %1845 = vmatprep.subr.mxu0 0.0
        %1846 = vmatpush1.msra.mxu0 %v1779
        %1847 = vmatprep.subr.mxu0 0.0
        %1848 = vmatpush1.msra.mxu0 %v1774
        %1849 = vmatprep.subr.mxu0 0.0
        %1850 = vmatpush1.msra.mxu0 %v1769
        %1851 = vmatprep.subr.mxu0 0.0
        %1852 = vmatpush2.msra.mxu0 0.0
        %1853 = vmatprep.subr.mxu0 0.0
        %1854 = vmatpush2.msra.mxu0 0.0
        %1855 = vmatprep.subr.mxu0 0.0
        %1856 = vmatpush2.msra.mxu0 0.0
        %1857 = vmatprep.subr.mxu0 0.0
        %1858 = vmatpush2.msra.mxu0 0.0
        %1859 = vmatprep.subr.mxu0 0.0
        %1860 = vmatpush2.msra.mxu0 0.0
        %1861 = vmatprep.subr.mxu0 0.0
        %1862 = vmatpush2.msra.mxu0 0.0
        %1863 = vmatprep.subr.mxu0 0.0
        %1864 = vmatpush2.msra.mxu0 0.0
        %1865 = vmatprep.subr.mxu0 0.0
        %1866 = vmatpush2.msra.mxu0 0.0
        %1867 = vmatprep.subr.mxu0 0.0
        %1868 = vmatpush2.msra.mxu0 0.0
        %1869 = vmatprep.subr.mxu0 0.0
        %1870 = vmatpush2.msra.mxu0 0.0
        %1871 = vmatprep.subr.mxu0 0.0
        %1872 = vmatpush2.msra.mxu0 0.0
        %1873 = vmatprep.subr.mxu0 0.0
        %1874 = vmatpush2.msra.mxu0 0.0
        %1875 = vmatprep.subr.mxu0 0.0
        %1876 = vmatpush2.msra.mxu0 0.0
        %1877 = vmatprep.subr.mxu0 0.0
        %1878 = vmatpush2.msra.mxu0 0.0
        %1879 = vmatprep.subr.mxu0 0.0
        %1880 = vmatpush2.msra.mxu0 0.0
        %1881 = vmatprep.subr.mxu0 0.0
        %1882 = vmatpush2.msra.mxu0 0.0
        %1883 = vmatprep.mubr.f32.mxu0 0.0
        %1884 = vmatmul.mubr.f32.gmra.mxu0 %v1796
        %v1885 = vpop.f32.mrf.mxu0
        %v1886 = vadd.f32 0.0, %v1885
        %v1887 = vpop.f32.mrf.mxu0
        %1888 = vmatprep.mubr.f32.mxu0 0.0
        %1889 = vmatmul.mubr.f32.gmra.mxu0 %v1799
        %v1890 = vpop.f32.mrf.mxu0
        %v1891 = vadd.f32 0.0, %v1890
        %v1892 = vpop.f32.mrf.mxu0
        %1893 = vmatprep.mubr.f32.mxu0 0.0
        %1894 = vmatmul.mubr.f32.gmra.mxu0 %v1802
        %v1895 = vpop.f32.mrf.mxu0
        %v1896 = vadd.f32 0.0, %v1895
        %v1897 = vpop.f32.mrf.mxu0
        %1898 = vmatprep.mubr.f32.mxu0 0.0
        %1899 = vmatmul.mubr.f32.gmra.mxu0 %v1805
        %v1900 = vpop.f32.mrf.mxu0
        %v1901 = vadd.f32 0.0, %v1900
        %v1902 = vpop.f32.mrf.mxu0
        %1903 = vmatprep.mubr.f32.mxu0 0.0
        %1904 = vmatmul.mubr.f32.gmra.mxu0 %v1808
        %v1905 = vpop.f32.mrf.mxu0
        %v1906 = vadd.f32 0.0, %v1905
        %v1907 = vpop.f32.mrf.mxu0
        %1908 = vmatprep.mubr.f32.mxu0 0.0
        %1909 = vmatmul.mubr.f32.gmra.mxu0 %v1811
        %v1910 = vpop.f32.mrf.mxu0
        %v1911 = vadd.f32 0.0, %v1910
        %v1912 = vpop.f32.mrf.mxu0
        %1913 = vmatprep.mubr.f32.mxu0 0.0
        %1914 = vmatmul.mubr.f32.gmra.mxu0 %v1814
        %v1915 = vpop.f32.mrf.mxu0
        %v1916 = vadd.f32 0.0, %v1915
        %v1917 = vpop.f32.mrf.mxu0
        %1918 = vmatprep.mubr.f32.mxu0 0.0
        %1919 = vmatmul.mubr.f32.gmra.mxu0 %v1817
        %v1920 = vpop.f32.mrf.mxu0
        %v1921 = vadd.f32 0.0, %v1920
        %v1922 = vpop.f32.mrf.mxu0
        %1923 = vdwg.mxu0
        %s1924 = scalar_lea.vmem %s163, 384 [#allocation2]
        %1925 = vst.msk [vmem:[%s1924] sm:$0xff] %vm412, %v1886
        %1926 = vst.msk [vmem:[%s1924 + $0x8] sm:$0xff] %vm412, %v1891
        %1927 = vst.msk [vmem:[%s1924 + $0x10] sm:$0xff] %vm412, %v1896
        %1928 = vst.msk [vmem:[%s1924 + $0x18] sm:$0xff] %vm412, %v1901
        %1929 = vst.msk [vmem:[%s1924 + $0x20] sm:$0xff] %vm412, %v1906
        %1930 = vst.msk [vmem:[%s1924 + $0x28] sm:$0xff] %vm412, %v1911
        %1931 = vst.msk [vmem:[%s1924 + $0x30] sm:$0xff] %vm412, %v1916
        %1932 = vst.msk [vmem:[%s1924 + $0x38] sm:$0xff] %vm412, %v1921
        %s1933 = scalar_lea.vmem %s168, 224
        %v1934 = vld [vmem:[%s1933] sm:$0xff]
        %v1935 = vld [vmem:[%s1933 + $0x8] sm:$0xff]
        %v1936 = vld [vmem:[%s1933 + $0x10] sm:$0xff]
        %v1937 = vld [vmem:[%s1933 + $0x18] sm:$0xff]
        %v1938 = vld [vmem:[%s2] sm:$0xff]
        %v1939 = vld [vmem:[%s2 + $0x8] sm:$0xff]
        %v1940 = vld [vmem:[%s2 + $0x10] sm:$0xff]
        %v1941 = vld [vmem:[%s2 + $0x18] sm:$0xff]
        %v1943 = vsel %vm177, %v1934, 0
        %v1946 = vsel %vm177, %v1935, 0
        %v1949 = vsel %vm177, %v1936, 0
        %v1952 = vsel %vm177, %v1937, 0
        %1954 = vmatprep.subr.mxu0 0.0
        %1955 = vmatpush1.msra.mxu0 0.0
        %1956 = vmatprep.subr.mxu0 0.0
        %1957 = vmatpush1.msra.mxu0 0.0
        %1958 = vmatprep.subr.mxu0 0.0
        %1959 = vmatpush1.msra.mxu0 0.0
        %1960 = vmatprep.subr.mxu0 0.0
        %1961 = vmatpush1.msra.mxu0 0.0
        %1962 = vmatprep.subr.mxu0 0.0
        %1963 = vmatpush1.msra.mxu0 0.0
        %1964 = vmatprep.subr.mxu0 0.0
        %1965 = vmatpush1.msra.mxu0 0.0
        %1966 = vmatprep.subr.mxu0 0.0
        %1967 = vmatpush1.msra.mxu0 0.0
        %1968 = vmatprep.subr.mxu0 0.0
        %1969 = vmatpush1.msra.mxu0 0.0
        %1970 = vmatprep.subr.mxu0 0.0
        %1971 = vmatpush1.msra.mxu0 0.0
        %1972 = vmatprep.subr.mxu0 0.0
        %1973 = vmatpush1.msra.mxu0 0.0
        %1974 = vmatprep.subr.mxu0 0.0
        %1975 = vmatpush1.msra.mxu0 0.0
        %1976 = vmatprep.subr.mxu0 0.0
        %1977 = vmatpush1.msra.mxu0 0.0
        %1978 = vmatprep.subr.mxu0 0.0
        %1979 = vmatpush1.msra.mxu0 %v1941
        %1980 = vmatprep.subr.mxu0 0.0
        %1981 = vmatpush1.msra.mxu0 %v1940
        %1982 = vmatprep.subr.mxu0 0.0
        %1983 = vmatpush1.msra.mxu0 %v1939
        %1984 = vmatprep.subr.mxu0 0.0
        %1985 = vmatpush1.msra.mxu0 %v1938
        %1986 = vmatprep.subr.mxu0 0.0
        %1987 = vmatpush2.msra.mxu0 0.0
        %1988 = vmatprep.subr.mxu0 0.0
        %1989 = vmatpush2.msra.mxu0 0.0
        %1990 = vmatprep.subr.mxu0 0.0
        %1991 = vmatpush2.msra.mxu0 0.0
        %1992 = vmatprep.subr.mxu0 0.0
        %1993 = vmatpush2.msra.mxu0 0.0
        %1994 = vmatprep.subr.mxu0 0.0
        %1995 = vmatpush2.msra.mxu0 0.0
        %1996 = vmatprep.subr.mxu0 0.0
        %1997 = vmatpush2.msra.mxu0 0.0
        %1998 = vmatprep.subr.mxu0 0.0
        %1999 = vmatpush2.msra.mxu0 0.0
        %2000 = vmatprep.subr.mxu0 0.0
        %2001 = vmatpush2.msra.mxu0 0.0
        %2002 = vmatprep.subr.mxu0 0.0
        %2003 = vmatpush2.msra.mxu0 0.0
        %2004 = vmatprep.subr.mxu0 0.0
        %2005 = vmatpush2.msra.mxu0 0.0
        %2006 = vmatprep.subr.mxu0 0.0
        %2007 = vmatpush2.msra.mxu0 0.0
        %2008 = vmatprep.subr.mxu0 0.0
        %2009 = vmatpush2.msra.mxu0 0.0
        %2010 = vmatprep.subr.mxu0 0.0
        %2011 = vmatpush2.msra.mxu0 0.0
        %2012 = vmatprep.subr.mxu0 0.0
        %2013 = vmatpush2.msra.mxu0 0.0
        %2014 = vmatprep.subr.mxu0 0.0
        %2015 = vmatpush2.msra.mxu0 0.0
        %2016 = vmatprep.subr.mxu0 0.0
        %2017 = vmatpush2.msra.mxu0 0.0
        %2018 = vmatprep.mubr.f32.mxu0 0.0
        %2019 = vmatmul.mubr.f32.gmra.mxu0 %v1943
        %v2020 = vpop.f32.mrf.mxu0
        %v2021 = vadd.f32 0.0, %v2020
        %v2022 = vpop.f32.mrf.mxu0
        %2023 = vmatprep.mubr.f32.mxu0 0.0
        %2024 = vmatmul.mubr.f32.gmra.mxu0 %v1946
        %v2025 = vpop.f32.mrf.mxu0
        %v2026 = vadd.f32 0.0, %v2025
        %v2027 = vpop.f32.mrf.mxu0
        %2028 = vmatprep.mubr.f32.mxu0 0.0
        %2029 = vmatmul.mubr.f32.gmra.mxu0 %v1949
        %v2030 = vpop.f32.mrf.mxu0
        %v2031 = vadd.f32 0.0, %v2030
        %v2032 = vpop.f32.mrf.mxu0
        %2033 = vmatprep.mubr.f32.mxu0 0.0
        %2034 = vmatmul.mubr.f32.gmra.mxu0 %v1952
        %v2035 = vpop.f32.mrf.mxu0
        %v2036 = vadd.f32 0.0, %v2035
        %v2037 = vpop.f32.mrf.mxu0
        %2038 = vdwg.mxu0
        %v2039 = vld [vmem:[%s1] sm:$0xff]
        %v2040 = vld [vmem:[%s1 + $0x8] sm:$0xff]
        %v2041 = vld [vmem:[%s1 + $0x10] sm:$0xff]
        %v2042 = vld [vmem:[%s1 + $0x18] sm:$0xff]
        %v2043 = vld [vmem:[%s1 + $0x20] sm:$0xff]
        %v2044 = vld [vmem:[%s1 + $0x28] sm:$0xff]
        %v2045 = vld [vmem:[%s1 + $0x30] sm:$0xff]
        %v2046 = vld [vmem:[%s1 + $0x38] sm:$0xff]
        %v2048 = vsel %vm177, %v2039, 0
        %v2051 = vsel %vm177, %v2040, 0
        %v2054 = vsel %vm177, %v2041, 0
        %v2057 = vsel %vm177, %v2042, 0
        %v2060 = vsel %vm177, %v2043, 0
        %v2063 = vsel %vm177, %v2044, 0
        %v2066 = vsel %vm177, %v2045, 0
        %v2069 = vsel %vm177, %v2046, 0
        %2071 = vmatprep.subr.mxu0 0.0
        %2072 = vmatpush1.msra.mxu0 0.0
        %2073 = vmatprep.subr.mxu0 0.0
        %2074 = vmatpush1.msra.mxu0 0.0
        %2075 = vmatprep.subr.mxu0 0.0
        %2076 = vmatpush1.msra.mxu0 0.0
        %2077 = vmatprep.subr.mxu0 0.0
        %2078 = vmatpush1.msra.mxu0 0.0
        %2079 = vmatprep.subr.mxu0 0.0
        %2080 = vmatpush1.msra.mxu0 0.0
        %2081 = vmatprep.subr.mxu0 0.0
        %2082 = vmatpush1.msra.mxu0 0.0
        %2083 = vmatprep.subr.mxu0 0.0
        %2084 = vmatpush1.msra.mxu0 0.0
        %2085 = vmatprep.subr.mxu0 0.0
        %2086 = vmatpush1.msra.mxu0 0.0
        %2087 = vmatprep.subr.mxu0 0.0
        %2088 = vmatpush1.msra.mxu0 0.0
        %2089 = vmatprep.subr.mxu0 0.0
        %2090 = vmatpush1.msra.mxu0 0.0
        %2091 = vmatprep.subr.mxu0 0.0
        %2092 = vmatpush1.msra.mxu0 0.0
        %2093 = vmatprep.subr.mxu0 0.0
        %2094 = vmatpush1.msra.mxu0 0.0
        %2095 = vmatprep.subr.mxu0 0.0
        %2096 = vmatpush1.msra.mxu0 %v2036
        %2097 = vmatprep.subr.mxu0 0.0
        %2098 = vmatpush1.msra.mxu0 %v2031
        %2099 = vmatprep.subr.mxu0 0.0
        %2100 = vmatpush1.msra.mxu0 %v2026
        %2101 = vmatprep.subr.mxu0 0.0
        %2102 = vmatpush1.msra.mxu0 %v2021
        %2103 = vmatprep.subr.mxu0 0.0
        %2104 = vmatpush2.msra.mxu0 0.0
        %2105 = vmatprep.subr.mxu0 0.0
        %2106 = vmatpush2.msra.mxu0 0.0
        %2107 = vmatprep.subr.mxu0 0.0
        %2108 = vmatpush2.msra.mxu0 0.0
        %2109 = vmatprep.subr.mxu0 0.0
        %2110 = vmatpush2.msra.mxu0 0.0
        %2111 = vmatprep.subr.mxu0 0.0
        %2112 = vmatpush2.msra.mxu0 0.0
        %2113 = vmatprep.subr.mxu0 0.0
        %2114 = vmatpush2.msra.mxu0 0.0
        %2115 = vmatprep.subr.mxu0 0.0
        %2116 = vmatpush2.msra.mxu0 0.0
        %2117 = vmatprep.subr.mxu0 0.0
        %2118 = vmatpush2.msra.mxu0 0.0
        %2119 = vmatprep.subr.mxu0 0.0
        %2120 = vmatpush2.msra.mxu0 0.0
        %2121 = vmatprep.subr.mxu0 0.0
        %2122 = vmatpush2.msra.mxu0 0.0
        %2123 = vmatprep.subr.mxu0 0.0
        %2124 = vmatpush2.msra.mxu0 0.0
        %2125 = vmatprep.subr.mxu0 0.0
        %2126 = vmatpush2.msra.mxu0 0.0
        %2127 = vmatprep.subr.mxu0 0.0
        %2128 = vmatpush2.msra.mxu0 0.0
        %2129 = vmatprep.subr.mxu0 0.0
        %2130 = vmatpush2.msra.mxu0 0.0
        %2131 = vmatprep.subr.mxu0 0.0
        %2132 = vmatpush2.msra.mxu0 0.0
        %2133 = vmatprep.subr.mxu0 0.0
        %2134 = vmatpush2.msra.mxu0 0.0
        %2135 = vmatprep.mubr.f32.mxu0 0.0
        %2136 = vmatmul.mubr.f32.gmra.mxu0 %v2048
        %v2137 = vpop.f32.mrf.mxu0
        %v2138 = vadd.f32 0.0, %v2137
        %v2139 = vpop.f32.mrf.mxu0
        %2140 = vmatprep.mubr.f32.mxu0 0.0
        %2141 = vmatmul.mubr.f32.gmra.mxu0 %v2051
        %v2142 = vpop.f32.mrf.mxu0
        %v2143 = vadd.f32 0.0, %v2142
        %v2144 = vpop.f32.mrf.mxu0
        %2145 = vmatprep.mubr.f32.mxu0 0.0
        %2146 = vmatmul.mubr.f32.gmra.mxu0 %v2054
        %v2147 = vpop.f32.mrf.mxu0
        %v2148 = vadd.f32 0.0, %v2147
        %v2149 = vpop.f32.mrf.mxu0
        %2150 = vmatprep.mubr.f32.mxu0 0.0
        %2151 = vmatmul.mubr.f32.gmra.mxu0 %v2057
        %v2152 = vpop.f32.mrf.mxu0
        %v2153 = vadd.f32 0.0, %v2152
        %v2154 = vpop.f32.mrf.mxu0
        %2155 = vmatprep.mubr.f32.mxu0 0.0
        %2156 = vmatmul.mubr.f32.gmra.mxu0 %v2060
        %v2157 = vpop.f32.mrf.mxu0
        %v2158 = vadd.f32 0.0, %v2157
        %v2159 = vpop.f32.mrf.mxu0
        %2160 = vmatprep.mubr.f32.mxu0 0.0
        %2161 = vmatmul.mubr.f32.gmra.mxu0 %v2063
        %v2162 = vpop.f32.mrf.mxu0
        %v2163 = vadd.f32 0.0, %v2162
        %v2164 = vpop.f32.mrf.mxu0
        %2165 = vmatprep.mubr.f32.mxu0 0.0
        %2166 = vmatmul.mubr.f32.gmra.mxu0 %v2066
        %v2167 = vpop.f32.mrf.mxu0
        %v2168 = vadd.f32 0.0, %v2167
        %v2169 = vpop.f32.mrf.mxu0
        %2170 = vmatprep.mubr.f32.mxu0 0.0
        %2171 = vmatmul.mubr.f32.gmra.mxu0 %v2069
        %v2172 = vpop.f32.mrf.mxu0
        %v2173 = vadd.f32 0.0, %v2172
        %v2174 = vpop.f32.mrf.mxu0
        %2175 = vdwg.mxu0
        %s2176 = scalar_lea.vmem %s163, 448 [#allocation2]
        %2177 = vst.msk [vmem:[%s2176] sm:$0xff] %vm412, %v2138
        %2178 = vst.msk [vmem:[%s2176 + $0x8] sm:$0xff] %vm412, %v2143
        %2179 = vst.msk [vmem:[%s2176 + $0x10] sm:$0xff] %vm412, %v2148
        %2180 = vst.msk [vmem:[%s2176 + $0x18] sm:$0xff] %vm412, %v2153
        %2181 = vst.msk [vmem:[%s2176 + $0x20] sm:$0xff] %vm412, %v2158
        %2182 = vst.msk [vmem:[%s2176 + $0x28] sm:$0xff] %vm412, %v2163
        %2183 = vst.msk [vmem:[%s2176 + $0x30] sm:$0xff] %vm412, %v2168
        %2184 = vst.msk [vmem:[%s2176 + $0x38] sm:$0xff] %vm412, %v2173
        %s2185 = sand.u32 %s93, 1
        %s2186 = scalar_lea.sflag [#allocation3], %s2185
        %s2187 = sand.u32 %s93, 1
        %s2188 = smul.addr %s2187, 512
        %s2189 = scalar_lea.vmem [#allocation2], %s2188
        // Predicated region
        $region33: #{forward.19} parent=31 // pred_check
          %p2190 = pneg %p103
        $region34: #{forward.19} parent=31 // pred_check_branch
          %2192 = sbr.rel (%p2190) target = $region36
        $region35: #{forward.19} parent=31 // pred_region
          %s2194 = ssub.s32 8192, 8192
          %2195 = vsyncadd %s2186, %s2194
          %s2196 = smul.addr %s17, 64
          %s2197 = smul.addr %s2196, 128
          %s2198 = scalar_lea.hbm %s3, %s2197
          %s2199 = sshll.u32 %s2189, 4
          %s2200 = int_to_ptr.vmem [resolvable:$true] %s2199
          %2205 = dma.vmem_to_hbm [thread:$0]  %s2200, 8192, %s2198, %s2186, 128, 128, 8
        $region36: #{forward.19} parent=31 // pred_fallthru
          _
      $region32: #{forward.19} parent=5 // pred_fallthru
        _
      %p2206 = scmp.le.s32.totalorder 2, %s12
      // Predicated region
      $region37: #{forward.19} parent=5 // pred_check
        %p2207 = pneg %p2206
      $region38: #{forward.19} parent=5 // pred_check_branch
        %2209 = sbr.rel (%p2207) target = $region40
      $region39: #{forward.19} parent=5 // pred_region
        %s2210 = ssub.s32 %s12, 2
        // Predicated region
        $region41: #{forward.19} parent=39 // pred_check
          %p2211 = pneg %p109
        $region42: #{forward.19} parent=39 // pred_check_branch
          %2213 = sbr.rel (%p2211) target = $region44
        $region43: #{forward.19} parent=39 // pred_region
          %s2214 = sand.u32 %s94, 1
          %s2215 = scalar_lea.sflag [#allocation3], %s2214
          %s2216 = sand.u32 %s94, 1
          %s2217 = smul.addr %s2216, 512
          %s2218 = scalar_lea.vmem [#allocation2], %s2217
          %2219 = dma.done %s2215, 8192
        $region44: #{forward.19} parent=39 // pred_fallthru
          _
      $region40: #{forward.19} parent=5 // pred_fallthru
        _
    $region6: #{forward.19} parent=1 // loop_footer
      %s16 = sadd.s32 1, %s12
    $region7: #{forward.19} parent=1 // loop_footer_branch
      %11 = sbr.rel target = $region3
    $region8: #{forward.19} parent=1 // loop_exit
      _
    %2220 = vsyncpa [#allocation3], 1
    %s2221 = scalar_lea.sflag [#allocation3], 1
    %2222 = vsyncpa %s2221, 1

</llo_original>
